<compile_context>
chip_gen: v7x
topology: tpu7x:2x2x1
jax: 0.10.0
libtpu: 0.0.40
codegen_flags: <defaults>
</compile_context>

<pallas_src>
import functools

import jax
import jax.numpy as jnp
import numpy as np
from jax import lax
from jax.experimental import pallas as pl
from jax.experimental.pallas import tpu as pltpu

BN_EPS = 1e-5
NEG_SLOPE = 0.2
LANE = 128
MAX_SINGLE_TILE_M = 2048   # above this, split the (no-BN) grid into 2 parallel steps


def _round_up(x, m):
    return ((x + m - 1) // m) * m


# --------------------------------------------------------------------------
# Pallas kernels
# --------------------------------------------------------------------------
def _conv_lrelu_kernel(p_ref, w_ref, o_ref):
    # (tile_m, K) bf16 @ (K, Cp) bf16 -> f32 epilogue, fused LeakyReLU, bf16 store.
    acc = jnp.dot(p_ref[...], w_ref[...], preferred_element_type=jnp.float32)
    o_ref[...] = jnp.where(acc >= 0.0, acc, NEG_SLOPE * acc).astype(o_ref.dtype)


def _conv_bn_lrelu_kernel(p_ref, w_ref, g_ref, b_ref, o_ref, acc_ref, *, inv_m):
    # Whole layer in one grid step: matmul into VMEM scratch, BatchNorm
    # (training-mode, biased variance, two-pass) + affine + LeakyReLU fused.
    # Only the final bf16/f32 activation ever goes back to HBM.
    acc_ref[...] = jnp.dot(p_ref[...], w_ref[...],
                           preferred_element_type=jnp.float32)
    x = acc_ref[...]
    mean = jnp.sum(x, axis=0, keepdims=True) * inv_m          # (1, Cp)
    xc = x - mean
    var = jnp.sum(xc * xc, axis=0, keepdims=True) * inv_m     # two-pass variance
    scale = g_ref[...] * lax.rsqrt(var + BN_EPS)              # padded lanes: gamma=0
    y = xc * scale + b_ref[...]
    o_ref[...] = jnp.where(y >= 0.0, y, NEG_SLOPE * y).astype(o_ref.dtype)


# --------------------------------------------------------------------------
# pallas_call wrappers
# --------------------------------------------------------------------------
def conv_lrelu(patches, wmat, out_dtype):
    m, k = patches.shape
    cp = wmat.shape[1]
    if m > MAX_SINGLE_TILE_M and m % 2 == 0 and (m // 2) % 8 == 0:
        tile_m, steps = m // 2, 2           # 2 parallel steps -> both TCs on v7x
    else:
        tile_m, steps = m, 1
    return pl.pallas_call(
        _conv_lrelu_kernel,
        out_shape=jax.ShapeDtypeStruct((m, cp), out_dtype),
        grid=(steps,),
        in_specs=[
            pl.BlockSpec((tile_m, k), lambda i: (i, 0)),
            pl.BlockSpec((k, cp), lambda i: (0, 0)),      # weight resident
        ],
        out_specs=pl.BlockSpec((tile_m, cp), lambda i: (i, 0)),
        compiler_params=pltpu.CompilerParams(dimension_semantics=("parallel",)),
    )(patches, wmat)


def conv_bn_lrelu(patches, wmat, gamma, beta, out_dtype):
    m, k = patches.shape
    cp = wmat.shape[1]
    assert m % 8 == 0, "BN layer rows must be a multiple of 8"
    # Whole layer fits VMEM comfortably on every generation at these sizes
    # (raw conv scratch <= 512 KiB f32, patches <= 512 KiB bf16).
    kern = functools.partial(_conv_bn_lrelu_kernel, inv_m=1.0 / m)
    return pl.pallas_call(
        kern,
        out_shape=jax.ShapeDtypeStruct((m, cp), out_dtype),
        grid=(1,),
        in_specs=[
            pl.BlockSpec((m, k), lambda i: (0, 0)),
            pl.BlockSpec((k, cp), lambda i: (0, 0)),
            pl.BlockSpec((1, cp), lambda i: (0, 0)),      # gamma (padded lanes = 0)
            pl.BlockSpec((1, cp), lambda i: (0, 0)),      # beta  (padded lanes = 0)
        ],
        out_specs=pl.BlockSpec((m, cp), lambda i: (0, 0)),
        scratch_shapes=[pltpu.VMEM((m, cp), jnp.float32)],   # raw conv, VMEM-resident
        compiler_params=pltpu.CompilerParams(dimension_semantics=("arbitrary",)),
    )(patches, wmat, gamma, beta)


# --------------------------------------------------------------------------
# Glue: NHWC im2col for k=4, s=2, p=1 (K ordering = (kh, kw, c_in)) — XLA side,
# operates directly on bf16 activations (no extra convert pass).
# --------------------------------------------------------------------------
def im2col_nhwc_4x4_s2_p1(x):
    n, h, w, c = x.shape
    ho, wo = h // 2, w // 2
    xp = jnp.pad(x, ((0, 0), (1, 1), (1, 1), (0, 0)))
    pieces = [xp[:, ki:ki + 2 * ho:2, kj:kj + 2 * wo:2, :]
              for ki in range(4) for kj in range(4)]
    p = jnp.stack(pieces, axis=3)                 # (N, Ho, Wo, 16, C)
    return p.reshape(n * ho * wo, 16 * c)


# --------------------------------------------------------------------------
# Parameters
# --------------------------------------------------------------------------
def init_params(key, nc=1, ndf=16):
    # Conv2d(nc,ndf) -> (ndf,2ndf) -> (2ndf,4ndf) -> (4ndf,8ndf); BN on layers 2..4
    chans = [nc, ndf, ndf * 2, ndf * 4, ndf * 8]
    params = []
    for li in range(4):
        key, sub = jax.random.split(key)
        c_in, c_out = chans[li], chans[li + 1]
        w = 0.02 * jax.random.normal(sub, (c_out, c_in, 4, 4), jnp.float32)
        gamma = jnp.ones((c_out,), jnp.float32)   # PyTorch BN default init
        beta = jnp.zeros((c_out,), jnp.float32)
        params.append((w, gamma, beta, li > 0))
    return params


def prepare_params(params):
    """One-time preprocessing: OIHW weight -> (16*C_in, Cp) bf16 with output
    channels zero-padded to a multiple of 128 (lane-dense stores); gamma/beta
    zero-padded likewise so padded lanes stay exactly 0 through BN+LeakyReLU."""
    prepped = []
    for (w, gamma, beta, use_bn) in params:
        c_out, c_in, kh, kw = w.shape
        cp = _round_up(c_out, LANE)
        wmat = w.transpose(2, 3, 1, 0).reshape(kh * kw * c_in, c_out)
        wmat = jnp.pad(wmat, ((0, 0), (0, cp - c_out))).astype(jnp.bfloat16)
        gamma_p = jnp.pad(gamma, (0, cp - c_out)).reshape(1, cp)
        beta_p = jnp.pad(beta, (0, cp - c_out)).reshape(1, cp)
        prepped.append(dict(wmat=wmat, gamma=gamma_p, beta=beta_p,
                            c_out=c_out, use_bn=use_bn))
    return prepped


# --------------------------------------------------------------------------
# Full forward (the `main` feature extractor of Discriminator, mode='F')
# --------------------------------------------------------------------------
def discriminator_f(x_nchw, prepped):
    # NCHW -> NHWC once at entry; single bf16 cast for the whole network.
    h = jnp.transpose(x_nchw, (0, 2, 3, 1)).astype(jnp.bfloat16)
    n_layers = len(prepped)
    for li, layer in enumerate(prepped):
        n, hh, ww, _ = h.shape
        ho, wo = hh // 2, ww // 2
        c_out = layer["c_out"]
        patches = im2col_nhwc_4x4_s2_p1(h)        # bf16 already
        out_dtype = jnp.float32 if li == n_layers - 1 else jnp.bfloat16
        if layer["use_bn"]:
            out = conv_bn_lrelu(patches, layer["wmat"], layer["gamma"],
                                layer["beta"], out_dtype)
        else:
            out = conv_lrelu(patches, layer["wmat"], out_dtype)
        h = out[:, :c_out].reshape(n, ho, wo, c_out)   # drop padded lanes
    return jnp.transpose(h, (0, 3, 1, 2))          # back to NCHW at exit


# --------------------------------------------------------------------------
# Pure-JAX f32 reference (PyTorch training-mode semantics)
# --------------------------------------------------------------------------
def ref_forward(x, params):
    h = x
    for (w, gamma, beta, use_bn) in params:
        h = lax.conv_general_dilated(
            h, w, window_strides=(2, 2), padding=((1, 1), (1, 1)),
            dimension_numbers=("NCHW", "OIHW", "NCHW"),
        )
        if use_bn:
            mean = jnp.mean(h, axis=(0, 2, 3), keepdims=True)
            var = jnp.mean(jnp.square(h - mean), axis=(0, 2, 3), keepdims=True)
            h = (h - mean) * lax.rsqrt(var + BN_EPS)
            h = h * gamma.reshape(1, -1, 1, 1) + beta.reshape(1, -1, 1, 1)
        h = jnp.where(h >= 0.0, h, NEG_SLOPE * h)
    return h


if __name__ == "__main__":
    key = jax.random.PRNGKey(0)
    kx, kp = jax.random.split(key)

    # Canonical DCGAN 64x64 input (matches the 4x stride-2 stack), small
    # batch=4, nc=1, ndf=16 -> output (4, 128, 4, 4).
    x = jax.random.normal(kx, (4, 1, 64, 64), jnp.float32)
    raw_params = init_params(kp, nc=1, ndf=16)
    prepped = prepare_params(raw_params)

    fwd = jax.jit(functools.partial(discriminator_f, prepped=prepped))
    out = jax.block_until_ready(fwd(x))

    ref = jax.block_until_ready(ref_forward(x, raw_params))
    assert out.shape == ref.shape == (4, 128, 4, 4)
    # bf16 matmul inputs / bf16 intermediate activations -> looser tolerance
    # vs the f32 end-to-end reference.
    np.testing.assert_allclose(np.asarray(out), np.asarray(ref),
                               rtol=5e-2, atol=5e-2)

    print("KERNEL_OK")
</pallas_src>

<mosaic_0001>
module attributes {stable_mosaic.version = 11 : i64} {
  func.func @_conv_lrelu_kernel(%arg0: i32, %arg1: memref<2048x16xbf16, #tpu.memory_space<vmem>>, %arg2: memref<16x128xbf16, #tpu.memory_space<vmem>>, %arg3: memref<2048x128xbf16, #tpu.memory_space<vmem>>) attributes {dimension_semantics = [#tpu.dimension_semantics<parallel>], iteration_bounds = array<i64: 2>, scalar_prefetch = 0 : i64, scratch_operands = 0 : i64, tpu.core_type = #tpu.core_type<tc>, window_params = [{transform_indices = @transform_0, window_bounds = array<i64: 2048, 16>}, {pipeline_mode = #tpu.pipeline_mode<synchronous>, transform_indices = @transform_1, window_bounds = array<i64: 16, 128>}, {transform_indices = @transform_2, window_bounds = array<i64: 2048, 128>}]} {
    %c0 = arith.constant 0 : index
    %c0_0 = arith.constant 0 : index
    %0 = vector.load %arg1[%c0, %c0_0] : memref<2048x16xbf16, #tpu.memory_space<vmem>>, vector<2048x16xbf16>
    %c0_1 = arith.constant 0 : index
    %c0_2 = arith.constant 0 : index
    %1 = vector.load %arg2[%c0_1, %c0_2] : memref<16x128xbf16, #tpu.memory_space<vmem>>, vector<16x128xbf16>
    %cst = arith.constant dense<0.000000e+00> : vector<2048x128xf32>
    %2 = tpu.matmul %0, %1, %cst {dimension_numbers = #tpu.dot_dimension_numbers<[1], [0], [0], [1], [0, 0, 1, 1], [], []>} : vector<2048x16xbf16>, vector<16x128xbf16>, vector<2048x128xf32> -> vector<2048x128xf32>
    %cst_3 = arith.constant 0.000000e+00 : f32
    %3 = vector.broadcast %cst_3 : f32 to vector<2048x128xf32>
    %4 = arith.cmpf oge, %2, %3 : vector<2048x128xf32>
    %cst_4 = arith.constant 2.000000e-01 : f32
    %5 = vector.broadcast %cst_4 : f32 to vector<2048x128xf32>
    %6 = arith.mulf %5, %2 : vector<2048x128xf32>
    %7 = arith.select %4, %2, %6 : vector<2048x128xi1>, vector<2048x128xf32>
    %8 = arith.truncf %7 : vector<2048x128xf32> to vector<2048x128xbf16>
    %c0_5 = arith.constant 0 : index
    %c0_6 = arith.constant 0 : index
    %9 = vector.load %arg3[%c0_5, %c0_6] : memref<2048x128xbf16, #tpu.memory_space<vmem>>, vector<2048x128xbf16>
    tpu.vector_store %arg3[%c0_5, %c0_6], %8 {strides = array<i32>} : memref<2048x128xbf16, #tpu.memory_space<vmem>>, vector<2048x128xbf16>,
    return
  }
  func.func @transform_0(%arg0: i32) -> (i32, i32) {
    %c0_i32 = arith.constant 0 : i32
    %c0_i32_0 = arith.constant 0 : i32
    return %arg0, %c0_i32 : i32, i32
  }
  func.func @transform_1(%arg0: i32) -> (i32, i32) {
    %c0_i32 = arith.constant 0 : i32
    %c0_i32_0 = arith.constant 0 : i32
    %c0_i32_1 = arith.constant 0 : i32
    return %c0_i32, %c0_i32_0 : i32, i32
  }
  func.func @transform_2(%arg0: i32) -> (i32, i32) {
    %c0_i32 = arith.constant 0 : i32
    %c0_i32_0 = arith.constant 0 : i32
    return %arg0, %c0_i32 : i32, i32
  }
}

module attributes {stable_mosaic.version = 11 : i64} {
  func.func @_conv_bn_lrelu_kernel(%arg0: i32, %arg1: memref<1024x256xbf16, #tpu.memory_space<vmem>>, %arg2: memref<256x128xbf16, #tpu.memory_space<vmem>>, %arg3: memref<1x128xf32, #tpu.memory_space<vmem>>, %arg4: memref<1x128xf32, #tpu.memory_space<vmem>>, %arg5: memref<1024x128xbf16, #tpu.memory_space<vmem>>, %arg6: memref<1024x128xf32, #tpu.memory_space<vmem>>) attributes {dimension_semantics = [#tpu.dimension_semantics<arbitrary>], iteration_bounds = array<i64: 1>, scalar_prefetch = 0 : i64, scratch_operands = 1 : i64, tpu.core_type = #tpu.core_type<tc>, window_params = [{pipeline_mode = #tpu.pipeline_mode<synchronous>, transform_indices = @transform_0, window_bounds = array<i64: 1024, 256>}, {pipeline_mode = #tpu.pipeline_mode<synchronous>, transform_indices = @transform_1, window_bounds = array<i64: 256, 128>}, {pipeline_mode = #tpu.pipeline_mode<synchronous>, transform_indices = @transform_2, window_bounds = array<i64: 1, 128>}, {pipeline_mode = #tpu.pipeline_mode<synchronous>, transform_indices = @transform_3, window_bounds = array<i64: 1, 128>}, {pipeline_mode = #tpu.pipeline_mode<synchronous>, transform_indices = @transform_4, window_bounds = array<i64: 1024, 128>}]} {
    %c0 = arith.constant 0 : index
    %c0_0 = arith.constant 0 : index
    %0 = vector.load %arg1[%c0, %c0_0] : memref<1024x256xbf16, #tpu.memory_space<vmem>>, vector<1024x256xbf16>
    %c0_1 = arith.constant 0 : index
    %c0_2 = arith.constant 0 : index
    %1 = vector.load %arg2[%c0_1, %c0_2] : memref<256x128xbf16, #tpu.memory_space<vmem>>, vector<256x128xbf16>
    %cst = arith.constant dense<0.000000e+00> : vector<1024x128xf32>
    %2 = tpu.matmul %0, %1, %cst {dimension_numbers = #tpu.dot_dimension_numbers<[1], [0], [0], [1], [0, 0, 1, 1], [], []>} : vector<1024x256xbf16>, vector<256x128xbf16>, vector<1024x128xf32> -> vector<1024x128xf32>
    %c0_3 = arith.constant 0 : index
    %c0_4 = arith.constant 0 : index
    %3 = vector.load %arg6[%c0_3, %c0_4] : memref<1024x128xf32, #tpu.memory_space<vmem>>, vector<1024x128xf32>
    tpu.vector_store %arg6[%c0_3, %c0_4], %2 {strides = array<i32>} : memref<1024x128xf32, #tpu.memory_space<vmem>>, vector<1024x128xf32>,
    %c0_5 = arith.constant 0 : index
    %c0_6 = arith.constant 0 : index
    %4 = vector.load %arg6[%c0_5, %c0_6] : memref<1024x128xf32, #tpu.memory_space<vmem>>, vector<1024x128xf32>
    %cst_7 = arith.constant dense<0.000000e+00> : vector<128xf32>
    %5 = vector.multi_reduction <add>, %4, %cst_7 [0] : vector<1024x128xf32> to vector<128xf32>
    %6 = vector.shape_cast %5 : vector<128xf32> to vector<1x128xf32>
    %cst_8 = arith.constant 9.765625E-4 : f32
    %7 = vector.broadcast %cst_8 : f32 to vector<1x128xf32>
    %8 = arith.mulf %6, %7 : vector<1x128xf32>
    %9 = vector.broadcast %8 : vector<1x128xf32> to vector<1024x128xf32>
    %10 = arith.subf %4, %9 : vector<1024x128xf32>
    %11 = arith.mulf %10, %10 : vector<1024x128xf32>
    %cst_9 = arith.constant dense<0.000000e+00> : vector<128xf32>
    %12 = vector.multi_reduction <add>, %11, %cst_9 [0] : vector<1024x128xf32> to vector<128xf32>
    %13 = vector.shape_cast %12 : vector<128xf32> to vector<1x128xf32>
    %cst_10 = arith.constant 9.765625E-4 : f32
    %14 = vector.broadcast %cst_10 : f32 to vector<1x128xf32>
    %15 = arith.mulf %13, %14 : vector<1x128xf32>
    %c0_11 = arith.constant 0 : index
    %c0_12 = arith.constant 0 : index
    %16 = vector.load %arg3[%c0_11, %c0_12] : memref<1x128xf32, #tpu.memory_space<vmem>>, vector<1x128xf32>
    %cst_13 = arith.constant 9.99999974E-6 : f32
    %17 = vector.broadcast %cst_13 : f32 to vector<1x128xf32>
    %18 = arith.addf %15, %17 : vector<1x128xf32>
    %19 = math.rsqrt %18 : vector<1x128xf32>
    %20 = arith.mulf %16, %19 : vector<1x128xf32>
    %21 = vector.broadcast %20 : vector<1x128xf32> to vector<1024x128xf32>
    %22 = arith.mulf %10, %21 : vector<1024x128xf32>
    %c0_14 = arith.constant 0 : index
    %c0_15 = arith.constant 0 : index
    %23 = vector.load %arg4[%c0_14, %c0_15] : memref<1x128xf32, #tpu.memory_space<vmem>>, vector<1x128xf32>
    %24 = vector.broadcast %23 : vector<1x128xf32> to vector<1024x128xf32>
    %25 = arith.addf %22, %24 : vector<1024x128xf32>
    %cst_16 = arith.constant 0.000000e+00 : f32
    %26 = vector.broadcast %cst_16 : f32 to vector<1024x128xf32>
    %27 = arith.cmpf oge, %25, %26 : vector<1024x128xf32>
    %cst_17 = arith.constant 2.000000e-01 : f32
    %28 = vector.broadcast %cst_17 : f32 to vector<1024x128xf32>
    %29 = arith.mulf %28, %25 : vector<1024x128xf32>
    %30 = arith.select %27, %25, %29 : vector<1024x128xi1>, vector<1024x128xf32>
    %31 = arith.truncf %30 : vector<1024x128xf32> to vector<1024x128xbf16>
    %c0_18 = arith.constant 0 : index
    %c0_19 = arith.constant 0 : index
    %32 = vector.load %arg5[%c0_18, %c0_19] : memref<1024x128xbf16, #tpu.memory_space<vmem>>, vector<1024x128xbf16>
    tpu.vector_store %arg5[%c0_18, %c0_19], %31 {strides = array<i32>} : memref<1024x128xbf16, #tpu.memory_space<vmem>>, vector<1024x128xbf16>,
    return
  }
  func.func @transform_0(%arg0: i32) -> (i32, i32) {
    %c0_i32 = arith.constant 0 : i32
    %c0_i32_0 = arith.constant 0 : i32
    %c0_i32_1 = arith.constant 0 : i32
    return %c0_i32, %c0_i32_0 : i32, i32
  }
  func.func @transform_1(%arg0: i32) -> (i32, i32) {
    %c0_i32 = arith.constant 0 : i32
    %c0_i32_0 = arith.constant 0 : i32
    %c0_i32_1 = arith.constant 0 : i32
    return %c0_i32, %c0_i32_0 : i32, i32
  }
  func.func @transform_2(%arg0: i32) -> (i32, i32) {
    %c0_i32 = arith.constant 0 : i32
    %c0_i32_0 = arith.constant 0 : i32
    %c0_i32_1 = arith.constant 0 : i32
    return %c0_i32, %c0_i32_0 : i32, i32
  }
  func.func @transform_3(%arg0: i32) -> (i32, i32) {
    %c0_i32 = arith.constant 0 : i32
    %c0_i32_0 = arith.constant 0 : i32
    %c0_i32_1 = arith.constant 0 : i32
    return %c0_i32, %c0_i32_0 : i32, i32
  }
  func.func @transform_4(%arg0: i32) -> (i32, i32) {
    %c0_i32 = arith.constant 0 : i32
    %c0_i32_0 = arith.constant 0 : i32
    %c0_i32_1 = arith.constant 0 : i32
    return %c0_i32, %c0_i32_0 : i32, i32
  }
}

module attributes {stable_mosaic.version = 11 : i64} {
  func.func @_conv_bn_lrelu_kernel(%arg0: i32, %arg1: memref<256x512xbf16, #tpu.memory_space<vmem>>, %arg2: memref<512x128xbf16, #tpu.memory_space<vmem>>, %arg3: memref<1x128xf32, #tpu.memory_space<vmem>>, %arg4: memref<1x128xf32, #tpu.memory_space<vmem>>, %arg5: memref<256x128xbf16, #tpu.memory_space<vmem>>, %arg6: memref<256x128xf32, #tpu.memory_space<vmem>>) attributes {dimension_semantics = [#tpu.dimension_semantics<arbitrary>], iteration_bounds = array<i64: 1>, scalar_prefetch = 0 : i64, scratch_operands = 1 : i64, tpu.core_type = #tpu.core_type<tc>, window_params = [{pipeline_mode = #tpu.pipeline_mode<synchronous>, transform_indices = @transform_0, window_bounds = array<i64: 256, 512>}, {pipeline_mode = #tpu.pipeline_mode<synchronous>, transform_indices = @transform_1, window_bounds = array<i64: 512, 128>}, {pipeline_mode = #tpu.pipeline_mode<synchronous>, transform_indices = @transform_2, window_bounds = array<i64: 1, 128>}, {pipeline_mode = #tpu.pipeline_mode<synchronous>, transform_indices = @transform_3, window_bounds = array<i64: 1, 128>}, {pipeline_mode = #tpu.pipeline_mode<synchronous>, transform_indices = @transform_4, window_bounds = array<i64: 256, 128>}]} {
    %c0 = arith.constant 0 : index
    %c0_0 = arith.constant 0 : index
    %0 = vector.load %arg1[%c0, %c0_0] : memref<256x512xbf16, #tpu.memory_space<vmem>>, vector<256x512xbf16>
    %c0_1 = arith.constant 0 : index
    %c0_2 = arith.constant 0 : index
    %1 = vector.load %arg2[%c0_1, %c0_2] : memref<512x128xbf16, #tpu.memory_space<vmem>>, vector<512x128xbf16>
    %cst = arith.constant dense<0.000000e+00> : vector<256x128xf32>
    %2 = tpu.matmul %0, %1, %cst {dimension_numbers = #tpu.dot_dimension_numbers<[1], [0], [0], [1], [0, 0, 1, 1], [], []>} : vector<256x512xbf16>, vector<512x128xbf16>, vector<256x128xf32> -> vector<256x128xf32>
    %c0_3 = arith.constant 0 : index
    %c0_4 = arith.constant 0 : index
    %3 = vector.load %arg6[%c0_3, %c0_4] : memref<256x128xf32, #tpu.memory_space<vmem>>, vector<256x128xf32>
    tpu.vector_store %arg6[%c0_3, %c0_4], %2 {strides = array<i32>} : memref<256x128xf32, #tpu.memory_space<vmem>>, vector<256x128xf32>,
    %c0_5 = arith.constant 0 : index
    %c0_6 = arith.constant 0 : index
    %4 = vector.load %arg6[%c0_5, %c0_6] : memref<256x128xf32, #tpu.memory_space<vmem>>, vector<256x128xf32>
    %cst_7 = arith.constant dense<0.000000e+00> : vector<128xf32>
    %5 = vector.multi_reduction <add>, %4, %cst_7 [0] : vector<256x128xf32> to vector<128xf32>
    %6 = vector.shape_cast %5 : vector<128xf32> to vector<1x128xf32>
    %cst_8 = arith.constant 3.906250e-03 : f32
    %7 = vector.broadcast %cst_8 : f32 to vector<1x128xf32>
    %8 = arith.mulf %6, %7 : vector<1x128xf32>
    %9 = vector.broadcast %8 : vector<1x128xf32> to vector<256x128xf32>
    %10 = arith.subf %4, %9 : vector<256x128xf32>
    %11 = arith.mulf %10, %10 : vector<256x128xf32>
    %cst_9 = arith.constant dense<0.000000e+00> : vector<128xf32>
    %12 = vector.multi_reduction <add>, %11, %cst_9 [0] : vector<256x128xf32> to vector<128xf32>
    %13 = vector.shape_cast %12 : vector<128xf32> to vector<1x128xf32>
    %cst_10 = arith.constant 3.906250e-03 : f32
    %14 = vector.broadcast %cst_10 : f32 to vector<1x128xf32>
    %15 = arith.mulf %13, %14 : vector<1x128xf32>
    %c0_11 = arith.constant 0 : index
    %c0_12 = arith.constant 0 : index
    %16 = vector.load %arg3[%c0_11, %c0_12] : memref<1x128xf32, #tpu.memory_space<vmem>>, vector<1x128xf32>
    %cst_13 = arith.constant 9.99999974E-6 : f32
    %17 = vector.broadcast %cst_13 : f32 to vector<1x128xf32>
    %18 = arith.addf %15, %17 : vector<1x128xf32>
    %19 = math.rsqrt %18 : vector<1x128xf32>
    %20 = arith.mulf %16, %19 : vector<1x128xf32>
    %21 = vector.broadcast %20 : vector<1x128xf32> to vector<256x128xf32>
    %22 = arith.mulf %10, %21 : vector<256x128xf32>
    %c0_14 = arith.constant 0 : index
    %c0_15 = arith.constant 0 : index
    %23 = vector.load %arg4[%c0_14, %c0_15] : memref<1x128xf32, #tpu.memory_space<vmem>>, vector<1x128xf32>
    %24 = vector.broadcast %23 : vector<1x128xf32> to vector<256x128xf32>
    %25 = arith.addf %22, %24 : vector<256x128xf32>
    %cst_16 = arith.constant 0.000000e+00 : f32
    %26 = vector.broadcast %cst_16 : f32 to vector<256x128xf32>
    %27 = arith.cmpf oge, %25, %26 : vector<256x128xf32>
    %cst_17 = arith.constant 2.000000e-01 : f32
    %28 = vector.broadcast %cst_17 : f32 to vector<256x128xf32>
    %29 = arith.mulf %28, %25 : vector<256x128xf32>
    %30 = arith.select %27, %25, %29 : vector<256x128xi1>, vector<256x128xf32>
    %31 = arith.truncf %30 : vector<256x128xf32> to vector<256x128xbf16>
    %c0_18 = arith.constant 0 : index
    %c0_19 = arith.constant 0 : index
    %32 = vector.load %arg5[%c0_18, %c0_19] : memref<256x128xbf16, #tpu.memory_space<vmem>>, vector<256x128xbf16>
    tpu.vector_store %arg5[%c0_18, %c0_19], %31 {strides = array<i32>} : memref<256x128xbf16, #tpu.memory_space<vmem>>, vector<256x128xbf16>,
    return
  }
  func.func @transform_0(%arg0: i32) -> (i32, i32) {
    %c0_i32 = arith.constant 0 : i32
    %c0_i32_0 = arith.constant 0 : i32
    %c0_i32_1 = arith.constant 0 : i32
    return %c0_i32, %c0_i32_0 : i32, i32
  }
  func.func @transform_1(%arg0: i32) -> (i32, i32) {
    %c0_i32 = arith.constant 0 : i32
    %c0_i32_0 = arith.constant 0 : i32
    %c0_i32_1 = arith.constant 0 : i32
    return %c0_i32, %c0_i32_0 : i32, i32
  }
  func.func @transform_2(%arg0: i32) -> (i32, i32) {
    %c0_i32 = arith.constant 0 : i32
    %c0_i32_0 = arith.constant 0 : i32
    %c0_i32_1 = arith.constant 0 : i32
    return %c0_i32, %c0_i32_0 : i32, i32
  }
  func.func @transform_3(%arg0: i32) -> (i32, i32) {
    %c0_i32 = arith.constant 0 : i32
    %c0_i32_0 = arith.constant 0 : i32
    %c0_i32_1 = arith.constant 0 : i32
    return %c0_i32, %c0_i32_0 : i32, i32
  }
  func.func @transform_4(%arg0: i32) -> (i32, i32) {
    %c0_i32 = arith.constant 0 : i32
    %c0_i32_0 = arith.constant 0 : i32
    %c0_i32_1 = arith.constant 0 : i32
    return %c0_i32, %c0_i32_0 : i32, i32
  }
}

module attributes {stable_mosaic.version = 11 : i64} {
  func.func @_conv_bn_lrelu_kernel(%arg0: i32, %arg1: memref<64x1024xbf16, #tpu.memory_space<vmem>>, %arg2: memref<1024x128xbf16, #tpu.memory_space<vmem>>, %arg3: memref<1x128xf32, #tpu.memory_space<vmem>>, %arg4: memref<1x128xf32, #tpu.memory_space<vmem>>, %arg5: memref<64x128xf32, #tpu.memory_space<vmem>>, %arg6: memref<64x128xf32, #tpu.memory_space<vmem>>) attributes {dimension_semantics = [#tpu.dimension_semantics<arbitrary>], iteration_bounds = array<i64: 1>, scalar_prefetch = 0 : i64, scratch_operands = 1 : i64, tpu.core_type = #tpu.core_type<tc>, window_params = [{pipeline_mode = #tpu.pipeline_mode<synchronous>, transform_indices = @transform_0, window_bounds = array<i64: 64, 1024>}, {pipeline_mode = #tpu.pipeline_mode<synchronous>, transform_indices = @transform_1, window_bounds = array<i64: 1024, 128>}, {pipeline_mode = #tpu.pipeline_mode<synchronous>, transform_indices = @transform_2, window_bounds = array<i64: 1, 128>}, {pipeline_mode = #tpu.pipeline_mode<synchronous>, transform_indices = @transform_3, window_bounds = array<i64: 1, 128>}, {pipeline_mode = #tpu.pipeline_mode<synchronous>, transform_indices = @transform_4, window_bounds = array<i64: 64, 128>}]} {
    %c0 = arith.constant 0 : index
    %c0_0 = arith.constant 0 : index
    %0 = vector.load %arg1[%c0, %c0_0] : memref<64x1024xbf16, #tpu.memory_space<vmem>>, vector<64x1024xbf16>
    %c0_1 = arith.constant 0 : index
    %c0_2 = arith.constant 0 : index
    %1 = vector.load %arg2[%c0_1, %c0_2] : memref<1024x128xbf16, #tpu.memory_space<vmem>>, vector<1024x128xbf16>
    %cst = arith.constant dense<0.000000e+00> : vector<64x128xf32>
    %2 = tpu.matmul %0, %1, %cst {dimension_numbers = #tpu.dot_dimension_numbers<[1], [0], [0], [1], [0, 0, 1, 1], [], []>} : vector<64x1024xbf16>, vector<1024x128xbf16>, vector<64x128xf32> -> vector<64x128xf32>
    %c0_3 = arith.constant 0 : index
    %c0_4 = arith.constant 0 : index
    %3 = vector.load %arg6[%c0_3, %c0_4] : memref<64x128xf32, #tpu.memory_space<vmem>>, vector<64x128xf32>
    tpu.vector_store %arg6[%c0_3, %c0_4], %2 {strides = array<i32>} : memref<64x128xf32, #tpu.memory_space<vmem>>, vector<64x128xf32>,
    %c0_5 = arith.constant 0 : index
    %c0_6 = arith.constant 0 : index
    %4 = vector.load %arg6[%c0_5, %c0_6] : memref<64x128xf32, #tpu.memory_space<vmem>>, vector<64x128xf32>
    %cst_7 = arith.constant dense<0.000000e+00> : vector<128xf32>
    %5 = vector.multi_reduction <add>, %4, %cst_7 [0] : vector<64x128xf32> to vector<128xf32>
    %6 = vector.shape_cast %5 : vector<128xf32> to vector<1x128xf32>
    %cst_8 = arith.constant 1.562500e-02 : f32
    %7 = vector.broadcast %cst_8 : f32 to vector<1x128xf32>
    %8 = arith.mulf %6, %7 : vector<1x128xf32>
    %9 = vector.broadcast %8 : vector<1x128xf32> to vector<64x128xf32>
    %10 = arith.subf %4, %9 : vector<64x128xf32>
    %11 = arith.mulf %10, %10 : vector<64x128xf32>
    %cst_9 = arith.constant dense<0.000000e+00> : vector<128xf32>
    %12 = vector.multi_reduction <add>, %11, %cst_9 [0] : vector<64x128xf32> to vector<128xf32>
    %13 = vector.shape_cast %12 : vector<128xf32> to vector<1x128xf32>
    %cst_10 = arith.constant 1.562500e-02 : f32
    %14 = vector.broadcast %cst_10 : f32 to vector<1x128xf32>
    %15 = arith.mulf %13, %14 : vector<1x128xf32>
    %c0_11 = arith.constant 0 : index
    %c0_12 = arith.constant 0 : index
    %16 = vector.load %arg3[%c0_11, %c0_12] : memref<1x128xf32, #tpu.memory_space<vmem>>, vector<1x128xf32>
    %cst_13 = arith.constant 9.99999974E-6 : f32
    %17 = vector.broadcast %cst_13 : f32 to vector<1x128xf32>
    %18 = arith.addf %15, %17 : vector<1x128xf32>
    %19 = math.rsqrt %18 : vector<1x128xf32>
    %20 = arith.mulf %16, %19 : vector<1x128xf32>
    %21 = vector.broadcast %20 : vector<1x128xf32> to vector<64x128xf32>
    %22 = arith.mulf %10, %21 : vector<64x128xf32>
    %c0_14 = arith.constant 0 : index
    %c0_15 = arith.constant 0 : index
    %23 = vector.load %arg4[%c0_14, %c0_15] : memref<1x128xf32, #tpu.memory_space<vmem>>, vector<1x128xf32>
    %24 = vector.broadcast %23 : vector<1x128xf32> to vector<64x128xf32>
    %25 = arith.addf %22, %24 : vector<64x128xf32>
    %cst_16 = arith.constant 0.000000e+00 : f32
    %26 = vector.broadcast %cst_16 : f32 to vector<64x128xf32>
    %27 = arith.cmpf oge, %25, %26 : vector<64x128xf32>
    %cst_17 = arith.constant 2.000000e-01 : f32
    %28 = vector.broadcast %cst_17 : f32 to vector<64x128xf32>
    %29 = arith.mulf %28, %25 : vector<64x128xf32>
    %30 = arith.select %27, %25, %29 : vector<64x128xi1>, vector<64x128xf32>
    %c0_18 = arith.constant 0 : index
    %c0_19 = arith.constant 0 : index
    %31 = vector.load %arg5[%c0_18, %c0_19] : memref<64x128xf32, #tpu.memory_space<vmem>>, vector<64x128xf32>
    tpu.vector_store %arg5[%c0_18, %c0_19], %30 {strides = array<i32>} : memref<64x128xf32, #tpu.memory_space<vmem>>, vector<64x128xf32>,
    return
  }
  func.func @transform_0(%arg0: i32) -> (i32, i32) {
    %c0_i32 = arith.constant 0 : i32
    %c0_i32_0 = arith.constant 0 : i32
    %c0_i32_1 = arith.constant 0 : i32
    return %c0_i32, %c0_i32_0 : i32, i32
  }
  func.func @transform_1(%arg0: i32) -> (i32, i32) {
    %c0_i32 = arith.constant 0 : i32
    %c0_i32_0 = arith.constant 0 : i32
    %c0_i32_1 = arith.constant 0 : i32
    return %c0_i32, %c0_i32_0 : i32, i32
  }
  func.func @transform_2(%arg0: i32) -> (i32, i32) {
    %c0_i32 = arith.constant 0 : i32
    %c0_i32_0 = arith.constant 0 : i32
    %c0_i32_1 = arith.constant 0 : i32
    return %c0_i32, %c0_i32_0 : i32, i32
  }
  func.func @transform_3(%arg0: i32) -> (i32, i32) {
    %c0_i32 = arith.constant 0 : i32
    %c0_i32_0 = arith.constant 0 : i32
    %c0_i32_1 = arith.constant 0 : i32
    return %c0_i32, %c0_i32_0 : i32, i32
  }
  func.func @transform_4(%arg0: i32) -> (i32, i32) {
    %c0_i32 = arith.constant 0 : i32
    %c0_i32_0 = arith.constant 0 : i32
    %c0_i32_1 = arith.constant 0 : i32
    return %c0_i32, %c0_i32_0 : i32, i32
  }
}

</mosaic_0001>

<llo_original>
// kernel: discriminator_f.4
$region0: #{discriminator_f.4}
  #allocation0 [shape = 'u32[]', space=smem, size = 0x4, offset = 0x4, fixed_abs, tag = 'smem constant byte address 0x4 - core index']
  #allocation1 [shape = 'u32[144,128]{1,0:T(1,128)}', space=vmem, size = 0x12000, scoped, tag = 'internal scratch']
  %s0 = inlined_call_operand.vmem [shape: bf16[4096,16], index: 0, kind: input, shape index: {}]
  %s1 = inlined_call_operand.hbm [shape: bf16[16,128], index: 1, kind: input, shape index: {}]
  %s2 = inlined_call_operand.vmem [shape: bf16[4096,128], index: 2, kind: output, shape index: {}]
  %s3 = sld [smem:[#allocation0]]
  $region45: #{discriminator_f.4} parent=0
    _
  %s5 = ssub.s32 1, %s3
  %s6 = scalar_select 0, %s5, %s3
  $region1: #{discriminator_f.4} parent=0
    #allocation2 [shape = 'u8[4096]{0}', space=vmem, size = 0x1000, scoped, tag = 'input window, operand 1, single buffered']
    #allocation3 [shape = 's32[2]{0}', space=sflag, size = 0x8, scoped, tag = 'scoped memory for discriminator_f.4']
    %7 = vsyncpa [#allocation3], 0
    loop: start=0, step=1, limit=4
    $region2: #{discriminator_f.4} parent=1 // loop_pre_header
      _
    $region3: #{discriminator_f.4} parent=1 // loop_header
      %s9 = sphi 0, %s13
      %p10 = scmp.ge.s32.totalorder %s9, 4
      %s19 = sphi 0, %s21
      %s22 = sphi 0, %s19
      %s23 = sphi 0, %s22
      %s39 = sphi 0, %s23
      %s43 = sphi 0, %s43
      %s45 = sphi 0, %s43
      %s46 = sphi 0, %s45
      %s60 = sphi 0, %s46
      %s66 = sphi 0, %s68
      %s69 = sphi 0, %s66
      %s70 = sphi 0, %s69
      %s86 = sphi 0, %s70
    $region4: #{discriminator_f.4} parent=1 // loop_header_branch
      %12 = sbr.rel (%p10) target = $region8
    $region5: #{discriminator_f.4} parent=1 // loop_body
      %s14 = ssub.s32 %s9, 1
      %s15 = ssub.s32 %s9, 2
      %s16 = sadd.s32 %s9, 1
      %s17 = ssub.s32 %s9, %s16
      %p18 = scmp.eq.s32.totalorder %s17, 0
      %s20 = sadd.s32 %s19, 1
      %s21 = scalar_select %p18, %s19, %s20
      %p24 = pneg %p18
      %p25 = scmp.eq.s32.totalorder %s9, 1
      %p26 = por %p24, %p25
      %p27 = scmp.ne.s32.totalorder %s19, %s22
      %p28 = scmp.eq.s32.totalorder %s9, 0
      %p29 = por %p27, %p28
      %p30 = scmp.ne.s32.totalorder %s19, %s22
      %p31 = scmp.eq.s32.totalorder %s14, 1
      %p32 = por %p30, %p31
      %p33 = scmp.ne.s32.totalorder %s22, %s23
      %p34 = scmp.eq.s32.totalorder %s14, 0
      %p35 = por %p33, %p34
      %p36 = scmp.ne.s32.totalorder %s22, %s23
      %p37 = scmp.eq.s32.totalorder %s15, 1
      %p38 = por %p36, %p37
      %p40 = scmp.ne.s32.totalorder %s23, %s39
      %p41 = scmp.eq.s32.totalorder %s15, 0
      %p42 = por %p40, %p41
      %s44 = sadd.s32 %s43, 1
      %p47 = scmp.eq.s32.totalorder %s9, 1
      %p48 = scmp.ne.s32.totalorder %s43, %s45
      %p49 = scmp.eq.s32.totalorder %s9, 0
      %p50 = por %p48, %p49
      %p51 = scmp.ne.s32.totalorder %s43, %s45
      %p52 = scmp.eq.s32.totalorder %s14, 1
      %p53 = por %p51, %p52
      %p54 = scmp.ne.s32.totalorder %s45, %s46
      %p55 = scmp.eq.s32.totalorder %s14, 0
      %p56 = por %p54, %p55
      %p57 = scmp.ne.s32.totalorder %s45, %s46
      %p58 = scmp.eq.s32.totalorder %s15, 1
      %p59 = por %p57, %p58
      %p61 = scmp.ne.s32.totalorder %s46, %s60
      %p62 = scmp.eq.s32.totalorder %s15, 0
      %p63 = por %p61, %p62
      %s64 = ssub.s32 %s9, %s16
      %p65 = scmp.eq.s32.totalorder %s64, 0
      %s67 = sadd.s32 %s66, 1
      %s68 = scalar_select %p65, %s66, %s67
      %p71 = pneg %p65
      %p72 = scmp.eq.s32.totalorder %s9, 1
      %p73 = por %p71, %p72
      %p74 = scmp.ne.s32.totalorder %s66, %s69
      %p75 = scmp.eq.s32.totalorder %s9, 0
      %p76 = por %p74, %p75
      %p77 = scmp.ne.s32.totalorder %s66, %s69
      %p78 = scmp.eq.s32.totalorder %s14, 1
      %p79 = por %p77, %p78
      %p80 = scmp.ne.s32.totalorder %s69, %s70
      %p81 = scmp.eq.s32.totalorder %s14, 0
      %p82 = por %p80, %p81
      %p83 = scmp.ne.s32.totalorder %s69, %s70
      %p84 = scmp.eq.s32.totalorder %s15, 1
      %p85 = por %p83, %p84
      %p87 = scmp.ne.s32.totalorder %s70, %s86
      %p88 = scmp.eq.s32.totalorder %s15, 0
      %p89 = por %p87, %p88
      %p90 = scmp.le.s32.totalorder 1, %s9
      %p91 = scmp.lt.s32.totalorder %s9, 3
      %p92 = pnand %p90, %p91
      %p93 = pneg %p92
      // Predicated region
      $region9: #{discriminator_f.4} parent=5 // pred_check
        _
      $region10: #{discriminator_f.4} parent=5 // pred_check_branch
        %95 = sbr.rel (%p92) target = $region12
      $region11: #{discriminator_f.4} parent=5 // pred_region
        %s96 = ssub.s32 %s9, 1
        // Predicated region
        $region13: #{discriminator_f.4} parent=11 // pred_check
          %p97 = pneg %p56
        $region14: #{discriminator_f.4} parent=11 // pred_check_branch
          %99 = sbr.rel (%p97) target = $region16
        $region15: #{discriminator_f.4} parent=11 // pred_region
          %s101 = ssub.s32 128, 128
          %102 = vsyncadd [#allocation3], %s101
          %s103 = sshll.u32 [#allocation2], 4
          %s104 = int_to_ptr.vmem [resolvable:$true] %s103
          %109 = dma.hbm_to_vmem [thread:$0]  %s1, 128, %s104, [#allocation3], 64, 64, 4
        $region16: #{discriminator_f.4} parent=11 // pred_fallthru
          _
      $region12: #{discriminator_f.4} parent=5 // pred_fallthru
        _
      %p110 = scmp.lt.s32.totalorder %s9, 2
      // Predicated region
      $region17: #{discriminator_f.4} parent=5 // pred_check
        %p111 = pneg %p110
      $region18: #{discriminator_f.4} parent=5 // pred_check_branch
        %113 = sbr.rel (%p111) target = $region20
      $region19: #{discriminator_f.4} parent=5 // pred_region
        // Predicated region
        $region21: #{discriminator_f.4} parent=19 // pred_check
          %p114 = pneg %p29
        $region22: #{discriminator_f.4} parent=19 // pred_check_branch
          %116 = sbr.rel (%p114) target = $region24
        $region23: #{discriminator_f.4} parent=19 // pred_region
          %s117 = smul.u32 256, %s9
          %p118 = scmp.lt.s32.totalorder %s117, 511
          %s119 = scalar_select %p118, %s117, 511
          %s120 = smul.addr %s119, 4
          %s121 = scalar_lea.vmem %s0, %s120
          %s122 = smul.u32 256, %s9
        $region24: #{discriminator_f.4} parent=19 // pred_fallthru
          _
      $region20: #{discriminator_f.4} parent=5 // pred_fallthru
        _
      %p123 = scmp.le.s32.totalorder 1, %s9
      %p124 = scmp.lt.s32.totalorder %s9, 3
      %p125 = pnand %p123, %p124
      %p126 = pneg %p125
      // Predicated region
      $region25: #{discriminator_f.4} parent=5 // pred_check
        _
      $region26: #{discriminator_f.4} parent=5 // pred_check_branch
        %128 = sbr.rel (%p125) target = $region28
      $region27: #{discriminator_f.4} parent=5 // pred_region
        %s129 = ssub.s32 %s9, 1
        // Predicated region
        $region29: #{discriminator_f.4} parent=27 // pred_check
          %p130 = pneg %p56
        $region30: #{discriminator_f.4} parent=27 // pred_check_branch
          %132 = sbr.rel (%p130) target = $region32
        $region31: #{discriminator_f.4} parent=27 // pred_region
          %133 = dma.done [#allocation3], 128
        $region32: #{discriminator_f.4} parent=27 // pred_fallthru
          _
        %s134 = smul.u32 256, %s14
        %p135 = scmp.lt.s32.totalorder %s134, 511
        %s136 = scalar_select %p135, %s134, 511
        %s137 = smul.addr %s136, 4
        %s138 = scalar_lea.vmem %s0, %s137
        %p139 = pneg %p35
        %p140 = pneg %p32
        %p141 = pneg %p56
        %p142 = pneg %p53
        %p143 = pneg %p82
        %p144 = pneg %p79
        %s145 = smul.u32 256, %s14
        %p146 = scmp.lt.s32.totalorder %s145, 511
        %s147 = scalar_select %p146, %s145, 511
        %s148 = smul.addr %s147, 4
        %s149 = scalar_lea.vmem %s2, %s148
        %s150 = smul.u32 256, %s14
        %p151 = scmp.lt.s32.totalorder %s150, 511
        %s152 = scalar_select %p151, %s150, 511
        %s153 = smul.addr %s152, 4
        %s154 = scalar_lea.vmem %s0, %s153
        %s155 = smul.u32 256, %s14
        %s156 = smul.u32 256, %s14
        %p157 = scmp.lt.s32.totalorder %s156, 511
        %s158 = scalar_select %p157, %s156, 511
        %s159 = smul.addr %s158, 4
        %s160 = scalar_lea.vmem %s2, %s159
        %s161 = smul.u32 256, %s14
        %v163 = vld [vmem:[%s154] sm:$0xf]
        %v164 = vld [vmem:[%s154 + $0x4] sm:$0xf]
        %v165 = vld [vmem:[%s154 + $0x8] sm:$0xf]
        %v166 = vld [vmem:[%s154 + $0xc] sm:$0xf]
        %v167 = vld [vmem:[%s154 + $0x10] sm:$0xf]
        %v168 = vld [vmem:[%s154 + $0x14] sm:$0xf]
        %v169 = vld [vmem:[%s154 + $0x18] sm:$0xf]
        %v170 = vld [vmem:[%s154 + $0x1c] sm:$0xf]
        %v171 = vld [vmem:[%s154 + $0x20] sm:$0xf]
        %v172 = vld [vmem:[%s154 + $0x24] sm:$0xf]
        %v173 = vld [vmem:[%s154 + $0x28] sm:$0xf]
        %v174 = vld [vmem:[%s154 + $0x2c] sm:$0xf]
        %v175 = vld [vmem:[%s154 + $0x30] sm:$0xf]
        %v176 = vld [vmem:[%s154 + $0x34] sm:$0xf]
        %v177 = vld [vmem:[%s154 + $0x38] sm:$0xf]
        %v178 = vld [vmem:[%s154 + $0x3c] sm:$0xf]
        %v179 = vld [vmem:[%s154 + $0x40] sm:$0xf]
        %v180 = vld [vmem:[%s154 + $0x44] sm:$0xf]
        %v181 = vld [vmem:[%s154 + $0x48] sm:$0xf]
        %v182 = vld [vmem:[%s154 + $0x4c] sm:$0xf]
        %v183 = vld [vmem:[%s154 + $0x50] sm:$0xf]
        %v184 = vld [vmem:[%s154 + $0x54] sm:$0xf]
        %v185 = vld [vmem:[%s154 + $0x58] sm:$0xf]
        %v186 = vld [vmem:[%s154 + $0x5c] sm:$0xf]
        %v187 = vld [vmem:[%s154 + $0x60] sm:$0xf]
        %v188 = vld [vmem:[%s154 + $0x64] sm:$0xf]
        %v189 = vld [vmem:[%s154 + $0x68] sm:$0xf]
        %v190 = vld [vmem:[%s154 + $0x6c] sm:$0xf]
        %v191 = vld [vmem:[%s154 + $0x70] sm:$0xf]
        %v192 = vld [vmem:[%s154 + $0x74] sm:$0xf]
        %v193 = vld [vmem:[%s154 + $0x78] sm:$0xf]
        %v194 = vld [vmem:[%s154 + $0x7c] sm:$0xf]
        %v195 = vld [vmem:[%s154 + $0x80] sm:$0xf]
        %v196 = vld [vmem:[%s154 + $0x84] sm:$0xf]
        %v197 = vld [vmem:[%s154 + $0x88] sm:$0xf]
        %v198 = vld [vmem:[%s154 + $0x8c] sm:$0xf]
        %v199 = vld [vmem:[%s154 + $0x90] sm:$0xf]
        %v200 = vld [vmem:[%s154 + $0x94] sm:$0xf]
        %v201 = vld [vmem:[%s154 + $0x98] sm:$0xf]
        %v202 = vld [vmem:[%s154 + $0x9c] sm:$0xf]
        %v203 = vld [vmem:[%s154 + $0xa0] sm:$0xf]
        %v204 = vld [vmem:[%s154 + $0xa4] sm:$0xf]
        %v205 = vld [vmem:[%s154 + $0xa8] sm:$0xf]
        %v206 = vld [vmem:[%s154 + $0xac] sm:$0xf]
        %v207 = vld [vmem:[%s154 + $0xb0] sm:$0xf]
        %v208 = vld [vmem:[%s154 + $0xb4] sm:$0xf]
        %v209 = vld [vmem:[%s154 + $0xb8] sm:$0xf]
        %v210 = vld [vmem:[%s154 + $0xbc] sm:$0xf]
        %v211 = vld [vmem:[%s154 + $0xc0] sm:$0xf]
        %v212 = vld [vmem:[%s154 + $0xc4] sm:$0xf]
        %v213 = vld [vmem:[%s154 + $0xc8] sm:$0xf]
        %v214 = vld [vmem:[%s154 + $0xcc] sm:$0xf]
        %v215 = vld [vmem:[%s154 + $0xd0] sm:$0xf]
        %v216 = vld [vmem:[%s154 + $0xd4] sm:$0xf]
        %v217 = vld [vmem:[%s154 + $0xd8] sm:$0xf]
        %v218 = vld [vmem:[%s154 + $0xdc] sm:$0xf]
        %v219 = vld [vmem:[%s154 + $0xe0] sm:$0xf]
        %v220 = vld [vmem:[%s154 + $0xe4] sm:$0xf]
        %v221 = vld [vmem:[%s154 + $0xe8] sm:$0xf]
        %v222 = vld [vmem:[%s154 + $0xec] sm:$0xf]
        %v223 = vld [vmem:[%s154 + $0xf0] sm:$0xf]
        %v224 = vld [vmem:[%s154 + $0xf4] sm:$0xf]
        %v225 = vld [vmem:[%s154 + $0xf8] sm:$0xf]
        %v226 = vld [vmem:[%s154 + $0xfc] sm:$0xf]
        %v227 = vld [vmem:[%s154 + $0x100] sm:$0xf]
        %v228 = vld [vmem:[%s154 + $0x104] sm:$0xf]
        %v229 = vld [vmem:[%s154 + $0x108] sm:$0xf]
        %v230 = vld [vmem:[%s154 + $0x10c] sm:$0xf]
        %v231 = vld [vmem:[%s154 + $0x110] sm:$0xf]
        %v232 = vld [vmem:[%s154 + $0x114] sm:$0xf]
        %v233 = vld [vmem:[%s154 + $0x118] sm:$0xf]
        %v234 = vld [vmem:[%s154 + $0x11c] sm:$0xf]
        %v235 = vld [vmem:[%s154 + $0x120] sm:$0xf]
        %v236 = vld [vmem:[%s154 + $0x124] sm:$0xf]
        %v237 = vld [vmem:[%s154 + $0x128] sm:$0xf]
        %v238 = vld [vmem:[%s154 + $0x12c] sm:$0xf]
        %v239 = vld [vmem:[%s154 + $0x130] sm:$0xf]
        %v240 = vld [vmem:[%s154 + $0x134] sm:$0xf]
        %v241 = vld [vmem:[%s154 + $0x138] sm:$0xf]
        %v242 = vld [vmem:[%s154 + $0x13c] sm:$0xf]
        %v243 = vld [vmem:[%s154 + $0x140] sm:$0xf]
        %v244 = vld [vmem:[%s154 + $0x144] sm:$0xf]
        %v245 = vld [vmem:[%s154 + $0x148] sm:$0xf]
        %v246 = vld [vmem:[%s154 + $0x14c] sm:$0xf]
        %v247 = vld [vmem:[%s154 + $0x150] sm:$0xf]
        %v248 = vld [vmem:[%s154 + $0x154] sm:$0xf]
        %v249 = vld [vmem:[%s154 + $0x158] sm:$0xf]
        %v250 = vld [vmem:[%s154 + $0x15c] sm:$0xf]
        %v251 = vld [vmem:[%s154 + $0x160] sm:$0xf]
        %v252 = vld [vmem:[%s154 + $0x164] sm:$0xf]
        %v253 = vld [vmem:[%s154 + $0x168] sm:$0xf]
        %v254 = vld [vmem:[%s154 + $0x16c] sm:$0xf]
        %v255 = vld [vmem:[%s154 + $0x170] sm:$0xf]
        %v256 = vld [vmem:[%s154 + $0x174] sm:$0xf]
        %v257 = vld [vmem:[%s154 + $0x178] sm:$0xf]
        %v258 = vld [vmem:[%s154 + $0x17c] sm:$0xf]
        %v259 = vld [vmem:[%s154 + $0x180] sm:$0xf]
        %v260 = vld [vmem:[%s154 + $0x184] sm:$0xf]
        %v261 = vld [vmem:[%s154 + $0x188] sm:$0xf]
        %v262 = vld [vmem:[%s154 + $0x18c] sm:$0xf]
        %v263 = vld [vmem:[%s154 + $0x190] sm:$0xf]
        %v264 = vld [vmem:[%s154 + $0x194] sm:$0xf]
        %v265 = vld [vmem:[%s154 + $0x198] sm:$0xf]
        %v266 = vld [vmem:[%s154 + $0x19c] sm:$0xf]
        %v267 = vld [vmem:[%s154 + $0x1a0] sm:$0xf]
        %v268 = vld [vmem:[%s154 + $0x1a4] sm:$0xf]
        %v269 = vld [vmem:[%s154 + $0x1a8] sm:$0xf]
        %v270 = vld [vmem:[%s154 + $0x1ac] sm:$0xf]
        %v271 = vld [vmem:[%s154 + $0x1b0] sm:$0xf]
        %v272 = vld [vmem:[%s154 + $0x1b4] sm:$0xf]
        %v273 = vld [vmem:[%s154 + $0x1b8] sm:$0xf]
        %v274 = vld [vmem:[%s154 + $0x1bc] sm:$0xf]
        %v275 = vld [vmem:[%s154 + $0x1c0] sm:$0xf]
        %v276 = vld [vmem:[%s154 + $0x1c4] sm:$0xf]
        %v277 = vld [vmem:[%s154 + $0x1c8] sm:$0xf]
        %v278 = vld [vmem:[%s154 + $0x1cc] sm:$0xf]
        %v279 = vld [vmem:[%s154 + $0x1d0] sm:$0xf]
        %v280 = vld [vmem:[%s154 + $0x1d4] sm:$0xf]
        %v281 = vld [vmem:[%s154 + $0x1d8] sm:$0xf]
        %v282 = vld [vmem:[%s154 + $0x1dc] sm:$0xf]
        %v283 = vld [vmem:[%s154 + $0x1e0] sm:$0xf]
        %v284 = vld [vmem:[%s154 + $0x1e4] sm:$0xf]
        %v285 = vld [vmem:[%s154 + $0x1e8] sm:$0xf]
        %v286 = vld [vmem:[%s154 + $0x1ec] sm:$0xf]
        %v287 = vld [vmem:[%s154 + $0x1f0] sm:$0xf]
        %v288 = vld [vmem:[%s154 + $0x1f4] sm:$0xf]
        %v289 = vld [vmem:[%s154 + $0x1f8] sm:$0xf]
        %v290 = vld [vmem:[%s154 + $0x1fc] sm:$0xf]
        %v291 = vld [vmem:[%s154 + $0x200] sm:$0xf]
        %v292 = vld [vmem:[%s154 + $0x204] sm:$0xf]
        %v293 = vld [vmem:[%s154 + $0x208] sm:$0xf]
        %v294 = vld [vmem:[%s154 + $0x20c] sm:$0xf]
        %v295 = vld [vmem:[%s154 + $0x210] sm:$0xf]
        %v296 = vld [vmem:[%s154 + $0x214] sm:$0xf]
        %v297 = vld [vmem:[%s154 + $0x218] sm:$0xf]
        %v298 = vld [vmem:[%s154 + $0x21c] sm:$0xf]
        %v299 = vld [vmem:[%s154 + $0x220] sm:$0xf]
        %v300 = vld [vmem:[%s154 + $0x224] sm:$0xf]
        %v301 = vld [vmem:[%s154 + $0x228] sm:$0xf]
        %v302 = vld [vmem:[%s154 + $0x22c] sm:$0xf]
        %v303 = vld [vmem:[%s154 + $0x230] sm:$0xf]
        %v304 = vld [vmem:[%s154 + $0x234] sm:$0xf]
        %v305 = vld [vmem:[%s154 + $0x238] sm:$0xf]
        %v306 = vld [vmem:[%s154 + $0x23c] sm:$0xf]
        %v307 = vld [vmem:[%s154 + $0x240] sm:$0xf]
        %v308 = vld [vmem:[%s154 + $0x244] sm:$0xf]
        %v309 = vld [vmem:[%s154 + $0x248] sm:$0xf]
        %v310 = vld [vmem:[%s154 + $0x24c] sm:$0xf]
        %v311 = vld [vmem:[%s154 + $0x250] sm:$0xf]
        %v312 = vld [vmem:[%s154 + $0x254] sm:$0xf]
        %v313 = vld [vmem:[%s154 + $0x258] sm:$0xf]
        %v314 = vld [vmem:[%s154 + $0x25c] sm:$0xf]
        %v315 = vld [vmem:[%s154 + $0x260] sm:$0xf]
        %v316 = vld [vmem:[%s154 + $0x264] sm:$0xf]
        %v317 = vld [vmem:[%s154 + $0x268] sm:$0xf]
        %v318 = vld [vmem:[%s154 + $0x26c] sm:$0xf]
        %v319 = vld [vmem:[%s154 + $0x270] sm:$0xf]
        %v320 = vld [vmem:[%s154 + $0x274] sm:$0xf]
        %v321 = vld [vmem:[%s154 + $0x278] sm:$0xf]
        %v322 = vld [vmem:[%s154 + $0x27c] sm:$0xf]
        %v323 = vld [vmem:[%s154 + $0x280] sm:$0xf]
        %v324 = vld [vmem:[%s154 + $0x284] sm:$0xf]
        %v325 = vld [vmem:[%s154 + $0x288] sm:$0xf]
        %v326 = vld [vmem:[%s154 + $0x28c] sm:$0xf]
        %v327 = vld [vmem:[%s154 + $0x290] sm:$0xf]
        %v328 = vld [vmem:[%s154 + $0x294] sm:$0xf]
        %v329 = vld [vmem:[%s154 + $0x298] sm:$0xf]
        %v330 = vld [vmem:[%s154 + $0x29c] sm:$0xf]
        %v331 = vld [vmem:[%s154 + $0x2a0] sm:$0xf]
        %v332 = vld [vmem:[%s154 + $0x2a4] sm:$0xf]
        %v333 = vld [vmem:[%s154 + $0x2a8] sm:$0xf]
        %v334 = vld [vmem:[%s154 + $0x2ac] sm:$0xf]
        %v335 = vld [vmem:[%s154 + $0x2b0] sm:$0xf]
        %v336 = vld [vmem:[%s154 + $0x2b4] sm:$0xf]
        %v337 = vld [vmem:[%s154 + $0x2b8] sm:$0xf]
        %v338 = vld [vmem:[%s154 + $0x2bc] sm:$0xf]
        %v339 = vld [vmem:[%s154 + $0x2c0] sm:$0xf]
        %v340 = vld [vmem:[%s154 + $0x2c4] sm:$0xf]
        %v341 = vld [vmem:[%s154 + $0x2c8] sm:$0xf]
        %v342 = vld [vmem:[%s154 + $0x2cc] sm:$0xf]
        %v343 = vld [vmem:[%s154 + $0x2d0] sm:$0xf]
        %v344 = vld [vmem:[%s154 + $0x2d4] sm:$0xf]
        %v345 = vld [vmem:[%s154 + $0x2d8] sm:$0xf]
        %v346 = vld [vmem:[%s154 + $0x2dc] sm:$0xf]
        %v347 = vld [vmem:[%s154 + $0x2e0] sm:$0xf]
        %v348 = vld [vmem:[%s154 + $0x2e4] sm:$0xf]
        %v349 = vld [vmem:[%s154 + $0x2e8] sm:$0xf]
        %v350 = vld [vmem:[%s154 + $0x2ec] sm:$0xf]
        %v351 = vld [vmem:[%s154 + $0x2f0] sm:$0xf]
        %v352 = vld [vmem:[%s154 + $0x2f4] sm:$0xf]
        %v353 = vld [vmem:[%s154 + $0x2f8] sm:$0xf]
        %v354 = vld [vmem:[%s154 + $0x2fc] sm:$0xf]
        %v355 = vld [vmem:[%s154 + $0x300] sm:$0xf]
        %v356 = vld [vmem:[%s154 + $0x304] sm:$0xf]
        %v357 = vld [vmem:[%s154 + $0x308] sm:$0xf]
        %v358 = vld [vmem:[%s154 + $0x30c] sm:$0xf]
        %v359 = vld [vmem:[%s154 + $0x310] sm:$0xf]
        %v360 = vld [vmem:[%s154 + $0x314] sm:$0xf]
        %v361 = vld [vmem:[%s154 + $0x318] sm:$0xf]
        %v362 = vld [vmem:[%s154 + $0x31c] sm:$0xf]
        %v363 = vld [vmem:[%s154 + $0x320] sm:$0xf]
        %v364 = vld [vmem:[%s154 + $0x324] sm:$0xf]
        %v365 = vld [vmem:[%s154 + $0x328] sm:$0xf]
        %v366 = vld [vmem:[%s154 + $0x32c] sm:$0xf]
        %v367 = vld [vmem:[%s154 + $0x330] sm:$0xf]
        %v368 = vld [vmem:[%s154 + $0x334] sm:$0xf]
        %v369 = vld [vmem:[%s154 + $0x338] sm:$0xf]
        %v370 = vld [vmem:[%s154 + $0x33c] sm:$0xf]
        %v371 = vld [vmem:[%s154 + $0x340] sm:$0xf]
        %v372 = vld [vmem:[%s154 + $0x344] sm:$0xf]
        %v373 = vld [vmem:[%s154 + $0x348] sm:$0xf]
        %v374 = vld [vmem:[%s154 + $0x34c] sm:$0xf]
        %v375 = vld [vmem:[%s154 + $0x350] sm:$0xf]
        %v376 = vld [vmem:[%s154 + $0x354] sm:$0xf]
        %v377 = vld [vmem:[%s154 + $0x358] sm:$0xf]
        %v378 = vld [vmem:[%s154 + $0x35c] sm:$0xf]
        %v379 = vld [vmem:[%s154 + $0x360] sm:$0xf]
        %v380 = vld [vmem:[%s154 + $0x364] sm:$0xf]
        %v381 = vld [vmem:[%s154 + $0x368] sm:$0xf]
        %v382 = vld [vmem:[%s154 + $0x36c] sm:$0xf]
        %v383 = vld [vmem:[%s154 + $0x370] sm:$0xf]
        %v384 = vld [vmem:[%s154 + $0x374] sm:$0xf]
        %v385 = vld [vmem:[%s154 + $0x378] sm:$0xf]
        %v386 = vld [vmem:[%s154 + $0x37c] sm:$0xf]
        %v387 = vld [vmem:[%s154 + $0x380] sm:$0xf]
        %v388 = vld [vmem:[%s154 + $0x384] sm:$0xf]
        %v389 = vld [vmem:[%s154 + $0x388] sm:$0xf]
        %v390 = vld [vmem:[%s154 + $0x38c] sm:$0xf]
        %v391 = vld [vmem:[%s154 + $0x390] sm:$0xf]
        %v392 = vld [vmem:[%s154 + $0x394] sm:$0xf]
        %v393 = vld [vmem:[%s154 + $0x398] sm:$0xf]
        %v394 = vld [vmem:[%s154 + $0x39c] sm:$0xf]
        %v395 = vld [vmem:[%s154 + $0x3a0] sm:$0xf]
        %v396 = vld [vmem:[%s154 + $0x3a4] sm:$0xf]
        %v397 = vld [vmem:[%s154 + $0x3a8] sm:$0xf]
        %v398 = vld [vmem:[%s154 + $0x3ac] sm:$0xf]
        %v399 = vld [vmem:[%s154 + $0x3b0] sm:$0xf]
        %v400 = vld [vmem:[%s154 + $0x3b4] sm:$0xf]
        %v401 = vld [vmem:[%s154 + $0x3b8] sm:$0xf]
        %v402 = vld [vmem:[%s154 + $0x3bc] sm:$0xf]
        %v403 = vld [vmem:[%s154 + $0x3c0] sm:$0xf]
        %v404 = vld [vmem:[%s154 + $0x3c4] sm:$0xf]
        %v405 = vld [vmem:[%s154 + $0x3c8] sm:$0xf]
        %v406 = vld [vmem:[%s154 + $0x3cc] sm:$0xf]
        %v407 = vld [vmem:[%s154 + $0x3d0] sm:$0xf]
        %v408 = vld [vmem:[%s154 + $0x3d4] sm:$0xf]
        %v409 = vld [vmem:[%s154 + $0x3d8] sm:$0xf]
        %v410 = vld [vmem:[%s154 + $0x3dc] sm:$0xf]
        %v411 = vld [vmem:[%s154 + $0x3e0] sm:$0xf]
        %v412 = vld [vmem:[%s154 + $0x3e4] sm:$0xf]
        %v413 = vld [vmem:[%s154 + $0x3e8] sm:$0xf]
        %v414 = vld [vmem:[%s154 + $0x3ec] sm:$0xf]
        %v415 = vld [vmem:[%s154 + $0x3f0] sm:$0xf]
        %v416 = vld [vmem:[%s154 + $0x3f4] sm:$0xf]
        %v417 = vld [vmem:[%s154 + $0x3f8] sm:$0xf]
        %v418 = vld [vmem:[%s154 + $0x3fc] sm:$0xf]
        %v419 = vld [vmem:[#allocation2] sm:$0xf]
        %v420 = vld [vmem:[#allocation2 + $0x4] sm:$0xf]
        %v677 = vunpack.c.l.b16 %v163
        %v678 = vunpack.c.l.b16 %v164
        %v679 = vunpack.c.l.b16 %v165
        %v680 = vunpack.c.l.b16 %v166
        %v681 = vunpack.c.l.b16 %v167
        %v682 = vunpack.c.l.b16 %v168
        %v683 = vunpack.c.l.b16 %v169
        %v684 = vunpack.c.l.b16 %v170
        %v685 = vunpack.c.l.b16 %v171
        %v686 = vunpack.c.l.b16 %v172
        %v687 = vunpack.c.l.b16 %v173
        %v688 = vunpack.c.l.b16 %v174
        %v689 = vunpack.c.l.b16 %v175
        %v690 = vunpack.c.l.b16 %v176
        %v691 = vunpack.c.l.b16 %v177
        %v692 = vunpack.c.l.b16 %v178
        %v693 = vunpack.c.l.b16 %v179
        %v694 = vunpack.c.l.b16 %v180
        %v695 = vunpack.c.l.b16 %v181
        %v696 = vunpack.c.l.b16 %v182
        %v697 = vunpack.c.l.b16 %v183
        %v698 = vunpack.c.l.b16 %v184
        %v699 = vunpack.c.l.b16 %v185
        %v700 = vunpack.c.l.b16 %v186
        %v701 = vunpack.c.l.b16 %v187
        %v702 = vunpack.c.l.b16 %v188
        %v703 = vunpack.c.l.b16 %v189
        %v704 = vunpack.c.l.b16 %v190
        %v705 = vunpack.c.l.b16 %v191
        %v706 = vunpack.c.l.b16 %v192
        %v707 = vunpack.c.l.b16 %v193
        %v708 = vunpack.c.l.b16 %v194
        %v709 = vunpack.c.l.b16 %v195
        %v710 = vunpack.c.l.b16 %v196
        %v711 = vunpack.c.l.b16 %v197
        %v712 = vunpack.c.l.b16 %v198
        %v713 = vunpack.c.l.b16 %v199
        %v714 = vunpack.c.l.b16 %v200
        %v715 = vunpack.c.l.b16 %v201
        %v716 = vunpack.c.l.b16 %v202
        %v717 = vunpack.c.l.b16 %v203
        %v718 = vunpack.c.l.b16 %v204
        %v719 = vunpack.c.l.b16 %v205
        %v720 = vunpack.c.l.b16 %v206
        %v721 = vunpack.c.l.b16 %v207
        %v722 = vunpack.c.l.b16 %v208
        %v723 = vunpack.c.l.b16 %v209
        %v724 = vunpack.c.l.b16 %v210
        %v725 = vunpack.c.l.b16 %v211
        %v726 = vunpack.c.l.b16 %v212
        %v727 = vunpack.c.l.b16 %v213
        %v728 = vunpack.c.l.b16 %v214
        %v729 = vunpack.c.l.b16 %v215
        %v730 = vunpack.c.l.b16 %v216
        %v731 = vunpack.c.l.b16 %v217
        %v732 = vunpack.c.l.b16 %v218
        %v733 = vunpack.c.l.b16 %v219
        %v734 = vunpack.c.l.b16 %v220
        %v735 = vunpack.c.l.b16 %v221
        %v736 = vunpack.c.l.b16 %v222
        %v737 = vunpack.c.l.b16 %v223
        %v738 = vunpack.c.l.b16 %v224
        %v739 = vunpack.c.l.b16 %v225
        %v740 = vunpack.c.l.b16 %v226
        %v741 = vunpack.c.l.b16 %v227
        %v742 = vunpack.c.l.b16 %v228
        %v743 = vunpack.c.l.b16 %v229
        %v744 = vunpack.c.l.b16 %v230
        %v745 = vunpack.c.l.b16 %v231
        %v746 = vunpack.c.l.b16 %v232
        %v747 = vunpack.c.l.b16 %v233
        %v748 = vunpack.c.l.b16 %v234
        %v749 = vunpack.c.l.b16 %v235
        %v750 = vunpack.c.l.b16 %v236
        %v751 = vunpack.c.l.b16 %v237
        %v752 = vunpack.c.l.b16 %v238
        %v753 = vunpack.c.l.b16 %v239
        %v754 = vunpack.c.l.b16 %v240
        %v755 = vunpack.c.l.b16 %v241
        %v756 = vunpack.c.l.b16 %v242
        %v757 = vunpack.c.l.b16 %v243
        %v758 = vunpack.c.l.b16 %v244
        %v759 = vunpack.c.l.b16 %v245
        %v760 = vunpack.c.l.b16 %v246
        %v761 = vunpack.c.l.b16 %v247
        %v762 = vunpack.c.l.b16 %v248
        %v763 = vunpack.c.l.b16 %v249
        %v764 = vunpack.c.l.b16 %v250
        %v765 = vunpack.c.l.b16 %v251
        %v766 = vunpack.c.l.b16 %v252
        %v767 = vunpack.c.l.b16 %v253
        %v768 = vunpack.c.l.b16 %v254
        %v769 = vunpack.c.l.b16 %v255
        %v770 = vunpack.c.l.b16 %v256
        %v771 = vunpack.c.l.b16 %v257
        %v772 = vunpack.c.l.b16 %v258
        %v773 = vunpack.c.l.b16 %v259
        %v774 = vunpack.c.l.b16 %v260
        %v775 = vunpack.c.l.b16 %v261
        %v776 = vunpack.c.l.b16 %v262
        %v777 = vunpack.c.l.b16 %v263
        %v778 = vunpack.c.l.b16 %v264
        %v779 = vunpack.c.l.b16 %v265
        %v780 = vunpack.c.l.b16 %v266
        %v781 = vunpack.c.l.b16 %v267
        %v782 = vunpack.c.l.b16 %v268
        %v783 = vunpack.c.l.b16 %v269
        %v784 = vunpack.c.l.b16 %v270
        %v785 = vunpack.c.l.b16 %v271
        %v786 = vunpack.c.l.b16 %v272
        %v787 = vunpack.c.l.b16 %v273
        %v788 = vunpack.c.l.b16 %v274
        %v789 = vunpack.c.l.b16 %v275
        %v790 = vunpack.c.l.b16 %v276
        %v791 = vunpack.c.l.b16 %v277
        %v792 = vunpack.c.l.b16 %v278
        %v793 = vunpack.c.l.b16 %v279
        %v794 = vunpack.c.l.b16 %v280
        %v795 = vunpack.c.l.b16 %v281
        %v796 = vunpack.c.l.b16 %v282
        %v797 = vunpack.c.l.b16 %v283
        %v798 = vunpack.c.l.b16 %v284
        %v799 = vunpack.c.l.b16 %v285
        %v800 = vunpack.c.l.b16 %v286
        %v801 = vunpack.c.l.b16 %v287
        %v802 = vunpack.c.l.b16 %v288
        %v803 = vunpack.c.l.b16 %v289
        %v804 = vunpack.c.l.b16 %v290
        %v805 = vunpack.c.l.b16 %v291
        %v806 = vunpack.c.l.b16 %v292
        %v807 = vunpack.c.l.b16 %v293
        %v808 = vunpack.c.l.b16 %v294
        %v809 = vunpack.c.l.b16 %v295
        %v810 = vunpack.c.l.b16 %v296
        %v811 = vunpack.c.l.b16 %v297
        %v812 = vunpack.c.l.b16 %v298
        %v813 = vunpack.c.l.b16 %v299
        %v814 = vunpack.c.l.b16 %v300
        %v815 = vunpack.c.l.b16 %v301
        %v816 = vunpack.c.l.b16 %v302
        %v817 = vunpack.c.l.b16 %v303
        %v818 = vunpack.c.l.b16 %v304
        %v819 = vunpack.c.l.b16 %v305
        %v820 = vunpack.c.l.b16 %v306
        %v821 = vunpack.c.l.b16 %v307
        %v822 = vunpack.c.l.b16 %v308
        %v823 = vunpack.c.l.b16 %v309
        %v824 = vunpack.c.l.b16 %v310
        %v825 = vunpack.c.l.b16 %v311
        %v826 = vunpack.c.l.b16 %v312
        %v827 = vunpack.c.l.b16 %v313
        %v828 = vunpack.c.l.b16 %v314
        %v829 = vunpack.c.l.b16 %v315
        %v830 = vunpack.c.l.b16 %v316
        %v831 = vunpack.c.l.b16 %v317
        %v832 = vunpack.c.l.b16 %v318
        %v833 = vunpack.c.l.b16 %v319
        %v834 = vunpack.c.l.b16 %v320
        %v835 = vunpack.c.l.b16 %v321
        %v836 = vunpack.c.l.b16 %v322
        %v837 = vunpack.c.l.b16 %v323
        %v838 = vunpack.c.l.b16 %v324
        %v839 = vunpack.c.l.b16 %v325
        %v840 = vunpack.c.l.b16 %v326
        %v841 = vunpack.c.l.b16 %v327
        %v842 = vunpack.c.l.b16 %v328
        %v843 = vunpack.c.l.b16 %v329
        %v844 = vunpack.c.l.b16 %v330
        %v845 = vunpack.c.l.b16 %v331
        %v846 = vunpack.c.l.b16 %v332
        %v847 = vunpack.c.l.b16 %v333
        %v848 = vunpack.c.l.b16 %v334
        %v849 = vunpack.c.l.b16 %v335
        %v850 = vunpack.c.l.b16 %v336
        %v851 = vunpack.c.l.b16 %v337
        %v852 = vunpack.c.l.b16 %v338
        %v853 = vunpack.c.l.b16 %v339
        %v854 = vunpack.c.l.b16 %v340
        %v855 = vunpack.c.l.b16 %v341
        %v856 = vunpack.c.l.b16 %v342
        %v857 = vunpack.c.l.b16 %v343
        %v858 = vunpack.c.l.b16 %v344
        %v859 = vunpack.c.l.b16 %v345
        %v860 = vunpack.c.l.b16 %v346
        %v861 = vunpack.c.l.b16 %v347
        %v862 = vunpack.c.l.b16 %v348
        %v863 = vunpack.c.l.b16 %v349
        %v864 = vunpack.c.l.b16 %v350
        %v865 = vunpack.c.l.b16 %v351
        %v866 = vunpack.c.l.b16 %v352
        %v867 = vunpack.c.l.b16 %v353
        %v868 = vunpack.c.l.b16 %v354
        %v869 = vunpack.c.l.b16 %v355
        %v870 = vunpack.c.l.b16 %v356
        %v871 = vunpack.c.l.b16 %v357
        %v872 = vunpack.c.l.b16 %v358
        %v873 = vunpack.c.l.b16 %v359
        %v874 = vunpack.c.l.b16 %v360
        %v875 = vunpack.c.l.b16 %v361
        %v876 = vunpack.c.l.b16 %v362
        %v877 = vunpack.c.l.b16 %v363
        %v878 = vunpack.c.l.b16 %v364
        %v879 = vunpack.c.l.b16 %v365
        %v880 = vunpack.c.l.b16 %v366
        %v881 = vunpack.c.l.b16 %v367
        %v882 = vunpack.c.l.b16 %v368
        %v883 = vunpack.c.l.b16 %v369
        %v884 = vunpack.c.l.b16 %v370
        %v885 = vunpack.c.l.b16 %v371
        %v886 = vunpack.c.l.b16 %v372
        %v887 = vunpack.c.l.b16 %v373
        %v888 = vunpack.c.l.b16 %v374
        %v889 = vunpack.c.l.b16 %v375
        %v890 = vunpack.c.l.b16 %v376
        %v891 = vunpack.c.l.b16 %v377
        %v892 = vunpack.c.l.b16 %v378
        %v893 = vunpack.c.l.b16 %v379
        %v894 = vunpack.c.l.b16 %v380
        %v895 = vunpack.c.l.b16 %v381
        %v896 = vunpack.c.l.b16 %v382
        %v897 = vunpack.c.l.b16 %v383
        %v898 = vunpack.c.l.b16 %v384
        %v899 = vunpack.c.l.b16 %v385
        %v900 = vunpack.c.l.b16 %v386
        %v901 = vunpack.c.l.b16 %v387
        %v902 = vunpack.c.l.b16 %v388
        %v903 = vunpack.c.l.b16 %v389
        %v904 = vunpack.c.l.b16 %v390
        %v905 = vunpack.c.l.b16 %v391
        %v906 = vunpack.c.l.b16 %v392
        %v907 = vunpack.c.l.b16 %v393
        %v908 = vunpack.c.l.b16 %v394
        %v909 = vunpack.c.l.b16 %v395
        %v910 = vunpack.c.l.b16 %v396
        %v911 = vunpack.c.l.b16 %v397
        %v912 = vunpack.c.l.b16 %v398
        %v913 = vunpack.c.l.b16 %v399
        %v914 = vunpack.c.l.b16 %v400
        %v915 = vunpack.c.l.b16 %v401
        %v916 = vunpack.c.l.b16 %v402
        %v917 = vunpack.c.l.b16 %v403
        %v918 = vunpack.c.l.b16 %v404
        %v919 = vunpack.c.l.b16 %v405
        %v920 = vunpack.c.l.b16 %v406
        %v921 = vunpack.c.l.b16 %v407
        %v922 = vunpack.c.l.b16 %v408
        %v923 = vunpack.c.l.b16 %v409
        %v924 = vunpack.c.l.b16 %v410
        %v925 = vunpack.c.l.b16 %v411
        %v926 = vunpack.c.l.b16 %v412
        %v927 = vunpack.c.l.b16 %v413
        %v928 = vunpack.c.l.b16 %v414
        %v929 = vunpack.c.l.b16 %v415
        %v930 = vunpack.c.l.b16 %v416
        %v931 = vunpack.c.l.b16 %v417
        %v932 = vunpack.c.l.b16 %v418
        %v933 = vpack.c.b16 %v678, %v677
        %v934 = vpack.c.b16 %v680, %v679
        %v935 = vpack.c.b16 %v682, %v681
        %v936 = vpack.c.b16 %v684, %v683
        %v937 = vpack.c.b16 %v686, %v685
        %v938 = vpack.c.b16 %v688, %v687
        %v939 = vpack.c.b16 %v690, %v689
        %v940 = vpack.c.b16 %v692, %v691
        %v941 = vpack.c.b16 %v694, %v693
        %v942 = vpack.c.b16 %v696, %v695
        %v943 = vpack.c.b16 %v698, %v697
        %v944 = vpack.c.b16 %v700, %v699
        %v945 = vpack.c.b16 %v702, %v701
        %v946 = vpack.c.b16 %v704, %v703
        %v947 = vpack.c.b16 %v706, %v705
        %v948 = vpack.c.b16 %v708, %v707
        %v949 = vpack.c.b16 %v710, %v709
        %v950 = vpack.c.b16 %v712, %v711
        %v951 = vpack.c.b16 %v714, %v713
        %v952 = vpack.c.b16 %v716, %v715
        %v953 = vpack.c.b16 %v718, %v717
        %v954 = vpack.c.b16 %v720, %v719
        %v955 = vpack.c.b16 %v722, %v721
        %v956 = vpack.c.b16 %v724, %v723
        %v957 = vpack.c.b16 %v726, %v725
        %v958 = vpack.c.b16 %v728, %v727
        %v959 = vpack.c.b16 %v730, %v729
        %v960 = vpack.c.b16 %v732, %v731
        %v961 = vpack.c.b16 %v734, %v733
        %v962 = vpack.c.b16 %v736, %v735
        %v963 = vpack.c.b16 %v738, %v737
        %v964 = vpack.c.b16 %v740, %v739
        %v965 = vpack.c.b16 %v742, %v741
        %v966 = vpack.c.b16 %v744, %v743
        %v967 = vpack.c.b16 %v746, %v745
        %v968 = vpack.c.b16 %v748, %v747
        %v969 = vpack.c.b16 %v750, %v749
        %v970 = vpack.c.b16 %v752, %v751
        %v971 = vpack.c.b16 %v754, %v753
        %v972 = vpack.c.b16 %v756, %v755
        %v973 = vpack.c.b16 %v758, %v757
        %v974 = vpack.c.b16 %v760, %v759
        %v975 = vpack.c.b16 %v762, %v761
        %v976 = vpack.c.b16 %v764, %v763
        %v977 = vpack.c.b16 %v766, %v765
        %v978 = vpack.c.b16 %v768, %v767
        %v979 = vpack.c.b16 %v770, %v769
        %v980 = vpack.c.b16 %v772, %v771
        %v981 = vpack.c.b16 %v774, %v773
        %v982 = vpack.c.b16 %v776, %v775
        %v983 = vpack.c.b16 %v778, %v777
        %v984 = vpack.c.b16 %v780, %v779
        %v985 = vpack.c.b16 %v782, %v781
        %v986 = vpack.c.b16 %v784, %v783
        %v987 = vpack.c.b16 %v786, %v785
        %v988 = vpack.c.b16 %v788, %v787
        %v989 = vpack.c.b16 %v790, %v789
        %v990 = vpack.c.b16 %v792, %v791
        %v991 = vpack.c.b16 %v794, %v793
        %v992 = vpack.c.b16 %v796, %v795
        %v993 = vpack.c.b16 %v798, %v797
        %v994 = vpack.c.b16 %v800, %v799
        %v995 = vpack.c.b16 %v802, %v801
        %v996 = vpack.c.b16 %v804, %v803
        %v997 = vpack.c.b16 %v806, %v805
        %v998 = vpack.c.b16 %v808, %v807
        %v999 = vpack.c.b16 %v810, %v809
        %v1000 = vpack.c.b16 %v812, %v811
        %v1001 = vpack.c.b16 %v814, %v813
        %v1002 = vpack.c.b16 %v816, %v815
        %v1003 = vpack.c.b16 %v818, %v817
        %v1004 = vpack.c.b16 %v820, %v819
        %v1005 = vpack.c.b16 %v822, %v821
        %v1006 = vpack.c.b16 %v824, %v823
        %v1007 = vpack.c.b16 %v826, %v825
        %v1008 = vpack.c.b16 %v828, %v827
        %v1009 = vpack.c.b16 %v830, %v829
        %v1010 = vpack.c.b16 %v832, %v831
        %v1011 = vpack.c.b16 %v834, %v833
        %v1012 = vpack.c.b16 %v836, %v835
        %v1013 = vpack.c.b16 %v838, %v837
        %v1014 = vpack.c.b16 %v840, %v839
        %v1015 = vpack.c.b16 %v842, %v841
        %v1016 = vpack.c.b16 %v844, %v843
        %v1017 = vpack.c.b16 %v846, %v845
        %v1018 = vpack.c.b16 %v848, %v847
        %v1019 = vpack.c.b16 %v850, %v849
        %v1020 = vpack.c.b16 %v852, %v851
        %v1021 = vpack.c.b16 %v854, %v853
        %v1022 = vpack.c.b16 %v856, %v855
        %v1023 = vpack.c.b16 %v858, %v857
        %v1024 = vpack.c.b16 %v860, %v859
        %v1025 = vpack.c.b16 %v862, %v861
        %v1026 = vpack.c.b16 %v864, %v863
        %v1027 = vpack.c.b16 %v866, %v865
        %v1028 = vpack.c.b16 %v868, %v867
        %v1029 = vpack.c.b16 %v870, %v869
        %v1030 = vpack.c.b16 %v872, %v871
        %v1031 = vpack.c.b16 %v874, %v873
        %v1032 = vpack.c.b16 %v876, %v875
        %v1033 = vpack.c.b16 %v878, %v877
        %v1034 = vpack.c.b16 %v880, %v879
        %v1035 = vpack.c.b16 %v882, %v881
        %v1036 = vpack.c.b16 %v884, %v883
        %v1037 = vpack.c.b16 %v886, %v885
        %v1038 = vpack.c.b16 %v888, %v887
        %v1039 = vpack.c.b16 %v890, %v889
        %v1040 = vpack.c.b16 %v892, %v891
        %v1041 = vpack.c.b16 %v894, %v893
        %v1042 = vpack.c.b16 %v896, %v895
        %v1043 = vpack.c.b16 %v898, %v897
        %v1044 = vpack.c.b16 %v900, %v899
        %v1045 = vpack.c.b16 %v902, %v901
        %v1046 = vpack.c.b16 %v904, %v903
        %v1047 = vpack.c.b16 %v906, %v905
        %v1048 = vpack.c.b16 %v908, %v907
        %v1049 = vpack.c.b16 %v910, %v909
        %v1050 = vpack.c.b16 %v912, %v911
        %v1051 = vpack.c.b16 %v914, %v913
        %v1052 = vpack.c.b16 %v916, %v915
        %v1053 = vpack.c.b16 %v918, %v917
        %v1054 = vpack.c.b16 %v920, %v919
        %v1055 = vpack.c.b16 %v922, %v921
        %v1056 = vpack.c.b16 %v924, %v923
        %v1057 = vpack.c.b16 %v926, %v925
        %v1058 = vpack.c.b16 %v928, %v927
        %v1059 = vpack.c.b16 %v930, %v929
        %v1060 = vpack.c.b16 %v932, %v931
        %v1063 = vunpack.c.l.b16 %v419
        %v1064 = vunpack.c.l.b16 %v420
        %v1065 = vpack.c.b16 %v1064, %v1063
        %vm1067 = vcmask 130048
        %v1069 = vsel %vm1067, %v933, 0
        %v1072 = vsel %vm1067, %v934, 0
        %v1075 = vsel %vm1067, %v935, 0
        %v1078 = vsel %vm1067, %v936, 0
        %v1081 = vsel %vm1067, %v937, 0
        %v1084 = vsel %vm1067, %v938, 0
        %v1087 = vsel %vm1067, %v939, 0
        %v1090 = vsel %vm1067, %v940, 0
        %v1093 = vsel %vm1067, %v941, 0
        %v1096 = vsel %vm1067, %v942, 0
        %v1099 = vsel %vm1067, %v943, 0
        %v1102 = vsel %vm1067, %v944, 0
        %v1105 = vsel %vm1067, %v945, 0
        %v1108 = vsel %vm1067, %v946, 0
        %v1111 = vsel %vm1067, %v947, 0
        %v1114 = vsel %vm1067, %v948, 0
        %v1117 = vsel %vm1067, %v949, 0
        %v1120 = vsel %vm1067, %v950, 0
        %v1123 = vsel %vm1067, %v951, 0
        %v1126 = vsel %vm1067, %v952, 0
        %v1129 = vsel %vm1067, %v953, 0
        %v1132 = vsel %vm1067, %v954, 0
        %v1135 = vsel %vm1067, %v955, 0
        %v1138 = vsel %vm1067, %v956, 0
        %v1141 = vsel %vm1067, %v957, 0
        %v1144 = vsel %vm1067, %v958, 0
        %v1147 = vsel %vm1067, %v959, 0
        %v1150 = vsel %vm1067, %v960, 0
        %v1153 = vsel %vm1067, %v961, 0
        %v1156 = vsel %vm1067, %v962, 0
        %v1159 = vsel %vm1067, %v963, 0
        %v1162 = vsel %vm1067, %v964, 0
        %v1165 = vsel %vm1067, %v965, 0
        %v1168 = vsel %vm1067, %v966, 0
        %v1171 = vsel %vm1067, %v967, 0
        %v1174 = vsel %vm1067, %v968, 0
        %v1177 = vsel %vm1067, %v969, 0
        %v1180 = vsel %vm1067, %v970, 0
        %v1183 = vsel %vm1067, %v971, 0
        %v1186 = vsel %vm1067, %v972, 0
        %v1189 = vsel %vm1067, %v973, 0
        %v1192 = vsel %vm1067, %v974, 0
        %v1195 = vsel %vm1067, %v975, 0
        %v1198 = vsel %vm1067, %v976, 0
        %v1201 = vsel %vm1067, %v977, 0
        %v1204 = vsel %vm1067, %v978, 0
        %v1207 = vsel %vm1067, %v979, 0
        %v1210 = vsel %vm1067, %v980, 0
        %v1213 = vsel %vm1067, %v981, 0
        %v1216 = vsel %vm1067, %v982, 0
        %v1219 = vsel %vm1067, %v983, 0
        %v1222 = vsel %vm1067, %v984, 0
        %v1225 = vsel %vm1067, %v985, 0
        %v1228 = vsel %vm1067, %v986, 0
        %v1231 = vsel %vm1067, %v987, 0
        %v1234 = vsel %vm1067, %v988, 0
        %v1237 = vsel %vm1067, %v989, 0
        %v1240 = vsel %vm1067, %v990, 0
        %v1243 = vsel %vm1067, %v991, 0
        %v1246 = vsel %vm1067, %v992, 0
        %v1249 = vsel %vm1067, %v993, 0
        %v1252 = vsel %vm1067, %v994, 0
        %v1255 = vsel %vm1067, %v995, 0
        %v1258 = vsel %vm1067, %v996, 0
        %v1261 = vsel %vm1067, %v997, 0
        %v1264 = vsel %vm1067, %v998, 0
        %v1267 = vsel %vm1067, %v999, 0
        %v1270 = vsel %vm1067, %v1000, 0
        %v1273 = vsel %vm1067, %v1001, 0
        %v1276 = vsel %vm1067, %v1002, 0
        %v1279 = vsel %vm1067, %v1003, 0
        %v1282 = vsel %vm1067, %v1004, 0
        %v1285 = vsel %vm1067, %v1005, 0
        %v1288 = vsel %vm1067, %v1006, 0
        %v1291 = vsel %vm1067, %v1007, 0
        %v1294 = vsel %vm1067, %v1008, 0
        %v1297 = vsel %vm1067, %v1009, 0
        %v1300 = vsel %vm1067, %v1010, 0
        %v1303 = vsel %vm1067, %v1011, 0
        %v1306 = vsel %vm1067, %v1012, 0
        %v1309 = vsel %vm1067, %v1013, 0
        %v1312 = vsel %vm1067, %v1014, 0
        %v1315 = vsel %vm1067, %v1015, 0
        %v1318 = vsel %vm1067, %v1016, 0
        %v1321 = vsel %vm1067, %v1017, 0
        %v1324 = vsel %vm1067, %v1018, 0
        %v1327 = vsel %vm1067, %v1019, 0
        %v1330 = vsel %vm1067, %v1020, 0
        %v1333 = vsel %vm1067, %v1021, 0
        %v1336 = vsel %vm1067, %v1022, 0
        %v1339 = vsel %vm1067, %v1023, 0
        %v1342 = vsel %vm1067, %v1024, 0
        %v1345 = vsel %vm1067, %v1025, 0
        %v1348 = vsel %vm1067, %v1026, 0
        %v1351 = vsel %vm1067, %v1027, 0
        %v1354 = vsel %vm1067, %v1028, 0
        %v1357 = vsel %vm1067, %v1029, 0
        %v1360 = vsel %vm1067, %v1030, 0
        %v1363 = vsel %vm1067, %v1031, 0
        %v1366 = vsel %vm1067, %v1032, 0
        %v1369 = vsel %vm1067, %v1033, 0
        %v1372 = vsel %vm1067, %v1034, 0
        %v1375 = vsel %vm1067, %v1035, 0
        %v1378 = vsel %vm1067, %v1036, 0
        %v1381 = vsel %vm1067, %v1037, 0
        %v1384 = vsel %vm1067, %v1038, 0
        %v1387 = vsel %vm1067, %v1039, 0
        %v1390 = vsel %vm1067, %v1040, 0
        %v1393 = vsel %vm1067, %v1041, 0
        %v1396 = vsel %vm1067, %v1042, 0
        %v1399 = vsel %vm1067, %v1043, 0
        %v1402 = vsel %vm1067, %v1044, 0
        %v1405 = vsel %vm1067, %v1045, 0
        %v1408 = vsel %vm1067, %v1046, 0
        %v1411 = vsel %vm1067, %v1047, 0
        %v1414 = vsel %vm1067, %v1048, 0
        %v1417 = vsel %vm1067, %v1049, 0
        %v1420 = vsel %vm1067, %v1050, 0
        %v1423 = vsel %vm1067, %v1051, 0
        %v1426 = vsel %vm1067, %v1052, 0
        %v1429 = vsel %vm1067, %v1053, 0
        %v1432 = vsel %vm1067, %v1054, 0
        %v1435 = vsel %vm1067, %v1055, 0
        %v1438 = vsel %vm1067, %v1056, 0
        %v1441 = vsel %vm1067, %v1057, 0
        %v1444 = vsel %vm1067, %v1058, 0
        %v1447 = vsel %vm1067, %v1059, 0
        %v1450 = vsel %vm1067, %v1060, 0
        %1452 = vmatprep.subr.bf16.mxu0 0
        %1453 = vmatpush1.bf16.msra.mxu0 %v1065
        %1454 = vmatprep.subr.bf16.mxu0 0
        %1455 = vmatpush1.bf16.msra.mxu0 0
        %1456 = vmatprep.subr.bf16.mxu0 0
        %1457 = vmatpush1.bf16.msra.mxu0 0
        %1458 = vmatprep.subr.bf16.mxu0 0
        %1459 = vmatpush1.bf16.msra.mxu0 0
        %1460 = vmatprep.subr.bf16.mxu0 0
        %1461 = vmatpush1.bf16.msra.mxu0 0
        %1462 = vmatprep.subr.bf16.mxu0 0
        %1463 = vmatpush1.bf16.msra.mxu0 0
        %1464 = vmatprep.subr.bf16.mxu0 0
        %1465 = vmatpush1.bf16.msra.mxu0 0
        %1466 = vmatprep.subr.bf16.mxu0 0
        %1467 = vmatpush1.bf16.msra.mxu0 0
        %1468 = vmatprep.subr.bf16.mxu0 0
        %1469 = vmatpush1.bf16.msra.mxu0 0
        %1470 = vmatprep.subr.bf16.mxu0 0
        %1471 = vmatpush1.bf16.msra.mxu0 0
        %1472 = vmatprep.subr.bf16.mxu0 0
        %1473 = vmatpush1.bf16.msra.mxu0 0
        %1474 = vmatprep.subr.bf16.mxu0 0
        %1475 = vmatpush1.bf16.msra.mxu0 0
        %1476 = vmatprep.subr.bf16.mxu0 0
        %1477 = vmatpush1.bf16.msra.mxu0 0
        %1478 = vmatprep.subr.bf16.mxu0 0
        %1479 = vmatpush1.bf16.msra.mxu0 0
        %1480 = vmatprep.subr.bf16.mxu0 0
        %1481 = vmatpush1.bf16.msra.mxu0 0
        %1482 = vmatprep.subr.bf16.mxu0 0
        %1483 = vmatpush1.bf16.msra.mxu0 0
        %1484 = vmatprep.mubr.bf16.mxu0 0
        %1485 = vmatmul.mubr.bf16.gmra.mrb[0].mxu0 %v1069
        %v1486 = vpop.f32.mrb[0].mxu0
        %v1487 = vadd.f32 0.0, %v1486
        %v1488 = vpop.f32.mrb[0].mxu0
        %v1489 = vpop.f32.mrb[0].mxu0
        %v1490 = vadd.f32 0.0, %v1489
        %v1491 = vpop.f32.mrb[0].mxu0
        %1492 = vmatprep.mubr.bf16.mxu0 0
        %1493 = vmatmul.mubr.bf16.gmra.mrb[0].mxu0 %v1072
        %v1494 = vpop.f32.mrb[0].mxu0
        %v1495 = vadd.f32 0.0, %v1494
        %v1496 = vpop.f32.mrb[0].mxu0
        %v1497 = vpop.f32.mrb[0].mxu0
        %v1498 = vadd.f32 0.0, %v1497
        %v1499 = vpop.f32.mrb[0].mxu0
        %1500 = vmatprep.mubr.bf16.mxu0 0
        %1501 = vmatmul.mubr.bf16.gmra.mrb[0].mxu0 %v1075
        %v1502 = vpop.f32.mrb[0].mxu0
        %v1503 = vadd.f32 0.0, %v1502
        %v1504 = vpop.f32.mrb[0].mxu0
        %v1505 = vpop.f32.mrb[0].mxu0
        %v1506 = vadd.f32 0.0, %v1505
        %v1507 = vpop.f32.mrb[0].mxu0
        %1508 = vmatprep.mubr.bf16.mxu0 0
        %1509 = vmatmul.mubr.bf16.gmra.mrb[0].mxu0 %v1078
        %v1510 = vpop.f32.mrb[0].mxu0
        %v1511 = vadd.f32 0.0, %v1510
        %v1512 = vpop.f32.mrb[0].mxu0
        %v1513 = vpop.f32.mrb[0].mxu0
        %v1514 = vadd.f32 0.0, %v1513
        %v1515 = vpop.f32.mrb[0].mxu0
        %1516 = vmatprep.mubr.bf16.mxu0 0
        %1517 = vmatmul.mubr.bf16.gmra.mrb[0].mxu0 %v1081
        %v1518 = vpop.f32.mrb[0].mxu0
        %v1519 = vadd.f32 0.0, %v1518
        %v1520 = vpop.f32.mrb[0].mxu0
        %v1521 = vpop.f32.mrb[0].mxu0
        %v1522 = vadd.f32 0.0, %v1521
        %v1523 = vpop.f32.mrb[0].mxu0
        %1524 = vmatprep.mubr.bf16.mxu0 0
        %1525 = vmatmul.mubr.bf16.gmra.mrb[0].mxu0 %v1084
        %v1526 = vpop.f32.mrb[0].mxu0
        %v1527 = vadd.f32 0.0, %v1526
        %v1528 = vpop.f32.mrb[0].mxu0
        %v1529 = vpop.f32.mrb[0].mxu0
        %v1530 = vadd.f32 0.0, %v1529
        %v1531 = vpop.f32.mrb[0].mxu0
        %1532 = vmatprep.mubr.bf16.mxu0 0
        %1533 = vmatmul.mubr.bf16.gmra.mrb[0].mxu0 %v1087
        %v1534 = vpop.f32.mrb[0].mxu0
        %v1535 = vadd.f32 0.0, %v1534
        %v1536 = vpop.f32.mrb[0].mxu0
        %v1537 = vpop.f32.mrb[0].mxu0
        %v1538 = vadd.f32 0.0, %v1537
        %v1539 = vpop.f32.mrb[0].mxu0
        %1540 = vmatprep.mubr.bf16.mxu0 0
        %1541 = vmatmul.mubr.bf16.gmra.mrb[0].mxu0 %v1090
        %v1542 = vpop.f32.mrb[0].mxu0
        %v1543 = vadd.f32 0.0, %v1542
        %v1544 = vpop.f32.mrb[0].mxu0
        %v1545 = vpop.f32.mrb[0].mxu0
        %v1546 = vadd.f32 0.0, %v1545
        %v1547 = vpop.f32.mrb[0].mxu0
        %1548 = vmatprep.mubr.bf16.mxu0 0
        %1549 = vmatmul.mubr.bf16.gmra.mrb[0].mxu0 %v1093
        %v1550 = vpop.f32.mrb[0].mxu0
        %v1551 = vadd.f32 0.0, %v1550
        %v1552 = vpop.f32.mrb[0].mxu0
        %v1553 = vpop.f32.mrb[0].mxu0
        %v1554 = vadd.f32 0.0, %v1553
        %v1555 = vpop.f32.mrb[0].mxu0
        %1556 = vmatprep.mubr.bf16.mxu0 0
        %1557 = vmatmul.mubr.bf16.gmra.mrb[0].mxu0 %v1096
        %v1558 = vpop.f32.mrb[0].mxu0
        %v1559 = vadd.f32 0.0, %v1558
        %v1560 = vpop.f32.mrb[0].mxu0
        %v1561 = vpop.f32.mrb[0].mxu0
        %v1562 = vadd.f32 0.0, %v1561
        %v1563 = vpop.f32.mrb[0].mxu0
        %1564 = vmatprep.mubr.bf16.mxu0 0
        %1565 = vmatmul.mubr.bf16.gmra.mrb[0].mxu0 %v1099
        %v1566 = vpop.f32.mrb[0].mxu0
        %v1567 = vadd.f32 0.0, %v1566
        %v1568 = vpop.f32.mrb[0].mxu0
        %v1569 = vpop.f32.mrb[0].mxu0
        %v1570 = vadd.f32 0.0, %v1569
        %v1571 = vpop.f32.mrb[0].mxu0
        %1572 = vmatprep.mubr.bf16.mxu0 0
        %1573 = vmatmul.mubr.bf16.gmra.mrb[0].mxu0 %v1102
        %v1574 = vpop.f32.mrb[0].mxu0
        %v1575 = vadd.f32 0.0, %v1574
        %v1576 = vpop.f32.mrb[0].mxu0
        %v1577 = vpop.f32.mrb[0].mxu0
        %v1578 = vadd.f32 0.0, %v1577
        %v1579 = vpop.f32.mrb[0].mxu0
        %1580 = vmatprep.mubr.bf16.mxu0 0
        %1581 = vmatmul.mubr.bf16.gmra.mrb[0].mxu0 %v1105
        %v1582 = vpop.f32.mrb[0].mxu0
        %v1583 = vadd.f32 0.0, %v1582
        %v1584 = vpop.f32.mrb[0].mxu0
        %v1585 = vpop.f32.mrb[0].mxu0
        %v1586 = vadd.f32 0.0, %v1585
        %v1587 = vpop.f32.mrb[0].mxu0
        %1588 = vmatprep.mubr.bf16.mxu0 0
        %1589 = vmatmul.mubr.bf16.gmra.mrb[0].mxu0 %v1108
        %v1590 = vpop.f32.mrb[0].mxu0
        %v1591 = vadd.f32 0.0, %v1590
        %v1592 = vpop.f32.mrb[0].mxu0
        %v1593 = vpop.f32.mrb[0].mxu0
        %v1594 = vadd.f32 0.0, %v1593
        %v1595 = vpop.f32.mrb[0].mxu0
        %1596 = vmatprep.mubr.bf16.mxu0 0
        %1597 = vmatmul.mubr.bf16.gmra.mrb[0].mxu0 %v1111
        %v1598 = vpop.f32.mrb[0].mxu0
        %v1599 = vadd.f32 0.0, %v1598
        %v1600 = vpop.f32.mrb[0].mxu0
        %v1601 = vpop.f32.mrb[0].mxu0
        %v1602 = vadd.f32 0.0, %v1601
        %v1603 = vpop.f32.mrb[0].mxu0
        %1604 = vmatprep.mubr.bf16.mxu0 0
        %1605 = vmatmul.mubr.bf16.gmra.mrb[0].mxu0 %v1114
        %v1606 = vpop.f32.mrb[0].mxu0
        %v1607 = vadd.f32 0.0, %v1606
        %v1608 = vpop.f32.mrb[0].mxu0
        %v1609 = vpop.f32.mrb[0].mxu0
        %v1610 = vadd.f32 0.0, %v1609
        %v1611 = vpop.f32.mrb[0].mxu0
        %1612 = vmatprep.mubr.bf16.mxu0 0
        %1613 = vmatmul.mubr.bf16.gmra.mrb[0].mxu0 %v1117
        %v1614 = vpop.f32.mrb[0].mxu0
        %v1615 = vadd.f32 0.0, %v1614
        %v1616 = vpop.f32.mrb[0].mxu0
        %v1617 = vpop.f32.mrb[0].mxu0
        %v1618 = vadd.f32 0.0, %v1617
        %v1619 = vpop.f32.mrb[0].mxu0
        %1620 = vmatprep.mubr.bf16.mxu0 0
        %1621 = vmatmul.mubr.bf16.gmra.mrb[0].mxu0 %v1120
        %v1622 = vpop.f32.mrb[0].mxu0
        %v1623 = vadd.f32 0.0, %v1622
        %v1624 = vpop.f32.mrb[0].mxu0
        %v1625 = vpop.f32.mrb[0].mxu0
        %v1626 = vadd.f32 0.0, %v1625
        %v1627 = vpop.f32.mrb[0].mxu0
        %1628 = vmatprep.mubr.bf16.mxu0 0
        %1629 = vmatmul.mubr.bf16.gmra.mrb[0].mxu0 %v1123
        %v1630 = vpop.f32.mrb[0].mxu0
        %v1631 = vadd.f32 0.0, %v1630
        %v1632 = vpop.f32.mrb[0].mxu0
        %v1633 = vpop.f32.mrb[0].mxu0
        %v1634 = vadd.f32 0.0, %v1633
        %v1635 = vpop.f32.mrb[0].mxu0
        %1636 = vmatprep.mubr.bf16.mxu0 0
        %1637 = vmatmul.mubr.bf16.gmra.mrb[0].mxu0 %v1126
        %v1638 = vpop.f32.mrb[0].mxu0
        %v1639 = vadd.f32 0.0, %v1638
        %v1640 = vpop.f32.mrb[0].mxu0
        %v1641 = vpop.f32.mrb[0].mxu0
        %v1642 = vadd.f32 0.0, %v1641
        %v1643 = vpop.f32.mrb[0].mxu0
        %1644 = vmatprep.mubr.bf16.mxu0 0
        %1645 = vmatmul.mubr.bf16.gmra.mrb[0].mxu0 %v1129
        %v1646 = vpop.f32.mrb[0].mxu0
        %v1647 = vadd.f32 0.0, %v1646
        %v1648 = vpop.f32.mrb[0].mxu0
        %v1649 = vpop.f32.mrb[0].mxu0
        %v1650 = vadd.f32 0.0, %v1649
        %v1651 = vpop.f32.mrb[0].mxu0
        %1652 = vmatprep.mubr.bf16.mxu0 0
        %1653 = vmatmul.mubr.bf16.gmra.mrb[0].mxu0 %v1132
        %v1654 = vpop.f32.mrb[0].mxu0
        %v1655 = vadd.f32 0.0, %v1654
        %v1656 = vpop.f32.mrb[0].mxu0
        %v1657 = vpop.f32.mrb[0].mxu0
        %v1658 = vadd.f32 0.0, %v1657
        %v1659 = vpop.f32.mrb[0].mxu0
        %1660 = vmatprep.mubr.bf16.mxu0 0
        %1661 = vmatmul.mubr.bf16.gmra.mrb[0].mxu0 %v1135
        %v1662 = vpop.f32.mrb[0].mxu0
        %v1663 = vadd.f32 0.0, %v1662
        %v1664 = vpop.f32.mrb[0].mxu0
        %v1665 = vpop.f32.mrb[0].mxu0
        %v1666 = vadd.f32 0.0, %v1665
        %v1667 = vpop.f32.mrb[0].mxu0
        %1668 = vmatprep.mubr.bf16.mxu0 0
        %1669 = vmatmul.mubr.bf16.gmra.mrb[0].mxu0 %v1138
        %v1670 = vpop.f32.mrb[0].mxu0
        %v1671 = vadd.f32 0.0, %v1670
        %v1672 = vpop.f32.mrb[0].mxu0
        %v1673 = vpop.f32.mrb[0].mxu0
        %v1674 = vadd.f32 0.0, %v1673
        %v1675 = vpop.f32.mrb[0].mxu0
        %1676 = vmatprep.mubr.bf16.mxu0 0
        %1677 = vmatmul.mubr.bf16.gmra.mrb[0].mxu0 %v1141
        %v1678 = vpop.f32.mrb[0].mxu0
        %v1679 = vadd.f32 0.0, %v1678
        %v1680 = vpop.f32.mrb[0].mxu0
        %v1681 = vpop.f32.mrb[0].mxu0
        %v1682 = vadd.f32 0.0, %v1681
        %v1683 = vpop.f32.mrb[0].mxu0
        %1684 = vmatprep.mubr.bf16.mxu0 0
        %1685 = vmatmul.mubr.bf16.gmra.mrb[0].mxu0 %v1144
        %v1686 = vpop.f32.mrb[0].mxu0
        %v1687 = vadd.f32 0.0, %v1686
        %v1688 = vpop.f32.mrb[0].mxu0
        %v1689 = vpop.f32.mrb[0].mxu0
        %v1690 = vadd.f32 0.0, %v1689
        %v1691 = vpop.f32.mrb[0].mxu0
        %1692 = vmatprep.mubr.bf16.mxu0 0
        %1693 = vmatmul.mubr.bf16.gmra.mrb[0].mxu0 %v1147
        %v1694 = vpop.f32.mrb[0].mxu0
        %v1695 = vadd.f32 0.0, %v1694
        %v1696 = vpop.f32.mrb[0].mxu0
        %v1697 = vpop.f32.mrb[0].mxu0
        %v1698 = vadd.f32 0.0, %v1697
        %v1699 = vpop.f32.mrb[0].mxu0
        %1700 = vmatprep.mubr.bf16.mxu0 0
        %1701 = vmatmul.mubr.bf16.gmra.mrb[0].mxu0 %v1150
        %v1702 = vpop.f32.mrb[0].mxu0
        %v1703 = vadd.f32 0.0, %v1702
        %v1704 = vpop.f32.mrb[0].mxu0
        %v1705 = vpop.f32.mrb[0].mxu0
        %v1706 = vadd.f32 0.0, %v1705
        %v1707 = vpop.f32.mrb[0].mxu0
        %1708 = vmatprep.mubr.bf16.mxu0 0
        %1709 = vmatmul.mubr.bf16.gmra.mrb[0].mxu0 %v1153
        %v1710 = vpop.f32.mrb[0].mxu0
        %v1711 = vadd.f32 0.0, %v1710
        %v1712 = vpop.f32.mrb[0].mxu0
        %v1713 = vpop.f32.mrb[0].mxu0
        %v1714 = vadd.f32 0.0, %v1713
        %v1715 = vpop.f32.mrb[0].mxu0
        %1716 = vmatprep.mubr.bf16.mxu0 0
        %1717 = vmatmul.mubr.bf16.gmra.mrb[0].mxu0 %v1156
        %v1718 = vpop.f32.mrb[0].mxu0
        %v1719 = vadd.f32 0.0, %v1718
        %v1720 = vpop.f32.mrb[0].mxu0
        %v1721 = vpop.f32.mrb[0].mxu0
        %v1722 = vadd.f32 0.0, %v1721
        %v1723 = vpop.f32.mrb[0].mxu0
        %1724 = vmatprep.mubr.bf16.mxu0 0
        %1725 = vmatmul.mubr.bf16.gmra.mrb[0].mxu0 %v1159
        %v1726 = vpop.f32.mrb[0].mxu0
        %v1727 = vadd.f32 0.0, %v1726
        %v1728 = vpop.f32.mrb[0].mxu0
        %v1729 = vpop.f32.mrb[0].mxu0
        %v1730 = vadd.f32 0.0, %v1729
        %v1731 = vpop.f32.mrb[0].mxu0
        %1732 = vmatprep.mubr.bf16.mxu0 0
        %1733 = vmatmul.mubr.bf16.gmra.mrb[0].mxu0 %v1162
        %v1734 = vpop.f32.mrb[0].mxu0
        %v1735 = vadd.f32 0.0, %v1734
        %v1736 = vpop.f32.mrb[0].mxu0
        %v1737 = vpop.f32.mrb[0].mxu0
        %v1738 = vadd.f32 0.0, %v1737
        %v1739 = vpop.f32.mrb[0].mxu0
        %1740 = vmatprep.mubr.bf16.mxu0 0
        %1741 = vmatmul.mubr.bf16.gmra.mrb[0].mxu0 %v1165
        %v1742 = vpop.f32.mrb[0].mxu0
        %v1743 = vadd.f32 0.0, %v1742
        %v1744 = vpop.f32.mrb[0].mxu0
        %v1745 = vpop.f32.mrb[0].mxu0
        %v1746 = vadd.f32 0.0, %v1745
        %v1747 = vpop.f32.mrb[0].mxu0
        %1748 = vmatprep.mubr.bf16.mxu0 0
        %1749 = vmatmul.mubr.bf16.gmra.mrb[0].mxu0 %v1168
        %v1750 = vpop.f32.mrb[0].mxu0
        %v1751 = vadd.f32 0.0, %v1750
        %v1752 = vpop.f32.mrb[0].mxu0
        %v1753 = vpop.f32.mrb[0].mxu0
        %v1754 = vadd.f32 0.0, %v1753
        %v1755 = vpop.f32.mrb[0].mxu0
        %1756 = vmatprep.mubr.bf16.mxu0 0
        %1757 = vmatmul.mubr.bf16.gmra.mrb[0].mxu0 %v1171
        %v1758 = vpop.f32.mrb[0].mxu0
        %v1759 = vadd.f32 0.0, %v1758
        %v1760 = vpop.f32.mrb[0].mxu0
        %v1761 = vpop.f32.mrb[0].mxu0
        %v1762 = vadd.f32 0.0, %v1761
        %v1763 = vpop.f32.mrb[0].mxu0
        %1764 = vmatprep.mubr.bf16.mxu0 0
        %1765 = vmatmul.mubr.bf16.gmra.mrb[0].mxu0 %v1174
        %v1766 = vpop.f32.mrb[0].mxu0
        %v1767 = vadd.f32 0.0, %v1766
        %v1768 = vpop.f32.mrb[0].mxu0
        %v1769 = vpop.f32.mrb[0].mxu0
        %v1770 = vadd.f32 0.0, %v1769
        %v1771 = vpop.f32.mrb[0].mxu0
        %1772 = vmatprep.mubr.bf16.mxu0 0
        %1773 = vmatmul.mubr.bf16.gmra.mrb[0].mxu0 %v1177
        %v1774 = vpop.f32.mrb[0].mxu0
        %v1775 = vadd.f32 0.0, %v1774
        %v1776 = vpop.f32.mrb[0].mxu0
        %v1777 = vpop.f32.mrb[0].mxu0
        %v1778 = vadd.f32 0.0, %v1777
        %v1779 = vpop.f32.mrb[0].mxu0
        %1780 = vmatprep.mubr.bf16.mxu0 0
        %1781 = vmatmul.mubr.bf16.gmra.mrb[0].mxu0 %v1180
        %v1782 = vpop.f32.mrb[0].mxu0
        %v1783 = vadd.f32 0.0, %v1782
        %v1784 = vpop.f32.mrb[0].mxu0
        %v1785 = vpop.f32.mrb[0].mxu0
        %v1786 = vadd.f32 0.0, %v1785
        %v1787 = vpop.f32.mrb[0].mxu0
        %1788 = vmatprep.mubr.bf16.mxu0 0
        %1789 = vmatmul.mubr.bf16.gmra.mrb[0].mxu0 %v1183
        %v1790 = vpop.f32.mrb[0].mxu0
        %v1791 = vadd.f32 0.0, %v1790
        %v1792 = vpop.f32.mrb[0].mxu0
        %v1793 = vpop.f32.mrb[0].mxu0
        %v1794 = vadd.f32 0.0, %v1793
        %v1795 = vpop.f32.mrb[0].mxu0
        %1796 = vmatprep.mubr.bf16.mxu0 0
        %1797 = vmatmul.mubr.bf16.gmra.mrb[0].mxu0 %v1186
        %v1798 = vpop.f32.mrb[0].mxu0
        %v1799 = vadd.f32 0.0, %v1798
        %v1800 = vpop.f32.mrb[0].mxu0
        %v1801 = vpop.f32.mrb[0].mxu0
        %v1802 = vadd.f32 0.0, %v1801
        %v1803 = vpop.f32.mrb[0].mxu0
        %1804 = vmatprep.mubr.bf16.mxu0 0
        %1805 = vmatmul.mubr.bf16.gmra.mrb[0].mxu0 %v1189
        %v1806 = vpop.f32.mrb[0].mxu0
        %v1807 = vadd.f32 0.0, %v1806
        %v1808 = vpop.f32.mrb[0].mxu0
        %v1809 = vpop.f32.mrb[0].mxu0
        %v1810 = vadd.f32 0.0, %v1809
        %v1811 = vpop.f32.mrb[0].mxu0
        %1812 = vmatprep.mubr.bf16.mxu0 0
        %1813 = vmatmul.mubr.bf16.gmra.mrb[0].mxu0 %v1192
        %v1814 = vpop.f32.mrb[0].mxu0
        %v1815 = vadd.f32 0.0, %v1814
        %v1816 = vpop.f32.mrb[0].mxu0
        %v1817 = vpop.f32.mrb[0].mxu0
        %v1818 = vadd.f32 0.0, %v1817
        %v1819 = vpop.f32.mrb[0].mxu0
        %1820 = vmatprep.mubr.bf16.mxu0 0
        %1821 = vmatmul.mubr.bf16.gmra.mrb[0].mxu0 %v1195
        %v1822 = vpop.f32.mrb[0].mxu0
        %v1823 = vadd.f32 0.0, %v1822
        %v1824 = vpop.f32.mrb[0].mxu0
        %v1825 = vpop.f32.mrb[0].mxu0
        %v1826 = vadd.f32 0.0, %v1825
        %v1827 = vpop.f32.mrb[0].mxu0
        %1828 = vmatprep.mubr.bf16.mxu0 0
        %1829 = vmatmul.mubr.bf16.gmra.mrb[0].mxu0 %v1198
        %v1830 = vpop.f32.mrb[0].mxu0
        %v1831 = vadd.f32 0.0, %v1830
        %v1832 = vpop.f32.mrb[0].mxu0
        %v1833 = vpop.f32.mrb[0].mxu0
        %v1834 = vadd.f32 0.0, %v1833
        %v1835 = vpop.f32.mrb[0].mxu0
        %1836 = vmatprep.mubr.bf16.mxu0 0
        %1837 = vmatmul.mubr.bf16.gmra.mrb[0].mxu0 %v1201
        %v1838 = vpop.f32.mrb[0].mxu0
        %v1839 = vadd.f32 0.0, %v1838
        %v1840 = vpop.f32.mrb[0].mxu0
        %v1841 = vpop.f32.mrb[0].mxu0
        %v1842 = vadd.f32 0.0, %v1841
        %v1843 = vpop.f32.mrb[0].mxu0
        %1844 = vmatprep.mubr.bf16.mxu0 0
        %1845 = vmatmul.mubr.bf16.gmra.mrb[0].mxu0 %v1204
        %v1846 = vpop.f32.mrb[0].mxu0
        %v1847 = vadd.f32 0.0, %v1846
        %v1848 = vpop.f32.mrb[0].mxu0
        %v1849 = vpop.f32.mrb[0].mxu0
        %v1850 = vadd.f32 0.0, %v1849
        %v1851 = vpop.f32.mrb[0].mxu0
        %1852 = vmatprep.mubr.bf16.mxu0 0
        %1853 = vmatmul.mubr.bf16.gmra.mrb[0].mxu0 %v1207
        %v1854 = vpop.f32.mrb[0].mxu0
        %v1855 = vadd.f32 0.0, %v1854
        %v1856 = vpop.f32.mrb[0].mxu0
        %v1857 = vpop.f32.mrb[0].mxu0
        %v1858 = vadd.f32 0.0, %v1857
        %v1859 = vpop.f32.mrb[0].mxu0
        %1860 = vmatprep.mubr.bf16.mxu0 0
        %1861 = vmatmul.mubr.bf16.gmra.mrb[0].mxu0 %v1210
        %v1862 = vpop.f32.mrb[0].mxu0
        %v1863 = vadd.f32 0.0, %v1862
        %v1864 = vpop.f32.mrb[0].mxu0
        %v1865 = vpop.f32.mrb[0].mxu0
        %v1866 = vadd.f32 0.0, %v1865
        %v1867 = vpop.f32.mrb[0].mxu0
        %1868 = vmatprep.mubr.bf16.mxu0 0
        %1869 = vmatmul.mubr.bf16.gmra.mrb[0].mxu0 %v1213
        %v1870 = vpop.f32.mrb[0].mxu0
        %v1871 = vadd.f32 0.0, %v1870
        %v1872 = vpop.f32.mrb[0].mxu0
        %v1873 = vpop.f32.mrb[0].mxu0
        %v1874 = vadd.f32 0.0, %v1873
        %v1875 = vpop.f32.mrb[0].mxu0
        %1876 = vmatprep.mubr.bf16.mxu0 0
        %1877 = vmatmul.mubr.bf16.gmra.mrb[0].mxu0 %v1216
        %v1878 = vpop.f32.mrb[0].mxu0
        %v1879 = vadd.f32 0.0, %v1878
        %v1880 = vpop.f32.mrb[0].mxu0
        %v1881 = vpop.f32.mrb[0].mxu0
        %v1882 = vadd.f32 0.0, %v1881
        %v1883 = vpop.f32.mrb[0].mxu0
        %1884 = vmatprep.mubr.bf16.mxu0 0
        %1885 = vmatmul.mubr.bf16.gmra.mrb[0].mxu0 %v1219
        %v1886 = vpop.f32.mrb[0].mxu0
        %v1887 = vadd.f32 0.0, %v1886
        %v1888 = vpop.f32.mrb[0].mxu0
        %v1889 = vpop.f32.mrb[0].mxu0
        %v1890 = vadd.f32 0.0, %v1889
        %v1891 = vpop.f32.mrb[0].mxu0
        %1892 = vmatprep.mubr.bf16.mxu0 0
        %1893 = vmatmul.mubr.bf16.gmra.mrb[0].mxu0 %v1222
        %v1894 = vpop.f32.mrb[0].mxu0
        %v1895 = vadd.f32 0.0, %v1894
        %v1896 = vpop.f32.mrb[0].mxu0
        %v1897 = vpop.f32.mrb[0].mxu0
        %v1898 = vadd.f32 0.0, %v1897
        %v1899 = vpop.f32.mrb[0].mxu0
        %1900 = vmatprep.mubr.bf16.mxu0 0
        %1901 = vmatmul.mubr.bf16.gmra.mrb[0].mxu0 %v1225
        %v1902 = vpop.f32.mrb[0].mxu0
        %v1903 = vadd.f32 0.0, %v1902
        %v1904 = vpop.f32.mrb[0].mxu0
        %v1905 = vpop.f32.mrb[0].mxu0
        %v1906 = vadd.f32 0.0, %v1905
        %v1907 = vpop.f32.mrb[0].mxu0
        %1908 = vmatprep.mubr.bf16.mxu0 0
        %1909 = vmatmul.mubr.bf16.gmra.mrb[0].mxu0 %v1228
        %v1910 = vpop.f32.mrb[0].mxu0
        %v1911 = vadd.f32 0.0, %v1910
        %v1912 = vpop.f32.mrb[0].mxu0
        %v1913 = vpop.f32.mrb[0].mxu0
        %v1914 = vadd.f32 0.0, %v1913
        %v1915 = vpop.f32.mrb[0].mxu0
        %1916 = vmatprep.mubr.bf16.mxu0 0
        %1917 = vmatmul.mubr.bf16.gmra.mrb[0].mxu0 %v1231
        %v1918 = vpop.f32.mrb[0].mxu0
        %v1919 = vadd.f32 0.0, %v1918
        %v1920 = vpop.f32.mrb[0].mxu0
        %v1921 = vpop.f32.mrb[0].mxu0
        %v1922 = vadd.f32 0.0, %v1921
        %v1923 = vpop.f32.mrb[0].mxu0
        %1924 = vmatprep.mubr.bf16.mxu0 0
        %1925 = vmatmul.mubr.bf16.gmra.mrb[0].mxu0 %v1234
        %v1926 = vpop.f32.mrb[0].mxu0
        %v1927 = vadd.f32 0.0, %v1926
        %v1928 = vpop.f32.mrb[0].mxu0
        %v1929 = vpop.f32.mrb[0].mxu0
        %v1930 = vadd.f32 0.0, %v1929
        %v1931 = vpop.f32.mrb[0].mxu0
        %1932 = vmatprep.mubr.bf16.mxu0 0
        %1933 = vmatmul.mubr.bf16.gmra.mrb[0].mxu0 %v1237
        %v1934 = vpop.f32.mrb[0].mxu0
        %v1935 = vadd.f32 0.0, %v1934
        %v1936 = vpop.f32.mrb[0].mxu0
        %v1937 = vpop.f32.mrb[0].mxu0
        %v1938 = vadd.f32 0.0, %v1937
        %v1939 = vpop.f32.mrb[0].mxu0
        %1940 = vmatprep.mubr.bf16.mxu0 0
        %1941 = vmatmul.mubr.bf16.gmra.mrb[0].mxu0 %v1240
        %v1942 = vpop.f32.mrb[0].mxu0
        %v1943 = vadd.f32 0.0, %v1942
        %v1944 = vpop.f32.mrb[0].mxu0
        %v1945 = vpop.f32.mrb[0].mxu0
        %v1946 = vadd.f32 0.0, %v1945
        %v1947 = vpop.f32.mrb[0].mxu0
        %1948 = vmatprep.mubr.bf16.mxu0 0
        %1949 = vmatmul.mubr.bf16.gmra.mrb[0].mxu0 %v1243
        %v1950 = vpop.f32.mrb[0].mxu0
        %v1951 = vadd.f32 0.0, %v1950
        %v1952 = vpop.f32.mrb[0].mxu0
        %v1953 = vpop.f32.mrb[0].mxu0
        %v1954 = vadd.f32 0.0, %v1953
        %v1955 = vpop.f32.mrb[0].mxu0
        %1956 = vmatprep.mubr.bf16.mxu0 0
        %1957 = vmatmul.mubr.bf16.gmra.mrb[0].mxu0 %v1246
        %v1958 = vpop.f32.mrb[0].mxu0
        %v1959 = vadd.f32 0.0, %v1958
        %v1960 = vpop.f32.mrb[0].mxu0
        %v1961 = vpop.f32.mrb[0].mxu0
        %v1962 = vadd.f32 0.0, %v1961
        %v1963 = vpop.f32.mrb[0].mxu0
        %1964 = vmatprep.mubr.bf16.mxu0 0
        %1965 = vmatmul.mubr.bf16.gmra.mrb[0].mxu0 %v1249
        %v1966 = vpop.f32.mrb[0].mxu0
        %v1967 = vadd.f32 0.0, %v1966
        %v1968 = vpop.f32.mrb[0].mxu0
        %v1969 = vpop.f32.mrb[0].mxu0
        %v1970 = vadd.f32 0.0, %v1969
        %v1971 = vpop.f32.mrb[0].mxu0
        %1972 = vmatprep.mubr.bf16.mxu0 0
        %1973 = vmatmul.mubr.bf16.gmra.mrb[0].mxu0 %v1252
        %v1974 = vpop.f32.mrb[0].mxu0
        %v1975 = vadd.f32 0.0, %v1974
        %v1976 = vpop.f32.mrb[0].mxu0
        %v1977 = vpop.f32.mrb[0].mxu0
        %v1978 = vadd.f32 0.0, %v1977
        %v1979 = vpop.f32.mrb[0].mxu0
        %1980 = vmatprep.mubr.bf16.mxu0 0
        %1981 = vmatmul.mubr.bf16.gmra.mrb[0].mxu0 %v1255
        %v1982 = vpop.f32.mrb[0].mxu0
        %v1983 = vadd.f32 0.0, %v1982
        %v1984 = vpop.f32.mrb[0].mxu0
        %v1985 = vpop.f32.mrb[0].mxu0
        %v1986 = vadd.f32 0.0, %v1985
        %v1987 = vpop.f32.mrb[0].mxu0
        %1988 = vmatprep.mubr.bf16.mxu0 0
        %1989 = vmatmul.mubr.bf16.gmra.mrb[0].mxu0 %v1258
        %v1990 = vpop.f32.mrb[0].mxu0
        %v1991 = vadd.f32 0.0, %v1990
        %v1992 = vpop.f32.mrb[0].mxu0
        %v1993 = vpop.f32.mrb[0].mxu0
        %v1994 = vadd.f32 0.0, %v1993
        %v1995 = vpop.f32.mrb[0].mxu0
        %1996 = vmatprep.mubr.bf16.mxu0 0
        %1997 = vmatmul.mubr.bf16.gmra.mrb[0].mxu0 %v1261
        %v1998 = vpop.f32.mrb[0].mxu0
        %v1999 = vadd.f32 0.0, %v1998
        %v2000 = vpop.f32.mrb[0].mxu0
        %v2001 = vpop.f32.mrb[0].mxu0
        %v2002 = vadd.f32 0.0, %v2001
        %v2003 = vpop.f32.mrb[0].mxu0
        %2004 = vmatprep.mubr.bf16.mxu0 0
        %2005 = vmatmul.mubr.bf16.gmra.mrb[0].mxu0 %v1264
        %v2006 = vpop.f32.mrb[0].mxu0
        %v2007 = vadd.f32 0.0, %v2006
        %v2008 = vpop.f32.mrb[0].mxu0
        %v2009 = vpop.f32.mrb[0].mxu0
        %v2010 = vadd.f32 0.0, %v2009
        %v2011 = vpop.f32.mrb[0].mxu0
        %2012 = vmatprep.mubr.bf16.mxu0 0
        %2013 = vmatmul.mubr.bf16.gmra.mrb[0].mxu0 %v1267
        %v2014 = vpop.f32.mrb[0].mxu0
        %v2015 = vadd.f32 0.0, %v2014
        %v2016 = vpop.f32.mrb[0].mxu0
        %v2017 = vpop.f32.mrb[0].mxu0
        %v2018 = vadd.f32 0.0, %v2017
        %v2019 = vpop.f32.mrb[0].mxu0
        %2020 = vmatprep.mubr.bf16.mxu0 0
        %2021 = vmatmul.mubr.bf16.gmra.mrb[0].mxu0 %v1270
        %v2022 = vpop.f32.mrb[0].mxu0
        %v2023 = vadd.f32 0.0, %v2022
        %v2024 = vpop.f32.mrb[0].mxu0
        %v2025 = vpop.f32.mrb[0].mxu0
        %v2026 = vadd.f32 0.0, %v2025
        %v2027 = vpop.f32.mrb[0].mxu0
        %2028 = vmatprep.mubr.bf16.mxu0 0
        %2029 = vmatmul.mubr.bf16.gmra.mrb[0].mxu0 %v1273
        %v2030 = vpop.f32.mrb[0].mxu0
        %v2031 = vadd.f32 0.0, %v2030
        %v2032 = vpop.f32.mrb[0].mxu0
        %v2033 = vpop.f32.mrb[0].mxu0
        %v2034 = vadd.f32 0.0, %v2033
        %v2035 = vpop.f32.mrb[0].mxu0
        %2036 = vmatprep.mubr.bf16.mxu0 0
        %2037 = vmatmul.mubr.bf16.gmra.mrb[0].mxu0 %v1276
        %v2038 = vpop.f32.mrb[0].mxu0
        %v2039 = vadd.f32 0.0, %v2038
        %v2040 = vpop.f32.mrb[0].mxu0
        %v2041 = vpop.f32.mrb[0].mxu0
        %v2042 = vadd.f32 0.0, %v2041
        %v2043 = vpop.f32.mrb[0].mxu0
        %2044 = vmatprep.mubr.bf16.mxu0 0
        %2045 = vmatmul.mubr.bf16.gmra.mrb[0].mxu0 %v1279
        %v2046 = vpop.f32.mrb[0].mxu0
        %v2047 = vadd.f32 0.0, %v2046
        %v2048 = vpop.f32.mrb[0].mxu0
        %v2049 = vpop.f32.mrb[0].mxu0
        %v2050 = vadd.f32 0.0, %v2049
        %v2051 = vpop.f32.mrb[0].mxu0
        %2052 = vmatprep.mubr.bf16.mxu0 0
        %2053 = vmatmul.mubr.bf16.gmra.mrb[0].mxu0 %v1282
        %v2054 = vpop.f32.mrb[0].mxu0
        %v2055 = vadd.f32 0.0, %v2054
        %v2056 = vpop.f32.mrb[0].mxu0
        %v2057 = vpop.f32.mrb[0].mxu0
        %v2058 = vadd.f32 0.0, %v2057
        %v2059 = vpop.f32.mrb[0].mxu0
        %2060 = vmatprep.mubr.bf16.mxu0 0
        %2061 = vmatmul.mubr.bf16.gmra.mrb[0].mxu0 %v1285
        %v2062 = vpop.f32.mrb[0].mxu0
        %v2063 = vadd.f32 0.0, %v2062
        %v2064 = vpop.f32.mrb[0].mxu0
        %v2065 = vpop.f32.mrb[0].mxu0
        %v2066 = vadd.f32 0.0, %v2065
        %v2067 = vpop.f32.mrb[0].mxu0
        %2068 = vmatprep.mubr.bf16.mxu0 0
        %2069 = vmatmul.mubr.bf16.gmra.mrb[0].mxu0 %v1288
        %v2070 = vpop.f32.mrb[0].mxu0
        %v2071 = vadd.f32 0.0, %v2070
        %v2072 = vpop.f32.mrb[0].mxu0
        %v2073 = vpop.f32.mrb[0].mxu0
        %v2074 = vadd.f32 0.0, %v2073
        %v2075 = vpop.f32.mrb[0].mxu0
        %2076 = vmatprep.mubr.bf16.mxu0 0
        %2077 = vmatmul.mubr.bf16.gmra.mrb[0].mxu0 %v1291
        %v2078 = vpop.f32.mrb[0].mxu0
        %v2079 = vadd.f32 0.0, %v2078
        %v2080 = vpop.f32.mrb[0].mxu0
        %v2081 = vpop.f32.mrb[0].mxu0
        %v2082 = vadd.f32 0.0, %v2081
        %v2083 = vpop.f32.mrb[0].mxu0
        %2084 = vmatprep.mubr.bf16.mxu0 0
        %2085 = vmatmul.mubr.bf16.gmra.mrb[0].mxu0 %v1294
        %v2086 = vpop.f32.mrb[0].mxu0
        %v2087 = vadd.f32 0.0, %v2086
        %v2088 = vpop.f32.mrb[0].mxu0
        %v2089 = vpop.f32.mrb[0].mxu0
        %v2090 = vadd.f32 0.0, %v2089
        %v2091 = vpop.f32.mrb[0].mxu0
        %2092 = vmatprep.mubr.bf16.mxu0 0
        %2093 = vmatmul.mubr.bf16.gmra.mrb[0].mxu0 %v1297
        %v2094 = vpop.f32.mrb[0].mxu0
        %v2095 = vadd.f32 0.0, %v2094
        %v2096 = vpop.f32.mrb[0].mxu0
        %v2097 = vpop.f32.mrb[0].mxu0
        %v2098 = vadd.f32 0.0, %v2097
        %v2099 = vpop.f32.mrb[0].mxu0
        %2100 = vmatprep.mubr.bf16.mxu0 0
        %2101 = vmatmul.mubr.bf16.gmra.mrb[0].mxu0 %v1300
        %v2102 = vpop.f32.mrb[0].mxu0
        %v2103 = vadd.f32 0.0, %v2102
        %v2104 = vpop.f32.mrb[0].mxu0
        %v2105 = vpop.f32.mrb[0].mxu0
        %v2106 = vadd.f32 0.0, %v2105
        %v2107 = vpop.f32.mrb[0].mxu0
        %2108 = vmatprep.mubr.bf16.mxu0 0
        %2109 = vmatmul.mubr.bf16.gmra.mrb[0].mxu0 %v1303
        %v2110 = vpop.f32.mrb[0].mxu0
        %v2111 = vadd.f32 0.0, %v2110
        %v2112 = vpop.f32.mrb[0].mxu0
        %v2113 = vpop.f32.mrb[0].mxu0
        %v2114 = vadd.f32 0.0, %v2113
        %v2115 = vpop.f32.mrb[0].mxu0
        %2116 = vmatprep.mubr.bf16.mxu0 0
        %2117 = vmatmul.mubr.bf16.gmra.mrb[0].mxu0 %v1306
        %v2118 = vpop.f32.mrb[0].mxu0
        %v2119 = vadd.f32 0.0, %v2118
        %v2120 = vpop.f32.mrb[0].mxu0
        %v2121 = vpop.f32.mrb[0].mxu0
        %v2122 = vadd.f32 0.0, %v2121
        %v2123 = vpop.f32.mrb[0].mxu0
        %2124 = vmatprep.mubr.bf16.mxu0 0
        %2125 = vmatmul.mubr.bf16.gmra.mrb[0].mxu0 %v1309
        %v2126 = vpop.f32.mrb[0].mxu0
        %v2127 = vadd.f32 0.0, %v2126
        %v2128 = vpop.f32.mrb[0].mxu0
        %v2129 = vpop.f32.mrb[0].mxu0
        %v2130 = vadd.f32 0.0, %v2129
        %v2131 = vpop.f32.mrb[0].mxu0
        %2132 = vmatprep.mubr.bf16.mxu0 0
        %2133 = vmatmul.mubr.bf16.gmra.mrb[0].mxu0 %v1312
        %v2134 = vpop.f32.mrb[0].mxu0
        %v2135 = vadd.f32 0.0, %v2134
        %v2136 = vpop.f32.mrb[0].mxu0
        %v2137 = vpop.f32.mrb[0].mxu0
        %v2138 = vadd.f32 0.0, %v2137
        %v2139 = vpop.f32.mrb[0].mxu0
        %2140 = vmatprep.mubr.bf16.mxu0 0
        %2141 = vmatmul.mubr.bf16.gmra.mrb[0].mxu0 %v1315
        %v2142 = vpop.f32.mrb[0].mxu0
        %v2143 = vadd.f32 0.0, %v2142
        %v2144 = vpop.f32.mrb[0].mxu0
        %v2145 = vpop.f32.mrb[0].mxu0
        %v2146 = vadd.f32 0.0, %v2145
        %v2147 = vpop.f32.mrb[0].mxu0
        %2148 = vmatprep.mubr.bf16.mxu0 0
        %2149 = vmatmul.mubr.bf16.gmra.mrb[0].mxu0 %v1318
        %v2150 = vpop.f32.mrb[0].mxu0
        %v2151 = vadd.f32 0.0, %v2150
        %v2152 = vpop.f32.mrb[0].mxu0
        %v2153 = vpop.f32.mrb[0].mxu0
        %v2154 = vadd.f32 0.0, %v2153
        %v2155 = vpop.f32.mrb[0].mxu0
        %2156 = vmatprep.mubr.bf16.mxu0 0
        %2157 = vmatmul.mubr.bf16.gmra.mrb[0].mxu0 %v1321
        %v2158 = vpop.f32.mrb[0].mxu0
        %v2159 = vadd.f32 0.0, %v2158
        %v2160 = vpop.f32.mrb[0].mxu0
        %v2161 = vpop.f32.mrb[0].mxu0
        %v2162 = vadd.f32 0.0, %v2161
        %v2163 = vpop.f32.mrb[0].mxu0
        %2164 = vmatprep.mubr.bf16.mxu0 0
        %2165 = vmatmul.mubr.bf16.gmra.mrb[0].mxu0 %v1324
        %v2166 = vpop.f32.mrb[0].mxu0
        %v2167 = vadd.f32 0.0, %v2166
        %v2168 = vpop.f32.mrb[0].mxu0
        %v2169 = vpop.f32.mrb[0].mxu0
        %v2170 = vadd.f32 0.0, %v2169
        %v2171 = vpop.f32.mrb[0].mxu0
        %2172 = vmatprep.mubr.bf16.mxu0 0
        %2173 = vmatmul.mubr.bf16.gmra.mrb[0].mxu0 %v1327
        %v2174 = vpop.f32.mrb[0].mxu0
        %v2175 = vadd.f32 0.0, %v2174
        %v2176 = vpop.f32.mrb[0].mxu0
        %v2177 = vpop.f32.mrb[0].mxu0
        %v2178 = vadd.f32 0.0, %v2177
        %v2179 = vpop.f32.mrb[0].mxu0
        %2180 = vmatprep.mubr.bf16.mxu0 0
        %2181 = vmatmul.mubr.bf16.gmra.mrb[0].mxu0 %v1330
        %v2182 = vpop.f32.mrb[0].mxu0
        %v2183 = vadd.f32 0.0, %v2182
        %v2184 = vpop.f32.mrb[0].mxu0
        %v2185 = vpop.f32.mrb[0].mxu0
        %v2186 = vadd.f32 0.0, %v2185
        %v2187 = vpop.f32.mrb[0].mxu0
        %2188 = vmatprep.mubr.bf16.mxu0 0
        %2189 = vmatmul.mubr.bf16.gmra.mrb[0].mxu0 %v1333
        %v2190 = vpop.f32.mrb[0].mxu0
        %v2191 = vadd.f32 0.0, %v2190
        %v2192 = vpop.f32.mrb[0].mxu0
        %v2193 = vpop.f32.mrb[0].mxu0
        %v2194 = vadd.f32 0.0, %v2193
        %v2195 = vpop.f32.mrb[0].mxu0
        %2196 = vmatprep.mubr.bf16.mxu0 0
        %2197 = vmatmul.mubr.bf16.gmra.mrb[0].mxu0 %v1336
        %v2198 = vpop.f32.mrb[0].mxu0
        %v2199 = vadd.f32 0.0, %v2198
        %v2200 = vpop.f32.mrb[0].mxu0
        %v2201 = vpop.f32.mrb[0].mxu0
        %v2202 = vadd.f32 0.0, %v2201
        %v2203 = vpop.f32.mrb[0].mxu0
        %2204 = vmatprep.mubr.bf16.mxu0 0
        %2205 = vmatmul.mubr.bf16.gmra.mrb[0].mxu0 %v1339
        %v2206 = vpop.f32.mrb[0].mxu0
        %v2207 = vadd.f32 0.0, %v2206
        %v2208 = vpop.f32.mrb[0].mxu0
        %v2209 = vpop.f32.mrb[0].mxu0
        %v2210 = vadd.f32 0.0, %v2209
        %v2211 = vpop.f32.mrb[0].mxu0
        %2212 = vmatprep.mubr.bf16.mxu0 0
        %2213 = vmatmul.mubr.bf16.gmra.mrb[0].mxu0 %v1342
        %v2214 = vpop.f32.mrb[0].mxu0
        %v2215 = vadd.f32 0.0, %v2214
        %v2216 = vpop.f32.mrb[0].mxu0
        %v2217 = vpop.f32.mrb[0].mxu0
        %v2218 = vadd.f32 0.0, %v2217
        %v2219 = vpop.f32.mrb[0].mxu0
        %2220 = vmatprep.mubr.bf16.mxu0 0
        %2221 = vmatmul.mubr.bf16.gmra.mrb[0].mxu0 %v1345
        %v2222 = vpop.f32.mrb[0].mxu0
        %v2223 = vadd.f32 0.0, %v2222
        %v2224 = vpop.f32.mrb[0].mxu0
        %v2225 = vpop.f32.mrb[0].mxu0
        %v2226 = vadd.f32 0.0, %v2225
        %v2227 = vpop.f32.mrb[0].mxu0
        %2228 = vmatprep.mubr.bf16.mxu0 0
        %2229 = vmatmul.mubr.bf16.gmra.mrb[0].mxu0 %v1348
        %v2230 = vpop.f32.mrb[0].mxu0
        %v2231 = vadd.f32 0.0, %v2230
        %v2232 = vpop.f32.mrb[0].mxu0
        %v2233 = vpop.f32.mrb[0].mxu0
        %v2234 = vadd.f32 0.0, %v2233
        %v2235 = vpop.f32.mrb[0].mxu0
        %2236 = vmatprep.mubr.bf16.mxu0 0
        %2237 = vmatmul.mubr.bf16.gmra.mrb[0].mxu0 %v1351
        %v2238 = vpop.f32.mrb[0].mxu0
        %v2239 = vadd.f32 0.0, %v2238
        %v2240 = vpop.f32.mrb[0].mxu0
        %v2241 = vpop.f32.mrb[0].mxu0
        %v2242 = vadd.f32 0.0, %v2241
        %v2243 = vpop.f32.mrb[0].mxu0
        %2244 = vmatprep.mubr.bf16.mxu0 0
        %2245 = vmatmul.mubr.bf16.gmra.mrb[0].mxu0 %v1354
        %v2246 = vpop.f32.mrb[0].mxu0
        %v2247 = vadd.f32 0.0, %v2246
        %v2248 = vpop.f32.mrb[0].mxu0
        %v2249 = vpop.f32.mrb[0].mxu0
        %v2250 = vadd.f32 0.0, %v2249
        %v2251 = vpop.f32.mrb[0].mxu0
        %2252 = vmatprep.mubr.bf16.mxu0 0
        %2253 = vmatmul.mubr.bf16.gmra.mrb[0].mxu0 %v1357
        %v2254 = vpop.f32.mrb[0].mxu0
        %v2255 = vadd.f32 0.0, %v2254
        %v2256 = vpop.f32.mrb[0].mxu0
        %v2257 = vpop.f32.mrb[0].mxu0
        %v2258 = vadd.f32 0.0, %v2257
        %v2259 = vpop.f32.mrb[0].mxu0
        %2260 = vmatprep.mubr.bf16.mxu0 0
        %2261 = vmatmul.mubr.bf16.gmra.mrb[0].mxu0 %v1360
        %v2262 = vpop.f32.mrb[0].mxu0
        %v2263 = vadd.f32 0.0, %v2262
        %v2264 = vpop.f32.mrb[0].mxu0
        %v2265 = vpop.f32.mrb[0].mxu0
        %v2266 = vadd.f32 0.0, %v2265
        %v2267 = vpop.f32.mrb[0].mxu0
        %2268 = vmatprep.mubr.bf16.mxu0 0
        %2269 = vmatmul.mubr.bf16.gmra.mrb[0].mxu0 %v1363
        %v2270 = vpop.f32.mrb[0].mxu0
        %v2271 = vadd.f32 0.0, %v2270
        %v2272 = vpop.f32.mrb[0].mxu0
        %v2273 = vpop.f32.mrb[0].mxu0
        %v2274 = vadd.f32 0.0, %v2273
        %v2275 = vpop.f32.mrb[0].mxu0
        %2276 = vmatprep.mubr.bf16.mxu0 0
        %2277 = vmatmul.mubr.bf16.gmra.mrb[0].mxu0 %v1366
        %v2278 = vpop.f32.mrb[0].mxu0
        %v2279 = vadd.f32 0.0, %v2278
        %v2280 = vpop.f32.mrb[0].mxu0
        %v2281 = vpop.f32.mrb[0].mxu0
        %v2282 = vadd.f32 0.0, %v2281
        %v2283 = vpop.f32.mrb[0].mxu0
        %2284 = vmatprep.mubr.bf16.mxu0 0
        %2285 = vmatmul.mubr.bf16.gmra.mrb[0].mxu0 %v1369
        %v2286 = vpop.f32.mrb[0].mxu0
        %v2287 = vadd.f32 0.0, %v2286
        %v2288 = vpop.f32.mrb[0].mxu0
        %v2289 = vpop.f32.mrb[0].mxu0
        %v2290 = vadd.f32 0.0, %v2289
        %v2291 = vpop.f32.mrb[0].mxu0
        %2292 = vmatprep.mubr.bf16.mxu0 0
        %2293 = vmatmul.mubr.bf16.gmra.mrb[0].mxu0 %v1372
        %v2294 = vpop.f32.mrb[0].mxu0
        %v2295 = vadd.f32 0.0, %v2294
        %v2296 = vpop.f32.mrb[0].mxu0
        %v2297 = vpop.f32.mrb[0].mxu0
        %v2298 = vadd.f32 0.0, %v2297
        %v2299 = vpop.f32.mrb[0].mxu0
        %2300 = vmatprep.mubr.bf16.mxu0 0
        %2301 = vmatmul.mubr.bf16.gmra.mrb[0].mxu0 %v1375
        %v2302 = vpop.f32.mrb[0].mxu0
        %v2303 = vadd.f32 0.0, %v2302
        %v2304 = vpop.f32.mrb[0].mxu0
        %v2305 = vpop.f32.mrb[0].mxu0
        %v2306 = vadd.f32 0.0, %v2305
        %v2307 = vpop.f32.mrb[0].mxu0
        %2308 = vmatprep.mubr.bf16.mxu0 0
        %2309 = vmatmul.mubr.bf16.gmra.mrb[0].mxu0 %v1378
        %v2310 = vpop.f32.mrb[0].mxu0
        %v2311 = vadd.f32 0.0, %v2310
        %v2312 = vpop.f32.mrb[0].mxu0
        %v2313 = vpop.f32.mrb[0].mxu0
        %v2314 = vadd.f32 0.0, %v2313
        %v2315 = vpop.f32.mrb[0].mxu0
        %2316 = vmatprep.mubr.bf16.mxu0 0
        %2317 = vmatmul.mubr.bf16.gmra.mrb[0].mxu0 %v1381
        %v2318 = vpop.f32.mrb[0].mxu0
        %v2319 = vadd.f32 0.0, %v2318
        %v2320 = vpop.f32.mrb[0].mxu0
        %v2321 = vpop.f32.mrb[0].mxu0
        %v2322 = vadd.f32 0.0, %v2321
        %v2323 = vpop.f32.mrb[0].mxu0
        %2324 = vmatprep.mubr.bf16.mxu0 0
        %2325 = vmatmul.mubr.bf16.gmra.mrb[0].mxu0 %v1384
        %v2326 = vpop.f32.mrb[0].mxu0
        %v2327 = vadd.f32 0.0, %v2326
        %v2328 = vpop.f32.mrb[0].mxu0
        %v2329 = vpop.f32.mrb[0].mxu0
        %v2330 = vadd.f32 0.0, %v2329
        %v2331 = vpop.f32.mrb[0].mxu0
        %2332 = vmatprep.mubr.bf16.mxu0 0
        %2333 = vmatmul.mubr.bf16.gmra.mrb[0].mxu0 %v1387
        %v2334 = vpop.f32.mrb[0].mxu0
        %v2335 = vadd.f32 0.0, %v2334
        %v2336 = vpop.f32.mrb[0].mxu0
        %v2337 = vpop.f32.mrb[0].mxu0
        %v2338 = vadd.f32 0.0, %v2337
        %v2339 = vpop.f32.mrb[0].mxu0
        %2340 = vmatprep.mubr.bf16.mxu0 0
        %2341 = vmatmul.mubr.bf16.gmra.mrb[0].mxu0 %v1390
        %v2342 = vpop.f32.mrb[0].mxu0
        %v2343 = vadd.f32 0.0, %v2342
        %v2344 = vpop.f32.mrb[0].mxu0
        %v2345 = vpop.f32.mrb[0].mxu0
        %v2346 = vadd.f32 0.0, %v2345
        %v2347 = vpop.f32.mrb[0].mxu0
        %2348 = vmatprep.mubr.bf16.mxu0 0
        %2349 = vmatmul.mubr.bf16.gmra.mrb[0].mxu0 %v1393
        %v2350 = vpop.f32.mrb[0].mxu0
        %v2351 = vadd.f32 0.0, %v2350
        %v2352 = vpop.f32.mrb[0].mxu0
        %v2353 = vpop.f32.mrb[0].mxu0
        %v2354 = vadd.f32 0.0, %v2353
        %v2355 = vpop.f32.mrb[0].mxu0
        %2356 = vmatprep.mubr.bf16.mxu0 0
        %2357 = vmatmul.mubr.bf16.gmra.mrb[0].mxu0 %v1396
        %v2358 = vpop.f32.mrb[0].mxu0
        %v2359 = vadd.f32 0.0, %v2358
        %v2360 = vpop.f32.mrb[0].mxu0
        %v2361 = vpop.f32.mrb[0].mxu0
        %v2362 = vadd.f32 0.0, %v2361
        %v2363 = vpop.f32.mrb[0].mxu0
        %2364 = vmatprep.mubr.bf16.mxu0 0
        %2365 = vmatmul.mubr.bf16.gmra.mrb[0].mxu0 %v1399
        %v2366 = vpop.f32.mrb[0].mxu0
        %v2367 = vadd.f32 0.0, %v2366
        %v2368 = vpop.f32.mrb[0].mxu0
        %v2369 = vpop.f32.mrb[0].mxu0
        %v2370 = vadd.f32 0.0, %v2369
        %v2371 = vpop.f32.mrb[0].mxu0
        %2372 = vmatprep.mubr.bf16.mxu0 0
        %2373 = vmatmul.mubr.bf16.gmra.mrb[0].mxu0 %v1402
        %v2374 = vpop.f32.mrb[0].mxu0
        %v2375 = vadd.f32 0.0, %v2374
        %v2376 = vpop.f32.mrb[0].mxu0
        %v2377 = vpop.f32.mrb[0].mxu0
        %v2378 = vadd.f32 0.0, %v2377
        %v2379 = vpop.f32.mrb[0].mxu0
        %2380 = vmatprep.mubr.bf16.mxu0 0
        %2381 = vmatmul.mubr.bf16.gmra.mrb[0].mxu0 %v1405
        %v2382 = vpop.f32.mrb[0].mxu0
        %v2383 = vadd.f32 0.0, %v2382
        %v2384 = vpop.f32.mrb[0].mxu0
        %v2385 = vpop.f32.mrb[0].mxu0
        %v2386 = vadd.f32 0.0, %v2385
        %v2387 = vpop.f32.mrb[0].mxu0
        %2388 = vmatprep.mubr.bf16.mxu0 0
        %2389 = vmatmul.mubr.bf16.gmra.mrb[0].mxu0 %v1408
        %v2390 = vpop.f32.mrb[0].mxu0
        %v2391 = vadd.f32 0.0, %v2390
        %v2392 = vpop.f32.mrb[0].mxu0
        %v2393 = vpop.f32.mrb[0].mxu0
        %v2394 = vadd.f32 0.0, %v2393
        %v2395 = vpop.f32.mrb[0].mxu0
        %2396 = vmatprep.mubr.bf16.mxu0 0
        %2397 = vmatmul.mubr.bf16.gmra.mrb[0].mxu0 %v1411
        %v2398 = vpop.f32.mrb[0].mxu0
        %v2399 = vadd.f32 0.0, %v2398
        %v2400 = vpop.f32.mrb[0].mxu0
        %v2401 = vpop.f32.mrb[0].mxu0
        %v2402 = vadd.f32 0.0, %v2401
        %v2403 = vpop.f32.mrb[0].mxu0
        %2404 = vmatprep.mubr.bf16.mxu0 0
        %2405 = vmatmul.mubr.bf16.gmra.mrb[0].mxu0 %v1414
        %v2406 = vpop.f32.mrb[0].mxu0
        %v2407 = vadd.f32 0.0, %v2406
        %v2408 = vpop.f32.mrb[0].mxu0
        %v2409 = vpop.f32.mrb[0].mxu0
        %v2410 = vadd.f32 0.0, %v2409
        %v2411 = vpop.f32.mrb[0].mxu0
        %2412 = vmatprep.mubr.bf16.mxu0 0
        %2413 = vmatmul.mubr.bf16.gmra.mrb[0].mxu0 %v1417
        %v2414 = vpop.f32.mrb[0].mxu0
        %v2415 = vadd.f32 0.0, %v2414
        %v2416 = vpop.f32.mrb[0].mxu0
        %v2417 = vpop.f32.mrb[0].mxu0
        %v2418 = vadd.f32 0.0, %v2417
        %v2419 = vpop.f32.mrb[0].mxu0
        %2420 = vmatprep.mubr.bf16.mxu0 0
        %2421 = vmatmul.mubr.bf16.gmra.mrb[0].mxu0 %v1420
        %v2422 = vpop.f32.mrb[0].mxu0
        %v2423 = vadd.f32 0.0, %v2422
        %v2424 = vpop.f32.mrb[0].mxu0
        %v2425 = vpop.f32.mrb[0].mxu0
        %v2426 = vadd.f32 0.0, %v2425
        %v2427 = vpop.f32.mrb[0].mxu0
        %2428 = vmatprep.mubr.bf16.mxu0 0
        %2429 = vmatmul.mubr.bf16.gmra.mrb[0].mxu0 %v1423
        %v2430 = vpop.f32.mrb[0].mxu0
        %v2431 = vadd.f32 0.0, %v2430
        %v2432 = vpop.f32.mrb[0].mxu0
        %v2433 = vpop.f32.mrb[0].mxu0
        %v2434 = vadd.f32 0.0, %v2433
        %v2435 = vpop.f32.mrb[0].mxu0
        %2436 = vmatprep.mubr.bf16.mxu0 0
        %2437 = vmatmul.mubr.bf16.gmra.mrb[0].mxu0 %v1426
        %v2438 = vpop.f32.mrb[0].mxu0
        %v2439 = vadd.f32 0.0, %v2438
        %v2440 = vpop.f32.mrb[0].mxu0
        %v2441 = vpop.f32.mrb[0].mxu0
        %v2442 = vadd.f32 0.0, %v2441
        %v2443 = vpop.f32.mrb[0].mxu0
        %2444 = vmatprep.mubr.bf16.mxu0 0
        %2445 = vmatmul.mubr.bf16.gmra.mrb[0].mxu0 %v1429
        %v2446 = vpop.f32.mrb[0].mxu0
        %v2447 = vadd.f32 0.0, %v2446
        %v2448 = vpop.f32.mrb[0].mxu0
        %v2449 = vpop.f32.mrb[0].mxu0
        %v2450 = vadd.f32 0.0, %v2449
        %v2451 = vpop.f32.mrb[0].mxu0
        %2452 = vmatprep.mubr.bf16.mxu0 0
        %2453 = vmatmul.mubr.bf16.gmra.mrb[0].mxu0 %v1432
        %v2454 = vpop.f32.mrb[0].mxu0
        %v2455 = vadd.f32 0.0, %v2454
        %v2456 = vpop.f32.mrb[0].mxu0
        %v2457 = vpop.f32.mrb[0].mxu0
        %v2458 = vadd.f32 0.0, %v2457
        %v2459 = vpop.f32.mrb[0].mxu0
        %2460 = vmatprep.mubr.bf16.mxu0 0
        %2461 = vmatmul.mubr.bf16.gmra.mrb[0].mxu0 %v1435
        %v2462 = vpop.f32.mrb[0].mxu0
        %v2463 = vadd.f32 0.0, %v2462
        %v2464 = vpop.f32.mrb[0].mxu0
        %v2465 = vpop.f32.mrb[0].mxu0
        %v2466 = vadd.f32 0.0, %v2465
        %v2467 = vpop.f32.mrb[0].mxu0
        %2468 = vmatprep.mubr.bf16.mxu0 0
        %2469 = vmatmul.mubr.bf16.gmra.mrb[0].mxu0 %v1438
        %v2470 = vpop.f32.mrb[0].mxu0
        %v2471 = vadd.f32 0.0, %v2470
        %v2472 = vpop.f32.mrb[0].mxu0
        %v2473 = vpop.f32.mrb[0].mxu0
        %v2474 = vadd.f32 0.0, %v2473
        %v2475 = vpop.f32.mrb[0].mxu0
        %2476 = vmatprep.mubr.bf16.mxu0 0
        %2477 = vmatmul.mubr.bf16.gmra.mrb[0].mxu0 %v1441
        %v2478 = vpop.f32.mrb[0].mxu0
        %v2479 = vadd.f32 0.0, %v2478
        %v2480 = vpop.f32.mrb[0].mxu0
        %v2481 = vpop.f32.mrb[0].mxu0
        %v2482 = vadd.f32 0.0, %v2481
        %v2483 = vpop.f32.mrb[0].mxu0
        %2484 = vmatprep.mubr.bf16.mxu0 0
        %2485 = vmatmul.mubr.bf16.gmra.mrb[0].mxu0 %v1444
        %v2486 = vpop.f32.mrb[0].mxu0
        %v2487 = vadd.f32 0.0, %v2486
        %v2488 = vpop.f32.mrb[0].mxu0
        %v2489 = vpop.f32.mrb[0].mxu0
        %v2490 = vadd.f32 0.0, %v2489
        %v2491 = vpop.f32.mrb[0].mxu0
        %2492 = vmatprep.mubr.bf16.mxu0 0
        %2493 = vmatmul.mubr.bf16.gmra.mrb[0].mxu0 %v1447
        %v2494 = vpop.f32.mrb[0].mxu0
        %v2495 = vadd.f32 0.0, %v2494
        %v2496 = vpop.f32.mrb[0].mxu0
        %v2497 = vpop.f32.mrb[0].mxu0
        %v2498 = vadd.f32 0.0, %v2497
        %v2499 = vpop.f32.mrb[0].mxu0
        %2500 = vmatprep.mubr.bf16.mxu0 0
        %2501 = vmatmul.mubr.bf16.gmra.mrb[0].mxu0 %v1450
        %v2502 = vpop.f32.mrb[0].mxu0
        %v2503 = vadd.f32 0.0, %v2502
        %v2504 = vpop.f32.mrb[0].mxu0
        %v2505 = vpop.f32.mrb[0].mxu0
        %v2506 = vadd.f32 0.0, %v2505
        %v2507 = vpop.f32.mrb[0].mxu0
        %2508 = vdwg.mxu0
        %vm2509 = vcmp.ge.f32.partialorder %v1487, 0.0
        %vm2510 = vcmp.ge.f32.partialorder %v1490, 0.0
        %vm2511 = vcmp.ge.f32.partialorder %v1495, 0.0
        %vm2512 = vcmp.ge.f32.partialorder %v1498, 0.0
        %vm2513 = vcmp.ge.f32.partialorder %v1503, 0.0
        %vm2514 = vcmp.ge.f32.partialorder %v1506, 0.0
        %vm2515 = vcmp.ge.f32.partialorder %v1511, 0.0
        %vm2516 = vcmp.ge.f32.partialorder %v1514, 0.0
        %vm2517 = vcmp.ge.f32.partialorder %v1519, 0.0
        %vm2518 = vcmp.ge.f32.partialorder %v1522, 0.0
        %vm2519 = vcmp.ge.f32.partialorder %v1527, 0.0
        %vm2520 = vcmp.ge.f32.partialorder %v1530, 0.0
        %vm2521 = vcmp.ge.f32.partialorder %v1535, 0.0
        %vm2522 = vcmp.ge.f32.partialorder %v1538, 0.0
        %vm2523 = vcmp.ge.f32.partialorder %v1543, 0.0
        %vm2524 = vcmp.ge.f32.partialorder %v1546, 0.0
        %vm2525 = vcmp.ge.f32.partialorder %v1551, 0.0
        %vm2526 = vcmp.ge.f32.partialorder %v1554, 0.0
        %vm2527 = vcmp.ge.f32.partialorder %v1559, 0.0
        %vm2528 = vcmp.ge.f32.partialorder %v1562, 0.0
        %vm2529 = vcmp.ge.f32.partialorder %v1567, 0.0
        %vm2530 = vcmp.ge.f32.partialorder %v1570, 0.0
        %vm2531 = vcmp.ge.f32.partialorder %v1575, 0.0
        %vm2532 = vcmp.ge.f32.partialorder %v1578, 0.0
        %vm2533 = vcmp.ge.f32.partialorder %v1583, 0.0
        %vm2534 = vcmp.ge.f32.partialorder %v1586, 0.0
        %vm2535 = vcmp.ge.f32.partialorder %v1591, 0.0
        %vm2536 = vcmp.ge.f32.partialorder %v1594, 0.0
        %vm2537 = vcmp.ge.f32.partialorder %v1599, 0.0
        %vm2538 = vcmp.ge.f32.partialorder %v1602, 0.0
        %vm2539 = vcmp.ge.f32.partialorder %v1607, 0.0
        %vm2540 = vcmp.ge.f32.partialorder %v1610, 0.0
        %vm2541 = vcmp.ge.f32.partialorder %v1615, 0.0
        %vm2542 = vcmp.ge.f32.partialorder %v1618, 0.0
        %vm2543 = vcmp.ge.f32.partialorder %v1623, 0.0
        %vm2544 = vcmp.ge.f32.partialorder %v1626, 0.0
        %vm2545 = vcmp.ge.f32.partialorder %v1631, 0.0
        %vm2546 = vcmp.ge.f32.partialorder %v1634, 0.0
        %vm2547 = vcmp.ge.f32.partialorder %v1639, 0.0
        %vm2548 = vcmp.ge.f32.partialorder %v1642, 0.0
        %vm2549 = vcmp.ge.f32.partialorder %v1647, 0.0
        %vm2550 = vcmp.ge.f32.partialorder %v1650, 0.0
        %vm2551 = vcmp.ge.f32.partialorder %v1655, 0.0
        %vm2552 = vcmp.ge.f32.partialorder %v1658, 0.0
        %vm2553 = vcmp.ge.f32.partialorder %v1663, 0.0
        %vm2554 = vcmp.ge.f32.partialorder %v1666, 0.0
        %vm2555 = vcmp.ge.f32.partialorder %v1671, 0.0
        %vm2556 = vcmp.ge.f32.partialorder %v1674, 0.0
        %vm2557 = vcmp.ge.f32.partialorder %v1679, 0.0
        %vm2558 = vcmp.ge.f32.partialorder %v1682, 0.0
        %vm2559 = vcmp.ge.f32.partialorder %v1687, 0.0
        %vm2560 = vcmp.ge.f32.partialorder %v1690, 0.0
        %vm2561 = vcmp.ge.f32.partialorder %v1695, 0.0
        %vm2562 = vcmp.ge.f32.partialorder %v1698, 0.0
        %vm2563 = vcmp.ge.f32.partialorder %v1703, 0.0
        %vm2564 = vcmp.ge.f32.partialorder %v1706, 0.0
        %vm2565 = vcmp.ge.f32.partialorder %v1711, 0.0
        %vm2566 = vcmp.ge.f32.partialorder %v1714, 0.0
        %vm2567 = vcmp.ge.f32.partialorder %v1719, 0.0
        %vm2568 = vcmp.ge.f32.partialorder %v1722, 0.0
        %vm2569 = vcmp.ge.f32.partialorder %v1727, 0.0
        %vm2570 = vcmp.ge.f32.partialorder %v1730, 0.0
        %vm2571 = vcmp.ge.f32.partialorder %v1735, 0.0
        %vm2572 = vcmp.ge.f32.partialorder %v1738, 0.0
        %vm2573 = vcmp.ge.f32.partialorder %v1743, 0.0
        %vm2574 = vcmp.ge.f32.partialorder %v1746, 0.0
        %vm2575 = vcmp.ge.f32.partialorder %v1751, 0.0
        %vm2576 = vcmp.ge.f32.partialorder %v1754, 0.0
        %vm2577 = vcmp.ge.f32.partialorder %v1759, 0.0
        %vm2578 = vcmp.ge.f32.partialorder %v1762, 0.0
        %vm2579 = vcmp.ge.f32.partialorder %v1767, 0.0
        %vm2580 = vcmp.ge.f32.partialorder %v1770, 0.0
        %vm2581 = vcmp.ge.f32.partialorder %v1775, 0.0
        %vm2582 = vcmp.ge.f32.partialorder %v1778, 0.0
        %vm2583 = vcmp.ge.f32.partialorder %v1783, 0.0
        %vm2584 = vcmp.ge.f32.partialorder %v1786, 0.0
        %vm2585 = vcmp.ge.f32.partialorder %v1791, 0.0
        %vm2586 = vcmp.ge.f32.partialorder %v1794, 0.0
        %vm2587 = vcmp.ge.f32.partialorder %v1799, 0.0
        %vm2588 = vcmp.ge.f32.partialorder %v1802, 0.0
        %vm2589 = vcmp.ge.f32.partialorder %v1807, 0.0
        %vm2590 = vcmp.ge.f32.partialorder %v1810, 0.0
        %vm2591 = vcmp.ge.f32.partialorder %v1815, 0.0
        %vm2592 = vcmp.ge.f32.partialorder %v1818, 0.0
        %vm2593 = vcmp.ge.f32.partialorder %v1823, 0.0
        %vm2594 = vcmp.ge.f32.partialorder %v1826, 0.0
        %vm2595 = vcmp.ge.f32.partialorder %v1831, 0.0
        %vm2596 = vcmp.ge.f32.partialorder %v1834, 0.0
        %vm2597 = vcmp.ge.f32.partialorder %v1839, 0.0
        %vm2598 = vcmp.ge.f32.partialorder %v1842, 0.0
        %vm2599 = vcmp.ge.f32.partialorder %v1847, 0.0
        %vm2600 = vcmp.ge.f32.partialorder %v1850, 0.0
        %vm2601 = vcmp.ge.f32.partialorder %v1855, 0.0
        %vm2602 = vcmp.ge.f32.partialorder %v1858, 0.0
        %vm2603 = vcmp.ge.f32.partialorder %v1863, 0.0
        %vm2604 = vcmp.ge.f32.partialorder %v1866, 0.0
        %vm2605 = vcmp.ge.f32.partialorder %v1871, 0.0
        %vm2606 = vcmp.ge.f32.partialorder %v1874, 0.0
        %vm2607 = vcmp.ge.f32.partialorder %v1879, 0.0
        %vm2608 = vcmp.ge.f32.partialorder %v1882, 0.0
        %vm2609 = vcmp.ge.f32.partialorder %v1887, 0.0
        %vm2610 = vcmp.ge.f32.partialorder %v1890, 0.0
        %vm2611 = vcmp.ge.f32.partialorder %v1895, 0.0
        %vm2612 = vcmp.ge.f32.partialorder %v1898, 0.0
        %vm2613 = vcmp.ge.f32.partialorder %v1903, 0.0
        %vm2614 = vcmp.ge.f32.partialorder %v1906, 0.0
        %vm2615 = vcmp.ge.f32.partialorder %v1911, 0.0
        %vm2616 = vcmp.ge.f32.partialorder %v1914, 0.0
        %vm2617 = vcmp.ge.f32.partialorder %v1919, 0.0
        %vm2618 = vcmp.ge.f32.partialorder %v1922, 0.0
        %vm2619 = vcmp.ge.f32.partialorder %v1927, 0.0
        %vm2620 = vcmp.ge.f32.partialorder %v1930, 0.0
        %vm2621 = vcmp.ge.f32.partialorder %v1935, 0.0
        %vm2622 = vcmp.ge.f32.partialorder %v1938, 0.0
        %vm2623 = vcmp.ge.f32.partialorder %v1943, 0.0
        %vm2624 = vcmp.ge.f32.partialorder %v1946, 0.0
        %vm2625 = vcmp.ge.f32.partialorder %v1951, 0.0
        %vm2626 = vcmp.ge.f32.partialorder %v1954, 0.0
        %vm2627 = vcmp.ge.f32.partialorder %v1959, 0.0
        %vm2628 = vcmp.ge.f32.partialorder %v1962, 0.0
        %vm2629 = vcmp.ge.f32.partialorder %v1967, 0.0
        %vm2630 = vcmp.ge.f32.partialorder %v1970, 0.0
        %vm2631 = vcmp.ge.f32.partialorder %v1975, 0.0
        %vm2632 = vcmp.ge.f32.partialorder %v1978, 0.0
        %vm2633 = vcmp.ge.f32.partialorder %v1983, 0.0
        %vm2634 = vcmp.ge.f32.partialorder %v1986, 0.0
        %vm2635 = vcmp.ge.f32.partialorder %v1991, 0.0
        %vm2636 = vcmp.ge.f32.partialorder %v1994, 0.0
        %vm2637 = vcmp.ge.f32.partialorder %v1999, 0.0
        %vm2638 = vcmp.ge.f32.partialorder %v2002, 0.0
        %vm2639 = vcmp.ge.f32.partialorder %v2007, 0.0
        %vm2640 = vcmp.ge.f32.partialorder %v2010, 0.0
        %vm2641 = vcmp.ge.f32.partialorder %v2015, 0.0
        %vm2642 = vcmp.ge.f32.partialorder %v2018, 0.0
        %vm2643 = vcmp.ge.f32.partialorder %v2023, 0.0
        %vm2644 = vcmp.ge.f32.partialorder %v2026, 0.0
        %vm2645 = vcmp.ge.f32.partialorder %v2031, 0.0
        %vm2646 = vcmp.ge.f32.partialorder %v2034, 0.0
        %vm2647 = vcmp.ge.f32.partialorder %v2039, 0.0
        %vm2648 = vcmp.ge.f32.partialorder %v2042, 0.0
        %vm2649 = vcmp.ge.f32.partialorder %v2047, 0.0
        %vm2650 = vcmp.ge.f32.partialorder %v2050, 0.0
        %vm2651 = vcmp.ge.f32.partialorder %v2055, 0.0
        %vm2652 = vcmp.ge.f32.partialorder %v2058, 0.0
        %vm2653 = vcmp.ge.f32.partialorder %v2063, 0.0
        %vm2654 = vcmp.ge.f32.partialorder %v2066, 0.0
        %vm2655 = vcmp.ge.f32.partialorder %v2071, 0.0
        %vm2656 = vcmp.ge.f32.partialorder %v2074, 0.0
        %vm2657 = vcmp.ge.f32.partialorder %v2079, 0.0
        %vm2658 = vcmp.ge.f32.partialorder %v2082, 0.0
        %vm2659 = vcmp.ge.f32.partialorder %v2087, 0.0
        %vm2660 = vcmp.ge.f32.partialorder %v2090, 0.0
        %vm2661 = vcmp.ge.f32.partialorder %v2095, 0.0
        %vm2662 = vcmp.ge.f32.partialorder %v2098, 0.0
        %vm2663 = vcmp.ge.f32.partialorder %v2103, 0.0
        %vm2664 = vcmp.ge.f32.partialorder %v2106, 0.0
        %vm2665 = vcmp.ge.f32.partialorder %v2111, 0.0
        %vm2666 = vcmp.ge.f32.partialorder %v2114, 0.0
        %vm2667 = vcmp.ge.f32.partialorder %v2119, 0.0
        %vm2668 = vcmp.ge.f32.partialorder %v2122, 0.0
        %vm2669 = vcmp.ge.f32.partialorder %v2127, 0.0
        %vm2670 = vcmp.ge.f32.partialorder %v2130, 0.0
        %vm2671 = vcmp.ge.f32.partialorder %v2135, 0.0
        %vm2672 = vcmp.ge.f32.partialorder %v2138, 0.0
        %vm2673 = vcmp.ge.f32.partialorder %v2143, 0.0
        %vm2674 = vcmp.ge.f32.partialorder %v2146, 0.0
        %vm2675 = vcmp.ge.f32.partialorder %v2151, 0.0
        %vm2676 = vcmp.ge.f32.partialorder %v2154, 0.0
        %vm2677 = vcmp.ge.f32.partialorder %v2159, 0.0
        %vm2678 = vcmp.ge.f32.partialorder %v2162, 0.0
        %vm2679 = vcmp.ge.f32.partialorder %v2167, 0.0
        %vm2680 = vcmp.ge.f32.partialorder %v2170, 0.0
        %vm2681 = vcmp.ge.f32.partialorder %v2175, 0.0
        %vm2682 = vcmp.ge.f32.partialorder %v2178, 0.0
        %vm2683 = vcmp.ge.f32.partialorder %v2183, 0.0
        %vm2684 = vcmp.ge.f32.partialorder %v2186, 0.0
        %vm2685 = vcmp.ge.f32.partialorder %v2191, 0.0
        %vm2686 = vcmp.ge.f32.partialorder %v2194, 0.0
        %vm2687 = vcmp.ge.f32.partialorder %v2199, 0.0
        %vm2688 = vcmp.ge.f32.partialorder %v2202, 0.0
        %vm2689 = vcmp.ge.f32.partialorder %v2207, 0.0
        %vm2690 = vcmp.ge.f32.partialorder %v2210, 0.0
        %vm2691 = vcmp.ge.f32.partialorder %v2215, 0.0
        %vm2692 = vcmp.ge.f32.partialorder %v2218, 0.0
        %vm2693 = vcmp.ge.f32.partialorder %v2223, 0.0
        %vm2694 = vcmp.ge.f32.partialorder %v2226, 0.0
        %vm2695 = vcmp.ge.f32.partialorder %v2231, 0.0
        %vm2696 = vcmp.ge.f32.partialorder %v2234, 0.0
        %vm2697 = vcmp.ge.f32.partialorder %v2239, 0.0
        %vm2698 = vcmp.ge.f32.partialorder %v2242, 0.0
        %vm2699 = vcmp.ge.f32.partialorder %v2247, 0.0
        %vm2700 = vcmp.ge.f32.partialorder %v2250, 0.0
        %vm2701 = vcmp.ge.f32.partialorder %v2255, 0.0
        %vm2702 = vcmp.ge.f32.partialorder %v2258, 0.0
        %vm2703 = vcmp.ge.f32.partialorder %v2263, 0.0
        %vm2704 = vcmp.ge.f32.partialorder %v2266, 0.0
        %vm2705 = vcmp.ge.f32.partialorder %v2271, 0.0
        %vm2706 = vcmp.ge.f32.partialorder %v2274, 0.0
        %vm2707 = vcmp.ge.f32.partialorder %v2279, 0.0
        %vm2708 = vcmp.ge.f32.partialorder %v2282, 0.0
        %vm2709 = vcmp.ge.f32.partialorder %v2287, 0.0
        %vm2710 = vcmp.ge.f32.partialorder %v2290, 0.0
        %vm2711 = vcmp.ge.f32.partialorder %v2295, 0.0
        %vm2712 = vcmp.ge.f32.partialorder %v2298, 0.0
        %vm2713 = vcmp.ge.f32.partialorder %v2303, 0.0
        %vm2714 = vcmp.ge.f32.partialorder %v2306, 0.0
        %vm2715 = vcmp.ge.f32.partialorder %v2311, 0.0
        %vm2716 = vcmp.ge.f32.partialorder %v2314, 0.0
        %vm2717 = vcmp.ge.f32.partialorder %v2319, 0.0
        %vm2718 = vcmp.ge.f32.partialorder %v2322, 0.0
        %vm2719 = vcmp.ge.f32.partialorder %v2327, 0.0
        %vm2720 = vcmp.ge.f32.partialorder %v2330, 0.0
        %vm2721 = vcmp.ge.f32.partialorder %v2335, 0.0
        %vm2722 = vcmp.ge.f32.partialorder %v2338, 0.0
        %vm2723 = vcmp.ge.f32.partialorder %v2343, 0.0
        %vm2724 = vcmp.ge.f32.partialorder %v2346, 0.0
        %vm2725 = vcmp.ge.f32.partialorder %v2351, 0.0
        %vm2726 = vcmp.ge.f32.partialorder %v2354, 0.0
        %vm2727 = vcmp.ge.f32.partialorder %v2359, 0.0
        %vm2728 = vcmp.ge.f32.partialorder %v2362, 0.0
        %vm2729 = vcmp.ge.f32.partialorder %v2367, 0.0
        %vm2730 = vcmp.ge.f32.partialorder %v2370, 0.0
        %vm2731 = vcmp.ge.f32.partialorder %v2375, 0.0
        %vm2732 = vcmp.ge.f32.partialorder %v2378, 0.0
        %vm2733 = vcmp.ge.f32.partialorder %v2383, 0.0
        %vm2734 = vcmp.ge.f32.partialorder %v2386, 0.0
        %vm2735 = vcmp.ge.f32.partialorder %v2391, 0.0
        %vm2736 = vcmp.ge.f32.partialorder %v2394, 0.0
        %vm2737 = vcmp.ge.f32.partialorder %v2399, 0.0
        %vm2738 = vcmp.ge.f32.partialorder %v2402, 0.0
        %vm2739 = vcmp.ge.f32.partialorder %v2407, 0.0
        %vm2740 = vcmp.ge.f32.partialorder %v2410, 0.0
        %vm2741 = vcmp.ge.f32.partialorder %v2415, 0.0
        %vm2742 = vcmp.ge.f32.partialorder %v2418, 0.0
        %vm2743 = vcmp.ge.f32.partialorder %v2423, 0.0
        %vm2744 = vcmp.ge.f32.partialorder %v2426, 0.0
        %vm2745 = vcmp.ge.f32.partialorder %v2431, 0.0
        %vm2746 = vcmp.ge.f32.partialorder %v2434, 0.0
        %vm2747 = vcmp.ge.f32.partialorder %v2439, 0.0
        %vm2748 = vcmp.ge.f32.partialorder %v2442, 0.0
        %vm2749 = vcmp.ge.f32.partialorder %v2447, 0.0
        %vm2750 = vcmp.ge.f32.partialorder %v2450, 0.0
        %vm2751 = vcmp.ge.f32.partialorder %v2455, 0.0
        %vm2752 = vcmp.ge.f32.partialorder %v2458, 0.0
        %vm2753 = vcmp.ge.f32.partialorder %v2463, 0.0
        %vm2754 = vcmp.ge.f32.partialorder %v2466, 0.0
        %vm2755 = vcmp.ge.f32.partialorder %v2471, 0.0
        %vm2756 = vcmp.ge.f32.partialorder %v2474, 0.0
        %vm2757 = vcmp.ge.f32.partialorder %v2479, 0.0
        %vm2758 = vcmp.ge.f32.partialorder %v2482, 0.0
        %vm2759 = vcmp.ge.f32.partialorder %v2487, 0.0
        %vm2760 = vcmp.ge.f32.partialorder %v2490, 0.0
        %vm2761 = vcmp.ge.f32.partialorder %v2495, 0.0
        %vm2762 = vcmp.ge.f32.partialorder %v2498, 0.0
        %vm2763 = vcmp.ge.f32.partialorder %v2503, 0.0
        %vm2764 = vcmp.ge.f32.partialorder %v2506, 0.0
        %v2765 = vmul.f32 %v1487, 0.2
        %v2766 = vmul.f32 %v1490, 0.2
        %v2767 = vmul.f32 %v1495, 0.2
        %v2768 = vmul.f32 %v1498, 0.2
        %v2769 = vmul.f32 %v1503, 0.2
        %v2770 = vmul.f32 %v1506, 0.2
        %v2771 = vmul.f32 %v1511, 0.2
        %v2772 = vmul.f32 %v1514, 0.2
        %v2773 = vmul.f32 %v1519, 0.2
        %v2774 = vmul.f32 %v1522, 0.2
        %v2775 = vmul.f32 %v1527, 0.2
        %v2776 = vmul.f32 %v1530, 0.2
        %v2777 = vmul.f32 %v1535, 0.2
        %v2778 = vmul.f32 %v1538, 0.2
        %v2779 = vmul.f32 %v1543, 0.2
        %v2780 = vmul.f32 %v1546, 0.2
        %v2781 = vmul.f32 %v1551, 0.2
        %v2782 = vmul.f32 %v1554, 0.2
        %v2783 = vmul.f32 %v1559, 0.2
        %v2784 = vmul.f32 %v1562, 0.2
        %v2785 = vmul.f32 %v1567, 0.2
        %v2786 = vmul.f32 %v1570, 0.2
        %v2787 = vmul.f32 %v1575, 0.2
        %v2788 = vmul.f32 %v1578, 0.2
        %v2789 = vmul.f32 %v1583, 0.2
        %v2790 = vmul.f32 %v1586, 0.2
        %v2791 = vmul.f32 %v1591, 0.2
        %v2792 = vmul.f32 %v1594, 0.2
        %v2793 = vmul.f32 %v1599, 0.2
        %v2794 = vmul.f32 %v1602, 0.2
        %v2795 = vmul.f32 %v1607, 0.2
        %v2796 = vmul.f32 %v1610, 0.2
        %v2797 = vmul.f32 %v1615, 0.2
        %v2798 = vmul.f32 %v1618, 0.2
        %v2799 = vmul.f32 %v1623, 0.2
        %v2800 = vmul.f32 %v1626, 0.2
        %v2801 = vmul.f32 %v1631, 0.2
        %v2802 = vmul.f32 %v1634, 0.2
        %v2803 = vmul.f32 %v1639, 0.2
        %v2804 = vmul.f32 %v1642, 0.2
        %v2805 = vmul.f32 %v1647, 0.2
        %v2806 = vmul.f32 %v1650, 0.2
        %v2807 = vmul.f32 %v1655, 0.2
        %v2808 = vmul.f32 %v1658, 0.2
        %v2809 = vmul.f32 %v1663, 0.2
        %v2810 = vmul.f32 %v1666, 0.2
        %v2811 = vmul.f32 %v1671, 0.2
        %v2812 = vmul.f32 %v1674, 0.2
        %v2813 = vmul.f32 %v1679, 0.2
        %v2814 = vmul.f32 %v1682, 0.2
        %v2815 = vmul.f32 %v1687, 0.2
        %v2816 = vmul.f32 %v1690, 0.2
        %v2817 = vmul.f32 %v1695, 0.2
        %v2818 = vmul.f32 %v1698, 0.2
        %v2819 = vmul.f32 %v1703, 0.2
        %v2820 = vmul.f32 %v1706, 0.2
        %v2821 = vmul.f32 %v1711, 0.2
        %v2822 = vmul.f32 %v1714, 0.2
        %v2823 = vmul.f32 %v1719, 0.2
        %v2824 = vmul.f32 %v1722, 0.2
        %v2825 = vmul.f32 %v1727, 0.2
        %v2826 = vmul.f32 %v1730, 0.2
        %v2827 = vmul.f32 %v1735, 0.2
        %v2828 = vmul.f32 %v1738, 0.2
        %v2829 = vmul.f32 %v1743, 0.2
        %v2830 = vmul.f32 %v1746, 0.2
        %v2831 = vmul.f32 %v1751, 0.2
        %v2832 = vmul.f32 %v1754, 0.2
        %v2833 = vmul.f32 %v1759, 0.2
        %v2834 = vmul.f32 %v1762, 0.2
        %v2835 = vmul.f32 %v1767, 0.2
        %v2836 = vmul.f32 %v1770, 0.2
        %v2837 = vmul.f32 %v1775, 0.2
        %v2838 = vmul.f32 %v1778, 0.2
        %v2839 = vmul.f32 %v1783, 0.2
        %v2840 = vmul.f32 %v1786, 0.2
        %v2841 = vmul.f32 %v1791, 0.2
        %v2842 = vmul.f32 %v1794, 0.2
        %v2843 = vmul.f32 %v1799, 0.2
        %v2844 = vmul.f32 %v1802, 0.2
        %v2845 = vmul.f32 %v1807, 0.2
        %v2846 = vmul.f32 %v1810, 0.2
        %v2847 = vmul.f32 %v1815, 0.2
        %v2848 = vmul.f32 %v1818, 0.2
        %v2849 = vmul.f32 %v1823, 0.2
        %v2850 = vmul.f32 %v1826, 0.2
        %v2851 = vmul.f32 %v1831, 0.2
        %v2852 = vmul.f32 %v1834, 0.2
        %v2853 = vmul.f32 %v1839, 0.2
        %v2854 = vmul.f32 %v1842, 0.2
        %v2855 = vmul.f32 %v1847, 0.2
        %v2856 = vmul.f32 %v1850, 0.2
        %v2857 = vmul.f32 %v1855, 0.2
        %v2858 = vmul.f32 %v1858, 0.2
        %v2859 = vmul.f32 %v1863, 0.2
        %v2860 = vmul.f32 %v1866, 0.2
        %v2861 = vmul.f32 %v1871, 0.2
        %v2862 = vmul.f32 %v1874, 0.2
        %v2863 = vmul.f32 %v1879, 0.2
        %v2864 = vmul.f32 %v1882, 0.2
        %v2865 = vmul.f32 %v1887, 0.2
        %v2866 = vmul.f32 %v1890, 0.2
        %v2867 = vmul.f32 %v1895, 0.2
        %v2868 = vmul.f32 %v1898, 0.2
        %v2869 = vmul.f32 %v1903, 0.2
        %v2870 = vmul.f32 %v1906, 0.2
        %v2871 = vmul.f32 %v1911, 0.2
        %v2872 = vmul.f32 %v1914, 0.2
        %v2873 = vmul.f32 %v1919, 0.2
        %v2874 = vmul.f32 %v1922, 0.2
        %v2875 = vmul.f32 %v1927, 0.2
        %v2876 = vmul.f32 %v1930, 0.2
        %v2877 = vmul.f32 %v1935, 0.2
        %v2878 = vmul.f32 %v1938, 0.2
        %v2879 = vmul.f32 %v1943, 0.2
        %v2880 = vmul.f32 %v1946, 0.2
        %v2881 = vmul.f32 %v1951, 0.2
        %v2882 = vmul.f32 %v1954, 0.2
        %v2883 = vmul.f32 %v1959, 0.2
        %v2884 = vmul.f32 %v1962, 0.2
        %v2885 = vmul.f32 %v1967, 0.2
        %v2886 = vmul.f32 %v1970, 0.2
        %v2887 = vmul.f32 %v1975, 0.2
        %v2888 = vmul.f32 %v1978, 0.2
        %v2889 = vmul.f32 %v1983, 0.2
        %v2890 = vmul.f32 %v1986, 0.2
        %v2891 = vmul.f32 %v1991, 0.2
        %v2892 = vmul.f32 %v1994, 0.2
        %v2893 = vmul.f32 %v1999, 0.2
        %v2894 = vmul.f32 %v2002, 0.2
        %v2895 = vmul.f32 %v2007, 0.2
        %v2896 = vmul.f32 %v2010, 0.2
        %v2897 = vmul.f32 %v2015, 0.2
        %v2898 = vmul.f32 %v2018, 0.2
        %v2899 = vmul.f32 %v2023, 0.2
        %v2900 = vmul.f32 %v2026, 0.2
        %v2901 = vmul.f32 %v2031, 0.2
        %v2902 = vmul.f32 %v2034, 0.2
        %v2903 = vmul.f32 %v2039, 0.2
        %v2904 = vmul.f32 %v2042, 0.2
        %v2905 = vmul.f32 %v2047, 0.2
        %v2906 = vmul.f32 %v2050, 0.2
        %v2907 = vmul.f32 %v2055, 0.2
        %v2908 = vmul.f32 %v2058, 0.2
        %v2909 = vmul.f32 %v2063, 0.2
        %v2910 = vmul.f32 %v2066, 0.2
        %v2911 = vmul.f32 %v2071, 0.2
        %v2912 = vmul.f32 %v2074, 0.2
        %v2913 = vmul.f32 %v2079, 0.2
        %v2914 = vmul.f32 %v2082, 0.2
        %v2915 = vmul.f32 %v2087, 0.2
        %v2916 = vmul.f32 %v2090, 0.2
        %v2917 = vmul.f32 %v2095, 0.2
        %v2918 = vmul.f32 %v2098, 0.2
        %v2919 = vmul.f32 %v2103, 0.2
        %v2920 = vmul.f32 %v2106, 0.2
        %v2921 = vmul.f32 %v2111, 0.2
        %v2922 = vmul.f32 %v2114, 0.2
        %v2923 = vmul.f32 %v2119, 0.2
        %v2924 = vmul.f32 %v2122, 0.2
        %v2925 = vmul.f32 %v2127, 0.2
        %v2926 = vmul.f32 %v2130, 0.2
        %v2927 = vmul.f32 %v2135, 0.2
        %v2928 = vmul.f32 %v2138, 0.2
        %v2929 = vmul.f32 %v2143, 0.2
        %v2930 = vmul.f32 %v2146, 0.2
        %v2931 = vmul.f32 %v2151, 0.2
        %v2932 = vmul.f32 %v2154, 0.2
        %v2933 = vmul.f32 %v2159, 0.2
        %v2934 = vmul.f32 %v2162, 0.2
        %v2935 = vmul.f32 %v2167, 0.2
        %v2936 = vmul.f32 %v2170, 0.2
        %v2937 = vmul.f32 %v2175, 0.2
        %v2938 = vmul.f32 %v2178, 0.2
        %v2939 = vmul.f32 %v2183, 0.2
        %v2940 = vmul.f32 %v2186, 0.2
        %v2941 = vmul.f32 %v2191, 0.2
        %v2942 = vmul.f32 %v2194, 0.2
        %v2943 = vmul.f32 %v2199, 0.2
        %v2944 = vmul.f32 %v2202, 0.2
        %v2945 = vmul.f32 %v2207, 0.2
        %v2946 = vmul.f32 %v2210, 0.2
        %v2947 = vmul.f32 %v2215, 0.2
        %v2948 = vmul.f32 %v2218, 0.2
        %v2949 = vmul.f32 %v2223, 0.2
        %v2950 = vmul.f32 %v2226, 0.2
        %v2951 = vmul.f32 %v2231, 0.2
        %v2952 = vmul.f32 %v2234, 0.2
        %v2953 = vmul.f32 %v2239, 0.2
        %v2954 = vmul.f32 %v2242, 0.2
        %v2955 = vmul.f32 %v2247, 0.2
        %v2956 = vmul.f32 %v2250, 0.2
        %v2957 = vmul.f32 %v2255, 0.2
        %v2958 = vmul.f32 %v2258, 0.2
        %v2959 = vmul.f32 %v2263, 0.2
        %v2960 = vmul.f32 %v2266, 0.2
        %v2961 = vmul.f32 %v2271, 0.2
        %v2962 = vmul.f32 %v2274, 0.2
        %v2963 = vmul.f32 %v2279, 0.2
        %v2964 = vmul.f32 %v2282, 0.2
        %v2965 = vmul.f32 %v2287, 0.2
        %v2966 = vmul.f32 %v2290, 0.2
        %v2967 = vmul.f32 %v2295, 0.2
        %v2968 = vmul.f32 %v2298, 0.2
        %v2969 = vmul.f32 %v2303, 0.2
        %v2970 = vmul.f32 %v2306, 0.2
        %v2971 = vmul.f32 %v2311, 0.2
        %v2972 = vmul.f32 %v2314, 0.2
        %v2973 = vmul.f32 %v2319, 0.2
        %v2974 = vmul.f32 %v2322, 0.2
        %v2975 = vmul.f32 %v2327, 0.2
        %v2976 = vmul.f32 %v2330, 0.2
        %v2977 = vmul.f32 %v2335, 0.2
        %v2978 = vmul.f32 %v2338, 0.2
        %v2979 = vmul.f32 %v2343, 0.2
        %v2980 = vmul.f32 %v2346, 0.2
        %v2981 = vmul.f32 %v2351, 0.2
        %v2982 = vmul.f32 %v2354, 0.2
        %v2983 = vmul.f32 %v2359, 0.2
        %v2984 = vmul.f32 %v2362, 0.2
        %v2985 = vmul.f32 %v2367, 0.2
        %v2986 = vmul.f32 %v2370, 0.2
        %v2987 = vmul.f32 %v2375, 0.2
        %v2988 = vmul.f32 %v2378, 0.2
        %v2989 = vmul.f32 %v2383, 0.2
        %v2990 = vmul.f32 %v2386, 0.2
        %v2991 = vmul.f32 %v2391, 0.2
        %v2992 = vmul.f32 %v2394, 0.2
        %v2993 = vmul.f32 %v2399, 0.2
        %v2994 = vmul.f32 %v2402, 0.2
        %v2995 = vmul.f32 %v2407, 0.2
        %v2996 = vmul.f32 %v2410, 0.2
        %v2997 = vmul.f32 %v2415, 0.2
        %v2998 = vmul.f32 %v2418, 0.2
        %v2999 = vmul.f32 %v2423, 0.2
        %v3000 = vmul.f32 %v2426, 0.2
        %v3001 = vmul.f32 %v2431, 0.2
        %v3002 = vmul.f32 %v2434, 0.2
        %v3003 = vmul.f32 %v2439, 0.2
        %v3004 = vmul.f32 %v2442, 0.2
        %v3005 = vmul.f32 %v2447, 0.2
        %v3006 = vmul.f32 %v2450, 0.2
        %v3007 = vmul.f32 %v2455, 0.2
        %v3008 = vmul.f32 %v2458, 0.2
        %v3009 = vmul.f32 %v2463, 0.2
        %v3010 = vmul.f32 %v2466, 0.2
        %v3011 = vmul.f32 %v2471, 0.2
        %v3012 = vmul.f32 %v2474, 0.2
        %v3013 = vmul.f32 %v2479, 0.2
        %v3014 = vmul.f32 %v2482, 0.2
        %v3015 = vmul.f32 %v2487, 0.2
        %v3016 = vmul.f32 %v2490, 0.2
        %v3017 = vmul.f32 %v2495, 0.2
        %v3018 = vmul.f32 %v2498, 0.2
        %v3019 = vmul.f32 %v2503, 0.2
        %v3020 = vmul.f32 %v2506, 0.2
        %v3021 = vsel %vm2509, %v1487, %v2765
        %v3022 = vsel %vm2510, %v1490, %v2766
        %v3023 = vsel %vm2511, %v1495, %v2767
        %v3024 = vsel %vm2512, %v1498, %v2768
        %v3025 = vsel %vm2513, %v1503, %v2769
        %v3026 = vsel %vm2514, %v1506, %v2770
        %v3027 = vsel %vm2515, %v1511, %v2771
        %v3028 = vsel %vm2516, %v1514, %v2772
        %v3029 = vsel %vm2517, %v1519, %v2773
        %v3030 = vsel %vm2518, %v1522, %v2774
        %v3031 = vsel %vm2519, %v1527, %v2775
        %v3032 = vsel %vm2520, %v1530, %v2776
        %v3033 = vsel %vm2521, %v1535, %v2777
        %v3034 = vsel %vm2522, %v1538, %v2778
        %v3035 = vsel %vm2523, %v1543, %v2779
        %v3036 = vsel %vm2524, %v1546, %v2780
        %v3037 = vsel %vm2525, %v1551, %v2781
        %v3038 = vsel %vm2526, %v1554, %v2782
        %v3039 = vsel %vm2527, %v1559, %v2783
        %v3040 = vsel %vm2528, %v1562, %v2784
        %v3041 = vsel %vm2529, %v1567, %v2785
        %v3042 = vsel %vm2530, %v1570, %v2786
        %v3043 = vsel %vm2531, %v1575, %v2787
        %v3044 = vsel %vm2532, %v1578, %v2788
        %v3045 = vsel %vm2533, %v1583, %v2789
        %v3046 = vsel %vm2534, %v1586, %v2790
        %v3047 = vsel %vm2535, %v1591, %v2791
        %v3048 = vsel %vm2536, %v1594, %v2792
        %v3049 = vsel %vm2537, %v1599, %v2793
        %v3050 = vsel %vm2538, %v1602, %v2794
        %v3051 = vsel %vm2539, %v1607, %v2795
        %v3052 = vsel %vm2540, %v1610, %v2796
        %v3053 = vsel %vm2541, %v1615, %v2797
        %v3054 = vsel %vm2542, %v1618, %v2798
        %v3055 = vsel %vm2543, %v1623, %v2799
        %v3056 = vsel %vm2544, %v1626, %v2800
        %v3057 = vsel %vm2545, %v1631, %v2801
        %v3058 = vsel %vm2546, %v1634, %v2802
        %v3059 = vsel %vm2547, %v1639, %v2803
        %v3060 = vsel %vm2548, %v1642, %v2804
        %v3061 = vsel %vm2549, %v1647, %v2805
        %v3062 = vsel %vm2550, %v1650, %v2806
        %v3063 = vsel %vm2551, %v1655, %v2807
        %v3064 = vsel %vm2552, %v1658, %v2808
        %v3065 = vsel %vm2553, %v1663, %v2809
        %v3066 = vsel %vm2554, %v1666, %v2810
        %v3067 = vsel %vm2555, %v1671, %v2811
        %v3068 = vsel %vm2556, %v1674, %v2812
        %v3069 = vsel %vm2557, %v1679, %v2813
        %v3070 = vsel %vm2558, %v1682, %v2814
        %v3071 = vsel %vm2559, %v1687, %v2815
        %v3072 = vsel %vm2560, %v1690, %v2816
        %v3073 = vsel %vm2561, %v1695, %v2817
        %v3074 = vsel %vm2562, %v1698, %v2818
        %v3075 = vsel %vm2563, %v1703, %v2819
        %v3076 = vsel %vm2564, %v1706, %v2820
        %v3077 = vsel %vm2565, %v1711, %v2821
        %v3078 = vsel %vm2566, %v1714, %v2822
        %v3079 = vsel %vm2567, %v1719, %v2823
        %v3080 = vsel %vm2568, %v1722, %v2824
        %v3081 = vsel %vm2569, %v1727, %v2825
        %v3082 = vsel %vm2570, %v1730, %v2826
        %v3083 = vsel %vm2571, %v1735, %v2827
        %v3084 = vsel %vm2572, %v1738, %v2828
        %v3085 = vsel %vm2573, %v1743, %v2829
        %v3086 = vsel %vm2574, %v1746, %v2830
        %v3087 = vsel %vm2575, %v1751, %v2831
        %v3088 = vsel %vm2576, %v1754, %v2832
        %v3089 = vsel %vm2577, %v1759, %v2833
        %v3090 = vsel %vm2578, %v1762, %v2834
        %v3091 = vsel %vm2579, %v1767, %v2835
        %v3092 = vsel %vm2580, %v1770, %v2836
        %v3093 = vsel %vm2581, %v1775, %v2837
        %v3094 = vsel %vm2582, %v1778, %v2838
        %v3095 = vsel %vm2583, %v1783, %v2839
        %v3096 = vsel %vm2584, %v1786, %v2840
        %v3097 = vsel %vm2585, %v1791, %v2841
        %v3098 = vsel %vm2586, %v1794, %v2842
        %v3099 = vsel %vm2587, %v1799, %v2843
        %v3100 = vsel %vm2588, %v1802, %v2844
        %v3101 = vsel %vm2589, %v1807, %v2845
        %v3102 = vsel %vm2590, %v1810, %v2846
        %v3103 = vsel %vm2591, %v1815, %v2847
        %v3104 = vsel %vm2592, %v1818, %v2848
        %v3105 = vsel %vm2593, %v1823, %v2849
        %v3106 = vsel %vm2594, %v1826, %v2850
        %v3107 = vsel %vm2595, %v1831, %v2851
        %v3108 = vsel %vm2596, %v1834, %v2852
        %v3109 = vsel %vm2597, %v1839, %v2853
        %v3110 = vsel %vm2598, %v1842, %v2854
        %v3111 = vsel %vm2599, %v1847, %v2855
        %v3112 = vsel %vm2600, %v1850, %v2856
        %v3113 = vsel %vm2601, %v1855, %v2857
        %v3114 = vsel %vm2602, %v1858, %v2858
        %v3115 = vsel %vm2603, %v1863, %v2859
        %v3116 = vsel %vm2604, %v1866, %v2860
        %v3117 = vsel %vm2605, %v1871, %v2861
        %v3118 = vsel %vm2606, %v1874, %v2862
        %v3119 = vsel %vm2607, %v1879, %v2863
        %v3120 = vsel %vm2608, %v1882, %v2864
        %v3121 = vsel %vm2609, %v1887, %v2865
        %v3122 = vsel %vm2610, %v1890, %v2866
        %v3123 = vsel %vm2611, %v1895, %v2867
        %v3124 = vsel %vm2612, %v1898, %v2868
        %v3125 = vsel %vm2613, %v1903, %v2869
        %v3126 = vsel %vm2614, %v1906, %v2870
        %v3127 = vsel %vm2615, %v1911, %v2871
        %v3128 = vsel %vm2616, %v1914, %v2872
        %v3129 = vsel %vm2617, %v1919, %v2873
        %v3130 = vsel %vm2618, %v1922, %v2874
        %v3131 = vsel %vm2619, %v1927, %v2875
        %v3132 = vsel %vm2620, %v1930, %v2876
        %v3133 = vsel %vm2621, %v1935, %v2877
        %v3134 = vsel %vm2622, %v1938, %v2878
        %v3135 = vsel %vm2623, %v1943, %v2879
        %v3136 = vsel %vm2624, %v1946, %v2880
        %v3137 = vsel %vm2625, %v1951, %v2881
        %v3138 = vsel %vm2626, %v1954, %v2882
        %v3139 = vsel %vm2627, %v1959, %v2883
        %v3140 = vsel %vm2628, %v1962, %v2884
        %v3141 = vsel %vm2629, %v1967, %v2885
        %v3142 = vsel %vm2630, %v1970, %v2886
        %v3143 = vsel %vm2631, %v1975, %v2887
        %v3144 = vsel %vm2632, %v1978, %v2888
        %v3145 = vsel %vm2633, %v1983, %v2889
        %v3146 = vsel %vm2634, %v1986, %v2890
        %v3147 = vsel %vm2635, %v1991, %v2891
        %v3148 = vsel %vm2636, %v1994, %v2892
        %v3149 = vsel %vm2637, %v1999, %v2893
        %v3150 = vsel %vm2638, %v2002, %v2894
        %v3151 = vsel %vm2639, %v2007, %v2895
        %v3152 = vsel %vm2640, %v2010, %v2896
        %v3153 = vsel %vm2641, %v2015, %v2897
        %v3154 = vsel %vm2642, %v2018, %v2898
        %v3155 = vsel %vm2643, %v2023, %v2899
        %v3156 = vsel %vm2644, %v2026, %v2900
        %v3157 = vsel %vm2645, %v2031, %v2901
        %v3158 = vsel %vm2646, %v2034, %v2902
        %v3159 = vsel %vm2647, %v2039, %v2903
        %v3160 = vsel %vm2648, %v2042, %v2904
        %v3161 = vsel %vm2649, %v2047, %v2905
        %v3162 = vsel %vm2650, %v2050, %v2906
        %v3163 = vsel %vm2651, %v2055, %v2907
        %v3164 = vsel %vm2652, %v2058, %v2908
        %v3165 = vsel %vm2653, %v2063, %v2909
        %v3166 = vsel %vm2654, %v2066, %v2910
        %v3167 = vsel %vm2655, %v2071, %v2911
        %v3168 = vsel %vm2656, %v2074, %v2912
        %v3169 = vsel %vm2657, %v2079, %v2913
        %v3170 = vsel %vm2658, %v2082, %v2914
        %v3171 = vsel %vm2659, %v2087, %v2915
        %v3172 = vsel %vm2660, %v2090, %v2916
        %v3173 = vsel %vm2661, %v2095, %v2917
        %v3174 = vsel %vm2662, %v2098, %v2918
        %v3175 = vsel %vm2663, %v2103, %v2919
        %v3176 = vsel %vm2664, %v2106, %v2920
        %v3177 = vsel %vm2665, %v2111, %v2921
        %v3178 = vsel %vm2666, %v2114, %v2922
        %v3179 = vsel %vm2667, %v2119, %v2923
        %v3180 = vsel %vm2668, %v2122, %v2924
        %v3181 = vsel %vm2669, %v2127, %v2925
        %v3182 = vsel %vm2670, %v2130, %v2926
        %v3183 = vsel %vm2671, %v2135, %v2927
        %v3184 = vsel %vm2672, %v2138, %v2928
        %v3185 = vsel %vm2673, %v2143, %v2929
        %v3186 = vsel %vm2674, %v2146, %v2930
        %v3187 = vsel %vm2675, %v2151, %v2931
        %v3188 = vsel %vm2676, %v2154, %v2932
        %v3189 = vsel %vm2677, %v2159, %v2933
        %v3190 = vsel %vm2678, %v2162, %v2934
        %v3191 = vsel %vm2679, %v2167, %v2935
        %v3192 = vsel %vm2680, %v2170, %v2936
        %v3193 = vsel %vm2681, %v2175, %v2937
        %v3194 = vsel %vm2682, %v2178, %v2938
        %v3195 = vsel %vm2683, %v2183, %v2939
        %v3196 = vsel %vm2684, %v2186, %v2940
        %v3197 = vsel %vm2685, %v2191, %v2941
        %v3198 = vsel %vm2686, %v2194, %v2942
        %v3199 = vsel %vm2687, %v2199, %v2943
        %v3200 = vsel %vm2688, %v2202, %v2944
        %v3201 = vsel %vm2689, %v2207, %v2945
        %v3202 = vsel %vm2690, %v2210, %v2946
        %v3203 = vsel %vm2691, %v2215, %v2947
        %v3204 = vsel %vm2692, %v2218, %v2948
        %v3205 = vsel %vm2693, %v2223, %v2949
        %v3206 = vsel %vm2694, %v2226, %v2950
        %v3207 = vsel %vm2695, %v2231, %v2951
        %v3208 = vsel %vm2696, %v2234, %v2952
        %v3209 = vsel %vm2697, %v2239, %v2953
        %v3210 = vsel %vm2698, %v2242, %v2954
        %v3211 = vsel %vm2699, %v2247, %v2955
        %v3212 = vsel %vm2700, %v2250, %v2956
        %v3213 = vsel %vm2701, %v2255, %v2957
        %v3214 = vsel %vm2702, %v2258, %v2958
        %v3215 = vsel %vm2703, %v2263, %v2959
        %v3216 = vsel %vm2704, %v2266, %v2960
        %v3217 = vsel %vm2705, %v2271, %v2961
        %v3218 = vsel %vm2706, %v2274, %v2962
        %v3219 = vsel %vm2707, %v2279, %v2963
        %v3220 = vsel %vm2708, %v2282, %v2964
        %v3221 = vsel %vm2709, %v2287, %v2965
        %v3222 = vsel %vm2710, %v2290, %v2966
        %v3223 = vsel %vm2711, %v2295, %v2967
        %v3224 = vsel %vm2712, %v2298, %v2968
        %v3225 = vsel %vm2713, %v2303, %v2969
        %v3226 = vsel %vm2714, %v2306, %v2970
        %v3227 = vsel %vm2715, %v2311, %v2971
        %v3228 = vsel %vm2716, %v2314, %v2972
        %v3229 = vsel %vm2717, %v2319, %v2973
        %v3230 = vsel %vm2718, %v2322, %v2974
        %v3231 = vsel %vm2719, %v2327, %v2975
        %v3232 = vsel %vm2720, %v2330, %v2976
        %v3233 = vsel %vm2721, %v2335, %v2977
        %v3234 = vsel %vm2722, %v2338, %v2978
        %v3235 = vsel %vm2723, %v2343, %v2979
        %v3236 = vsel %vm2724, %v2346, %v2980
        %v3237 = vsel %vm2725, %v2351, %v2981
        %v3238 = vsel %vm2726, %v2354, %v2982
        %v3239 = vsel %vm2727, %v2359, %v2983
        %v3240 = vsel %vm2728, %v2362, %v2984
        %v3241 = vsel %vm2729, %v2367, %v2985
        %v3242 = vsel %vm2730, %v2370, %v2986
        %v3243 = vsel %vm2731, %v2375, %v2987
        %v3244 = vsel %vm2732, %v2378, %v2988
        %v3245 = vsel %vm2733, %v2383, %v2989
        %v3246 = vsel %vm2734, %v2386, %v2990
        %v3247 = vsel %vm2735, %v2391, %v2991
        %v3248 = vsel %vm2736, %v2394, %v2992
        %v3249 = vsel %vm2737, %v2399, %v2993
        %v3250 = vsel %vm2738, %v2402, %v2994
        %v3251 = vsel %vm2739, %v2407, %v2995
        %v3252 = vsel %vm2740, %v2410, %v2996
        %v3253 = vsel %vm2741, %v2415, %v2997
        %v3254 = vsel %vm2742, %v2418, %v2998
        %v3255 = vsel %vm2743, %v2423, %v2999
        %v3256 = vsel %vm2744, %v2426, %v3000
        %v3257 = vsel %vm2745, %v2431, %v3001
        %v3258 = vsel %vm2746, %v2434, %v3002
        %v3259 = vsel %vm2747, %v2439, %v3003
        %v3260 = vsel %vm2748, %v2442, %v3004
        %v3261 = vsel %vm2749, %v2447, %v3005
        %v3262 = vsel %vm2750, %v2450, %v3006
        %v3263 = vsel %vm2751, %v2455, %v3007
        %v3264 = vsel %vm2752, %v2458, %v3008
        %v3265 = vsel %vm2753, %v2463, %v3009
        %v3266 = vsel %vm2754, %v2466, %v3010
        %v3267 = vsel %vm2755, %v2471, %v3011
        %v3268 = vsel %vm2756, %v2474, %v3012
        %v3269 = vsel %vm2757, %v2479, %v3013
        %v3270 = vsel %vm2758, %v2482, %v3014
        %v3271 = vsel %vm2759, %v2487, %v3015
        %v3272 = vsel %vm2760, %v2490, %v3016
        %v3273 = vsel %vm2761, %v2495, %v3017
        %v3274 = vsel %vm2762, %v2498, %v3018
        %v3275 = vsel %vm2763, %v2503, %v3019
        %v3276 = vsel %vm2764, %v2506, %v3020
        %v3277 = vpack.c.bf16 %v3022, %v3021
        %v3278 = vpack.c.bf16 %v3024, %v3023
        %v3279 = vpack.c.bf16 %v3026, %v3025
        %v3280 = vpack.c.bf16 %v3028, %v3027
        %v3281 = vpack.c.bf16 %v3030, %v3029
        %v3282 = vpack.c.bf16 %v3032, %v3031
        %v3283 = vpack.c.bf16 %v3034, %v3033
        %v3284 = vpack.c.bf16 %v3036, %v3035
        %v3285 = vpack.c.bf16 %v3038, %v3037
        %v3286 = vpack.c.bf16 %v3040, %v3039
        %v3287 = vpack.c.bf16 %v3042, %v3041
        %v3288 = vpack.c.bf16 %v3044, %v3043
        %v3289 = vpack.c.bf16 %v3046, %v3045
        %v3290 = vpack.c.bf16 %v3048, %v3047
        %v3291 = vpack.c.bf16 %v3050, %v3049
        %v3292 = vpack.c.bf16 %v3052, %v3051
        %v3293 = vpack.c.bf16 %v3054, %v3053
        %v3294 = vpack.c.bf16 %v3056, %v3055
        %v3295 = vpack.c.bf16 %v3058, %v3057
        %v3296 = vpack.c.bf16 %v3060, %v3059
        %v3297 = vpack.c.bf16 %v3062, %v3061
        %v3298 = vpack.c.bf16 %v3064, %v3063
        %v3299 = vpack.c.bf16 %v3066, %v3065
        %v3300 = vpack.c.bf16 %v3068, %v3067
        %v3301 = vpack.c.bf16 %v3070, %v3069
        %v3302 = vpack.c.bf16 %v3072, %v3071
        %v3303 = vpack.c.bf16 %v3074, %v3073
        %v3304 = vpack.c.bf16 %v3076, %v3075
        %v3305 = vpack.c.bf16 %v3078, %v3077
        %v3306 = vpack.c.bf16 %v3080, %v3079
        %v3307 = vpack.c.bf16 %v3082, %v3081
        %v3308 = vpack.c.bf16 %v3084, %v3083
        %v3309 = vpack.c.bf16 %v3086, %v3085
        %v3310 = vpack.c.bf16 %v3088, %v3087
        %v3311 = vpack.c.bf16 %v3090, %v3089
        %v3312 = vpack.c.bf16 %v3092, %v3091
        %v3313 = vpack.c.bf16 %v3094, %v3093
        %v3314 = vpack.c.bf16 %v3096, %v3095
        %v3315 = vpack.c.bf16 %v3098, %v3097
        %v3316 = vpack.c.bf16 %v3100, %v3099
        %v3317 = vpack.c.bf16 %v3102, %v3101
        %v3318 = vpack.c.bf16 %v3104, %v3103
        %v3319 = vpack.c.bf16 %v3106, %v3105
        %v3320 = vpack.c.bf16 %v3108, %v3107
        %v3321 = vpack.c.bf16 %v3110, %v3109
        %v3322 = vpack.c.bf16 %v3112, %v3111
        %v3323 = vpack.c.bf16 %v3114, %v3113
        %v3324 = vpack.c.bf16 %v3116, %v3115
        %v3325 = vpack.c.bf16 %v3118, %v3117
        %v3326 = vpack.c.bf16 %v3120, %v3119
        %v3327 = vpack.c.bf16 %v3122, %v3121
        %v3328 = vpack.c.bf16 %v3124, %v3123
        %v3329 = vpack.c.bf16 %v3126, %v3125
        %v3330 = vpack.c.bf16 %v3128, %v3127
        %v3331 = vpack.c.bf16 %v3130, %v3129
        %v3332 = vpack.c.bf16 %v3132, %v3131
        %v3333 = vpack.c.bf16 %v3134, %v3133
        %v3334 = vpack.c.bf16 %v3136, %v3135
        %v3335 = vpack.c.bf16 %v3138, %v3137
        %v3336 = vpack.c.bf16 %v3140, %v3139
        %v3337 = vpack.c.bf16 %v3142, %v3141
        %v3338 = vpack.c.bf16 %v3144, %v3143
        %v3339 = vpack.c.bf16 %v3146, %v3145
        %v3340 = vpack.c.bf16 %v3148, %v3147
        %v3341 = vpack.c.bf16 %v3150, %v3149
        %v3342 = vpack.c.bf16 %v3152, %v3151
        %v3343 = vpack.c.bf16 %v3154, %v3153
        %v3344 = vpack.c.bf16 %v3156, %v3155
        %v3345 = vpack.c.bf16 %v3158, %v3157
        %v3346 = vpack.c.bf16 %v3160, %v3159
        %v3347 = vpack.c.bf16 %v3162, %v3161
        %v3348 = vpack.c.bf16 %v3164, %v3163
        %v3349 = vpack.c.bf16 %v3166, %v3165
        %v3350 = vpack.c.bf16 %v3168, %v3167
        %v3351 = vpack.c.bf16 %v3170, %v3169
        %v3352 = vpack.c.bf16 %v3172, %v3171
        %v3353 = vpack.c.bf16 %v3174, %v3173
        %v3354 = vpack.c.bf16 %v3176, %v3175
        %v3355 = vpack.c.bf16 %v3178, %v3177
        %v3356 = vpack.c.bf16 %v3180, %v3179
        %v3357 = vpack.c.bf16 %v3182, %v3181
        %v3358 = vpack.c.bf16 %v3184, %v3183
        %v3359 = vpack.c.bf16 %v3186, %v3185
        %v3360 = vpack.c.bf16 %v3188, %v3187
        %v3361 = vpack.c.bf16 %v3190, %v3189
        %v3362 = vpack.c.bf16 %v3192, %v3191
        %v3363 = vpack.c.bf16 %v3194, %v3193
        %v3364 = vpack.c.bf16 %v3196, %v3195
        %v3365 = vpack.c.bf16 %v3198, %v3197
        %v3366 = vpack.c.bf16 %v3200, %v3199
        %v3367 = vpack.c.bf16 %v3202, %v3201
        %v3368 = vpack.c.bf16 %v3204, %v3203
        %v3369 = vpack.c.bf16 %v3206, %v3205
        %v3370 = vpack.c.bf16 %v3208, %v3207
        %v3371 = vpack.c.bf16 %v3210, %v3209
        %v3372 = vpack.c.bf16 %v3212, %v3211
        %v3373 = vpack.c.bf16 %v3214, %v3213
        %v3374 = vpack.c.bf16 %v3216, %v3215
        %v3375 = vpack.c.bf16 %v3218, %v3217
        %v3376 = vpack.c.bf16 %v3220, %v3219
        %v3377 = vpack.c.bf16 %v3222, %v3221
        %v3378 = vpack.c.bf16 %v3224, %v3223
        %v3379 = vpack.c.bf16 %v3226, %v3225
        %v3380 = vpack.c.bf16 %v3228, %v3227
        %v3381 = vpack.c.bf16 %v3230, %v3229
        %v3382 = vpack.c.bf16 %v3232, %v3231
        %v3383 = vpack.c.bf16 %v3234, %v3233
        %v3384 = vpack.c.bf16 %v3236, %v3235
        %v3385 = vpack.c.bf16 %v3238, %v3237
        %v3386 = vpack.c.bf16 %v3240, %v3239
        %v3387 = vpack.c.bf16 %v3242, %v3241
        %v3388 = vpack.c.bf16 %v3244, %v3243
        %v3389 = vpack.c.bf16 %v3246, %v3245
        %v3390 = vpack.c.bf16 %v3248, %v3247
        %v3391 = vpack.c.bf16 %v3250, %v3249
        %v3392 = vpack.c.bf16 %v3252, %v3251
        %v3393 = vpack.c.bf16 %v3254, %v3253
        %v3394 = vpack.c.bf16 %v3256, %v3255
        %v3395 = vpack.c.bf16 %v3258, %v3257
        %v3396 = vpack.c.bf16 %v3260, %v3259
        %v3397 = vpack.c.bf16 %v3262, %v3261
        %v3398 = vpack.c.bf16 %v3264, %v3263
        %v3399 = vpack.c.bf16 %v3266, %v3265
        %v3400 = vpack.c.bf16 %v3268, %v3267
        %v3401 = vpack.c.bf16 %v3270, %v3269
        %v3402 = vpack.c.bf16 %v3272, %v3271
        %v3403 = vpack.c.bf16 %v3274, %v3273
        %v3404 = vpack.c.bf16 %v3276, %v3275
        %v3533 = vunpack.c.l.b16 %v3277
        %v3534 = vunpack.c.h.b16 %v3277
        %v3535 = vunpack.c.l.b16 %v3278
        %v3536 = vunpack.c.h.b16 %v3278
        %v3537 = vunpack.c.l.b16 %v3279
        %v3538 = vunpack.c.h.b16 %v3279
        %v3539 = vunpack.c.l.b16 %v3280
        %v3540 = vunpack.c.h.b16 %v3280
        %v3541 = vunpack.c.l.b16 %v3281
        %v3542 = vunpack.c.h.b16 %v3281
        %v3543 = vunpack.c.l.b16 %v3282
        %v3544 = vunpack.c.h.b16 %v3282
        %v3545 = vunpack.c.l.b16 %v3283
        %v3546 = vunpack.c.h.b16 %v3283
        %v3547 = vunpack.c.l.b16 %v3284
        %v3548 = vunpack.c.h.b16 %v3284
        %v3549 = vunpack.c.l.b16 %v3285
        %v3550 = vunpack.c.h.b16 %v3285
        %v3551 = vunpack.c.l.b16 %v3286
        %v3552 = vunpack.c.h.b16 %v3286
        %v3553 = vunpack.c.l.b16 %v3287
        %v3554 = vunpack.c.h.b16 %v3287
        %v3555 = vunpack.c.l.b16 %v3288
        %v3556 = vunpack.c.h.b16 %v3288
        %v3557 = vunpack.c.l.b16 %v3289
        %v3558 = vunpack.c.h.b16 %v3289
        %v3559 = vunpack.c.l.b16 %v3290
        %v3560 = vunpack.c.h.b16 %v3290
        %v3561 = vunpack.c.l.b16 %v3291
        %v3562 = vunpack.c.h.b16 %v3291
        %v3563 = vunpack.c.l.b16 %v3292
        %v3564 = vunpack.c.h.b16 %v3292
        %v3565 = vunpack.c.l.b16 %v3293
        %v3566 = vunpack.c.h.b16 %v3293
        %v3567 = vunpack.c.l.b16 %v3294
        %v3568 = vunpack.c.h.b16 %v3294
        %v3569 = vunpack.c.l.b16 %v3295
        %v3570 = vunpack.c.h.b16 %v3295
        %v3571 = vunpack.c.l.b16 %v3296
        %v3572 = vunpack.c.h.b16 %v3296
        %v3573 = vunpack.c.l.b16 %v3297
        %v3574 = vunpack.c.h.b16 %v3297
        %v3575 = vunpack.c.l.b16 %v3298
        %v3576 = vunpack.c.h.b16 %v3298
        %v3577 = vunpack.c.l.b16 %v3299
        %v3578 = vunpack.c.h.b16 %v3299
        %v3579 = vunpack.c.l.b16 %v3300
        %v3580 = vunpack.c.h.b16 %v3300
        %v3581 = vunpack.c.l.b16 %v3301
        %v3582 = vunpack.c.h.b16 %v3301
        %v3583 = vunpack.c.l.b16 %v3302
        %v3584 = vunpack.c.h.b16 %v3302
        %v3585 = vunpack.c.l.b16 %v3303
        %v3586 = vunpack.c.h.b16 %v3303
        %v3587 = vunpack.c.l.b16 %v3304
        %v3588 = vunpack.c.h.b16 %v3304
        %v3589 = vunpack.c.l.b16 %v3305
        %v3590 = vunpack.c.h.b16 %v3305
        %v3591 = vunpack.c.l.b16 %v3306
        %v3592 = vunpack.c.h.b16 %v3306
        %v3593 = vunpack.c.l.b16 %v3307
        %v3594 = vunpack.c.h.b16 %v3307
        %v3595 = vunpack.c.l.b16 %v3308
        %v3596 = vunpack.c.h.b16 %v3308
        %v3597 = vunpack.c.l.b16 %v3309
        %v3598 = vunpack.c.h.b16 %v3309
        %v3599 = vunpack.c.l.b16 %v3310
        %v3600 = vunpack.c.h.b16 %v3310
        %v3601 = vunpack.c.l.b16 %v3311
        %v3602 = vunpack.c.h.b16 %v3311
        %v3603 = vunpack.c.l.b16 %v3312
        %v3604 = vunpack.c.h.b16 %v3312
        %v3605 = vunpack.c.l.b16 %v3313
        %v3606 = vunpack.c.h.b16 %v3313
        %v3607 = vunpack.c.l.b16 %v3314
        %v3608 = vunpack.c.h.b16 %v3314
        %v3609 = vunpack.c.l.b16 %v3315
        %v3610 = vunpack.c.h.b16 %v3315
        %v3611 = vunpack.c.l.b16 %v3316
        %v3612 = vunpack.c.h.b16 %v3316
        %v3613 = vunpack.c.l.b16 %v3317
        %v3614 = vunpack.c.h.b16 %v3317
        %v3615 = vunpack.c.l.b16 %v3318
        %v3616 = vunpack.c.h.b16 %v3318
        %v3617 = vunpack.c.l.b16 %v3319
        %v3618 = vunpack.c.h.b16 %v3319
        %v3619 = vunpack.c.l.b16 %v3320
        %v3620 = vunpack.c.h.b16 %v3320
        %v3621 = vunpack.c.l.b16 %v3321
        %v3622 = vunpack.c.h.b16 %v3321
        %v3623 = vunpack.c.l.b16 %v3322
        %v3624 = vunpack.c.h.b16 %v3322
        %v3625 = vunpack.c.l.b16 %v3323
        %v3626 = vunpack.c.h.b16 %v3323
        %v3627 = vunpack.c.l.b16 %v3324
        %v3628 = vunpack.c.h.b16 %v3324
        %v3629 = vunpack.c.l.b16 %v3325
        %v3630 = vunpack.c.h.b16 %v3325
        %v3631 = vunpack.c.l.b16 %v3326
        %v3632 = vunpack.c.h.b16 %v3326
        %v3633 = vunpack.c.l.b16 %v3327
        %v3634 = vunpack.c.h.b16 %v3327
        %v3635 = vunpack.c.l.b16 %v3328
        %v3636 = vunpack.c.h.b16 %v3328
        %v3637 = vunpack.c.l.b16 %v3329
        %v3638 = vunpack.c.h.b16 %v3329
        %v3639 = vunpack.c.l.b16 %v3330
        %v3640 = vunpack.c.h.b16 %v3330
        %v3641 = vunpack.c.l.b16 %v3331
        %v3642 = vunpack.c.h.b16 %v3331
        %v3643 = vunpack.c.l.b16 %v3332
        %v3644 = vunpack.c.h.b16 %v3332
        %v3645 = vunpack.c.l.b16 %v3333
        %v3646 = vunpack.c.h.b16 %v3333
        %v3647 = vunpack.c.l.b16 %v3334
        %v3648 = vunpack.c.h.b16 %v3334
        %v3649 = vunpack.c.l.b16 %v3335
        %v3650 = vunpack.c.h.b16 %v3335
        %v3651 = vunpack.c.l.b16 %v3336
        %v3652 = vunpack.c.h.b16 %v3336
        %v3653 = vunpack.c.l.b16 %v3337
        %v3654 = vunpack.c.h.b16 %v3337
        %v3655 = vunpack.c.l.b16 %v3338
        %v3656 = vunpack.c.h.b16 %v3338
        %v3657 = vunpack.c.l.b16 %v3339
        %v3658 = vunpack.c.h.b16 %v3339
        %v3659 = vunpack.c.l.b16 %v3340
        %v3660 = vunpack.c.h.b16 %v3340
        %v3661 = vunpack.c.l.b16 %v3341
        %v3662 = vunpack.c.h.b16 %v3341
        %v3663 = vunpack.c.l.b16 %v3342
        %v3664 = vunpack.c.h.b16 %v3342
        %v3665 = vunpack.c.l.b16 %v3343
        %v3666 = vunpack.c.h.b16 %v3343
        %v3667 = vunpack.c.l.b16 %v3344
        %v3668 = vunpack.c.h.b16 %v3344
        %v3669 = vunpack.c.l.b16 %v3345
        %v3670 = vunpack.c.h.b16 %v3345
        %v3671 = vunpack.c.l.b16 %v3346
        %v3672 = vunpack.c.h.b16 %v3346
        %v3673 = vunpack.c.l.b16 %v3347
        %v3674 = vunpack.c.h.b16 %v3347
        %v3675 = vunpack.c.l.b16 %v3348
        %v3676 = vunpack.c.h.b16 %v3348
        %v3677 = vunpack.c.l.b16 %v3349
        %v3678 = vunpack.c.h.b16 %v3349
        %v3679 = vunpack.c.l.b16 %v3350
        %v3680 = vunpack.c.h.b16 %v3350
        %v3681 = vunpack.c.l.b16 %v3351
        %v3682 = vunpack.c.h.b16 %v3351
        %v3683 = vunpack.c.l.b16 %v3352
        %v3684 = vunpack.c.h.b16 %v3352
        %v3685 = vunpack.c.l.b16 %v3353
        %v3686 = vunpack.c.h.b16 %v3353
        %v3687 = vunpack.c.l.b16 %v3354
        %v3688 = vunpack.c.h.b16 %v3354
        %v3689 = vunpack.c.l.b16 %v3355
        %v3690 = vunpack.c.h.b16 %v3355
        %v3691 = vunpack.c.l.b16 %v3356
        %v3692 = vunpack.c.h.b16 %v3356
        %v3693 = vunpack.c.l.b16 %v3357
        %v3694 = vunpack.c.h.b16 %v3357
        %v3695 = vunpack.c.l.b16 %v3358
        %v3696 = vunpack.c.h.b16 %v3358
        %v3697 = vunpack.c.l.b16 %v3359
        %v3698 = vunpack.c.h.b16 %v3359
        %v3699 = vunpack.c.l.b16 %v3360
        %v3700 = vunpack.c.h.b16 %v3360
        %v3701 = vunpack.c.l.b16 %v3361
        %v3702 = vunpack.c.h.b16 %v3361
        %v3703 = vunpack.c.l.b16 %v3362
        %v3704 = vunpack.c.h.b16 %v3362
        %v3705 = vunpack.c.l.b16 %v3363
        %v3706 = vunpack.c.h.b16 %v3363
        %v3707 = vunpack.c.l.b16 %v3364
        %v3708 = vunpack.c.h.b16 %v3364
        %v3709 = vunpack.c.l.b16 %v3365
        %v3710 = vunpack.c.h.b16 %v3365
        %v3711 = vunpack.c.l.b16 %v3366
        %v3712 = vunpack.c.h.b16 %v3366
        %v3713 = vunpack.c.l.b16 %v3367
        %v3714 = vunpack.c.h.b16 %v3367
        %v3715 = vunpack.c.l.b16 %v3368
        %v3716 = vunpack.c.h.b16 %v3368
        %v3717 = vunpack.c.l.b16 %v3369
        %v3718 = vunpack.c.h.b16 %v3369
        %v3719 = vunpack.c.l.b16 %v3370
        %v3720 = vunpack.c.h.b16 %v3370
        %v3721 = vunpack.c.l.b16 %v3371
        %v3722 = vunpack.c.h.b16 %v3371
        %v3723 = vunpack.c.l.b16 %v3372
        %v3724 = vunpack.c.h.b16 %v3372
        %v3725 = vunpack.c.l.b16 %v3373
        %v3726 = vunpack.c.h.b16 %v3373
        %v3727 = vunpack.c.l.b16 %v3374
        %v3728 = vunpack.c.h.b16 %v3374
        %v3729 = vunpack.c.l.b16 %v3375
        %v3730 = vunpack.c.h.b16 %v3375
        %v3731 = vunpack.c.l.b16 %v3376
        %v3732 = vunpack.c.h.b16 %v3376
        %v3733 = vunpack.c.l.b16 %v3377
        %v3734 = vunpack.c.h.b16 %v3377
        %v3735 = vunpack.c.l.b16 %v3378
        %v3736 = vunpack.c.h.b16 %v3378
        %v3737 = vunpack.c.l.b16 %v3379
        %v3738 = vunpack.c.h.b16 %v3379
        %v3739 = vunpack.c.l.b16 %v3380
        %v3740 = vunpack.c.h.b16 %v3380
        %v3741 = vunpack.c.l.b16 %v3381
        %v3742 = vunpack.c.h.b16 %v3381
        %v3743 = vunpack.c.l.b16 %v3382
        %v3744 = vunpack.c.h.b16 %v3382
        %v3745 = vunpack.c.l.b16 %v3383
        %v3746 = vunpack.c.h.b16 %v3383
        %v3747 = vunpack.c.l.b16 %v3384
        %v3748 = vunpack.c.h.b16 %v3384
        %v3749 = vunpack.c.l.b16 %v3385
        %v3750 = vunpack.c.h.b16 %v3385
        %v3751 = vunpack.c.l.b16 %v3386
        %v3752 = vunpack.c.h.b16 %v3386
        %v3753 = vunpack.c.l.b16 %v3387
        %v3754 = vunpack.c.h.b16 %v3387
        %v3755 = vunpack.c.l.b16 %v3388
        %v3756 = vunpack.c.h.b16 %v3388
        %v3757 = vunpack.c.l.b16 %v3389
        %v3758 = vunpack.c.h.b16 %v3389
        %v3759 = vunpack.c.l.b16 %v3390
        %v3760 = vunpack.c.h.b16 %v3390
        %v3761 = vunpack.c.l.b16 %v3391
        %v3762 = vunpack.c.h.b16 %v3391
        %v3763 = vunpack.c.l.b16 %v3392
        %v3764 = vunpack.c.h.b16 %v3392
        %v3765 = vunpack.c.l.b16 %v3393
        %v3766 = vunpack.c.h.b16 %v3393
        %v3767 = vunpack.c.l.b16 %v3394
        %v3768 = vunpack.c.h.b16 %v3394
        %v3769 = vunpack.c.l.b16 %v3395
        %v3770 = vunpack.c.h.b16 %v3395
        %v3771 = vunpack.c.l.b16 %v3396
        %v3772 = vunpack.c.h.b16 %v3396
        %v3773 = vunpack.c.l.b16 %v3397
        %v3774 = vunpack.c.h.b16 %v3397
        %v3775 = vunpack.c.l.b16 %v3398
        %v3776 = vunpack.c.h.b16 %v3398
        %v3777 = vunpack.c.l.b16 %v3399
        %v3778 = vunpack.c.h.b16 %v3399
        %v3779 = vunpack.c.l.b16 %v3400
        %v3780 = vunpack.c.h.b16 %v3400
        %v3781 = vunpack.c.l.b16 %v3401
        %v3782 = vunpack.c.h.b16 %v3401
        %v3783 = vunpack.c.l.b16 %v3402
        %v3784 = vunpack.c.h.b16 %v3402
        %v3785 = vunpack.c.l.b16 %v3403
        %v3786 = vunpack.c.h.b16 %v3403
        %v3787 = vunpack.c.l.b16 %v3404
        %v3788 = vunpack.c.h.b16 %v3404
        %v3789 = vpack.c.b16 %v3533, %v3533
        %v3790 = vpack.c.b16 %v3534, %v3534
        %v3791 = vpack.c.b16 %v3535, %v3535
        %v3792 = vpack.c.b16 %v3536, %v3536
        %v3793 = vpack.c.b16 %v3537, %v3537
        %v3794 = vpack.c.b16 %v3538, %v3538
        %v3795 = vpack.c.b16 %v3539, %v3539
        %v3796 = vpack.c.b16 %v3540, %v3540
        %v3797 = vpack.c.b16 %v3541, %v3541
        %v3798 = vpack.c.b16 %v3542, %v3542
        %v3799 = vpack.c.b16 %v3543, %v3543
        %v3800 = vpack.c.b16 %v3544, %v3544
        %v3801 = vpack.c.b16 %v3545, %v3545
        %v3802 = vpack.c.b16 %v3546, %v3546
        %v3803 = vpack.c.b16 %v3547, %v3547
        %v3804 = vpack.c.b16 %v3548, %v3548
        %v3805 = vpack.c.b16 %v3549, %v3549
        %v3806 = vpack.c.b16 %v3550, %v3550
        %v3807 = vpack.c.b16 %v3551, %v3551
        %v3808 = vpack.c.b16 %v3552, %v3552
        %v3809 = vpack.c.b16 %v3553, %v3553
        %v3810 = vpack.c.b16 %v3554, %v3554
        %v3811 = vpack.c.b16 %v3555, %v3555
        %v3812 = vpack.c.b16 %v3556, %v3556
        %v3813 = vpack.c.b16 %v3557, %v3557
        %v3814 = vpack.c.b16 %v3558, %v3558
        %v3815 = vpack.c.b16 %v3559, %v3559
        %v3816 = vpack.c.b16 %v3560, %v3560
        %v3817 = vpack.c.b16 %v3561, %v3561
        %v3818 = vpack.c.b16 %v3562, %v3562
        %v3819 = vpack.c.b16 %v3563, %v3563
        %v3820 = vpack.c.b16 %v3564, %v3564
        %v3821 = vpack.c.b16 %v3565, %v3565
        %v3822 = vpack.c.b16 %v3566, %v3566
        %v3823 = vpack.c.b16 %v3567, %v3567
        %v3824 = vpack.c.b16 %v3568, %v3568
        %v3825 = vpack.c.b16 %v3569, %v3569
        %v3826 = vpack.c.b16 %v3570, %v3570
        %v3827 = vpack.c.b16 %v3571, %v3571
        %v3828 = vpack.c.b16 %v3572, %v3572
        %v3829 = vpack.c.b16 %v3573, %v3573
        %v3830 = vpack.c.b16 %v3574, %v3574
        %v3831 = vpack.c.b16 %v3575, %v3575
        %v3832 = vpack.c.b16 %v3576, %v3576
        %v3833 = vpack.c.b16 %v3577, %v3577
        %v3834 = vpack.c.b16 %v3578, %v3578
        %v3835 = vpack.c.b16 %v3579, %v3579
        %v3836 = vpack.c.b16 %v3580, %v3580
        %v3837 = vpack.c.b16 %v3581, %v3581
        %v3838 = vpack.c.b16 %v3582, %v3582
        %v3839 = vpack.c.b16 %v3583, %v3583
        %v3840 = vpack.c.b16 %v3584, %v3584
        %v3841 = vpack.c.b16 %v3585, %v3585
        %v3842 = vpack.c.b16 %v3586, %v3586
        %v3843 = vpack.c.b16 %v3587, %v3587
        %v3844 = vpack.c.b16 %v3588, %v3588
        %v3845 = vpack.c.b16 %v3589, %v3589
        %v3846 = vpack.c.b16 %v3590, %v3590
        %v3847 = vpack.c.b16 %v3591, %v3591
        %v3848 = vpack.c.b16 %v3592, %v3592
        %v3849 = vpack.c.b16 %v3593, %v3593
        %v3850 = vpack.c.b16 %v3594, %v3594
        %v3851 = vpack.c.b16 %v3595, %v3595
        %v3852 = vpack.c.b16 %v3596, %v3596
        %v3853 = vpack.c.b16 %v3597, %v3597
        %v3854 = vpack.c.b16 %v3598, %v3598
        %v3855 = vpack.c.b16 %v3599, %v3599
        %v3856 = vpack.c.b16 %v3600, %v3600
        %v3857 = vpack.c.b16 %v3601, %v3601
        %v3858 = vpack.c.b16 %v3602, %v3602
        %v3859 = vpack.c.b16 %v3603, %v3603
        %v3860 = vpack.c.b16 %v3604, %v3604
        %v3861 = vpack.c.b16 %v3605, %v3605
        %v3862 = vpack.c.b16 %v3606, %v3606
        %v3863 = vpack.c.b16 %v3607, %v3607
        %v3864 = vpack.c.b16 %v3608, %v3608
        %v3865 = vpack.c.b16 %v3609, %v3609
        %v3866 = vpack.c.b16 %v3610, %v3610
        %v3867 = vpack.c.b16 %v3611, %v3611
        %v3868 = vpack.c.b16 %v3612, %v3612
        %v3869 = vpack.c.b16 %v3613, %v3613
        %v3870 = vpack.c.b16 %v3614, %v3614
        %v3871 = vpack.c.b16 %v3615, %v3615
        %v3872 = vpack.c.b16 %v3616, %v3616
        %v3873 = vpack.c.b16 %v3617, %v3617
        %v3874 = vpack.c.b16 %v3618, %v3618
        %v3875 = vpack.c.b16 %v3619, %v3619
        %v3876 = vpack.c.b16 %v3620, %v3620
        %v3877 = vpack.c.b16 %v3621, %v3621
        %v3878 = vpack.c.b16 %v3622, %v3622
        %v3879 = vpack.c.b16 %v3623, %v3623
        %v3880 = vpack.c.b16 %v3624, %v3624
        %v3881 = vpack.c.b16 %v3625, %v3625
        %v3882 = vpack.c.b16 %v3626, %v3626
        %v3883 = vpack.c.b16 %v3627, %v3627
        %v3884 = vpack.c.b16 %v3628, %v3628
        %v3885 = vpack.c.b16 %v3629, %v3629
        %v3886 = vpack.c.b16 %v3630, %v3630
        %v3887 = vpack.c.b16 %v3631, %v3631
        %v3888 = vpack.c.b16 %v3632, %v3632
        %v3889 = vpack.c.b16 %v3633, %v3633
        %v3890 = vpack.c.b16 %v3634, %v3634
        %v3891 = vpack.c.b16 %v3635, %v3635
        %v3892 = vpack.c.b16 %v3636, %v3636
        %v3893 = vpack.c.b16 %v3637, %v3637
        %v3894 = vpack.c.b16 %v3638, %v3638
        %v3895 = vpack.c.b16 %v3639, %v3639
        %v3896 = vpack.c.b16 %v3640, %v3640
        %v3897 = vpack.c.b16 %v3641, %v3641
        %v3898 = vpack.c.b16 %v3642, %v3642
        %v3899 = vpack.c.b16 %v3643, %v3643
        %v3900 = vpack.c.b16 %v3644, %v3644
        %v3901 = vpack.c.b16 %v3645, %v3645
        %v3902 = vpack.c.b16 %v3646, %v3646
        %v3903 = vpack.c.b16 %v3647, %v3647
        %v3904 = vpack.c.b16 %v3648, %v3648
        %v3905 = vpack.c.b16 %v3649, %v3649
        %v3906 = vpack.c.b16 %v3650, %v3650
        %v3907 = vpack.c.b16 %v3651, %v3651
        %v3908 = vpack.c.b16 %v3652, %v3652
        %v3909 = vpack.c.b16 %v3653, %v3653
        %v3910 = vpack.c.b16 %v3654, %v3654
        %v3911 = vpack.c.b16 %v3655, %v3655
        %v3912 = vpack.c.b16 %v3656, %v3656
        %v3913 = vpack.c.b16 %v3657, %v3657
        %v3914 = vpack.c.b16 %v3658, %v3658
        %v3915 = vpack.c.b16 %v3659, %v3659
        %v3916 = vpack.c.b16 %v3660, %v3660
        %v3917 = vpack.c.b16 %v3661, %v3661
        %v3918 = vpack.c.b16 %v3662, %v3662
        %v3919 = vpack.c.b16 %v3663, %v3663
        %v3920 = vpack.c.b16 %v3664, %v3664
        %v3921 = vpack.c.b16 %v3665, %v3665
        %v3922 = vpack.c.b16 %v3666, %v3666
        %v3923 = vpack.c.b16 %v3667, %v3667
        %v3924 = vpack.c.b16 %v3668, %v3668
        %v3925 = vpack.c.b16 %v3669, %v3669
        %v3926 = vpack.c.b16 %v3670, %v3670
        %v3927 = vpack.c.b16 %v3671, %v3671
        %v3928 = vpack.c.b16 %v3672, %v3672
        %v3929 = vpack.c.b16 %v3673, %v3673
        %v3930 = vpack.c.b16 %v3674, %v3674
        %v3931 = vpack.c.b16 %v3675, %v3675
        %v3932 = vpack.c.b16 %v3676, %v3676
        %v3933 = vpack.c.b16 %v3677, %v3677
        %v3934 = vpack.c.b16 %v3678, %v3678
        %v3935 = vpack.c.b16 %v3679, %v3679
        %v3936 = vpack.c.b16 %v3680, %v3680
        %v3937 = vpack.c.b16 %v3681, %v3681
        %v3938 = vpack.c.b16 %v3682, %v3682
        %v3939 = vpack.c.b16 %v3683, %v3683
        %v3940 = vpack.c.b16 %v3684, %v3684
        %v3941 = vpack.c.b16 %v3685, %v3685
        %v3942 = vpack.c.b16 %v3686, %v3686
        %v3943 = vpack.c.b16 %v3687, %v3687
        %v3944 = vpack.c.b16 %v3688, %v3688
        %v3945 = vpack.c.b16 %v3689, %v3689
        %v3946 = vpack.c.b16 %v3690, %v3690
        %v3947 = vpack.c.b16 %v3691, %v3691
        %v3948 = vpack.c.b16 %v3692, %v3692
        %v3949 = vpack.c.b16 %v3693, %v3693
        %v3950 = vpack.c.b16 %v3694, %v3694
        %v3951 = vpack.c.b16 %v3695, %v3695
        %v3952 = vpack.c.b16 %v3696, %v3696
        %v3953 = vpack.c.b16 %v3697, %v3697
        %v3954 = vpack.c.b16 %v3698, %v3698
        %v3955 = vpack.c.b16 %v3699, %v3699
        %v3956 = vpack.c.b16 %v3700, %v3700
        %v3957 = vpack.c.b16 %v3701, %v3701
        %v3958 = vpack.c.b16 %v3702, %v3702
        %v3959 = vpack.c.b16 %v3703, %v3703
        %v3960 = vpack.c.b16 %v3704, %v3704
        %v3961 = vpack.c.b16 %v3705, %v3705
        %v3962 = vpack.c.b16 %v3706, %v3706
        %v3963 = vpack.c.b16 %v3707, %v3707
        %v3964 = vpack.c.b16 %v3708, %v3708
        %v3965 = vpack.c.b16 %v3709, %v3709
        %v3966 = vpack.c.b16 %v3710, %v3710
        %v3967 = vpack.c.b16 %v3711, %v3711
        %v3968 = vpack.c.b16 %v3712, %v3712
        %v3969 = vpack.c.b16 %v3713, %v3713
        %v3970 = vpack.c.b16 %v3714, %v3714
        %v3971 = vpack.c.b16 %v3715, %v3715
        %v3972 = vpack.c.b16 %v3716, %v3716
        %v3973 = vpack.c.b16 %v3717, %v3717
        %v3974 = vpack.c.b16 %v3718, %v3718
        %v3975 = vpack.c.b16 %v3719, %v3719
        %v3976 = vpack.c.b16 %v3720, %v3720
        %v3977 = vpack.c.b16 %v3721, %v3721
        %v3978 = vpack.c.b16 %v3722, %v3722
        %v3979 = vpack.c.b16 %v3723, %v3723
        %v3980 = vpack.c.b16 %v3724, %v3724
        %v3981 = vpack.c.b16 %v3725, %v3725
        %v3982 = vpack.c.b16 %v3726, %v3726
        %v3983 = vpack.c.b16 %v3727, %v3727
        %v3984 = vpack.c.b16 %v3728, %v3728
        %v3985 = vpack.c.b16 %v3729, %v3729
        %v3986 = vpack.c.b16 %v3730, %v3730
        %v3987 = vpack.c.b16 %v3731, %v3731
        %v3988 = vpack.c.b16 %v3732, %v3732
        %v3989 = vpack.c.b16 %v3733, %v3733
        %v3990 = vpack.c.b16 %v3734, %v3734
        %v3991 = vpack.c.b16 %v3735, %v3735
        %v3992 = vpack.c.b16 %v3736, %v3736
        %v3993 = vpack.c.b16 %v3737, %v3737
        %v3994 = vpack.c.b16 %v3738, %v3738
        %v3995 = vpack.c.b16 %v3739, %v3739
        %v3996 = vpack.c.b16 %v3740, %v3740
        %v3997 = vpack.c.b16 %v3741, %v3741
        %v3998 = vpack.c.b16 %v3742, %v3742
        %v3999 = vpack.c.b16 %v3743, %v3743
        %v4000 = vpack.c.b16 %v3744, %v3744
        %v4001 = vpack.c.b16 %v3745, %v3745
        %v4002 = vpack.c.b16 %v3746, %v3746
        %v4003 = vpack.c.b16 %v3747, %v3747
        %v4004 = vpack.c.b16 %v3748, %v3748
        %v4005 = vpack.c.b16 %v3749, %v3749
        %v4006 = vpack.c.b16 %v3750, %v3750
        %v4007 = vpack.c.b16 %v3751, %v3751
        %v4008 = vpack.c.b16 %v3752, %v3752
        %v4009 = vpack.c.b16 %v3753, %v3753
        %v4010 = vpack.c.b16 %v3754, %v3754
        %v4011 = vpack.c.b16 %v3755, %v3755
        %v4012 = vpack.c.b16 %v3756, %v3756
        %v4013 = vpack.c.b16 %v3757, %v3757
        %v4014 = vpack.c.b16 %v3758, %v3758
        %v4015 = vpack.c.b16 %v3759, %v3759
        %v4016 = vpack.c.b16 %v3760, %v3760
        %v4017 = vpack.c.b16 %v3761, %v3761
        %v4018 = vpack.c.b16 %v3762, %v3762
        %v4019 = vpack.c.b16 %v3763, %v3763
        %v4020 = vpack.c.b16 %v3764, %v3764
        %v4021 = vpack.c.b16 %v3765, %v3765
        %v4022 = vpack.c.b16 %v3766, %v3766
        %v4023 = vpack.c.b16 %v3767, %v3767
        %v4024 = vpack.c.b16 %v3768, %v3768
        %v4025 = vpack.c.b16 %v3769, %v3769
        %v4026 = vpack.c.b16 %v3770, %v3770
        %v4027 = vpack.c.b16 %v3771, %v3771
        %v4028 = vpack.c.b16 %v3772, %v3772
        %v4029 = vpack.c.b16 %v3773, %v3773
        %v4030 = vpack.c.b16 %v3774, %v3774
        %v4031 = vpack.c.b16 %v3775, %v3775
        %v4032 = vpack.c.b16 %v3776, %v3776
        %v4033 = vpack.c.b16 %v3777, %v3777
        %v4034 = vpack.c.b16 %v3778, %v3778
        %v4035 = vpack.c.b16 %v3779, %v3779
        %v4036 = vpack.c.b16 %v3780, %v3780
        %v4037 = vpack.c.b16 %v3781, %v3781
        %v4038 = vpack.c.b16 %v3782, %v3782
        %v4039 = vpack.c.b16 %v3783, %v3783
        %v4040 = vpack.c.b16 %v3784, %v3784
        %v4041 = vpack.c.b16 %v3785, %v3785
        %v4042 = vpack.c.b16 %v3786, %v3786
        %v4043 = vpack.c.b16 %v3787, %v3787
        %v4044 = vpack.c.b16 %v3788, %v3788
        %4301 = vst [vmem:[%s160] sm:$0xf] %v3789
        %4302 = vst [vmem:[%s160 + $0x4] sm:$0xf] %v3790
        %4303 = vst [vmem:[%s160 + $0x8] sm:$0xf] %v3791
        %4304 = vst [vmem:[%s160 + $0xc] sm:$0xf] %v3792
        %4305 = vst [vmem:[%s160 + $0x10] sm:$0xf] %v3793
        %4306 = vst [vmem:[%s160 + $0x14] sm:$0xf] %v3794
        %4307 = vst [vmem:[%s160 + $0x18] sm:$0xf] %v3795
        %4308 = vst [vmem:[%s160 + $0x1c] sm:$0xf] %v3796
        %4309 = vst [vmem:[%s160 + $0x20] sm:$0xf] %v3797
        %4310 = vst [vmem:[%s160 + $0x24] sm:$0xf] %v3798
        %4311 = vst [vmem:[%s160 + $0x28] sm:$0xf] %v3799
        %4312 = vst [vmem:[%s160 + $0x2c] sm:$0xf] %v3800
        %4313 = vst [vmem:[%s160 + $0x30] sm:$0xf] %v3801
        %4314 = vst [vmem:[%s160 + $0x34] sm:$0xf] %v3802
        %4315 = vst [vmem:[%s160 + $0x38] sm:$0xf] %v3803
        %4316 = vst [vmem:[%s160 + $0x3c] sm:$0xf] %v3804
        %4317 = vst [vmem:[%s160 + $0x40] sm:$0xf] %v3805
        %4318 = vst [vmem:[%s160 + $0x44] sm:$0xf] %v3806
        %4319 = vst [vmem:[%s160 + $0x48] sm:$0xf] %v3807
        %4320 = vst [vmem:[%s160 + $0x4c] sm:$0xf] %v3808
        %4321 = vst [vmem:[%s160 + $0x50] sm:$0xf] %v3809
        %4322 = vst [vmem:[%s160 + $0x54] sm:$0xf] %v3810
        %4323 = vst [vmem:[%s160 + $0x58] sm:$0xf] %v3811
        %4324 = vst [vmem:[%s160 + $0x5c] sm:$0xf] %v3812
        %4325 = vst [vmem:[%s160 + $0x60] sm:$0xf] %v3813
        %4326 = vst [vmem:[%s160 + $0x64] sm:$0xf] %v3814
        %4327 = vst [vmem:[%s160 + $0x68] sm:$0xf] %v3815
        %4328 = vst [vmem:[%s160 + $0x6c] sm:$0xf] %v3816
        %4329 = vst [vmem:[%s160 + $0x70] sm:$0xf] %v3817
        %4330 = vst [vmem:[%s160 + $0x74] sm:$0xf] %v3818
        %4331 = vst [vmem:[%s160 + $0x78] sm:$0xf] %v3819
        %4332 = vst [vmem:[%s160 + $0x7c] sm:$0xf] %v3820
        %4333 = vst [vmem:[%s160 + $0x80] sm:$0xf] %v3821
        %4334 = vst [vmem:[%s160 + $0x84] sm:$0xf] %v3822
        %4335 = vst [vmem:[%s160 + $0x88] sm:$0xf] %v3823
        %4336 = vst [vmem:[%s160 + $0x8c] sm:$0xf] %v3824
        %4337 = vst [vmem:[%s160 + $0x90] sm:$0xf] %v3825
        %4338 = vst [vmem:[%s160 + $0x94] sm:$0xf] %v3826
        %4339 = vst [vmem:[%s160 + $0x98] sm:$0xf] %v3827
        %4340 = vst [vmem:[%s160 + $0x9c] sm:$0xf] %v3828
        %4341 = vst [vmem:[%s160 + $0xa0] sm:$0xf] %v3829
        %4342 = vst [vmem:[%s160 + $0xa4] sm:$0xf] %v3830
        %4343 = vst [vmem:[%s160 + $0xa8] sm:$0xf] %v3831
        %4344 = vst [vmem:[%s160 + $0xac] sm:$0xf] %v3832
        %4345 = vst [vmem:[%s160 + $0xb0] sm:$0xf] %v3833
        %4346 = vst [vmem:[%s160 + $0xb4] sm:$0xf] %v3834
        %4347 = vst [vmem:[%s160 + $0xb8] sm:$0xf] %v3835
        %4348 = vst [vmem:[%s160 + $0xbc] sm:$0xf] %v3836
        %4349 = vst [vmem:[%s160 + $0xc0] sm:$0xf] %v3837
        %4350 = vst [vmem:[%s160 + $0xc4] sm:$0xf] %v3838
        %4351 = vst [vmem:[%s160 + $0xc8] sm:$0xf] %v3839
        %4352 = vst [vmem:[%s160 + $0xcc] sm:$0xf] %v3840
        %4353 = vst [vmem:[%s160 + $0xd0] sm:$0xf] %v3841
        %4354 = vst [vmem:[%s160 + $0xd4] sm:$0xf] %v3842
        %4355 = vst [vmem:[%s160 + $0xd8] sm:$0xf] %v3843
        %4356 = vst [vmem:[%s160 + $0xdc] sm:$0xf] %v3844
        %4357 = vst [vmem:[%s160 + $0xe0] sm:$0xf] %v3845
        %4358 = vst [vmem:[%s160 + $0xe4] sm:$0xf] %v3846
        %4359 = vst [vmem:[%s160 + $0xe8] sm:$0xf] %v3847
        %4360 = vst [vmem:[%s160 + $0xec] sm:$0xf] %v3848
        %4361 = vst [vmem:[%s160 + $0xf0] sm:$0xf] %v3849
        %4362 = vst [vmem:[%s160 + $0xf4] sm:$0xf] %v3850
        %4363 = vst [vmem:[%s160 + $0xf8] sm:$0xf] %v3851
        %4364 = vst [vmem:[%s160 + $0xfc] sm:$0xf] %v3852
        %4365 = vst [vmem:[%s160 + $0x100] sm:$0xf] %v3853
        %4366 = vst [vmem:[%s160 + $0x104] sm:$0xf] %v3854
        %4367 = vst [vmem:[%s160 + $0x108] sm:$0xf] %v3855
        %4368 = vst [vmem:[%s160 + $0x10c] sm:$0xf] %v3856
        %4369 = vst [vmem:[%s160 + $0x110] sm:$0xf] %v3857
        %4370 = vst [vmem:[%s160 + $0x114] sm:$0xf] %v3858
        %4371 = vst [vmem:[%s160 + $0x118] sm:$0xf] %v3859
        %4372 = vst [vmem:[%s160 + $0x11c] sm:$0xf] %v3860
        %4373 = vst [vmem:[%s160 + $0x120] sm:$0xf] %v3861
        %4374 = vst [vmem:[%s160 + $0x124] sm:$0xf] %v3862
        %4375 = vst [vmem:[%s160 + $0x128] sm:$0xf] %v3863
        %4376 = vst [vmem:[%s160 + $0x12c] sm:$0xf] %v3864
        %4377 = vst [vmem:[%s160 + $0x130] sm:$0xf] %v3865
        %4378 = vst [vmem:[%s160 + $0x134] sm:$0xf] %v3866
        %4379 = vst [vmem:[%s160 + $0x138] sm:$0xf] %v3867
        %4380 = vst [vmem:[%s160 + $0x13c] sm:$0xf] %v3868
        %4381 = vst [vmem:[%s160 + $0x140] sm:$0xf] %v3869
        %4382 = vst [vmem:[%s160 + $0x144] sm:$0xf] %v3870
        %4383 = vst [vmem:[%s160 + $0x148] sm:$0xf] %v3871
        %4384 = vst [vmem:[%s160 + $0x14c] sm:$0xf] %v3872
        %4385 = vst [vmem:[%s160 + $0x150] sm:$0xf] %v3873
        %4386 = vst [vmem:[%s160 + $0x154] sm:$0xf] %v3874
        %4387 = vst [vmem:[%s160 + $0x158] sm:$0xf] %v3875
        %4388 = vst [vmem:[%s160 + $0x15c] sm:$0xf] %v3876
        %4389 = vst [vmem:[%s160 + $0x160] sm:$0xf] %v3877
        %4390 = vst [vmem:[%s160 + $0x164] sm:$0xf] %v3878
        %4391 = vst [vmem:[%s160 + $0x168] sm:$0xf] %v3879
        %4392 = vst [vmem:[%s160 + $0x16c] sm:$0xf] %v3880
        %4393 = vst [vmem:[%s160 + $0x170] sm:$0xf] %v3881
        %4394 = vst [vmem:[%s160 + $0x174] sm:$0xf] %v3882
        %4395 = vst [vmem:[%s160 + $0x178] sm:$0xf] %v3883
        %4396 = vst [vmem:[%s160 + $0x17c] sm:$0xf] %v3884
        %4397 = vst [vmem:[%s160 + $0x180] sm:$0xf] %v3885
        %4398 = vst [vmem:[%s160 + $0x184] sm:$0xf] %v3886
        %4399 = vst [vmem:[%s160 + $0x188] sm:$0xf] %v3887
        %4400 = vst [vmem:[%s160 + $0x18c] sm:$0xf] %v3888
        %4401 = vst [vmem:[%s160 + $0x190] sm:$0xf] %v3889
        %4402 = vst [vmem:[%s160 + $0x194] sm:$0xf] %v3890
        %4403 = vst [vmem:[%s160 + $0x198] sm:$0xf] %v3891
        %4404 = vst [vmem:[%s160 + $0x19c] sm:$0xf] %v3892
        %4405 = vst [vmem:[%s160 + $0x1a0] sm:$0xf] %v3893
        %4406 = vst [vmem:[%s160 + $0x1a4] sm:$0xf] %v3894
        %4407 = vst [vmem:[%s160 + $0x1a8] sm:$0xf] %v3895
        %4408 = vst [vmem:[%s160 + $0x1ac] sm:$0xf] %v3896
        %4409 = vst [vmem:[%s160 + $0x1b0] sm:$0xf] %v3897
        %4410 = vst [vmem:[%s160 + $0x1b4] sm:$0xf] %v3898
        %4411 = vst [vmem:[%s160 + $0x1b8] sm:$0xf] %v3899
        %4412 = vst [vmem:[%s160 + $0x1bc] sm:$0xf] %v3900
        %4413 = vst [vmem:[%s160 + $0x1c0] sm:$0xf] %v3901
        %4414 = vst [vmem:[%s160 + $0x1c4] sm:$0xf] %v3902
        %4415 = vst [vmem:[%s160 + $0x1c8] sm:$0xf] %v3903
        %4416 = vst [vmem:[%s160 + $0x1cc] sm:$0xf] %v3904
        %4417 = vst [vmem:[%s160 + $0x1d0] sm:$0xf] %v3905
        %4418 = vst [vmem:[%s160 + $0x1d4] sm:$0xf] %v3906
        %4419 = vst [vmem:[%s160 + $0x1d8] sm:$0xf] %v3907
        %4420 = vst [vmem:[%s160 + $0x1dc] sm:$0xf] %v3908
        %4421 = vst [vmem:[%s160 + $0x1e0] sm:$0xf] %v3909
        %4422 = vst [vmem:[%s160 + $0x1e4] sm:$0xf] %v3910
        %4423 = vst [vmem:[%s160 + $0x1e8] sm:$0xf] %v3911
        %4424 = vst [vmem:[%s160 + $0x1ec] sm:$0xf] %v3912
        %4425 = vst [vmem:[%s160 + $0x1f0] sm:$0xf] %v3913
        %4426 = vst [vmem:[%s160 + $0x1f4] sm:$0xf] %v3914
        %4427 = vst [vmem:[%s160 + $0x1f8] sm:$0xf] %v3915
        %4428 = vst [vmem:[%s160 + $0x1fc] sm:$0xf] %v3916
        %4429 = vst [vmem:[%s160 + $0x200] sm:$0xf] %v3917
        %4430 = vst [vmem:[%s160 + $0x204] sm:$0xf] %v3918
        %4431 = vst [vmem:[%s160 + $0x208] sm:$0xf] %v3919
        %4432 = vst [vmem:[%s160 + $0x20c] sm:$0xf] %v3920
        %4433 = vst [vmem:[%s160 + $0x210] sm:$0xf] %v3921
        %4434 = vst [vmem:[%s160 + $0x214] sm:$0xf] %v3922
        %4435 = vst [vmem:[%s160 + $0x218] sm:$0xf] %v3923
        %4436 = vst [vmem:[%s160 + $0x21c] sm:$0xf] %v3924
        %4437 = vst [vmem:[%s160 + $0x220] sm:$0xf] %v3925
        %4438 = vst [vmem:[%s160 + $0x224] sm:$0xf] %v3926
        %4439 = vst [vmem:[%s160 + $0x228] sm:$0xf] %v3927
        %4440 = vst [vmem:[%s160 + $0x22c] sm:$0xf] %v3928
        %4441 = vst [vmem:[%s160 + $0x230] sm:$0xf] %v3929
        %4442 = vst [vmem:[%s160 + $0x234] sm:$0xf] %v3930
        %4443 = vst [vmem:[%s160 + $0x238] sm:$0xf] %v3931
        %4444 = vst [vmem:[%s160 + $0x23c] sm:$0xf] %v3932
        %4445 = vst [vmem:[%s160 + $0x240] sm:$0xf] %v3933
        %4446 = vst [vmem:[%s160 + $0x244] sm:$0xf] %v3934
        %4447 = vst [vmem:[%s160 + $0x248] sm:$0xf] %v3935
        %4448 = vst [vmem:[%s160 + $0x24c] sm:$0xf] %v3936
        %4449 = vst [vmem:[%s160 + $0x250] sm:$0xf] %v3937
        %4450 = vst [vmem:[%s160 + $0x254] sm:$0xf] %v3938
        %4451 = vst [vmem:[%s160 + $0x258] sm:$0xf] %v3939
        %4452 = vst [vmem:[%s160 + $0x25c] sm:$0xf] %v3940
        %4453 = vst [vmem:[%s160 + $0x260] sm:$0xf] %v3941
        %4454 = vst [vmem:[%s160 + $0x264] sm:$0xf] %v3942
        %4455 = vst [vmem:[%s160 + $0x268] sm:$0xf] %v3943
        %4456 = vst [vmem:[%s160 + $0x26c] sm:$0xf] %v3944
        %4457 = vst [vmem:[%s160 + $0x270] sm:$0xf] %v3945
        %4458 = vst [vmem:[%s160 + $0x274] sm:$0xf] %v3946
        %4459 = vst [vmem:[%s160 + $0x278] sm:$0xf] %v3947
        %4460 = vst [vmem:[%s160 + $0x27c] sm:$0xf] %v3948
        %4461 = vst [vmem:[%s160 + $0x280] sm:$0xf] %v3949
        %4462 = vst [vmem:[%s160 + $0x284] sm:$0xf] %v3950
        %4463 = vst [vmem:[%s160 + $0x288] sm:$0xf] %v3951
        %4464 = vst [vmem:[%s160 + $0x28c] sm:$0xf] %v3952
        %4465 = vst [vmem:[%s160 + $0x290] sm:$0xf] %v3953
        %4466 = vst [vmem:[%s160 + $0x294] sm:$0xf] %v3954
        %4467 = vst [vmem:[%s160 + $0x298] sm:$0xf] %v3955
        %4468 = vst [vmem:[%s160 + $0x29c] sm:$0xf] %v3956
        %4469 = vst [vmem:[%s160 + $0x2a0] sm:$0xf] %v3957
        %4470 = vst [vmem:[%s160 + $0x2a4] sm:$0xf] %v3958
        %4471 = vst [vmem:[%s160 + $0x2a8] sm:$0xf] %v3959
        %4472 = vst [vmem:[%s160 + $0x2ac] sm:$0xf] %v3960
        %4473 = vst [vmem:[%s160 + $0x2b0] sm:$0xf] %v3961
        %4474 = vst [vmem:[%s160 + $0x2b4] sm:$0xf] %v3962
        %4475 = vst [vmem:[%s160 + $0x2b8] sm:$0xf] %v3963
        %4476 = vst [vmem:[%s160 + $0x2bc] sm:$0xf] %v3964
        %4477 = vst [vmem:[%s160 + $0x2c0] sm:$0xf] %v3965
        %4478 = vst [vmem:[%s160 + $0x2c4] sm:$0xf] %v3966
        %4479 = vst [vmem:[%s160 + $0x2c8] sm:$0xf] %v3967
        %4480 = vst [vmem:[%s160 + $0x2cc] sm:$0xf] %v3968
        %4481 = vst [vmem:[%s160 + $0x2d0] sm:$0xf] %v3969
        %4482 = vst [vmem:[%s160 + $0x2d4] sm:$0xf] %v3970
        %4483 = vst [vmem:[%s160 + $0x2d8] sm:$0xf] %v3971
        %4484 = vst [vmem:[%s160 + $0x2dc] sm:$0xf] %v3972
        %4485 = vst [vmem:[%s160 + $0x2e0] sm:$0xf] %v3973
        %4486 = vst [vmem:[%s160 + $0x2e4] sm:$0xf] %v3974
        %4487 = vst [vmem:[%s160 + $0x2e8] sm:$0xf] %v3975
        %4488 = vst [vmem:[%s160 + $0x2ec] sm:$0xf] %v3976
        %4489 = vst [vmem:[%s160 + $0x2f0] sm:$0xf] %v3977
        %4490 = vst [vmem:[%s160 + $0x2f4] sm:$0xf] %v3978
        %4491 = vst [vmem:[%s160 + $0x2f8] sm:$0xf] %v3979
        %4492 = vst [vmem:[%s160 + $0x2fc] sm:$0xf] %v3980
        %4493 = vst [vmem:[%s160 + $0x300] sm:$0xf] %v3981
        %4494 = vst [vmem:[%s160 + $0x304] sm:$0xf] %v3982
        %4495 = vst [vmem:[%s160 + $0x308] sm:$0xf] %v3983
        %4496 = vst [vmem:[%s160 + $0x30c] sm:$0xf] %v3984
        %4497 = vst [vmem:[%s160 + $0x310] sm:$0xf] %v3985
        %4498 = vst [vmem:[%s160 + $0x314] sm:$0xf] %v3986
        %4499 = vst [vmem:[%s160 + $0x318] sm:$0xf] %v3987
        %4500 = vst [vmem:[%s160 + $0x31c] sm:$0xf] %v3988
        %4501 = vst [vmem:[%s160 + $0x320] sm:$0xf] %v3989
        %4502 = vst [vmem:[%s160 + $0x324] sm:$0xf] %v3990
        %4503 = vst [vmem:[%s160 + $0x328] sm:$0xf] %v3991
        %4504 = vst [vmem:[%s160 + $0x32c] sm:$0xf] %v3992
        %4505 = vst [vmem:[%s160 + $0x330] sm:$0xf] %v3993
        %4506 = vst [vmem:[%s160 + $0x334] sm:$0xf] %v3994
        %4507 = vst [vmem:[%s160 + $0x338] sm:$0xf] %v3995
        %4508 = vst [vmem:[%s160 + $0x33c] sm:$0xf] %v3996
        %4509 = vst [vmem:[%s160 + $0x340] sm:$0xf] %v3997
        %4510 = vst [vmem:[%s160 + $0x344] sm:$0xf] %v3998
        %4511 = vst [vmem:[%s160 + $0x348] sm:$0xf] %v3999
        %4512 = vst [vmem:[%s160 + $0x34c] sm:$0xf] %v4000
        %4513 = vst [vmem:[%s160 + $0x350] sm:$0xf] %v4001
        %4514 = vst [vmem:[%s160 + $0x354] sm:$0xf] %v4002
        %4515 = vst [vmem:[%s160 + $0x358] sm:$0xf] %v4003
        %4516 = vst [vmem:[%s160 + $0x35c] sm:$0xf] %v4004
        %4517 = vst [vmem:[%s160 + $0x360] sm:$0xf] %v4005
        %4518 = vst [vmem:[%s160 + $0x364] sm:$0xf] %v4006
        %4519 = vst [vmem:[%s160 + $0x368] sm:$0xf] %v4007
        %4520 = vst [vmem:[%s160 + $0x36c] sm:$0xf] %v4008
        %4521 = vst [vmem:[%s160 + $0x370] sm:$0xf] %v4009
        %4522 = vst [vmem:[%s160 + $0x374] sm:$0xf] %v4010
        %4523 = vst [vmem:[%s160 + $0x378] sm:$0xf] %v4011
        %4524 = vst [vmem:[%s160 + $0x37c] sm:$0xf] %v4012
        %4525 = vst [vmem:[%s160 + $0x380] sm:$0xf] %v4013
        %4526 = vst [vmem:[%s160 + $0x384] sm:$0xf] %v4014
        %4527 = vst [vmem:[%s160 + $0x388] sm:$0xf] %v4015
        %4528 = vst [vmem:[%s160 + $0x38c] sm:$0xf] %v4016
        %4529 = vst [vmem:[%s160 + $0x390] sm:$0xf] %v4017
        %4530 = vst [vmem:[%s160 + $0x394] sm:$0xf] %v4018
        %4531 = vst [vmem:[%s160 + $0x398] sm:$0xf] %v4019
        %4532 = vst [vmem:[%s160 + $0x39c] sm:$0xf] %v4020
        %4533 = vst [vmem:[%s160 + $0x3a0] sm:$0xf] %v4021
        %4534 = vst [vmem:[%s160 + $0x3a4] sm:$0xf] %v4022
        %4535 = vst [vmem:[%s160 + $0x3a8] sm:$0xf] %v4023
        %4536 = vst [vmem:[%s160 + $0x3ac] sm:$0xf] %v4024
        %4537 = vst [vmem:[%s160 + $0x3b0] sm:$0xf] %v4025
        %4538 = vst [vmem:[%s160 + $0x3b4] sm:$0xf] %v4026
        %4539 = vst [vmem:[%s160 + $0x3b8] sm:$0xf] %v4027
        %4540 = vst [vmem:[%s160 + $0x3bc] sm:$0xf] %v4028
        %4541 = vst [vmem:[%s160 + $0x3c0] sm:$0xf] %v4029
        %4542 = vst [vmem:[%s160 + $0x3c4] sm:$0xf] %v4030
        %4543 = vst [vmem:[%s160 + $0x3c8] sm:$0xf] %v4031
        %4544 = vst [vmem:[%s160 + $0x3cc] sm:$0xf] %v4032
        %4545 = vst [vmem:[%s160 + $0x3d0] sm:$0xf] %v4033
        %4546 = vst [vmem:[%s160 + $0x3d4] sm:$0xf] %v4034
        %4547 = vst [vmem:[%s160 + $0x3d8] sm:$0xf] %v4035
        %4548 = vst [vmem:[%s160 + $0x3dc] sm:$0xf] %v4036
        %4549 = vst [vmem:[%s160 + $0x3e0] sm:$0xf] %v4037
        %4550 = vst [vmem:[%s160 + $0x3e4] sm:$0xf] %v4038
        %4551 = vst [vmem:[%s160 + $0x3e8] sm:$0xf] %v4039
        %4552 = vst [vmem:[%s160 + $0x3ec] sm:$0xf] %v4040
        %4553 = vst [vmem:[%s160 + $0x3f0] sm:$0xf] %v4041
        %4554 = vst [vmem:[%s160 + $0x3f4] sm:$0xf] %v4042
        %4555 = vst [vmem:[%s160 + $0x3f8] sm:$0xf] %v4043
        %4556 = vst [vmem:[%s160 + $0x3fc] sm:$0xf] %v4044
        %s4557 = smul.u32 256, %s14
        %p4558 = scmp.lt.s32.totalorder %s4557, 511
        %s4559 = scalar_select %p4558, %s4557, 511
        %s4560 = smul.addr %s4559, 4
        %s4561 = scalar_lea.vmem %s2, %s4560
        // Predicated region
        $region33: #{discriminator_f.4} parent=27 // pred_check
          %p4562 = pneg %p79
        $region34: #{discriminator_f.4} parent=27 // pred_check_branch
          %4564 = sbr.rel (%p4562) target = $region36
        $region35: #{discriminator_f.4} parent=27 // pred_region
          %s4565 = smul.u32 256, %s14
        $region36: #{discriminator_f.4} parent=27 // pred_fallthru
          _
      $region28: #{discriminator_f.4} parent=5 // pred_fallthru
        _
      %p4566 = scmp.le.s32.totalorder 2, %s9
      // Predicated region
      $region37: #{discriminator_f.4} parent=5 // pred_check
        %p4567 = pneg %p4566
      $region38: #{discriminator_f.4} parent=5 // pred_check_branch
        %4569 = sbr.rel (%p4567) target = $region40
      $region39: #{discriminator_f.4} parent=5 // pred_region
        %s4570 = ssub.s32 %s9, 2
        // Predicated region
        $region41: #{discriminator_f.4} parent=39 // pred_check
          %p4571 = pneg %p85
        $region42: #{discriminator_f.4} parent=39 // pred_check_branch
          %4573 = sbr.rel (%p4571) target = $region44
        $region43: #{discriminator_f.4} parent=39 // pred_region
          %s4574 = smul.u32 256, %s15
          %p4575 = scmp.lt.s32.totalorder %s4574, 511
          %s4576 = scalar_select %p4575, %s4574, 511
          %s4577 = smul.addr %s4576, 4
          %s4578 = scalar_lea.vmem %s2, %s4577
        $region44: #{discriminator_f.4} parent=39 // pred_fallthru
          _
      $region40: #{discriminator_f.4} parent=5 // pred_fallthru
        _
    $region6: #{discriminator_f.4} parent=1 // loop_footer
      %s13 = sadd.s32 1, %s9
    $region7: #{discriminator_f.4} parent=1 // loop_footer_branch
      %8 = sbr.rel target = $region3
    $region8: #{discriminator_f.4} parent=1 // loop_exit
      _
    %4579 = vsyncpa [#allocation3], 1
    %s4580 = scalar_lea.sflag [#allocation3], 1
    %4581 = vsyncpa %s4580, 1

// kernel: discriminator_f.5
$region0: #{discriminator_f.5}
  #allocation0 [shape = 'u32[]', space=smem, size = 0x4, offset = 0x4, fixed_abs, tag = 'smem constant byte address 0x4 - core index']
  #allocation1 [shape = 'u32[144,128]{1,0:T(1,128)}', space=vmem, size = 0x12000, scoped, tag = 'internal scratch']
  #allocation2 [shape = 'f32[1024,128]{1,0:T(8,128)}', space=vmem, size = 0x80000, scoped, tag = 'scratch operand']
  %s0 = inlined_call_operand.vmem [shape: bf16[1024,256], index: 0, kind: input, shape index: {}]
  %s1 = inlined_call_operand.vmem [shape: bf16[256,128], index: 1, kind: input, shape index: {}]
  %s2 = inlined_call_operand.vmem [shape: f32[1,128], index: 2, kind: input, shape index: {}]
  %s3 = inlined_call_operand.vmem [shape: f32[1,128], index: 3, kind: input, shape index: {}]
  %s4 = inlined_call_operand.vmem [shape: bf16[1024,128], index: 4, kind: output, shape index: {}]
  %s5 = sld [smem:[#allocation0]]
  $region26: #{discriminator_f.5} parent=0
    _
  %s7 = ssub.s32 1, %s5
  %s8 = scalar_select 0, %s7, %s5
  // Predicated region
  $region2: #{discriminator_f.5} parent=0 // pred_check
    _
  $region3: #{discriminator_f.5} parent=0 // pred_check_branch
    %10 = sbr.rel (0) target = $region5
  $region4: #{discriminator_f.5} parent=0 // pred_region
    _
  $region5: #{discriminator_f.5} parent=0 // pred_fallthru
    _
  // Predicated region
  $region6: #{discriminator_f.5} parent=0 // pred_check
    _
  $region7: #{discriminator_f.5} parent=0 // pred_check_branch
    %12 = sbr.rel (0) target = $region9
  $region8: #{discriminator_f.5} parent=0 // pred_region
    _
  $region9: #{discriminator_f.5} parent=0 // pred_fallthru
    _
  // Predicated region
  $region10: #{discriminator_f.5} parent=0 // pred_check
    _
  $region11: #{discriminator_f.5} parent=0 // pred_check_branch
    %14 = sbr.rel (0) target = $region13
  $region12: #{discriminator_f.5} parent=0 // pred_region
    _
  $region13: #{discriminator_f.5} parent=0 // pred_fallthru
    _
  // Predicated region
  $region14: #{discriminator_f.5} parent=0 // pred_check
    _
  $region15: #{discriminator_f.5} parent=0 // pred_check_branch
    %16 = sbr.rel (0) target = $region17
  $region16: #{discriminator_f.5} parent=0 // pred_region
    _
  $region17: #{discriminator_f.5} parent=0 // pred_fallthru
    _
  %v18 = vld [vmem:[%s0] sm:$0xff]
  %v19 = vld [vmem:[%s0 + $0x8] sm:$0xff]
  %v20 = vld [vmem:[%s0 + $0x10] sm:$0xff]
  %v21 = vld [vmem:[%s0 + $0x18] sm:$0xff]
  %v22 = vld [vmem:[%s0 + $0x20] sm:$0xff]
  %v23 = vld [vmem:[%s0 + $0x28] sm:$0xff]
  %v24 = vld [vmem:[%s0 + $0x30] sm:$0xff]
  %v25 = vld [vmem:[%s0 + $0x38] sm:$0xff]
  %v26 = vld [vmem:[%s0 + $0x40] sm:$0xff]
  %v27 = vld [vmem:[%s0 + $0x48] sm:$0xff]
  %v28 = vld [vmem:[%s0 + $0x50] sm:$0xff]
  %v29 = vld [vmem:[%s0 + $0x58] sm:$0xff]
  %v30 = vld [vmem:[%s0 + $0x60] sm:$0xff]
  %v31 = vld [vmem:[%s0 + $0x68] sm:$0xff]
  %v32 = vld [vmem:[%s0 + $0x70] sm:$0xff]
  %v33 = vld [vmem:[%s0 + $0x78] sm:$0xff]
  %v34 = vld [vmem:[%s0 + $0x80] sm:$0xff]
  %v35 = vld [vmem:[%s0 + $0x88] sm:$0xff]
  %v36 = vld [vmem:[%s0 + $0x90] sm:$0xff]
  %v37 = vld [vmem:[%s0 + $0x98] sm:$0xff]
  %v38 = vld [vmem:[%s0 + $0xa0] sm:$0xff]
  %v39 = vld [vmem:[%s0 + $0xa8] sm:$0xff]
  %v40 = vld [vmem:[%s0 + $0xb0] sm:$0xff]
  %v41 = vld [vmem:[%s0 + $0xb8] sm:$0xff]
  %v42 = vld [vmem:[%s0 + $0xc0] sm:$0xff]
  %v43 = vld [vmem:[%s0 + $0xc8] sm:$0xff]
  %v44 = vld [vmem:[%s0 + $0xd0] sm:$0xff]
  %v45 = vld [vmem:[%s0 + $0xd8] sm:$0xff]
  %v46 = vld [vmem:[%s0 + $0xe0] sm:$0xff]
  %v47 = vld [vmem:[%s0 + $0xe8] sm:$0xff]
  %v48 = vld [vmem:[%s0 + $0xf0] sm:$0xff]
  %v49 = vld [vmem:[%s0 + $0xf8] sm:$0xff]
  %v50 = vld [vmem:[%s0 + $0x100] sm:$0xff]
  %v51 = vld [vmem:[%s0 + $0x108] sm:$0xff]
  %v52 = vld [vmem:[%s0 + $0x110] sm:$0xff]
  %v53 = vld [vmem:[%s0 + $0x118] sm:$0xff]
  %v54 = vld [vmem:[%s0 + $0x120] sm:$0xff]
  %v55 = vld [vmem:[%s0 + $0x128] sm:$0xff]
  %v56 = vld [vmem:[%s0 + $0x130] sm:$0xff]
  %v57 = vld [vmem:[%s0 + $0x138] sm:$0xff]
  %v58 = vld [vmem:[%s0 + $0x140] sm:$0xff]
  %v59 = vld [vmem:[%s0 + $0x148] sm:$0xff]
  %v60 = vld [vmem:[%s0 + $0x150] sm:$0xff]
  %v61 = vld [vmem:[%s0 + $0x158] sm:$0xff]
  %v62 = vld [vmem:[%s0 + $0x160] sm:$0xff]
  %v63 = vld [vmem:[%s0 + $0x168] sm:$0xff]
  %v64 = vld [vmem:[%s0 + $0x170] sm:$0xff]
  %v65 = vld [vmem:[%s0 + $0x178] sm:$0xff]
  %v66 = vld [vmem:[%s0 + $0x180] sm:$0xff]
  %v67 = vld [vmem:[%s0 + $0x188] sm:$0xff]
  %v68 = vld [vmem:[%s0 + $0x190] sm:$0xff]
  %v69 = vld [vmem:[%s0 + $0x198] sm:$0xff]
  %v70 = vld [vmem:[%s0 + $0x1a0] sm:$0xff]
  %v71 = vld [vmem:[%s0 + $0x1a8] sm:$0xff]
  %v72 = vld [vmem:[%s0 + $0x1b0] sm:$0xff]
  %v73 = vld [vmem:[%s0 + $0x1b8] sm:$0xff]
  %v74 = vld [vmem:[%s0 + $0x1c0] sm:$0xff]
  %v75 = vld [vmem:[%s0 + $0x1c8] sm:$0xff]
  %v76 = vld [vmem:[%s0 + $0x1d0] sm:$0xff]
  %v77 = vld [vmem:[%s0 + $0x1d8] sm:$0xff]
  %v78 = vld [vmem:[%s0 + $0x1e0] sm:$0xff]
  %v79 = vld [vmem:[%s0 + $0x1e8] sm:$0xff]
  %v80 = vld [vmem:[%s0 + $0x1f0] sm:$0xff]
  %v81 = vld [vmem:[%s0 + $0x1f8] sm:$0xff]
  %v82 = vld [vmem:[%s0 + $0x200] sm:$0xff]
  %v83 = vld [vmem:[%s0 + $0x208] sm:$0xff]
  %v84 = vld [vmem:[%s0 + $0x210] sm:$0xff]
  %v85 = vld [vmem:[%s0 + $0x218] sm:$0xff]
  %v86 = vld [vmem:[%s0 + $0x220] sm:$0xff]
  %v87 = vld [vmem:[%s0 + $0x228] sm:$0xff]
  %v88 = vld [vmem:[%s0 + $0x230] sm:$0xff]
  %v89 = vld [vmem:[%s0 + $0x238] sm:$0xff]
  %v90 = vld [vmem:[%s0 + $0x240] sm:$0xff]
  %v91 = vld [vmem:[%s0 + $0x248] sm:$0xff]
  %v92 = vld [vmem:[%s0 + $0x250] sm:$0xff]
  %v93 = vld [vmem:[%s0 + $0x258] sm:$0xff]
  %v94 = vld [vmem:[%s0 + $0x260] sm:$0xff]
  %v95 = vld [vmem:[%s0 + $0x268] sm:$0xff]
  %v96 = vld [vmem:[%s0 + $0x270] sm:$0xff]
  %v97 = vld [vmem:[%s0 + $0x278] sm:$0xff]
  %v98 = vld [vmem:[%s0 + $0x280] sm:$0xff]
  %v99 = vld [vmem:[%s0 + $0x288] sm:$0xff]
  %v100 = vld [vmem:[%s0 + $0x290] sm:$0xff]
  %v101 = vld [vmem:[%s0 + $0x298] sm:$0xff]
  %v102 = vld [vmem:[%s0 + $0x2a0] sm:$0xff]
  %v103 = vld [vmem:[%s0 + $0x2a8] sm:$0xff]
  %v104 = vld [vmem:[%s0 + $0x2b0] sm:$0xff]
  %v105 = vld [vmem:[%s0 + $0x2b8] sm:$0xff]
  %v106 = vld [vmem:[%s0 + $0x2c0] sm:$0xff]
  %v107 = vld [vmem:[%s0 + $0x2c8] sm:$0xff]
  %v108 = vld [vmem:[%s0 + $0x2d0] sm:$0xff]
  %v109 = vld [vmem:[%s0 + $0x2d8] sm:$0xff]
  %v110 = vld [vmem:[%s0 + $0x2e0] sm:$0xff]
  %v111 = vld [vmem:[%s0 + $0x2e8] sm:$0xff]
  %v112 = vld [vmem:[%s0 + $0x2f0] sm:$0xff]
  %v113 = vld [vmem:[%s0 + $0x2f8] sm:$0xff]
  %v114 = vld [vmem:[%s0 + $0x300] sm:$0xff]
  %v115 = vld [vmem:[%s0 + $0x308] sm:$0xff]
  %v116 = vld [vmem:[%s0 + $0x310] sm:$0xff]
  %v117 = vld [vmem:[%s0 + $0x318] sm:$0xff]
  %v118 = vld [vmem:[%s0 + $0x320] sm:$0xff]
  %v119 = vld [vmem:[%s0 + $0x328] sm:$0xff]
  %v120 = vld [vmem:[%s0 + $0x330] sm:$0xff]
  %v121 = vld [vmem:[%s0 + $0x338] sm:$0xff]
  %v122 = vld [vmem:[%s0 + $0x340] sm:$0xff]
  %v123 = vld [vmem:[%s0 + $0x348] sm:$0xff]
  %v124 = vld [vmem:[%s0 + $0x350] sm:$0xff]
  %v125 = vld [vmem:[%s0 + $0x358] sm:$0xff]
  %v126 = vld [vmem:[%s0 + $0x360] sm:$0xff]
  %v127 = vld [vmem:[%s0 + $0x368] sm:$0xff]
  %v128 = vld [vmem:[%s0 + $0x370] sm:$0xff]
  %v129 = vld [vmem:[%s0 + $0x378] sm:$0xff]
  %v130 = vld [vmem:[%s0 + $0x380] sm:$0xff]
  %v131 = vld [vmem:[%s0 + $0x388] sm:$0xff]
  %v132 = vld [vmem:[%s0 + $0x390] sm:$0xff]
  %v133 = vld [vmem:[%s0 + $0x398] sm:$0xff]
  %v134 = vld [vmem:[%s0 + $0x3a0] sm:$0xff]
  %v135 = vld [vmem:[%s0 + $0x3a8] sm:$0xff]
  %v136 = vld [vmem:[%s0 + $0x3b0] sm:$0xff]
  %v137 = vld [vmem:[%s0 + $0x3b8] sm:$0xff]
  %v138 = vld [vmem:[%s0 + $0x3c0] sm:$0xff]
  %v139 = vld [vmem:[%s0 + $0x3c8] sm:$0xff]
  %v140 = vld [vmem:[%s0 + $0x3d0] sm:$0xff]
  %v141 = vld [vmem:[%s0 + $0x3d8] sm:$0xff]
  %v142 = vld [vmem:[%s0 + $0x3e0] sm:$0xff]
  %v143 = vld [vmem:[%s0 + $0x3e8] sm:$0xff]
  %v144 = vld [vmem:[%s0 + $0x3f0] sm:$0xff]
  %v145 = vld [vmem:[%s0 + $0x3f8] sm:$0xff]
  %v146 = vld [vmem:[%s1] sm:$0xf]
  %v147 = vld [vmem:[%s1 + $0x4] sm:$0xf]
  %v148 = vld [vmem:[%s1 + $0x8] sm:$0xf]
  %v149 = vld [vmem:[%s1 + $0xc] sm:$0xf]
  %v150 = vld [vmem:[%s1 + $0x10] sm:$0xf]
  %v151 = vld [vmem:[%s1 + $0x14] sm:$0xf]
  %v152 = vld [vmem:[%s1 + $0x18] sm:$0xf]
  %v153 = vld [vmem:[%s1 + $0x1c] sm:$0xf]
  %v154 = vld [vmem:[%s1 + $0x20] sm:$0xf]
  %v155 = vld [vmem:[%s1 + $0x24] sm:$0xf]
  %v156 = vld [vmem:[%s1 + $0x28] sm:$0xf]
  %v157 = vld [vmem:[%s1 + $0x2c] sm:$0xf]
  %v158 = vld [vmem:[%s1 + $0x30] sm:$0xf]
  %v159 = vld [vmem:[%s1 + $0x34] sm:$0xf]
  %v160 = vld [vmem:[%s1 + $0x38] sm:$0xf]
  %v161 = vld [vmem:[%s1 + $0x3c] sm:$0xf]
  %v162 = vld [vmem:[%s1 + $0x40] sm:$0xf]
  %v163 = vld [vmem:[%s1 + $0x44] sm:$0xf]
  %v164 = vld [vmem:[%s1 + $0x48] sm:$0xf]
  %v165 = vld [vmem:[%s1 + $0x4c] sm:$0xf]
  %v166 = vld [vmem:[%s1 + $0x50] sm:$0xf]
  %v167 = vld [vmem:[%s1 + $0x54] sm:$0xf]
  %v168 = vld [vmem:[%s1 + $0x58] sm:$0xf]
  %v169 = vld [vmem:[%s1 + $0x5c] sm:$0xf]
  %v170 = vld [vmem:[%s1 + $0x60] sm:$0xf]
  %v171 = vld [vmem:[%s1 + $0x64] sm:$0xf]
  %v172 = vld [vmem:[%s1 + $0x68] sm:$0xf]
  %v173 = vld [vmem:[%s1 + $0x6c] sm:$0xf]
  %v174 = vld [vmem:[%s1 + $0x70] sm:$0xf]
  %v175 = vld [vmem:[%s1 + $0x74] sm:$0xf]
  %v176 = vld [vmem:[%s1 + $0x78] sm:$0xf]
  %v177 = vld [vmem:[%s1 + $0x7c] sm:$0xf]
  %v306 = vunpack.c.l.b16 %v18
  %v307 = vunpack.c.h.b16 %v18
  %v308 = vunpack.c.l.b16 %v19
  %v309 = vunpack.c.h.b16 %v19
  %v310 = vunpack.c.l.b16 %v20
  %v311 = vunpack.c.h.b16 %v20
  %v312 = vunpack.c.l.b16 %v21
  %v313 = vunpack.c.h.b16 %v21
  %v314 = vunpack.c.l.b16 %v22
  %v315 = vunpack.c.h.b16 %v22
  %v316 = vunpack.c.l.b16 %v23
  %v317 = vunpack.c.h.b16 %v23
  %v318 = vunpack.c.l.b16 %v24
  %v319 = vunpack.c.h.b16 %v24
  %v320 = vunpack.c.l.b16 %v25
  %v321 = vunpack.c.h.b16 %v25
  %v322 = vunpack.c.l.b16 %v26
  %v323 = vunpack.c.h.b16 %v26
  %v324 = vunpack.c.l.b16 %v27
  %v325 = vunpack.c.h.b16 %v27
  %v326 = vunpack.c.l.b16 %v28
  %v327 = vunpack.c.h.b16 %v28
  %v328 = vunpack.c.l.b16 %v29
  %v329 = vunpack.c.h.b16 %v29
  %v330 = vunpack.c.l.b16 %v30
  %v331 = vunpack.c.h.b16 %v30
  %v332 = vunpack.c.l.b16 %v31
  %v333 = vunpack.c.h.b16 %v31
  %v334 = vunpack.c.l.b16 %v32
  %v335 = vunpack.c.h.b16 %v32
  %v336 = vunpack.c.l.b16 %v33
  %v337 = vunpack.c.h.b16 %v33
  %v338 = vunpack.c.l.b16 %v34
  %v339 = vunpack.c.h.b16 %v34
  %v340 = vunpack.c.l.b16 %v35
  %v341 = vunpack.c.h.b16 %v35
  %v342 = vunpack.c.l.b16 %v36
  %v343 = vunpack.c.h.b16 %v36
  %v344 = vunpack.c.l.b16 %v37
  %v345 = vunpack.c.h.b16 %v37
  %v346 = vunpack.c.l.b16 %v38
  %v347 = vunpack.c.h.b16 %v38
  %v348 = vunpack.c.l.b16 %v39
  %v349 = vunpack.c.h.b16 %v39
  %v350 = vunpack.c.l.b16 %v40
  %v351 = vunpack.c.h.b16 %v40
  %v352 = vunpack.c.l.b16 %v41
  %v353 = vunpack.c.h.b16 %v41
  %v354 = vunpack.c.l.b16 %v42
  %v355 = vunpack.c.h.b16 %v42
  %v356 = vunpack.c.l.b16 %v43
  %v357 = vunpack.c.h.b16 %v43
  %v358 = vunpack.c.l.b16 %v44
  %v359 = vunpack.c.h.b16 %v44
  %v360 = vunpack.c.l.b16 %v45
  %v361 = vunpack.c.h.b16 %v45
  %v362 = vunpack.c.l.b16 %v46
  %v363 = vunpack.c.h.b16 %v46
  %v364 = vunpack.c.l.b16 %v47
  %v365 = vunpack.c.h.b16 %v47
  %v366 = vunpack.c.l.b16 %v48
  %v367 = vunpack.c.h.b16 %v48
  %v368 = vunpack.c.l.b16 %v49
  %v369 = vunpack.c.h.b16 %v49
  %v370 = vunpack.c.l.b16 %v50
  %v371 = vunpack.c.h.b16 %v50
  %v372 = vunpack.c.l.b16 %v51
  %v373 = vunpack.c.h.b16 %v51
  %v374 = vunpack.c.l.b16 %v52
  %v375 = vunpack.c.h.b16 %v52
  %v376 = vunpack.c.l.b16 %v53
  %v377 = vunpack.c.h.b16 %v53
  %v378 = vunpack.c.l.b16 %v54
  %v379 = vunpack.c.h.b16 %v54
  %v380 = vunpack.c.l.b16 %v55
  %v381 = vunpack.c.h.b16 %v55
  %v382 = vunpack.c.l.b16 %v56
  %v383 = vunpack.c.h.b16 %v56
  %v384 = vunpack.c.l.b16 %v57
  %v385 = vunpack.c.h.b16 %v57
  %v386 = vunpack.c.l.b16 %v58
  %v387 = vunpack.c.h.b16 %v58
  %v388 = vunpack.c.l.b16 %v59
  %v389 = vunpack.c.h.b16 %v59
  %v390 = vunpack.c.l.b16 %v60
  %v391 = vunpack.c.h.b16 %v60
  %v392 = vunpack.c.l.b16 %v61
  %v393 = vunpack.c.h.b16 %v61
  %v394 = vunpack.c.l.b16 %v62
  %v395 = vunpack.c.h.b16 %v62
  %v396 = vunpack.c.l.b16 %v63
  %v397 = vunpack.c.h.b16 %v63
  %v398 = vunpack.c.l.b16 %v64
  %v399 = vunpack.c.h.b16 %v64
  %v400 = vunpack.c.l.b16 %v65
  %v401 = vunpack.c.h.b16 %v65
  %v402 = vunpack.c.l.b16 %v66
  %v403 = vunpack.c.h.b16 %v66
  %v404 = vunpack.c.l.b16 %v67
  %v405 = vunpack.c.h.b16 %v67
  %v406 = vunpack.c.l.b16 %v68
  %v407 = vunpack.c.h.b16 %v68
  %v408 = vunpack.c.l.b16 %v69
  %v409 = vunpack.c.h.b16 %v69
  %v410 = vunpack.c.l.b16 %v70
  %v411 = vunpack.c.h.b16 %v70
  %v412 = vunpack.c.l.b16 %v71
  %v413 = vunpack.c.h.b16 %v71
  %v414 = vunpack.c.l.b16 %v72
  %v415 = vunpack.c.h.b16 %v72
  %v416 = vunpack.c.l.b16 %v73
  %v417 = vunpack.c.h.b16 %v73
  %v418 = vunpack.c.l.b16 %v74
  %v419 = vunpack.c.h.b16 %v74
  %v420 = vunpack.c.l.b16 %v75
  %v421 = vunpack.c.h.b16 %v75
  %v422 = vunpack.c.l.b16 %v76
  %v423 = vunpack.c.h.b16 %v76
  %v424 = vunpack.c.l.b16 %v77
  %v425 = vunpack.c.h.b16 %v77
  %v426 = vunpack.c.l.b16 %v78
  %v427 = vunpack.c.h.b16 %v78
  %v428 = vunpack.c.l.b16 %v79
  %v429 = vunpack.c.h.b16 %v79
  %v430 = vunpack.c.l.b16 %v80
  %v431 = vunpack.c.h.b16 %v80
  %v432 = vunpack.c.l.b16 %v81
  %v433 = vunpack.c.h.b16 %v81
  %v434 = vunpack.c.l.b16 %v82
  %v435 = vunpack.c.h.b16 %v82
  %v436 = vunpack.c.l.b16 %v83
  %v437 = vunpack.c.h.b16 %v83
  %v438 = vunpack.c.l.b16 %v84
  %v439 = vunpack.c.h.b16 %v84
  %v440 = vunpack.c.l.b16 %v85
  %v441 = vunpack.c.h.b16 %v85
  %v442 = vunpack.c.l.b16 %v86
  %v443 = vunpack.c.h.b16 %v86
  %v444 = vunpack.c.l.b16 %v87
  %v445 = vunpack.c.h.b16 %v87
  %v446 = vunpack.c.l.b16 %v88
  %v447 = vunpack.c.h.b16 %v88
  %v448 = vunpack.c.l.b16 %v89
  %v449 = vunpack.c.h.b16 %v89
  %v450 = vunpack.c.l.b16 %v90
  %v451 = vunpack.c.h.b16 %v90
  %v452 = vunpack.c.l.b16 %v91
  %v453 = vunpack.c.h.b16 %v91
  %v454 = vunpack.c.l.b16 %v92
  %v455 = vunpack.c.h.b16 %v92
  %v456 = vunpack.c.l.b16 %v93
  %v457 = vunpack.c.h.b16 %v93
  %v458 = vunpack.c.l.b16 %v94
  %v459 = vunpack.c.h.b16 %v94
  %v460 = vunpack.c.l.b16 %v95
  %v461 = vunpack.c.h.b16 %v95
  %v462 = vunpack.c.l.b16 %v96
  %v463 = vunpack.c.h.b16 %v96
  %v464 = vunpack.c.l.b16 %v97
  %v465 = vunpack.c.h.b16 %v97
  %v466 = vunpack.c.l.b16 %v98
  %v467 = vunpack.c.h.b16 %v98
  %v468 = vunpack.c.l.b16 %v99
  %v469 = vunpack.c.h.b16 %v99
  %v470 = vunpack.c.l.b16 %v100
  %v471 = vunpack.c.h.b16 %v100
  %v472 = vunpack.c.l.b16 %v101
  %v473 = vunpack.c.h.b16 %v101
  %v474 = vunpack.c.l.b16 %v102
  %v475 = vunpack.c.h.b16 %v102
  %v476 = vunpack.c.l.b16 %v103
  %v477 = vunpack.c.h.b16 %v103
  %v478 = vunpack.c.l.b16 %v104
  %v479 = vunpack.c.h.b16 %v104
  %v480 = vunpack.c.l.b16 %v105
  %v481 = vunpack.c.h.b16 %v105
  %v482 = vunpack.c.l.b16 %v106
  %v483 = vunpack.c.h.b16 %v106
  %v484 = vunpack.c.l.b16 %v107
  %v485 = vunpack.c.h.b16 %v107
  %v486 = vunpack.c.l.b16 %v108
  %v487 = vunpack.c.h.b16 %v108
  %v488 = vunpack.c.l.b16 %v109
  %v489 = vunpack.c.h.b16 %v109
  %v490 = vunpack.c.l.b16 %v110
  %v491 = vunpack.c.h.b16 %v110
  %v492 = vunpack.c.l.b16 %v111
  %v493 = vunpack.c.h.b16 %v111
  %v494 = vunpack.c.l.b16 %v112
  %v495 = vunpack.c.h.b16 %v112
  %v496 = vunpack.c.l.b16 %v113
  %v497 = vunpack.c.h.b16 %v113
  %v498 = vunpack.c.l.b16 %v114
  %v499 = vunpack.c.h.b16 %v114
  %v500 = vunpack.c.l.b16 %v115
  %v501 = vunpack.c.h.b16 %v115
  %v502 = vunpack.c.l.b16 %v116
  %v503 = vunpack.c.h.b16 %v116
  %v504 = vunpack.c.l.b16 %v117
  %v505 = vunpack.c.h.b16 %v117
  %v506 = vunpack.c.l.b16 %v118
  %v507 = vunpack.c.h.b16 %v118
  %v508 = vunpack.c.l.b16 %v119
  %v509 = vunpack.c.h.b16 %v119
  %v510 = vunpack.c.l.b16 %v120
  %v511 = vunpack.c.h.b16 %v120
  %v512 = vunpack.c.l.b16 %v121
  %v513 = vunpack.c.h.b16 %v121
  %v514 = vunpack.c.l.b16 %v122
  %v515 = vunpack.c.h.b16 %v122
  %v516 = vunpack.c.l.b16 %v123
  %v517 = vunpack.c.h.b16 %v123
  %v518 = vunpack.c.l.b16 %v124
  %v519 = vunpack.c.h.b16 %v124
  %v520 = vunpack.c.l.b16 %v125
  %v521 = vunpack.c.h.b16 %v125
  %v522 = vunpack.c.l.b16 %v126
  %v523 = vunpack.c.h.b16 %v126
  %v524 = vunpack.c.l.b16 %v127
  %v525 = vunpack.c.h.b16 %v127
  %v526 = vunpack.c.l.b16 %v128
  %v527 = vunpack.c.h.b16 %v128
  %v528 = vunpack.c.l.b16 %v129
  %v529 = vunpack.c.h.b16 %v129
  %v530 = vunpack.c.l.b16 %v130
  %v531 = vunpack.c.h.b16 %v130
  %v532 = vunpack.c.l.b16 %v131
  %v533 = vunpack.c.h.b16 %v131
  %v534 = vunpack.c.l.b16 %v132
  %v535 = vunpack.c.h.b16 %v132
  %v536 = vunpack.c.l.b16 %v133
  %v537 = vunpack.c.h.b16 %v133
  %v538 = vunpack.c.l.b16 %v134
  %v539 = vunpack.c.h.b16 %v134
  %v540 = vunpack.c.l.b16 %v135
  %v541 = vunpack.c.h.b16 %v135
  %v542 = vunpack.c.l.b16 %v136
  %v543 = vunpack.c.h.b16 %v136
  %v544 = vunpack.c.l.b16 %v137
  %v545 = vunpack.c.h.b16 %v137
  %v546 = vunpack.c.l.b16 %v138
  %v547 = vunpack.c.h.b16 %v138
  %v548 = vunpack.c.l.b16 %v139
  %v549 = vunpack.c.h.b16 %v139
  %v550 = vunpack.c.l.b16 %v140
  %v551 = vunpack.c.h.b16 %v140
  %v552 = vunpack.c.l.b16 %v141
  %v553 = vunpack.c.h.b16 %v141
  %v554 = vunpack.c.l.b16 %v142
  %v555 = vunpack.c.h.b16 %v142
  %v556 = vunpack.c.l.b16 %v143
  %v557 = vunpack.c.h.b16 %v143
  %v558 = vunpack.c.l.b16 %v144
  %v559 = vunpack.c.h.b16 %v144
  %v560 = vunpack.c.l.b16 %v145
  %v561 = vunpack.c.h.b16 %v145
  %v562 = vpack.c.b16 %v308, %v306
  %v563 = vpack.c.b16 %v309, %v307
  %v564 = vpack.c.b16 %v312, %v310
  %v565 = vpack.c.b16 %v313, %v311
  %v566 = vpack.c.b16 %v316, %v314
  %v567 = vpack.c.b16 %v317, %v315
  %v568 = vpack.c.b16 %v320, %v318
  %v569 = vpack.c.b16 %v321, %v319
  %v570 = vpack.c.b16 %v324, %v322
  %v571 = vpack.c.b16 %v325, %v323
  %v572 = vpack.c.b16 %v328, %v326
  %v573 = vpack.c.b16 %v329, %v327
  %v574 = vpack.c.b16 %v332, %v330
  %v575 = vpack.c.b16 %v333, %v331
  %v576 = vpack.c.b16 %v336, %v334
  %v577 = vpack.c.b16 %v337, %v335
  %v578 = vpack.c.b16 %v340, %v338
  %v579 = vpack.c.b16 %v341, %v339
  %v580 = vpack.c.b16 %v344, %v342
  %v581 = vpack.c.b16 %v345, %v343
  %v582 = vpack.c.b16 %v348, %v346
  %v583 = vpack.c.b16 %v349, %v347
  %v584 = vpack.c.b16 %v352, %v350
  %v585 = vpack.c.b16 %v353, %v351
  %v586 = vpack.c.b16 %v356, %v354
  %v587 = vpack.c.b16 %v357, %v355
  %v588 = vpack.c.b16 %v360, %v358
  %v589 = vpack.c.b16 %v361, %v359
  %v590 = vpack.c.b16 %v364, %v362
  %v591 = vpack.c.b16 %v365, %v363
  %v592 = vpack.c.b16 %v368, %v366
  %v593 = vpack.c.b16 %v369, %v367
  %v594 = vpack.c.b16 %v372, %v370
  %v595 = vpack.c.b16 %v373, %v371
  %v596 = vpack.c.b16 %v376, %v374
  %v597 = vpack.c.b16 %v377, %v375
  %v598 = vpack.c.b16 %v380, %v378
  %v599 = vpack.c.b16 %v381, %v379
  %v600 = vpack.c.b16 %v384, %v382
  %v601 = vpack.c.b16 %v385, %v383
  %v602 = vpack.c.b16 %v388, %v386
  %v603 = vpack.c.b16 %v389, %v387
  %v604 = vpack.c.b16 %v392, %v390
  %v605 = vpack.c.b16 %v393, %v391
  %v606 = vpack.c.b16 %v396, %v394
  %v607 = vpack.c.b16 %v397, %v395
  %v608 = vpack.c.b16 %v400, %v398
  %v609 = vpack.c.b16 %v401, %v399
  %v610 = vpack.c.b16 %v404, %v402
  %v611 = vpack.c.b16 %v405, %v403
  %v612 = vpack.c.b16 %v408, %v406
  %v613 = vpack.c.b16 %v409, %v407
  %v614 = vpack.c.b16 %v412, %v410
  %v615 = vpack.c.b16 %v413, %v411
  %v616 = vpack.c.b16 %v416, %v414
  %v617 = vpack.c.b16 %v417, %v415
  %v618 = vpack.c.b16 %v420, %v418
  %v619 = vpack.c.b16 %v421, %v419
  %v620 = vpack.c.b16 %v424, %v422
  %v621 = vpack.c.b16 %v425, %v423
  %v622 = vpack.c.b16 %v428, %v426
  %v623 = vpack.c.b16 %v429, %v427
  %v624 = vpack.c.b16 %v432, %v430
  %v625 = vpack.c.b16 %v433, %v431
  %v626 = vpack.c.b16 %v436, %v434
  %v627 = vpack.c.b16 %v437, %v435
  %v628 = vpack.c.b16 %v440, %v438
  %v629 = vpack.c.b16 %v441, %v439
  %v630 = vpack.c.b16 %v444, %v442
  %v631 = vpack.c.b16 %v445, %v443
  %v632 = vpack.c.b16 %v448, %v446
  %v633 = vpack.c.b16 %v449, %v447
  %v634 = vpack.c.b16 %v452, %v450
  %v635 = vpack.c.b16 %v453, %v451
  %v636 = vpack.c.b16 %v456, %v454
  %v637 = vpack.c.b16 %v457, %v455
  %v638 = vpack.c.b16 %v460, %v458
  %v639 = vpack.c.b16 %v461, %v459
  %v640 = vpack.c.b16 %v464, %v462
  %v641 = vpack.c.b16 %v465, %v463
  %v642 = vpack.c.b16 %v468, %v466
  %v643 = vpack.c.b16 %v469, %v467
  %v644 = vpack.c.b16 %v472, %v470
  %v645 = vpack.c.b16 %v473, %v471
  %v646 = vpack.c.b16 %v476, %v474
  %v647 = vpack.c.b16 %v477, %v475
  %v648 = vpack.c.b16 %v480, %v478
  %v649 = vpack.c.b16 %v481, %v479
  %v650 = vpack.c.b16 %v484, %v482
  %v651 = vpack.c.b16 %v485, %v483
  %v652 = vpack.c.b16 %v488, %v486
  %v653 = vpack.c.b16 %v489, %v487
  %v654 = vpack.c.b16 %v492, %v490
  %v655 = vpack.c.b16 %v493, %v491
  %v656 = vpack.c.b16 %v496, %v494
  %v657 = vpack.c.b16 %v497, %v495
  %v658 = vpack.c.b16 %v500, %v498
  %v659 = vpack.c.b16 %v501, %v499
  %v660 = vpack.c.b16 %v504, %v502
  %v661 = vpack.c.b16 %v505, %v503
  %v662 = vpack.c.b16 %v508, %v506
  %v663 = vpack.c.b16 %v509, %v507
  %v664 = vpack.c.b16 %v512, %v510
  %v665 = vpack.c.b16 %v513, %v511
  %v666 = vpack.c.b16 %v516, %v514
  %v667 = vpack.c.b16 %v517, %v515
  %v668 = vpack.c.b16 %v520, %v518
  %v669 = vpack.c.b16 %v521, %v519
  %v670 = vpack.c.b16 %v524, %v522
  %v671 = vpack.c.b16 %v525, %v523
  %v672 = vpack.c.b16 %v528, %v526
  %v673 = vpack.c.b16 %v529, %v527
  %v674 = vpack.c.b16 %v532, %v530
  %v675 = vpack.c.b16 %v533, %v531
  %v676 = vpack.c.b16 %v536, %v534
  %v677 = vpack.c.b16 %v537, %v535
  %v678 = vpack.c.b16 %v540, %v538
  %v679 = vpack.c.b16 %v541, %v539
  %v680 = vpack.c.b16 %v544, %v542
  %v681 = vpack.c.b16 %v545, %v543
  %v682 = vpack.c.b16 %v548, %v546
  %v683 = vpack.c.b16 %v549, %v547
  %v684 = vpack.c.b16 %v552, %v550
  %v685 = vpack.c.b16 %v553, %v551
  %v686 = vpack.c.b16 %v556, %v554
  %v687 = vpack.c.b16 %v557, %v555
  %v688 = vpack.c.b16 %v560, %v558
  %v689 = vpack.c.b16 %v561, %v559
  %v850 = vunpack.c.l.b16 %v146
  %v851 = vunpack.c.l.b16 %v147
  %v852 = vunpack.c.l.b16 %v148
  %v853 = vunpack.c.l.b16 %v149
  %v854 = vunpack.c.l.b16 %v150
  %v855 = vunpack.c.l.b16 %v151
  %v856 = vunpack.c.l.b16 %v152
  %v857 = vunpack.c.l.b16 %v153
  %v858 = vunpack.c.l.b16 %v154
  %v859 = vunpack.c.l.b16 %v155
  %v860 = vunpack.c.l.b16 %v156
  %v861 = vunpack.c.l.b16 %v157
  %v862 = vunpack.c.l.b16 %v158
  %v863 = vunpack.c.l.b16 %v159
  %v864 = vunpack.c.l.b16 %v160
  %v865 = vunpack.c.l.b16 %v161
  %v866 = vunpack.c.l.b16 %v162
  %v867 = vunpack.c.l.b16 %v163
  %v868 = vunpack.c.l.b16 %v164
  %v869 = vunpack.c.l.b16 %v165
  %v870 = vunpack.c.l.b16 %v166
  %v871 = vunpack.c.l.b16 %v167
  %v872 = vunpack.c.l.b16 %v168
  %v873 = vunpack.c.l.b16 %v169
  %v874 = vunpack.c.l.b16 %v170
  %v875 = vunpack.c.l.b16 %v171
  %v876 = vunpack.c.l.b16 %v172
  %v877 = vunpack.c.l.b16 %v173
  %v878 = vunpack.c.l.b16 %v174
  %v879 = vunpack.c.l.b16 %v175
  %v880 = vunpack.c.l.b16 %v176
  %v881 = vunpack.c.l.b16 %v177
  %v882 = vpack.c.b16 %v851, %v850
  %v883 = vpack.c.b16 %v853, %v852
  %v884 = vpack.c.b16 %v855, %v854
  %v885 = vpack.c.b16 %v857, %v856
  %v886 = vpack.c.b16 %v859, %v858
  %v887 = vpack.c.b16 %v861, %v860
  %v888 = vpack.c.b16 %v863, %v862
  %v889 = vpack.c.b16 %v865, %v864
  %v890 = vpack.c.b16 %v867, %v866
  %v891 = vpack.c.b16 %v869, %v868
  %v892 = vpack.c.b16 %v871, %v870
  %v893 = vpack.c.b16 %v873, %v872
  %v894 = vpack.c.b16 %v875, %v874
  %v895 = vpack.c.b16 %v877, %v876
  %v896 = vpack.c.b16 %v879, %v878
  %v897 = vpack.c.b16 %v881, %v880
  %914 = vmatprep.subr.bf16.mxu0 0
  %915 = vmatpush1.bf16.msra.mxu0 %v882
  %916 = vmatprep.subr.bf16.mxu0 0
  %917 = vmatpush1.bf16.msra.mxu0 %v883
  %918 = vmatprep.subr.bf16.mxu0 0
  %919 = vmatpush1.bf16.msra.mxu0 %v884
  %920 = vmatprep.subr.bf16.mxu0 0
  %921 = vmatpush1.bf16.msra.mxu0 %v885
  %922 = vmatprep.subr.bf16.mxu0 0
  %923 = vmatpush1.bf16.msra.mxu0 %v886
  %924 = vmatprep.subr.bf16.mxu0 0
  %925 = vmatpush1.bf16.msra.mxu0 %v887
  %926 = vmatprep.subr.bf16.mxu0 0
  %927 = vmatpush1.bf16.msra.mxu0 %v888
  %928 = vmatprep.subr.bf16.mxu0 0
  %929 = vmatpush1.bf16.msra.mxu0 %v889
  %930 = vmatprep.subr.bf16.mxu0 0
  %931 = vmatpush1.bf16.msra.mxu0 %v890
  %932 = vmatprep.subr.bf16.mxu0 0
  %933 = vmatpush1.bf16.msra.mxu0 %v891
  %934 = vmatprep.subr.bf16.mxu0 0
  %935 = vmatpush1.bf16.msra.mxu0 %v892
  %936 = vmatprep.subr.bf16.mxu0 0
  %937 = vmatpush1.bf16.msra.mxu0 %v893
  %938 = vmatprep.subr.bf16.mxu0 0
  %939 = vmatpush1.bf16.msra.mxu0 %v894
  %940 = vmatprep.subr.bf16.mxu0 0
  %941 = vmatpush1.bf16.msra.mxu0 %v895
  %942 = vmatprep.subr.bf16.mxu0 0
  %943 = vmatpush1.bf16.msra.mxu0 %v896
  %944 = vmatprep.subr.bf16.mxu0 0
  %945 = vmatpush1.bf16.msra.mxu0 %v897
  %946 = vmatprep.mubr.bf16.mxu0 %v563
  %947 = vmatmul.mubr.bf16.gmra.mrb[0].mxu0 %v562
  %v948 = vpop.f32.mrb[0].mxu0
  %v949 = vadd.f32 0.0, %v948
  %v950 = vpop.f32.mrb[0].mxu0
  %v951 = vpop.f32.mrb[0].mxu0
  %v952 = vadd.f32 0.0, %v951
  %v953 = vpop.f32.mrb[0].mxu0
  %954 = vmatprep.mubr.bf16.mxu0 %v565
  %955 = vmatmul.mubr.bf16.gmra.mrb[0].mxu0 %v564
  %v956 = vpop.f32.mrb[0].mxu0
  %v957 = vadd.f32 0.0, %v956
  %v958 = vpop.f32.mrb[0].mxu0
  %v959 = vpop.f32.mrb[0].mxu0
  %v960 = vadd.f32 0.0, %v959
  %v961 = vpop.f32.mrb[0].mxu0
  %962 = vmatprep.mubr.bf16.mxu0 %v567
  %963 = vmatmul.mubr.bf16.gmra.mrb[0].mxu0 %v566
  %v964 = vpop.f32.mrb[0].mxu0
  %v965 = vadd.f32 0.0, %v964
  %v966 = vpop.f32.mrb[0].mxu0
  %v967 = vpop.f32.mrb[0].mxu0
  %v968 = vadd.f32 0.0, %v967
  %v969 = vpop.f32.mrb[0].mxu0
  %970 = vmatprep.mubr.bf16.mxu0 %v569
  %971 = vmatmul.mubr.bf16.gmra.mrb[0].mxu0 %v568
  %v972 = vpop.f32.mrb[0].mxu0
  %v973 = vadd.f32 0.0, %v972
  %v974 = vpop.f32.mrb[0].mxu0
  %v975 = vpop.f32.mrb[0].mxu0
  %v976 = vadd.f32 0.0, %v975
  %v977 = vpop.f32.mrb[0].mxu0
  %978 = vmatprep.mubr.bf16.mxu0 %v571
  %979 = vmatmul.mubr.bf16.gmra.mrb[0].mxu0 %v570
  %v980 = vpop.f32.mrb[0].mxu0
  %v981 = vadd.f32 0.0, %v980
  %v982 = vpop.f32.mrb[0].mxu0
  %v983 = vpop.f32.mrb[0].mxu0
  %v984 = vadd.f32 0.0, %v983
  %v985 = vpop.f32.mrb[0].mxu0
  %986 = vmatprep.mubr.bf16.mxu0 %v573
  %987 = vmatmul.mubr.bf16.gmra.mrb[0].mxu0 %v572
  %v988 = vpop.f32.mrb[0].mxu0
  %v989 = vadd.f32 0.0, %v988
  %v990 = vpop.f32.mrb[0].mxu0
  %v991 = vpop.f32.mrb[0].mxu0
  %v992 = vadd.f32 0.0, %v991
  %v993 = vpop.f32.mrb[0].mxu0
  %994 = vmatprep.mubr.bf16.mxu0 %v575
  %995 = vmatmul.mubr.bf16.gmra.mrb[0].mxu0 %v574
  %v996 = vpop.f32.mrb[0].mxu0
  %v997 = vadd.f32 0.0, %v996
  %v998 = vpop.f32.mrb[0].mxu0
  %v999 = vpop.f32.mrb[0].mxu0
  %v1000 = vadd.f32 0.0, %v999
  %v1001 = vpop.f32.mrb[0].mxu0
  %1002 = vmatprep.mubr.bf16.mxu0 %v577
  %1003 = vmatmul.mubr.bf16.gmra.mrb[0].mxu0 %v576
  %v1004 = vpop.f32.mrb[0].mxu0
  %v1005 = vadd.f32 0.0, %v1004
  %v1006 = vpop.f32.mrb[0].mxu0
  %v1007 = vpop.f32.mrb[0].mxu0
  %v1008 = vadd.f32 0.0, %v1007
  %v1009 = vpop.f32.mrb[0].mxu0
  %1010 = vmatprep.mubr.bf16.mxu0 %v579
  %1011 = vmatmul.mubr.bf16.gmra.mrb[0].mxu0 %v578
  %v1012 = vpop.f32.mrb[0].mxu0
  %v1013 = vadd.f32 0.0, %v1012
  %v1014 = vpop.f32.mrb[0].mxu0
  %v1015 = vpop.f32.mrb[0].mxu0
  %v1016 = vadd.f32 0.0, %v1015
  %v1017 = vpop.f32.mrb[0].mxu0
  %1018 = vmatprep.mubr.bf16.mxu0 %v581
  %1019 = vmatmul.mubr.bf16.gmra.mrb[0].mxu0 %v580
  %v1020 = vpop.f32.mrb[0].mxu0
  %v1021 = vadd.f32 0.0, %v1020
  %v1022 = vpop.f32.mrb[0].mxu0
  %v1023 = vpop.f32.mrb[0].mxu0
  %v1024 = vadd.f32 0.0, %v1023
  %v1025 = vpop.f32.mrb[0].mxu0
  %1026 = vmatprep.mubr.bf16.mxu0 %v583
  %1027 = vmatmul.mubr.bf16.gmra.mrb[0].mxu0 %v582
  %v1028 = vpop.f32.mrb[0].mxu0
  %v1029 = vadd.f32 0.0, %v1028
  %v1030 = vpop.f32.mrb[0].mxu0
  %v1031 = vpop.f32.mrb[0].mxu0
  %v1032 = vadd.f32 0.0, %v1031
  %v1033 = vpop.f32.mrb[0].mxu0
  %1034 = vmatprep.mubr.bf16.mxu0 %v585
  %1035 = vmatmul.mubr.bf16.gmra.mrb[0].mxu0 %v584
  %v1036 = vpop.f32.mrb[0].mxu0
  %v1037 = vadd.f32 0.0, %v1036
  %v1038 = vpop.f32.mrb[0].mxu0
  %v1039 = vpop.f32.mrb[0].mxu0
  %v1040 = vadd.f32 0.0, %v1039
  %v1041 = vpop.f32.mrb[0].mxu0
  %1042 = vmatprep.mubr.bf16.mxu0 %v587
  %1043 = vmatmul.mubr.bf16.gmra.mrb[0].mxu0 %v586
  %v1044 = vpop.f32.mrb[0].mxu0
  %v1045 = vadd.f32 0.0, %v1044
  %v1046 = vpop.f32.mrb[0].mxu0
  %v1047 = vpop.f32.mrb[0].mxu0
  %v1048 = vadd.f32 0.0, %v1047
  %v1049 = vpop.f32.mrb[0].mxu0
  %1050 = vmatprep.mubr.bf16.mxu0 %v589
  %1051 = vmatmul.mubr.bf16.gmra.mrb[0].mxu0 %v588
  %v1052 = vpop.f32.mrb[0].mxu0
  %v1053 = vadd.f32 0.0, %v1052
  %v1054 = vpop.f32.mrb[0].mxu0
  %v1055 = vpop.f32.mrb[0].mxu0
  %v1056 = vadd.f32 0.0, %v1055
  %v1057 = vpop.f32.mrb[0].mxu0
  %1058 = vmatprep.mubr.bf16.mxu0 %v591
  %1059 = vmatmul.mubr.bf16.gmra.mrb[0].mxu0 %v590
  %v1060 = vpop.f32.mrb[0].mxu0
  %v1061 = vadd.f32 0.0, %v1060
  %v1062 = vpop.f32.mrb[0].mxu0
  %v1063 = vpop.f32.mrb[0].mxu0
  %v1064 = vadd.f32 0.0, %v1063
  %v1065 = vpop.f32.mrb[0].mxu0
  %1066 = vmatprep.mubr.bf16.mxu0 %v593
  %1067 = vmatmul.mubr.bf16.gmra.mrb[0].mxu0 %v592
  %v1068 = vpop.f32.mrb[0].mxu0
  %v1069 = vadd.f32 0.0, %v1068
  %v1070 = vpop.f32.mrb[0].mxu0
  %v1071 = vpop.f32.mrb[0].mxu0
  %v1072 = vadd.f32 0.0, %v1071
  %v1073 = vpop.f32.mrb[0].mxu0
  %1074 = vmatprep.mubr.bf16.mxu0 %v595
  %1075 = vmatmul.mubr.bf16.gmra.mrb[0].mxu0 %v594
  %v1076 = vpop.f32.mrb[0].mxu0
  %v1077 = vadd.f32 0.0, %v1076
  %v1078 = vpop.f32.mrb[0].mxu0
  %v1079 = vpop.f32.mrb[0].mxu0
  %v1080 = vadd.f32 0.0, %v1079
  %v1081 = vpop.f32.mrb[0].mxu0
  %1082 = vmatprep.mubr.bf16.mxu0 %v597
  %1083 = vmatmul.mubr.bf16.gmra.mrb[0].mxu0 %v596
  %v1084 = vpop.f32.mrb[0].mxu0
  %v1085 = vadd.f32 0.0, %v1084
  %v1086 = vpop.f32.mrb[0].mxu0
  %v1087 = vpop.f32.mrb[0].mxu0
  %v1088 = vadd.f32 0.0, %v1087
  %v1089 = vpop.f32.mrb[0].mxu0
  %1090 = vmatprep.mubr.bf16.mxu0 %v599
  %1091 = vmatmul.mubr.bf16.gmra.mrb[0].mxu0 %v598
  %v1092 = vpop.f32.mrb[0].mxu0
  %v1093 = vadd.f32 0.0, %v1092
  %v1094 = vpop.f32.mrb[0].mxu0
  %v1095 = vpop.f32.mrb[0].mxu0
  %v1096 = vadd.f32 0.0, %v1095
  %v1097 = vpop.f32.mrb[0].mxu0
  %1098 = vmatprep.mubr.bf16.mxu0 %v601
  %1099 = vmatmul.mubr.bf16.gmra.mrb[0].mxu0 %v600
  %v1100 = vpop.f32.mrb[0].mxu0
  %v1101 = vadd.f32 0.0, %v1100
  %v1102 = vpop.f32.mrb[0].mxu0
  %v1103 = vpop.f32.mrb[0].mxu0
  %v1104 = vadd.f32 0.0, %v1103
  %v1105 = vpop.f32.mrb[0].mxu0
  %1106 = vmatprep.mubr.bf16.mxu0 %v603
  %1107 = vmatmul.mubr.bf16.gmra.mrb[0].mxu0 %v602
  %v1108 = vpop.f32.mrb[0].mxu0
  %v1109 = vadd.f32 0.0, %v1108
  %v1110 = vpop.f32.mrb[0].mxu0
  %v1111 = vpop.f32.mrb[0].mxu0
  %v1112 = vadd.f32 0.0, %v1111
  %v1113 = vpop.f32.mrb[0].mxu0
  %1114 = vmatprep.mubr.bf16.mxu0 %v605
  %1115 = vmatmul.mubr.bf16.gmra.mrb[0].mxu0 %v604
  %v1116 = vpop.f32.mrb[0].mxu0
  %v1117 = vadd.f32 0.0, %v1116
  %v1118 = vpop.f32.mrb[0].mxu0
  %v1119 = vpop.f32.mrb[0].mxu0
  %v1120 = vadd.f32 0.0, %v1119
  %v1121 = vpop.f32.mrb[0].mxu0
  %1122 = vmatprep.mubr.bf16.mxu0 %v607
  %1123 = vmatmul.mubr.bf16.gmra.mrb[0].mxu0 %v606
  %v1124 = vpop.f32.mrb[0].mxu0
  %v1125 = vadd.f32 0.0, %v1124
  %v1126 = vpop.f32.mrb[0].mxu0
  %v1127 = vpop.f32.mrb[0].mxu0
  %v1128 = vadd.f32 0.0, %v1127
  %v1129 = vpop.f32.mrb[0].mxu0
  %1130 = vmatprep.mubr.bf16.mxu0 %v609
  %1131 = vmatmul.mubr.bf16.gmra.mrb[0].mxu0 %v608
  %v1132 = vpop.f32.mrb[0].mxu0
  %v1133 = vadd.f32 0.0, %v1132
  %v1134 = vpop.f32.mrb[0].mxu0
  %v1135 = vpop.f32.mrb[0].mxu0
  %v1136 = vadd.f32 0.0, %v1135
  %v1137 = vpop.f32.mrb[0].mxu0
  %1138 = vmatprep.mubr.bf16.mxu0 %v611
  %1139 = vmatmul.mubr.bf16.gmra.mrb[0].mxu0 %v610
  %v1140 = vpop.f32.mrb[0].mxu0
  %v1141 = vadd.f32 0.0, %v1140
  %v1142 = vpop.f32.mrb[0].mxu0
  %v1143 = vpop.f32.mrb[0].mxu0
  %v1144 = vadd.f32 0.0, %v1143
  %v1145 = vpop.f32.mrb[0].mxu0
  %1146 = vmatprep.mubr.bf16.mxu0 %v613
  %1147 = vmatmul.mubr.bf16.gmra.mrb[0].mxu0 %v612
  %v1148 = vpop.f32.mrb[0].mxu0
  %v1149 = vadd.f32 0.0, %v1148
  %v1150 = vpop.f32.mrb[0].mxu0
  %v1151 = vpop.f32.mrb[0].mxu0
  %v1152 = vadd.f32 0.0, %v1151
  %v1153 = vpop.f32.mrb[0].mxu0
  %1154 = vmatprep.mubr.bf16.mxu0 %v615
  %1155 = vmatmul.mubr.bf16.gmra.mrb[0].mxu0 %v614
  %v1156 = vpop.f32.mrb[0].mxu0
  %v1157 = vadd.f32 0.0, %v1156
  %v1158 = vpop.f32.mrb[0].mxu0
  %v1159 = vpop.f32.mrb[0].mxu0
  %v1160 = vadd.f32 0.0, %v1159
  %v1161 = vpop.f32.mrb[0].mxu0
  %1162 = vmatprep.mubr.bf16.mxu0 %v617
  %1163 = vmatmul.mubr.bf16.gmra.mrb[0].mxu0 %v616
  %v1164 = vpop.f32.mrb[0].mxu0
  %v1165 = vadd.f32 0.0, %v1164
  %v1166 = vpop.f32.mrb[0].mxu0
  %v1167 = vpop.f32.mrb[0].mxu0
  %v1168 = vadd.f32 0.0, %v1167
  %v1169 = vpop.f32.mrb[0].mxu0
  %1170 = vmatprep.mubr.bf16.mxu0 %v619
  %1171 = vmatmul.mubr.bf16.gmra.mrb[0].mxu0 %v618
  %v1172 = vpop.f32.mrb[0].mxu0
  %v1173 = vadd.f32 0.0, %v1172
  %v1174 = vpop.f32.mrb[0].mxu0
  %v1175 = vpop.f32.mrb[0].mxu0
  %v1176 = vadd.f32 0.0, %v1175
  %v1177 = vpop.f32.mrb[0].mxu0
  %1178 = vmatprep.mubr.bf16.mxu0 %v621
  %1179 = vmatmul.mubr.bf16.gmra.mrb[0].mxu0 %v620
  %v1180 = vpop.f32.mrb[0].mxu0
  %v1181 = vadd.f32 0.0, %v1180
  %v1182 = vpop.f32.mrb[0].mxu0
  %v1183 = vpop.f32.mrb[0].mxu0
  %v1184 = vadd.f32 0.0, %v1183
  %v1185 = vpop.f32.mrb[0].mxu0
  %1186 = vmatprep.mubr.bf16.mxu0 %v623
  %1187 = vmatmul.mubr.bf16.gmra.mrb[0].mxu0 %v622
  %v1188 = vpop.f32.mrb[0].mxu0
  %v1189 = vadd.f32 0.0, %v1188
  %v1190 = vpop.f32.mrb[0].mxu0
  %v1191 = vpop.f32.mrb[0].mxu0
  %v1192 = vadd.f32 0.0, %v1191
  %v1193 = vpop.f32.mrb[0].mxu0
  %1194 = vmatprep.mubr.bf16.mxu0 %v625
  %1195 = vmatmul.mubr.bf16.gmra.mrb[0].mxu0 %v624
  %v1196 = vpop.f32.mrb[0].mxu0
  %v1197 = vadd.f32 0.0, %v1196
  %v1198 = vpop.f32.mrb[0].mxu0
  %v1199 = vpop.f32.mrb[0].mxu0
  %v1200 = vadd.f32 0.0, %v1199
  %v1201 = vpop.f32.mrb[0].mxu0
  %1202 = vmatprep.mubr.bf16.mxu0 %v627
  %1203 = vmatmul.mubr.bf16.gmra.mrb[0].mxu0 %v626
  %v1204 = vpop.f32.mrb[0].mxu0
  %v1205 = vadd.f32 0.0, %v1204
  %v1206 = vpop.f32.mrb[0].mxu0
  %v1207 = vpop.f32.mrb[0].mxu0
  %v1208 = vadd.f32 0.0, %v1207
  %v1209 = vpop.f32.mrb[0].mxu0
  %1210 = vmatprep.mubr.bf16.mxu0 %v629
  %1211 = vmatmul.mubr.bf16.gmra.mrb[0].mxu0 %v628
  %v1212 = vpop.f32.mrb[0].mxu0
  %v1213 = vadd.f32 0.0, %v1212
  %v1214 = vpop.f32.mrb[0].mxu0
  %v1215 = vpop.f32.mrb[0].mxu0
  %v1216 = vadd.f32 0.0, %v1215
  %v1217 = vpop.f32.mrb[0].mxu0
  %1218 = vmatprep.mubr.bf16.mxu0 %v631
  %1219 = vmatmul.mubr.bf16.gmra.mrb[0].mxu0 %v630
  %v1220 = vpop.f32.mrb[0].mxu0
  %v1221 = vadd.f32 0.0, %v1220
  %v1222 = vpop.f32.mrb[0].mxu0
  %v1223 = vpop.f32.mrb[0].mxu0
  %v1224 = vadd.f32 0.0, %v1223
  %v1225 = vpop.f32.mrb[0].mxu0
  %1226 = vmatprep.mubr.bf16.mxu0 %v633
  %1227 = vmatmul.mubr.bf16.gmra.mrb[0].mxu0 %v632
  %v1228 = vpop.f32.mrb[0].mxu0
  %v1229 = vadd.f32 0.0, %v1228
  %v1230 = vpop.f32.mrb[0].mxu0
  %v1231 = vpop.f32.mrb[0].mxu0
  %v1232 = vadd.f32 0.0, %v1231
  %v1233 = vpop.f32.mrb[0].mxu0
  %1234 = vmatprep.mubr.bf16.mxu0 %v635
  %1235 = vmatmul.mubr.bf16.gmra.mrb[0].mxu0 %v634
  %v1236 = vpop.f32.mrb[0].mxu0
  %v1237 = vadd.f32 0.0, %v1236
  %v1238 = vpop.f32.mrb[0].mxu0
  %v1239 = vpop.f32.mrb[0].mxu0
  %v1240 = vadd.f32 0.0, %v1239
  %v1241 = vpop.f32.mrb[0].mxu0
  %1242 = vmatprep.mubr.bf16.mxu0 %v637
  %1243 = vmatmul.mubr.bf16.gmra.mrb[0].mxu0 %v636
  %v1244 = vpop.f32.mrb[0].mxu0
  %v1245 = vadd.f32 0.0, %v1244
  %v1246 = vpop.f32.mrb[0].mxu0
  %v1247 = vpop.f32.mrb[0].mxu0
  %v1248 = vadd.f32 0.0, %v1247
  %v1249 = vpop.f32.mrb[0].mxu0
  %1250 = vmatprep.mubr.bf16.mxu0 %v639
  %1251 = vmatmul.mubr.bf16.gmra.mrb[0].mxu0 %v638
  %v1252 = vpop.f32.mrb[0].mxu0
  %v1253 = vadd.f32 0.0, %v1252
  %v1254 = vpop.f32.mrb[0].mxu0
  %v1255 = vpop.f32.mrb[0].mxu0
  %v1256 = vadd.f32 0.0, %v1255
  %v1257 = vpop.f32.mrb[0].mxu0
  %1258 = vmatprep.mubr.bf16.mxu0 %v641
  %1259 = vmatmul.mubr.bf16.gmra.mrb[0].mxu0 %v640
  %v1260 = vpop.f32.mrb[0].mxu0
  %v1261 = vadd.f32 0.0, %v1260
  %v1262 = vpop.f32.mrb[0].mxu0
  %v1263 = vpop.f32.mrb[0].mxu0
  %v1264 = vadd.f32 0.0, %v1263
  %v1265 = vpop.f32.mrb[0].mxu0
  %1266 = vmatprep.mubr.bf16.mxu0 %v643
  %1267 = vmatmul.mubr.bf16.gmra.mrb[0].mxu0 %v642
  %v1268 = vpop.f32.mrb[0].mxu0
  %v1269 = vadd.f32 0.0, %v1268
  %v1270 = vpop.f32.mrb[0].mxu0
  %v1271 = vpop.f32.mrb[0].mxu0
  %v1272 = vadd.f32 0.0, %v1271
  %v1273 = vpop.f32.mrb[0].mxu0
  %1274 = vmatprep.mubr.bf16.mxu0 %v645
  %1275 = vmatmul.mubr.bf16.gmra.mrb[0].mxu0 %v644
  %v1276 = vpop.f32.mrb[0].mxu0
  %v1277 = vadd.f32 0.0, %v1276
  %v1278 = vpop.f32.mrb[0].mxu0
  %v1279 = vpop.f32.mrb[0].mxu0
  %v1280 = vadd.f32 0.0, %v1279
  %v1281 = vpop.f32.mrb[0].mxu0
  %1282 = vmatprep.mubr.bf16.mxu0 %v647
  %1283 = vmatmul.mubr.bf16.gmra.mrb[0].mxu0 %v646
  %v1284 = vpop.f32.mrb[0].mxu0
  %v1285 = vadd.f32 0.0, %v1284
  %v1286 = vpop.f32.mrb[0].mxu0
  %v1287 = vpop.f32.mrb[0].mxu0
  %v1288 = vadd.f32 0.0, %v1287
  %v1289 = vpop.f32.mrb[0].mxu0
  %1290 = vmatprep.mubr.bf16.mxu0 %v649
  %1291 = vmatmul.mubr.bf16.gmra.mrb[0].mxu0 %v648
  %v1292 = vpop.f32.mrb[0].mxu0
  %v1293 = vadd.f32 0.0, %v1292
  %v1294 = vpop.f32.mrb[0].mxu0
  %v1295 = vpop.f32.mrb[0].mxu0
  %v1296 = vadd.f32 0.0, %v1295
  %v1297 = vpop.f32.mrb[0].mxu0
  %1298 = vmatprep.mubr.bf16.mxu0 %v651
  %1299 = vmatmul.mubr.bf16.gmra.mrb[0].mxu0 %v650
  %v1300 = vpop.f32.mrb[0].mxu0
  %v1301 = vadd.f32 0.0, %v1300
  %v1302 = vpop.f32.mrb[0].mxu0
  %v1303 = vpop.f32.mrb[0].mxu0
  %v1304 = vadd.f32 0.0, %v1303
  %v1305 = vpop.f32.mrb[0].mxu0
  %1306 = vmatprep.mubr.bf16.mxu0 %v653
  %1307 = vmatmul.mubr.bf16.gmra.mrb[0].mxu0 %v652
  %v1308 = vpop.f32.mrb[0].mxu0
  %v1309 = vadd.f32 0.0, %v1308
  %v1310 = vpop.f32.mrb[0].mxu0
  %v1311 = vpop.f32.mrb[0].mxu0
  %v1312 = vadd.f32 0.0, %v1311
  %v1313 = vpop.f32.mrb[0].mxu0
  %1314 = vmatprep.mubr.bf16.mxu0 %v655
  %1315 = vmatmul.mubr.bf16.gmra.mrb[0].mxu0 %v654
  %v1316 = vpop.f32.mrb[0].mxu0
  %v1317 = vadd.f32 0.0, %v1316
  %v1318 = vpop.f32.mrb[0].mxu0
  %v1319 = vpop.f32.mrb[0].mxu0
  %v1320 = vadd.f32 0.0, %v1319
  %v1321 = vpop.f32.mrb[0].mxu0
  %1322 = vmatprep.mubr.bf16.mxu0 %v657
  %1323 = vmatmul.mubr.bf16.gmra.mrb[0].mxu0 %v656
  %v1324 = vpop.f32.mrb[0].mxu0
  %v1325 = vadd.f32 0.0, %v1324
  %v1326 = vpop.f32.mrb[0].mxu0
  %v1327 = vpop.f32.mrb[0].mxu0
  %v1328 = vadd.f32 0.0, %v1327
  %v1329 = vpop.f32.mrb[0].mxu0
  %1330 = vmatprep.mubr.bf16.mxu0 %v659
  %1331 = vmatmul.mubr.bf16.gmra.mrb[0].mxu0 %v658
  %v1332 = vpop.f32.mrb[0].mxu0
  %v1333 = vadd.f32 0.0, %v1332
  %v1334 = vpop.f32.mrb[0].mxu0
  %v1335 = vpop.f32.mrb[0].mxu0
  %v1336 = vadd.f32 0.0, %v1335
  %v1337 = vpop.f32.mrb[0].mxu0
  %1338 = vmatprep.mubr.bf16.mxu0 %v661
  %1339 = vmatmul.mubr.bf16.gmra.mrb[0].mxu0 %v660
  %v1340 = vpop.f32.mrb[0].mxu0
  %v1341 = vadd.f32 0.0, %v1340
  %v1342 = vpop.f32.mrb[0].mxu0
  %v1343 = vpop.f32.mrb[0].mxu0
  %v1344 = vadd.f32 0.0, %v1343
  %v1345 = vpop.f32.mrb[0].mxu0
  %1346 = vmatprep.mubr.bf16.mxu0 %v663
  %1347 = vmatmul.mubr.bf16.gmra.mrb[0].mxu0 %v662
  %v1348 = vpop.f32.mrb[0].mxu0
  %v1349 = vadd.f32 0.0, %v1348
  %v1350 = vpop.f32.mrb[0].mxu0
  %v1351 = vpop.f32.mrb[0].mxu0
  %v1352 = vadd.f32 0.0, %v1351
  %v1353 = vpop.f32.mrb[0].mxu0
  %1354 = vmatprep.mubr.bf16.mxu0 %v665
  %1355 = vmatmul.mubr.bf16.gmra.mrb[0].mxu0 %v664
  %v1356 = vpop.f32.mrb[0].mxu0
  %v1357 = vadd.f32 0.0, %v1356
  %v1358 = vpop.f32.mrb[0].mxu0
  %v1359 = vpop.f32.mrb[0].mxu0
  %v1360 = vadd.f32 0.0, %v1359
  %v1361 = vpop.f32.mrb[0].mxu0
  %1362 = vmatprep.mubr.bf16.mxu0 %v667
  %1363 = vmatmul.mubr.bf16.gmra.mrb[0].mxu0 %v666
  %v1364 = vpop.f32.mrb[0].mxu0
  %v1365 = vadd.f32 0.0, %v1364
  %v1366 = vpop.f32.mrb[0].mxu0
  %v1367 = vpop.f32.mrb[0].mxu0
  %v1368 = vadd.f32 0.0, %v1367
  %v1369 = vpop.f32.mrb[0].mxu0
  %1370 = vmatprep.mubr.bf16.mxu0 %v669
  %1371 = vmatmul.mubr.bf16.gmra.mrb[0].mxu0 %v668
  %v1372 = vpop.f32.mrb[0].mxu0
  %v1373 = vadd.f32 0.0, %v1372
  %v1374 = vpop.f32.mrb[0].mxu0
  %v1375 = vpop.f32.mrb[0].mxu0
  %v1376 = vadd.f32 0.0, %v1375
  %v1377 = vpop.f32.mrb[0].mxu0
  %1378 = vmatprep.mubr.bf16.mxu0 %v671
  %1379 = vmatmul.mubr.bf16.gmra.mrb[0].mxu0 %v670
  %v1380 = vpop.f32.mrb[0].mxu0
  %v1381 = vadd.f32 0.0, %v1380
  %v1382 = vpop.f32.mrb[0].mxu0
  %v1383 = vpop.f32.mrb[0].mxu0
  %v1384 = vadd.f32 0.0, %v1383
  %v1385 = vpop.f32.mrb[0].mxu0
  %1386 = vmatprep.mubr.bf16.mxu0 %v673
  %1387 = vmatmul.mubr.bf16.gmra.mrb[0].mxu0 %v672
  %v1388 = vpop.f32.mrb[0].mxu0
  %v1389 = vadd.f32 0.0, %v1388
  %v1390 = vpop.f32.mrb[0].mxu0
  %v1391 = vpop.f32.mrb[0].mxu0
  %v1392 = vadd.f32 0.0, %v1391
  %v1393 = vpop.f32.mrb[0].mxu0
  %1394 = vmatprep.mubr.bf16.mxu0 %v675
  %1395 = vmatmul.mubr.bf16.gmra.mrb[0].mxu0 %v674
  %v1396 = vpop.f32.mrb[0].mxu0
  %v1397 = vadd.f32 0.0, %v1396
  %v1398 = vpop.f32.mrb[0].mxu0
  %v1399 = vpop.f32.mrb[0].mxu0
  %v1400 = vadd.f32 0.0, %v1399
  %v1401 = vpop.f32.mrb[0].mxu0
  %1402 = vmatprep.mubr.bf16.mxu0 %v677
  %1403 = vmatmul.mubr.bf16.gmra.mrb[0].mxu0 %v676
  %v1404 = vpop.f32.mrb[0].mxu0
  %v1405 = vadd.f32 0.0, %v1404
  %v1406 = vpop.f32.mrb[0].mxu0
  %v1407 = vpop.f32.mrb[0].mxu0
  %v1408 = vadd.f32 0.0, %v1407
  %v1409 = vpop.f32.mrb[0].mxu0
  %1410 = vmatprep.mubr.bf16.mxu0 %v679
  %1411 = vmatmul.mubr.bf16.gmra.mrb[0].mxu0 %v678
  %v1412 = vpop.f32.mrb[0].mxu0
  %v1413 = vadd.f32 0.0, %v1412
  %v1414 = vpop.f32.mrb[0].mxu0
  %v1415 = vpop.f32.mrb[0].mxu0
  %v1416 = vadd.f32 0.0, %v1415
  %v1417 = vpop.f32.mrb[0].mxu0
  %1418 = vmatprep.mubr.bf16.mxu0 %v681
  %1419 = vmatmul.mubr.bf16.gmra.mrb[0].mxu0 %v680
  %v1420 = vpop.f32.mrb[0].mxu0
  %v1421 = vadd.f32 0.0, %v1420
  %v1422 = vpop.f32.mrb[0].mxu0
  %v1423 = vpop.f32.mrb[0].mxu0
  %v1424 = vadd.f32 0.0, %v1423
  %v1425 = vpop.f32.mrb[0].mxu0
  %1426 = vmatprep.mubr.bf16.mxu0 %v683
  %1427 = vmatmul.mubr.bf16.gmra.mrb[0].mxu0 %v682
  %v1428 = vpop.f32.mrb[0].mxu0
  %v1429 = vadd.f32 0.0, %v1428
  %v1430 = vpop.f32.mrb[0].mxu0
  %v1431 = vpop.f32.mrb[0].mxu0
  %v1432 = vadd.f32 0.0, %v1431
  %v1433 = vpop.f32.mrb[0].mxu0
  %1434 = vmatprep.mubr.bf16.mxu0 %v685
  %1435 = vmatmul.mubr.bf16.gmra.mrb[0].mxu0 %v684
  %v1436 = vpop.f32.mrb[0].mxu0
  %v1437 = vadd.f32 0.0, %v1436
  %v1438 = vpop.f32.mrb[0].mxu0
  %v1439 = vpop.f32.mrb[0].mxu0
  %v1440 = vadd.f32 0.0, %v1439
  %v1441 = vpop.f32.mrb[0].mxu0
  %1442 = vmatprep.mubr.bf16.mxu0 %v687
  %1443 = vmatmul.mubr.bf16.gmra.mrb[0].mxu0 %v686
  %v1444 = vpop.f32.mrb[0].mxu0
  %v1445 = vadd.f32 0.0, %v1444
  %v1446 = vpop.f32.mrb[0].mxu0
  %v1447 = vpop.f32.mrb[0].mxu0
  %v1448 = vadd.f32 0.0, %v1447
  %v1449 = vpop.f32.mrb[0].mxu0
  %1450 = vmatprep.mubr.bf16.mxu0 %v689
  %1451 = vmatmul.mubr.bf16.gmra.mrb[0].mxu0 %v688
  %v1452 = vpop.f32.mrb[0].mxu0
  %v1453 = vadd.f32 0.0, %v1452
  %v1454 = vpop.f32.mrb[0].mxu0
  %v1455 = vpop.f32.mrb[0].mxu0
  %v1456 = vadd.f32 0.0, %v1455
  %v1457 = vpop.f32.mrb[0].mxu0
  %1458 = vdwg.mxu0
  %1459 = vst [vmem:[#allocation2] sm:$0xff] %v949
  %1460 = vst [vmem:[#allocation2 + $0x8] sm:$0xff] %v952
  %1461 = vst [vmem:[#allocation2 + $0x10] sm:$0xff] %v957
  %1462 = vst [vmem:[#allocation2 + $0x18] sm:$0xff] %v960
  %1463 = vst [vmem:[#allocation2 + $0x20] sm:$0xff] %v965
  %1464 = vst [vmem:[#allocation2 + $0x28] sm:$0xff] %v968
  %1465 = vst [vmem:[#allocation2 + $0x30] sm:$0xff] %v973
  %1466 = vst [vmem:[#allocation2 + $0x38] sm:$0xff] %v976
  %1467 = vst [vmem:[#allocation2 + $0x40] sm:$0xff] %v981
  %1468 = vst [vmem:[#allocation2 + $0x48] sm:$0xff] %v984
  %1469 = vst [vmem:[#allocation2 + $0x50] sm:$0xff] %v989
  %1470 = vst [vmem:[#allocation2 + $0x58] sm:$0xff] %v992
  %1471 = vst [vmem:[#allocation2 + $0x60] sm:$0xff] %v997
  %1472 = vst [vmem:[#allocation2 + $0x68] sm:$0xff] %v1000
  %1473 = vst [vmem:[#allocation2 + $0x70] sm:$0xff] %v1005
  %1474 = vst [vmem:[#allocation2 + $0x78] sm:$0xff] %v1008
  %1475 = vst [vmem:[#allocation2 + $0x80] sm:$0xff] %v1013
  %1476 = vst [vmem:[#allocation2 + $0x88] sm:$0xff] %v1016
  %1477 = vst [vmem:[#allocation2 + $0x90] sm:$0xff] %v1021
  %1478 = vst [vmem:[#allocation2 + $0x98] sm:$0xff] %v1024
  %1479 = vst [vmem:[#allocation2 + $0xa0] sm:$0xff] %v1029
  %1480 = vst [vmem:[#allocation2 + $0xa8] sm:$0xff] %v1032
  %1481 = vst [vmem:[#allocation2 + $0xb0] sm:$0xff] %v1037
  %1482 = vst [vmem:[#allocation2 + $0xb8] sm:$0xff] %v1040
  %1483 = vst [vmem:[#allocation2 + $0xc0] sm:$0xff] %v1045
  %1484 = vst [vmem:[#allocation2 + $0xc8] sm:$0xff] %v1048
  %1485 = vst [vmem:[#allocation2 + $0xd0] sm:$0xff] %v1053
  %1486 = vst [vmem:[#allocation2 + $0xd8] sm:$0xff] %v1056
  %1487 = vst [vmem:[#allocation2 + $0xe0] sm:$0xff] %v1061
  %1488 = vst [vmem:[#allocation2 + $0xe8] sm:$0xff] %v1064
  %1489 = vst [vmem:[#allocation2 + $0xf0] sm:$0xff] %v1069
  %1490 = vst [vmem:[#allocation2 + $0xf8] sm:$0xff] %v1072
  %1491 = vst [vmem:[#allocation2 + $0x100] sm:$0xff] %v1077
  %1492 = vst [vmem:[#allocation2 + $0x108] sm:$0xff] %v1080
  %1493 = vst [vmem:[#allocation2 + $0x110] sm:$0xff] %v1085
  %1494 = vst [vmem:[#allocation2 + $0x118] sm:$0xff] %v1088
  %1495 = vst [vmem:[#allocation2 + $0x120] sm:$0xff] %v1093
  %1496 = vst [vmem:[#allocation2 + $0x128] sm:$0xff] %v1096
  %1497 = vst [vmem:[#allocation2 + $0x130] sm:$0xff] %v1101
  %1498 = vst [vmem:[#allocation2 + $0x138] sm:$0xff] %v1104
  %1499 = vst [vmem:[#allocation2 + $0x140] sm:$0xff] %v1109
  %1500 = vst [vmem:[#allocation2 + $0x148] sm:$0xff] %v1112
  %1501 = vst [vmem:[#allocation2 + $0x150] sm:$0xff] %v1117
  %1502 = vst [vmem:[#allocation2 + $0x158] sm:$0xff] %v1120
  %1503 = vst [vmem:[#allocation2 + $0x160] sm:$0xff] %v1125
  %1504 = vst [vmem:[#allocation2 + $0x168] sm:$0xff] %v1128
  %1505 = vst [vmem:[#allocation2 + $0x170] sm:$0xff] %v1133
  %1506 = vst [vmem:[#allocation2 + $0x178] sm:$0xff] %v1136
  %1507 = vst [vmem:[#allocation2 + $0x180] sm:$0xff] %v1141
  %1508 = vst [vmem:[#allocation2 + $0x188] sm:$0xff] %v1144
  %1509 = vst [vmem:[#allocation2 + $0x190] sm:$0xff] %v1149
  %1510 = vst [vmem:[#allocation2 + $0x198] sm:$0xff] %v1152
  %1511 = vst [vmem:[#allocation2 + $0x1a0] sm:$0xff] %v1157
  %1512 = vst [vmem:[#allocation2 + $0x1a8] sm:$0xff] %v1160
  %1513 = vst [vmem:[#allocation2 + $0x1b0] sm:$0xff] %v1165
  %1514 = vst [vmem:[#allocation2 + $0x1b8] sm:$0xff] %v1168
  %1515 = vst [vmem:[#allocation2 + $0x1c0] sm:$0xff] %v1173
  %1516 = vst [vmem:[#allocation2 + $0x1c8] sm:$0xff] %v1176
  %1517 = vst [vmem:[#allocation2 + $0x1d0] sm:$0xff] %v1181
  %1518 = vst [vmem:[#allocation2 + $0x1d8] sm:$0xff] %v1184
  %1519 = vst [vmem:[#allocation2 + $0x1e0] sm:$0xff] %v1189
  %1520 = vst [vmem:[#allocation2 + $0x1e8] sm:$0xff] %v1192
  %1521 = vst [vmem:[#allocation2 + $0x1f0] sm:$0xff] %v1197
  %1522 = vst [vmem:[#allocation2 + $0x1f8] sm:$0xff] %v1200
  %1523 = vst [vmem:[#allocation2 + $0x200] sm:$0xff] %v1205
  %1524 = vst [vmem:[#allocation2 + $0x208] sm:$0xff] %v1208
  %1525 = vst [vmem:[#allocation2 + $0x210] sm:$0xff] %v1213
  %1526 = vst [vmem:[#allocation2 + $0x218] sm:$0xff] %v1216
  %1527 = vst [vmem:[#allocation2 + $0x220] sm:$0xff] %v1221
  %1528 = vst [vmem:[#allocation2 + $0x228] sm:$0xff] %v1224
  %1529 = vst [vmem:[#allocation2 + $0x230] sm:$0xff] %v1229
  %1530 = vst [vmem:[#allocation2 + $0x238] sm:$0xff] %v1232
  %1531 = vst [vmem:[#allocation2 + $0x240] sm:$0xff] %v1237
  %1532 = vst [vmem:[#allocation2 + $0x248] sm:$0xff] %v1240
  %1533 = vst [vmem:[#allocation2 + $0x250] sm:$0xff] %v1245
  %1534 = vst [vmem:[#allocation2 + $0x258] sm:$0xff] %v1248
  %1535 = vst [vmem:[#allocation2 + $0x260] sm:$0xff] %v1253
  %1536 = vst [vmem:[#allocation2 + $0x268] sm:$0xff] %v1256
  %1537 = vst [vmem:[#allocation2 + $0x270] sm:$0xff] %v1261
  %1538 = vst [vmem:[#allocation2 + $0x278] sm:$0xff] %v1264
  %1539 = vst [vmem:[#allocation2 + $0x280] sm:$0xff] %v1269
  %1540 = vst [vmem:[#allocation2 + $0x288] sm:$0xff] %v1272
  %1541 = vst [vmem:[#allocation2 + $0x290] sm:$0xff] %v1277
  %1542 = vst [vmem:[#allocation2 + $0x298] sm:$0xff] %v1280
  %1543 = vst [vmem:[#allocation2 + $0x2a0] sm:$0xff] %v1285
  %1544 = vst [vmem:[#allocation2 + $0x2a8] sm:$0xff] %v1288
  %1545 = vst [vmem:[#allocation2 + $0x2b0] sm:$0xff] %v1293
  %1546 = vst [vmem:[#allocation2 + $0x2b8] sm:$0xff] %v1296
  %1547 = vst [vmem:[#allocation2 + $0x2c0] sm:$0xff] %v1301
  %1548 = vst [vmem:[#allocation2 + $0x2c8] sm:$0xff] %v1304
  %1549 = vst [vmem:[#allocation2 + $0x2d0] sm:$0xff] %v1309
  %1550 = vst [vmem:[#allocation2 + $0x2d8] sm:$0xff] %v1312
  %1551 = vst [vmem:[#allocation2 + $0x2e0] sm:$0xff] %v1317
  %1552 = vst [vmem:[#allocation2 + $0x2e8] sm:$0xff] %v1320
  %1553 = vst [vmem:[#allocation2 + $0x2f0] sm:$0xff] %v1325
  %1554 = vst [vmem:[#allocation2 + $0x2f8] sm:$0xff] %v1328
  %1555 = vst [vmem:[#allocation2 + $0x300] sm:$0xff] %v1333
  %1556 = vst [vmem:[#allocation2 + $0x308] sm:$0xff] %v1336
  %1557 = vst [vmem:[#allocation2 + $0x310] sm:$0xff] %v1341
  %1558 = vst [vmem:[#allocation2 + $0x318] sm:$0xff] %v1344
  %1559 = vst [vmem:[#allocation2 + $0x320] sm:$0xff] %v1349
  %1560 = vst [vmem:[#allocation2 + $0x328] sm:$0xff] %v1352
  %1561 = vst [vmem:[#allocation2 + $0x330] sm:$0xff] %v1357
  %1562 = vst [vmem:[#allocation2 + $0x338] sm:$0xff] %v1360
  %1563 = vst [vmem:[#allocation2 + $0x340] sm:$0xff] %v1365
  %1564 = vst [vmem:[#allocation2 + $0x348] sm:$0xff] %v1368
  %1565 = vst [vmem:[#allocation2 + $0x350] sm:$0xff] %v1373
  %1566 = vst [vmem:[#allocation2 + $0x358] sm:$0xff] %v1376
  %1567 = vst [vmem:[#allocation2 + $0x360] sm:$0xff] %v1381
  %1568 = vst [vmem:[#allocation2 + $0x368] sm:$0xff] %v1384
  %1569 = vst [vmem:[#allocation2 + $0x370] sm:$0xff] %v1389
  %1570 = vst [vmem:[#allocation2 + $0x378] sm:$0xff] %v1392
  %1571 = vst [vmem:[#allocation2 + $0x380] sm:$0xff] %v1397
  %1572 = vst [vmem:[#allocation2 + $0x388] sm:$0xff] %v1400
  %1573 = vst [vmem:[#allocation2 + $0x390] sm:$0xff] %v1405
  %1574 = vst [vmem:[#allocation2 + $0x398] sm:$0xff] %v1408
  %1575 = vst [vmem:[#allocation2 + $0x3a0] sm:$0xff] %v1413
  %1576 = vst [vmem:[#allocation2 + $0x3a8] sm:$0xff] %v1416
  %1577 = vst [vmem:[#allocation2 + $0x3b0] sm:$0xff] %v1421
  %1578 = vst [vmem:[#allocation2 + $0x3b8] sm:$0xff] %v1424
  %1579 = vst [vmem:[#allocation2 + $0x3c0] sm:$0xff] %v1429
  %1580 = vst [vmem:[#allocation2 + $0x3c8] sm:$0xff] %v1432
  %1581 = vst [vmem:[#allocation2 + $0x3d0] sm:$0xff] %v1437
  %1582 = vst [vmem:[#allocation2 + $0x3d8] sm:$0xff] %v1440
  %1583 = vst [vmem:[#allocation2 + $0x3e0] sm:$0xff] %v1445
  %1584 = vst [vmem:[#allocation2 + $0x3e8] sm:$0xff] %v1448
  %1585 = vst [vmem:[#allocation2 + $0x3f0] sm:$0xff] %v1453
  %1586 = vst [vmem:[#allocation2 + $0x3f8] sm:$0xff] %v1456
  %v1587 = vld [vmem:[#allocation2] sm:$0xff]
  %v1588 = vld [vmem:[#allocation2 + $0x8] sm:$0xff]
  %v1589 = vld [vmem:[#allocation2 + $0x10] sm:$0xff]
  %v1590 = vld [vmem:[#allocation2 + $0x18] sm:$0xff]
  %v1591 = vld [vmem:[#allocation2 + $0x20] sm:$0xff]
  %v1592 = vld [vmem:[#allocation2 + $0x28] sm:$0xff]
  %v1593 = vld [vmem:[#allocation2 + $0x30] sm:$0xff]
  %v1594 = vld [vmem:[#allocation2 + $0x38] sm:$0xff]
  %v1595 = vld [vmem:[#allocation2 + $0x40] sm:$0xff]
  %v1596 = vld [vmem:[#allocation2 + $0x48] sm:$0xff]
  %v1597 = vld [vmem:[#allocation2 + $0x50] sm:$0xff]
  %v1598 = vld [vmem:[#allocation2 + $0x58] sm:$0xff]
  %v1599 = vld [vmem:[#allocation2 + $0x60] sm:$0xff]
  %v1600 = vld [vmem:[#allocation2 + $0x68] sm:$0xff]
  %v1601 = vld [vmem:[#allocation2 + $0x70] sm:$0xff]
  %v1602 = vld [vmem:[#allocation2 + $0x78] sm:$0xff]
  %v1603 = vld [vmem:[#allocation2 + $0x80] sm:$0xff]
  %v1604 = vld [vmem:[#allocation2 + $0x88] sm:$0xff]
  %v1605 = vld [vmem:[#allocation2 + $0x90] sm:$0xff]
  %v1606 = vld [vmem:[#allocation2 + $0x98] sm:$0xff]
  %v1607 = vld [vmem:[#allocation2 + $0xa0] sm:$0xff]
  %v1608 = vld [vmem:[#allocation2 + $0xa8] sm:$0xff]
  %v1609 = vld [vmem:[#allocation2 + $0xb0] sm:$0xff]
  %v1610 = vld [vmem:[#allocation2 + $0xb8] sm:$0xff]
  %v1611 = vld [vmem:[#allocation2 + $0xc0] sm:$0xff]
  %v1612 = vld [vmem:[#allocation2 + $0xc8] sm:$0xff]
  %v1613 = vld [vmem:[#allocation2 + $0xd0] sm:$0xff]
  %v1614 = vld [vmem:[#allocation2 + $0xd8] sm:$0xff]
  %v1615 = vld [vmem:[#allocation2 + $0xe0] sm:$0xff]
  %v1616 = vld [vmem:[#allocation2 + $0xe8] sm:$0xff]
  %v1617 = vld [vmem:[#allocation2 + $0xf0] sm:$0xff]
  %v1618 = vld [vmem:[#allocation2 + $0xf8] sm:$0xff]
  %v1619 = vld [vmem:[#allocation2 + $0x100] sm:$0xff]
  %v1620 = vld [vmem:[#allocation2 + $0x108] sm:$0xff]
  %v1621 = vld [vmem:[#allocation2 + $0x110] sm:$0xff]
  %v1622 = vld [vmem:[#allocation2 + $0x118] sm:$0xff]
  %v1623 = vld [vmem:[#allocation2 + $0x120] sm:$0xff]
  %v1624 = vld [vmem:[#allocation2 + $0x128] sm:$0xff]
  %v1625 = vld [vmem:[#allocation2 + $0x130] sm:$0xff]
  %v1626 = vld [vmem:[#allocation2 + $0x138] sm:$0xff]
  %v1627 = vld [vmem:[#allocation2 + $0x140] sm:$0xff]
  %v1628 = vld [vmem:[#allocation2 + $0x148] sm:$0xff]
  %v1629 = vld [vmem:[#allocation2 + $0x150] sm:$0xff]
  %v1630 = vld [vmem:[#allocation2 + $0x158] sm:$0xff]
  %v1631 = vld [vmem:[#allocation2 + $0x160] sm:$0xff]
  %v1632 = vld [vmem:[#allocation2 + $0x168] sm:$0xff]
  %v1633 = vld [vmem:[#allocation2 + $0x170] sm:$0xff]
  %v1634 = vld [vmem:[#allocation2 + $0x178] sm:$0xff]
  %v1635 = vld [vmem:[#allocation2 + $0x180] sm:$0xff]
  %v1636 = vld [vmem:[#allocation2 + $0x188] sm:$0xff]
  %v1637 = vld [vmem:[#allocation2 + $0x190] sm:$0xff]
  %v1638 = vld [vmem:[#allocation2 + $0x198] sm:$0xff]
  %v1639 = vld [vmem:[#allocation2 + $0x1a0] sm:$0xff]
  %v1640 = vld [vmem:[#allocation2 + $0x1a8] sm:$0xff]
  %v1641 = vld [vmem:[#allocation2 + $0x1b0] sm:$0xff]
  %v1642 = vld [vmem:[#allocation2 + $0x1b8] sm:$0xff]
  %v1643 = vld [vmem:[#allocation2 + $0x1c0] sm:$0xff]
  %v1644 = vld [vmem:[#allocation2 + $0x1c8] sm:$0xff]
  %v1645 = vld [vmem:[#allocation2 + $0x1d0] sm:$0xff]
  %v1646 = vld [vmem:[#allocation2 + $0x1d8] sm:$0xff]
  %v1647 = vld [vmem:[#allocation2 + $0x1e0] sm:$0xff]
  %v1648 = vld [vmem:[#allocation2 + $0x1e8] sm:$0xff]
  %v1649 = vld [vmem:[#allocation2 + $0x1f0] sm:$0xff]
  %v1650 = vld [vmem:[#allocation2 + $0x1f8] sm:$0xff]
  %v1651 = vld [vmem:[#allocation2 + $0x200] sm:$0xff]
  %v1652 = vld [vmem:[#allocation2 + $0x208] sm:$0xff]
  %v1653 = vld [vmem:[#allocation2 + $0x210] sm:$0xff]
  %v1654 = vld [vmem:[#allocation2 + $0x218] sm:$0xff]
  %v1655 = vld [vmem:[#allocation2 + $0x220] sm:$0xff]
  %v1656 = vld [vmem:[#allocation2 + $0x228] sm:$0xff]
  %v1657 = vld [vmem:[#allocation2 + $0x230] sm:$0xff]
  %v1658 = vld [vmem:[#allocation2 + $0x238] sm:$0xff]
  %v1659 = vld [vmem:[#allocation2 + $0x240] sm:$0xff]
  %v1660 = vld [vmem:[#allocation2 + $0x248] sm:$0xff]
  %v1661 = vld [vmem:[#allocation2 + $0x250] sm:$0xff]
  %v1662 = vld [vmem:[#allocation2 + $0x258] sm:$0xff]
  %v1663 = vld [vmem:[#allocation2 + $0x260] sm:$0xff]
  %v1664 = vld [vmem:[#allocation2 + $0x268] sm:$0xff]
  %v1665 = vld [vmem:[#allocation2 + $0x270] sm:$0xff]
  %v1666 = vld [vmem:[#allocation2 + $0x278] sm:$0xff]
  %v1667 = vld [vmem:[#allocation2 + $0x280] sm:$0xff]
  %v1668 = vld [vmem:[#allocation2 + $0x288] sm:$0xff]
  %v1669 = vld [vmem:[#allocation2 + $0x290] sm:$0xff]
  %v1670 = vld [vmem:[#allocation2 + $0x298] sm:$0xff]
  %v1671 = vld [vmem:[#allocation2 + $0x2a0] sm:$0xff]
  %v1672 = vld [vmem:[#allocation2 + $0x2a8] sm:$0xff]
  %v1673 = vld [vmem:[#allocation2 + $0x2b0] sm:$0xff]
  %v1674 = vld [vmem:[#allocation2 + $0x2b8] sm:$0xff]
  %v1675 = vld [vmem:[#allocation2 + $0x2c0] sm:$0xff]
  %v1676 = vld [vmem:[#allocation2 + $0x2c8] sm:$0xff]
  %v1677 = vld [vmem:[#allocation2 + $0x2d0] sm:$0xff]
  %v1678 = vld [vmem:[#allocation2 + $0x2d8] sm:$0xff]
  %v1679 = vld [vmem:[#allocation2 + $0x2e0] sm:$0xff]
  %v1680 = vld [vmem:[#allocation2 + $0x2e8] sm:$0xff]
  %v1681 = vld [vmem:[#allocation2 + $0x2f0] sm:$0xff]
  %v1682 = vld [vmem:[#allocation2 + $0x2f8] sm:$0xff]
  %v1683 = vld [vmem:[#allocation2 + $0x300] sm:$0xff]
  %v1684 = vld [vmem:[#allocation2 + $0x308] sm:$0xff]
  %v1685 = vld [vmem:[#allocation2 + $0x310] sm:$0xff]
  %v1686 = vld [vmem:[#allocation2 + $0x318] sm:$0xff]
  %v1687 = vld [vmem:[#allocation2 + $0x320] sm:$0xff]
  %v1688 = vld [vmem:[#allocation2 + $0x328] sm:$0xff]
  %v1689 = vld [vmem:[#allocation2 + $0x330] sm:$0xff]
  %v1690 = vld [vmem:[#allocation2 + $0x338] sm:$0xff]
  %v1691 = vld [vmem:[#allocation2 + $0x340] sm:$0xff]
  %v1692 = vld [vmem:[#allocation2 + $0x348] sm:$0xff]
  %v1693 = vld [vmem:[#allocation2 + $0x350] sm:$0xff]
  %v1694 = vld [vmem:[#allocation2 + $0x358] sm:$0xff]
  %v1695 = vld [vmem:[#allocation2 + $0x360] sm:$0xff]
  %v1696 = vld [vmem:[#allocation2 + $0x368] sm:$0xff]
  %v1697 = vld [vmem:[#allocation2 + $0x370] sm:$0xff]
  %v1698 = vld [vmem:[#allocation2 + $0x378] sm:$0xff]
  %v1699 = vld [vmem:[#allocation2 + $0x380] sm:$0xff]
  %v1700 = vld [vmem:[#allocation2 + $0x388] sm:$0xff]
  %v1701 = vld [vmem:[#allocation2 + $0x390] sm:$0xff]
  %v1702 = vld [vmem:[#allocation2 + $0x398] sm:$0xff]
  %v1703 = vld [vmem:[#allocation2 + $0x3a0] sm:$0xff]
  %v1704 = vld [vmem:[#allocation2 + $0x3a8] sm:$0xff]
  %v1705 = vld [vmem:[#allocation2 + $0x3b0] sm:$0xff]
  %v1706 = vld [vmem:[#allocation2 + $0x3b8] sm:$0xff]
  %v1707 = vld [vmem:[#allocation2 + $0x3c0] sm:$0xff]
  %v1708 = vld [vmem:[#allocation2 + $0x3c8] sm:$0xff]
  %v1709 = vld [vmem:[#allocation2 + $0x3d0] sm:$0xff]
  %v1710 = vld [vmem:[#allocation2 + $0x3d8] sm:$0xff]
  %v1711 = vld [vmem:[#allocation2 + $0x3e0] sm:$0xff]
  %v1712 = vld [vmem:[#allocation2 + $0x3e8] sm:$0xff]
  %v1713 = vld [vmem:[#allocation2 + $0x3f0] sm:$0xff]
  %v1714 = vld [vmem:[#allocation2 + $0x3f8] sm:$0xff]
  %v1715 = vadd.f32 %v1587, %v1588
  %v1716 = vadd.f32 %v1715, %v1589
  %v1717 = vadd.f32 %v1716, %v1590
  %v1718 = vadd.f32 %v1717, %v1591
  %v1719 = vadd.f32 %v1718, %v1592
  %v1720 = vadd.f32 %v1719, %v1593
  %v1721 = vadd.f32 %v1720, %v1594
  %v1722 = vadd.f32 %v1721, %v1595
  %v1723 = vadd.f32 %v1722, %v1596
  %v1724 = vadd.f32 %v1723, %v1597
  %v1725 = vadd.f32 %v1724, %v1598
  %v1726 = vadd.f32 %v1725, %v1599
  %v1727 = vadd.f32 %v1726, %v1600
  %v1728 = vadd.f32 %v1727, %v1601
  %v1729 = vadd.f32 %v1728, %v1602
  %v1730 = vadd.f32 %v1729, %v1603
  %v1731 = vadd.f32 %v1730, %v1604
  %v1732 = vadd.f32 %v1731, %v1605
  %v1733 = vadd.f32 %v1732, %v1606
  %v1734 = vadd.f32 %v1733, %v1607
  %v1735 = vadd.f32 %v1734, %v1608
  %v1736 = vadd.f32 %v1735, %v1609
  %v1737 = vadd.f32 %v1736, %v1610
  %v1738 = vadd.f32 %v1737, %v1611
  %v1739 = vadd.f32 %v1738, %v1612
  %v1740 = vadd.f32 %v1739, %v1613
  %v1741 = vadd.f32 %v1740, %v1614
  %v1742 = vadd.f32 %v1741, %v1615
  %v1743 = vadd.f32 %v1742, %v1616
  %v1744 = vadd.f32 %v1743, %v1617
  %v1745 = vadd.f32 %v1744, %v1618
  %v1746 = vadd.f32 %v1745, %v1619
  %v1747 = vadd.f32 %v1746, %v1620
  %v1748 = vadd.f32 %v1747, %v1621
  %v1749 = vadd.f32 %v1748, %v1622
  %v1750 = vadd.f32 %v1749, %v1623
  %v1751 = vadd.f32 %v1750, %v1624
  %v1752 = vadd.f32 %v1751, %v1625
  %v1753 = vadd.f32 %v1752, %v1626
  %v1754 = vadd.f32 %v1753, %v1627
  %v1755 = vadd.f32 %v1754, %v1628
  %v1756 = vadd.f32 %v1755, %v1629
  %v1757 = vadd.f32 %v1756, %v1630
  %v1758 = vadd.f32 %v1757, %v1631
  %v1759 = vadd.f32 %v1758, %v1632
  %v1760 = vadd.f32 %v1759, %v1633
  %v1761 = vadd.f32 %v1760, %v1634
  %v1762 = vadd.f32 %v1761, %v1635
  %v1763 = vadd.f32 %v1762, %v1636
  %v1764 = vadd.f32 %v1763, %v1637
  %v1765 = vadd.f32 %v1764, %v1638
  %v1766 = vadd.f32 %v1765, %v1639
  %v1767 = vadd.f32 %v1766, %v1640
  %v1768 = vadd.f32 %v1767, %v1641
  %v1769 = vadd.f32 %v1768, %v1642
  %v1770 = vadd.f32 %v1769, %v1643
  %v1771 = vadd.f32 %v1770, %v1644
  %v1772 = vadd.f32 %v1771, %v1645
  %v1773 = vadd.f32 %v1772, %v1646
  %v1774 = vadd.f32 %v1773, %v1647
  %v1775 = vadd.f32 %v1774, %v1648
  %v1776 = vadd.f32 %v1775, %v1649
  %v1777 = vadd.f32 %v1776, %v1650
  %v1778 = vadd.f32 %v1777, %v1651
  %v1779 = vadd.f32 %v1778, %v1652
  %v1780 = vadd.f32 %v1779, %v1653
  %v1781 = vadd.f32 %v1780, %v1654
  %v1782 = vadd.f32 %v1781, %v1655
  %v1783 = vadd.f32 %v1782, %v1656
  %v1784 = vadd.f32 %v1783, %v1657
  %v1785 = vadd.f32 %v1784, %v1658
  %v1786 = vadd.f32 %v1785, %v1659
  %v1787 = vadd.f32 %v1786, %v1660
  %v1788 = vadd.f32 %v1787, %v1661
  %v1789 = vadd.f32 %v1788, %v1662
  %v1790 = vadd.f32 %v1789, %v1663
  %v1791 = vadd.f32 %v1790, %v1664
  %v1792 = vadd.f32 %v1791, %v1665
  %v1793 = vadd.f32 %v1792, %v1666
  %v1794 = vadd.f32 %v1793, %v1667
  %v1795 = vadd.f32 %v1794, %v1668
  %v1796 = vadd.f32 %v1795, %v1669
  %v1797 = vadd.f32 %v1796, %v1670
  %v1798 = vadd.f32 %v1797, %v1671
  %v1799 = vadd.f32 %v1798, %v1672
  %v1800 = vadd.f32 %v1799, %v1673
  %v1801 = vadd.f32 %v1800, %v1674
  %v1802 = vadd.f32 %v1801, %v1675
  %v1803 = vadd.f32 %v1802, %v1676
  %v1804 = vadd.f32 %v1803, %v1677
  %v1805 = vadd.f32 %v1804, %v1678
  %v1806 = vadd.f32 %v1805, %v1679
  %v1807 = vadd.f32 %v1806, %v1680
  %v1808 = vadd.f32 %v1807, %v1681
  %v1809 = vadd.f32 %v1808, %v1682
  %v1810 = vadd.f32 %v1809, %v1683
  %v1811 = vadd.f32 %v1810, %v1684
  %v1812 = vadd.f32 %v1811, %v1685
  %v1813 = vadd.f32 %v1812, %v1686
  %v1814 = vadd.f32 %v1813, %v1687
  %v1815 = vadd.f32 %v1814, %v1688
  %v1816 = vadd.f32 %v1815, %v1689
  %v1817 = vadd.f32 %v1816, %v1690
  %v1818 = vadd.f32 %v1817, %v1691
  %v1819 = vadd.f32 %v1818, %v1692
  %v1820 = vadd.f32 %v1819, %v1693
  %v1821 = vadd.f32 %v1820, %v1694
  %v1822 = vadd.f32 %v1821, %v1695
  %v1823 = vadd.f32 %v1822, %v1696
  %v1824 = vadd.f32 %v1823, %v1697
  %v1825 = vadd.f32 %v1824, %v1698
  %v1826 = vadd.f32 %v1825, %v1699
  %v1827 = vadd.f32 %v1826, %v1700
  %v1828 = vadd.f32 %v1827, %v1701
  %v1829 = vadd.f32 %v1828, %v1702
  %v1830 = vadd.f32 %v1829, %v1703
  %v1831 = vadd.f32 %v1830, %v1704
  %v1832 = vadd.f32 %v1831, %v1705
  %v1833 = vadd.f32 %v1832, %v1706
  %v1834 = vadd.f32 %v1833, %v1707
  %v1835 = vadd.f32 %v1834, %v1708
  %v1836 = vadd.f32 %v1835, %v1709
  %v1837 = vadd.f32 %v1836, %v1710
  %v1838 = vadd.f32 %v1837, %v1711
  %v1839 = vadd.f32 %v1838, %v1712
  %v1840 = vadd.f32 %v1839, %v1713
  %v1841 = vadd.f32 %v1840, %v1714
  %v1842 = vrot.slane %v1841, 4
  %v1843 = vadd.f32 %v1841, %v1842
  %v1844 = vrot.slane %v1843, 2
  %v1845 = vadd.f32 %v1843, %v1844
  %v1846 = vrot.slane %v1845, 1
  %v1847 = vadd.f32 %v1845, %v1846
  %v1848 = vmul.f32 %v1847, 0.0009765625
  %v1849 = vsub.f32 %v1587, %v1848
  %v1850 = vsub.f32 %v1588, %v1848
  %v1851 = vsub.f32 %v1589, %v1848
  %v1852 = vsub.f32 %v1590, %v1848
  %v1853 = vsub.f32 %v1591, %v1848
  %v1854 = vsub.f32 %v1592, %v1848
  %v1855 = vsub.f32 %v1593, %v1848
  %v1856 = vsub.f32 %v1594, %v1848
  %v1857 = vsub.f32 %v1595, %v1848
  %v1858 = vsub.f32 %v1596, %v1848
  %v1859 = vsub.f32 %v1597, %v1848
  %v1860 = vsub.f32 %v1598, %v1848
  %v1861 = vsub.f32 %v1599, %v1848
  %v1862 = vsub.f32 %v1600, %v1848
  %v1863 = vsub.f32 %v1601, %v1848
  %v1864 = vsub.f32 %v1602, %v1848
  %v1865 = vsub.f32 %v1603, %v1848
  %v1866 = vsub.f32 %v1604, %v1848
  %v1867 = vsub.f32 %v1605, %v1848
  %v1868 = vsub.f32 %v1606, %v1848
  %v1869 = vsub.f32 %v1607, %v1848
  %v1870 = vsub.f32 %v1608, %v1848
  %v1871 = vsub.f32 %v1609, %v1848
  %v1872 = vsub.f32 %v1610, %v1848
  %v1873 = vsub.f32 %v1611, %v1848
  %v1874 = vsub.f32 %v1612, %v1848
  %v1875 = vsub.f32 %v1613, %v1848
  %v1876 = vsub.f32 %v1614, %v1848
  %v1877 = vsub.f32 %v1615, %v1848
  %v1878 = vsub.f32 %v1616, %v1848
  %v1879 = vsub.f32 %v1617, %v1848
  %v1880 = vsub.f32 %v1618, %v1848
  %v1881 = vsub.f32 %v1619, %v1848
  %v1882 = vsub.f32 %v1620, %v1848
  %v1883 = vsub.f32 %v1621, %v1848
  %v1884 = vsub.f32 %v1622, %v1848
  %v1885 = vsub.f32 %v1623, %v1848
  %v1886 = vsub.f32 %v1624, %v1848
  %v1887 = vsub.f32 %v1625, %v1848
  %v1888 = vsub.f32 %v1626, %v1848
  %v1889 = vsub.f32 %v1627, %v1848
  %v1890 = vsub.f32 %v1628, %v1848
  %v1891 = vsub.f32 %v1629, %v1848
  %v1892 = vsub.f32 %v1630, %v1848
  %v1893 = vsub.f32 %v1631, %v1848
  %v1894 = vsub.f32 %v1632, %v1848
  %v1895 = vsub.f32 %v1633, %v1848
  %v1896 = vsub.f32 %v1634, %v1848
  %v1897 = vsub.f32 %v1635, %v1848
  %v1898 = vsub.f32 %v1636, %v1848
  %v1899 = vsub.f32 %v1637, %v1848
  %v1900 = vsub.f32 %v1638, %v1848
  %v1901 = vsub.f32 %v1639, %v1848
  %v1902 = vsub.f32 %v1640, %v1848
  %v1903 = vsub.f32 %v1641, %v1848
  %v1904 = vsub.f32 %v1642, %v1848
  %v1905 = vsub.f32 %v1643, %v1848
  %v1906 = vsub.f32 %v1644, %v1848
  %v1907 = vsub.f32 %v1645, %v1848
  %v1908 = vsub.f32 %v1646, %v1848
  %v1909 = vsub.f32 %v1647, %v1848
  %v1910 = vsub.f32 %v1648, %v1848
  %v1911 = vsub.f32 %v1649, %v1848
  %v1912 = vsub.f32 %v1650, %v1848
  %v1913 = vsub.f32 %v1651, %v1848
  %v1914 = vsub.f32 %v1652, %v1848
  %v1915 = vsub.f32 %v1653, %v1848
  %v1916 = vsub.f32 %v1654, %v1848
  %v1917 = vsub.f32 %v1655, %v1848
  %v1918 = vsub.f32 %v1656, %v1848
  %v1919 = vsub.f32 %v1657, %v1848
  %v1920 = vsub.f32 %v1658, %v1848
  %v1921 = vsub.f32 %v1659, %v1848
  %v1922 = vsub.f32 %v1660, %v1848
  %v1923 = vsub.f32 %v1661, %v1848
  %v1924 = vsub.f32 %v1662, %v1848
  %v1925 = vsub.f32 %v1663, %v1848
  %v1926 = vsub.f32 %v1664, %v1848
  %v1927 = vsub.f32 %v1665, %v1848
  %v1928 = vsub.f32 %v1666, %v1848
  %v1929 = vsub.f32 %v1667, %v1848
  %v1930 = vsub.f32 %v1668, %v1848
  %v1931 = vsub.f32 %v1669, %v1848
  %v1932 = vsub.f32 %v1670, %v1848
  %v1933 = vsub.f32 %v1671, %v1848
  %v1934 = vsub.f32 %v1672, %v1848
  %v1935 = vsub.f32 %v1673, %v1848
  %v1936 = vsub.f32 %v1674, %v1848
  %v1937 = vsub.f32 %v1675, %v1848
  %v1938 = vsub.f32 %v1676, %v1848
  %v1939 = vsub.f32 %v1677, %v1848
  %v1940 = vsub.f32 %v1678, %v1848
  %v1941 = vsub.f32 %v1679, %v1848
  %v1942 = vsub.f32 %v1680, %v1848
  %v1943 = vsub.f32 %v1681, %v1848
  %v1944 = vsub.f32 %v1682, %v1848
  %v1945 = vsub.f32 %v1683, %v1848
  %v1946 = vsub.f32 %v1684, %v1848
  %v1947 = vsub.f32 %v1685, %v1848
  %v1948 = vsub.f32 %v1686, %v1848
  %v1949 = vsub.f32 %v1687, %v1848
  %v1950 = vsub.f32 %v1688, %v1848
  %v1951 = vsub.f32 %v1689, %v1848
  %v1952 = vsub.f32 %v1690, %v1848
  %v1953 = vsub.f32 %v1691, %v1848
  %v1954 = vsub.f32 %v1692, %v1848
  %v1955 = vsub.f32 %v1693, %v1848
  %v1956 = vsub.f32 %v1694, %v1848
  %v1957 = vsub.f32 %v1695, %v1848
  %v1958 = vsub.f32 %v1696, %v1848
  %v1959 = vsub.f32 %v1697, %v1848
  %v1960 = vsub.f32 %v1698, %v1848
  %v1961 = vsub.f32 %v1699, %v1848
  %v1962 = vsub.f32 %v1700, %v1848
  %v1963 = vsub.f32 %v1701, %v1848
  %v1964 = vsub.f32 %v1702, %v1848
  %v1965 = vsub.f32 %v1703, %v1848
  %v1966 = vsub.f32 %v1704, %v1848
  %v1967 = vsub.f32 %v1705, %v1848
  %v1968 = vsub.f32 %v1706, %v1848
  %v1969 = vsub.f32 %v1707, %v1848
  %v1970 = vsub.f32 %v1708, %v1848
  %v1971 = vsub.f32 %v1709, %v1848
  %v1972 = vsub.f32 %v1710, %v1848
  %v1973 = vsub.f32 %v1711, %v1848
  %v1974 = vsub.f32 %v1712, %v1848
  %v1975 = vsub.f32 %v1713, %v1848
  %v1976 = vsub.f32 %v1714, %v1848
  %v1977 = vmul.f32 %v1849, %v1849
  %v1978 = vmul.f32 %v1850, %v1850
  %v1979 = vmul.f32 %v1851, %v1851
  %v1980 = vmul.f32 %v1852, %v1852
  %v1981 = vmul.f32 %v1853, %v1853
  %v1982 = vmul.f32 %v1854, %v1854
  %v1983 = vmul.f32 %v1855, %v1855
  %v1984 = vmul.f32 %v1856, %v1856
  %v1985 = vmul.f32 %v1857, %v1857
  %v1986 = vmul.f32 %v1858, %v1858
  %v1987 = vmul.f32 %v1859, %v1859
  %v1988 = vmul.f32 %v1860, %v1860
  %v1989 = vmul.f32 %v1861, %v1861
  %v1990 = vmul.f32 %v1862, %v1862
  %v1991 = vmul.f32 %v1863, %v1863
  %v1992 = vmul.f32 %v1864, %v1864
  %v1993 = vmul.f32 %v1865, %v1865
  %v1994 = vmul.f32 %v1866, %v1866
  %v1995 = vmul.f32 %v1867, %v1867
  %v1996 = vmul.f32 %v1868, %v1868
  %v1997 = vmul.f32 %v1869, %v1869
  %v1998 = vmul.f32 %v1870, %v1870
  %v1999 = vmul.f32 %v1871, %v1871
  %v2000 = vmul.f32 %v1872, %v1872
  %v2001 = vmul.f32 %v1873, %v1873
  %v2002 = vmul.f32 %v1874, %v1874
  %v2003 = vmul.f32 %v1875, %v1875
  %v2004 = vmul.f32 %v1876, %v1876
  %v2005 = vmul.f32 %v1877, %v1877
  %v2006 = vmul.f32 %v1878, %v1878
  %v2007 = vmul.f32 %v1879, %v1879
  %v2008 = vmul.f32 %v1880, %v1880
  %v2009 = vmul.f32 %v1881, %v1881
  %v2010 = vmul.f32 %v1882, %v1882
  %v2011 = vmul.f32 %v1883, %v1883
  %v2012 = vmul.f32 %v1884, %v1884
  %v2013 = vmul.f32 %v1885, %v1885
  %v2014 = vmul.f32 %v1886, %v1886
  %v2015 = vmul.f32 %v1887, %v1887
  %v2016 = vmul.f32 %v1888, %v1888
  %v2017 = vmul.f32 %v1889, %v1889
  %v2018 = vmul.f32 %v1890, %v1890
  %v2019 = vmul.f32 %v1891, %v1891
  %v2020 = vmul.f32 %v1892, %v1892
  %v2021 = vmul.f32 %v1893, %v1893
  %v2022 = vmul.f32 %v1894, %v1894
  %v2023 = vmul.f32 %v1895, %v1895
  %v2024 = vmul.f32 %v1896, %v1896
  %v2025 = vmul.f32 %v1897, %v1897
  %v2026 = vmul.f32 %v1898, %v1898
  %v2027 = vmul.f32 %v1899, %v1899
  %v2028 = vmul.f32 %v1900, %v1900
  %v2029 = vmul.f32 %v1901, %v1901
  %v2030 = vmul.f32 %v1902, %v1902
  %v2031 = vmul.f32 %v1903, %v1903
  %v2032 = vmul.f32 %v1904, %v1904
  %v2033 = vmul.f32 %v1905, %v1905
  %v2034 = vmul.f32 %v1906, %v1906
  %v2035 = vmul.f32 %v1907, %v1907
  %v2036 = vmul.f32 %v1908, %v1908
  %v2037 = vmul.f32 %v1909, %v1909
  %v2038 = vmul.f32 %v1910, %v1910
  %v2039 = vmul.f32 %v1911, %v1911
  %v2040 = vmul.f32 %v1912, %v1912
  %v2041 = vmul.f32 %v1913, %v1913
  %v2042 = vmul.f32 %v1914, %v1914
  %v2043 = vmul.f32 %v1915, %v1915
  %v2044 = vmul.f32 %v1916, %v1916
  %v2045 = vmul.f32 %v1917, %v1917
  %v2046 = vmul.f32 %v1918, %v1918
  %v2047 = vmul.f32 %v1919, %v1919
  %v2048 = vmul.f32 %v1920, %v1920
  %v2049 = vmul.f32 %v1921, %v1921
  %v2050 = vmul.f32 %v1922, %v1922
  %v2051 = vmul.f32 %v1923, %v1923
  %v2052 = vmul.f32 %v1924, %v1924
  %v2053 = vmul.f32 %v1925, %v1925
  %v2054 = vmul.f32 %v1926, %v1926
  %v2055 = vmul.f32 %v1927, %v1927
  %v2056 = vmul.f32 %v1928, %v1928
  %v2057 = vmul.f32 %v1929, %v1929
  %v2058 = vmul.f32 %v1930, %v1930
  %v2059 = vmul.f32 %v1931, %v1931
  %v2060 = vmul.f32 %v1932, %v1932
  %v2061 = vmul.f32 %v1933, %v1933
  %v2062 = vmul.f32 %v1934, %v1934
  %v2063 = vmul.f32 %v1935, %v1935
  %v2064 = vmul.f32 %v1936, %v1936
  %v2065 = vmul.f32 %v1937, %v1937
  %v2066 = vmul.f32 %v1938, %v1938
  %v2067 = vmul.f32 %v1939, %v1939
  %v2068 = vmul.f32 %v1940, %v1940
  %v2069 = vmul.f32 %v1941, %v1941
  %v2070 = vmul.f32 %v1942, %v1942
  %v2071 = vmul.f32 %v1943, %v1943
  %v2072 = vmul.f32 %v1944, %v1944
  %v2073 = vmul.f32 %v1945, %v1945
  %v2074 = vmul.f32 %v1946, %v1946
  %v2075 = vmul.f32 %v1947, %v1947
  %v2076 = vmul.f32 %v1948, %v1948
  %v2077 = vmul.f32 %v1949, %v1949
  %v2078 = vmul.f32 %v1950, %v1950
  %v2079 = vmul.f32 %v1951, %v1951
  %v2080 = vmul.f32 %v1952, %v1952
  %v2081 = vmul.f32 %v1953, %v1953
  %v2082 = vmul.f32 %v1954, %v1954
  %v2083 = vmul.f32 %v1955, %v1955
  %v2084 = vmul.f32 %v1956, %v1956
  %v2085 = vmul.f32 %v1957, %v1957
  %v2086 = vmul.f32 %v1958, %v1958
  %v2087 = vmul.f32 %v1959, %v1959
  %v2088 = vmul.f32 %v1960, %v1960
  %v2089 = vmul.f32 %v1961, %v1961
  %v2090 = vmul.f32 %v1962, %v1962
  %v2091 = vmul.f32 %v1963, %v1963
  %v2092 = vmul.f32 %v1964, %v1964
  %v2093 = vmul.f32 %v1965, %v1965
  %v2094 = vmul.f32 %v1966, %v1966
  %v2095 = vmul.f32 %v1967, %v1967
  %v2096 = vmul.f32 %v1968, %v1968
  %v2097 = vmul.f32 %v1969, %v1969
  %v2098 = vmul.f32 %v1970, %v1970
  %v2099 = vmul.f32 %v1971, %v1971
  %v2100 = vmul.f32 %v1972, %v1972
  %v2101 = vmul.f32 %v1973, %v1973
  %v2102 = vmul.f32 %v1974, %v1974
  %v2103 = vmul.f32 %v1975, %v1975
  %v2104 = vmul.f32 %v1976, %v1976
  %v2105 = vadd.f32 %v1977, %v1978
  %v2106 = vadd.f32 %v2105, %v1979
  %v2107 = vadd.f32 %v2106, %v1980
  %v2108 = vadd.f32 %v2107, %v1981
  %v2109 = vadd.f32 %v2108, %v1982
  %v2110 = vadd.f32 %v2109, %v1983
  %v2111 = vadd.f32 %v2110, %v1984
  %v2112 = vadd.f32 %v2111, %v1985
  %v2113 = vadd.f32 %v2112, %v1986
  %v2114 = vadd.f32 %v2113, %v1987
  %v2115 = vadd.f32 %v2114, %v1988
  %v2116 = vadd.f32 %v2115, %v1989
  %v2117 = vadd.f32 %v2116, %v1990
  %v2118 = vadd.f32 %v2117, %v1991
  %v2119 = vadd.f32 %v2118, %v1992
  %v2120 = vadd.f32 %v2119, %v1993
  %v2121 = vadd.f32 %v2120, %v1994
  %v2122 = vadd.f32 %v2121, %v1995
  %v2123 = vadd.f32 %v2122, %v1996
  %v2124 = vadd.f32 %v2123, %v1997
  %v2125 = vadd.f32 %v2124, %v1998
  %v2126 = vadd.f32 %v2125, %v1999
  %v2127 = vadd.f32 %v2126, %v2000
  %v2128 = vadd.f32 %v2127, %v2001
  %v2129 = vadd.f32 %v2128, %v2002
  %v2130 = vadd.f32 %v2129, %v2003
  %v2131 = vadd.f32 %v2130, %v2004
  %v2132 = vadd.f32 %v2131, %v2005
  %v2133 = vadd.f32 %v2132, %v2006
  %v2134 = vadd.f32 %v2133, %v2007
  %v2135 = vadd.f32 %v2134, %v2008
  %v2136 = vadd.f32 %v2135, %v2009
  %v2137 = vadd.f32 %v2136, %v2010
  %v2138 = vadd.f32 %v2137, %v2011
  %v2139 = vadd.f32 %v2138, %v2012
  %v2140 = vadd.f32 %v2139, %v2013
  %v2141 = vadd.f32 %v2140, %v2014
  %v2142 = vadd.f32 %v2141, %v2015
  %v2143 = vadd.f32 %v2142, %v2016
  %v2144 = vadd.f32 %v2143, %v2017
  %v2145 = vadd.f32 %v2144, %v2018
  %v2146 = vadd.f32 %v2145, %v2019
  %v2147 = vadd.f32 %v2146, %v2020
  %v2148 = vadd.f32 %v2147, %v2021
  %v2149 = vadd.f32 %v2148, %v2022
  %v2150 = vadd.f32 %v2149, %v2023
  %v2151 = vadd.f32 %v2150, %v2024
  %v2152 = vadd.f32 %v2151, %v2025
  %v2153 = vadd.f32 %v2152, %v2026
  %v2154 = vadd.f32 %v2153, %v2027
  %v2155 = vadd.f32 %v2154, %v2028
  %v2156 = vadd.f32 %v2155, %v2029
  %v2157 = vadd.f32 %v2156, %v2030
  %v2158 = vadd.f32 %v2157, %v2031
  %v2159 = vadd.f32 %v2158, %v2032
  %v2160 = vadd.f32 %v2159, %v2033
  %v2161 = vadd.f32 %v2160, %v2034
  %v2162 = vadd.f32 %v2161, %v2035
  %v2163 = vadd.f32 %v2162, %v2036
  %v2164 = vadd.f32 %v2163, %v2037
  %v2165 = vadd.f32 %v2164, %v2038
  %v2166 = vadd.f32 %v2165, %v2039
  %v2167 = vadd.f32 %v2166, %v2040
  %v2168 = vadd.f32 %v2167, %v2041
  %v2169 = vadd.f32 %v2168, %v2042
  %v2170 = vadd.f32 %v2169, %v2043
  %v2171 = vadd.f32 %v2170, %v2044
  %v2172 = vadd.f32 %v2171, %v2045
  %v2173 = vadd.f32 %v2172, %v2046
  %v2174 = vadd.f32 %v2173, %v2047
  %v2175 = vadd.f32 %v2174, %v2048
  %v2176 = vadd.f32 %v2175, %v2049
  %v2177 = vadd.f32 %v2176, %v2050
  %v2178 = vadd.f32 %v2177, %v2051
  %v2179 = vadd.f32 %v2178, %v2052
  %v2180 = vadd.f32 %v2179, %v2053
  %v2181 = vadd.f32 %v2180, %v2054
  %v2182 = vadd.f32 %v2181, %v2055
  %v2183 = vadd.f32 %v2182, %v2056
  %v2184 = vadd.f32 %v2183, %v2057
  %v2185 = vadd.f32 %v2184, %v2058
  %v2186 = vadd.f32 %v2185, %v2059
  %v2187 = vadd.f32 %v2186, %v2060
  %v2188 = vadd.f32 %v2187, %v2061
  %v2189 = vadd.f32 %v2188, %v2062
  %v2190 = vadd.f32 %v2189, %v2063
  %v2191 = vadd.f32 %v2190, %v2064
  %v2192 = vadd.f32 %v2191, %v2065
  %v2193 = vadd.f32 %v2192, %v2066
  %v2194 = vadd.f32 %v2193, %v2067
  %v2195 = vadd.f32 %v2194, %v2068
  %v2196 = vadd.f32 %v2195, %v2069
  %v2197 = vadd.f32 %v2196, %v2070
  %v2198 = vadd.f32 %v2197, %v2071
  %v2199 = vadd.f32 %v2198, %v2072
  %v2200 = vadd.f32 %v2199, %v2073
  %v2201 = vadd.f32 %v2200, %v2074
  %v2202 = vadd.f32 %v2201, %v2075
  %v2203 = vadd.f32 %v2202, %v2076
  %v2204 = vadd.f32 %v2203, %v2077
  %v2205 = vadd.f32 %v2204, %v2078
  %v2206 = vadd.f32 %v2205, %v2079
  %v2207 = vadd.f32 %v2206, %v2080
  %v2208 = vadd.f32 %v2207, %v2081
  %v2209 = vadd.f32 %v2208, %v2082
  %v2210 = vadd.f32 %v2209, %v2083
  %v2211 = vadd.f32 %v2210, %v2084
  %v2212 = vadd.f32 %v2211, %v2085
  %v2213 = vadd.f32 %v2212, %v2086
  %v2214 = vadd.f32 %v2213, %v2087
  %v2215 = vadd.f32 %v2214, %v2088
  %v2216 = vadd.f32 %v2215, %v2089
  %v2217 = vadd.f32 %v2216, %v2090
  %v2218 = vadd.f32 %v2217, %v2091
  %v2219 = vadd.f32 %v2218, %v2092
  %v2220 = vadd.f32 %v2219, %v2093
  %v2221 = vadd.f32 %v2220, %v2094
  %v2222 = vadd.f32 %v2221, %v2095
  %v2223 = vadd.f32 %v2222, %v2096
  %v2224 = vadd.f32 %v2223, %v2097
  %v2225 = vadd.f32 %v2224, %v2098
  %v2226 = vadd.f32 %v2225, %v2099
  %v2227 = vadd.f32 %v2226, %v2100
  %v2228 = vadd.f32 %v2227, %v2101
  %v2229 = vadd.f32 %v2228, %v2102
  %v2230 = vadd.f32 %v2229, %v2103
  %v2231 = vadd.f32 %v2230, %v2104
  %v2232 = vrot.slane %v2231, 4
  %v2233 = vadd.f32 %v2231, %v2232
  %v2234 = vrot.slane %v2233, 2
  %v2235 = vadd.f32 %v2233, %v2234
  %v2236 = vrot.slane %v2235, 1
  %v2237 = vadd.f32 %v2235, %v2236
  %v2238 = vmul.f32 %v2237, 0.0009765625
  %v2239 = vld [vmem:[%s2] sm:$0x1]
  %v2240 = vadd.f32 %v2238, 1e-05
  %v2241 = vrsqrt.pop %v2240
  %v2242 = vmul.f32 %v2239, %v2241
  %v2244 = vlaneseq
  %v2245 = vshrl.u32 %v2244, 7
  %v2246 = vsub.s32 0, %v2245
  %v2247 = vrot.slane %v2242, %v2246
  %v2249 = vmul.f32 %v1849, %v2247
  %v2250 = vmul.f32 %v1850, %v2247
  %v2251 = vmul.f32 %v1851, %v2247
  %v2252 = vmul.f32 %v1852, %v2247
  %v2253 = vmul.f32 %v1853, %v2247
  %v2254 = vmul.f32 %v1854, %v2247
  %v2255 = vmul.f32 %v1855, %v2247
  %v2256 = vmul.f32 %v1856, %v2247
  %v2257 = vmul.f32 %v1857, %v2247
  %v2258 = vmul.f32 %v1858, %v2247
  %v2259 = vmul.f32 %v1859, %v2247
  %v2260 = vmul.f32 %v1860, %v2247
  %v2261 = vmul.f32 %v1861, %v2247
  %v2262 = vmul.f32 %v1862, %v2247
  %v2263 = vmul.f32 %v1863, %v2247
  %v2264 = vmul.f32 %v1864, %v2247
  %v2265 = vmul.f32 %v1865, %v2247
  %v2266 = vmul.f32 %v1866, %v2247
  %v2267 = vmul.f32 %v1867, %v2247
  %v2268 = vmul.f32 %v1868, %v2247
  %v2269 = vmul.f32 %v1869, %v2247
  %v2270 = vmul.f32 %v1870, %v2247
  %v2271 = vmul.f32 %v1871, %v2247
  %v2272 = vmul.f32 %v1872, %v2247
  %v2273 = vmul.f32 %v1873, %v2247
  %v2274 = vmul.f32 %v1874, %v2247
  %v2275 = vmul.f32 %v1875, %v2247
  %v2276 = vmul.f32 %v1876, %v2247
  %v2277 = vmul.f32 %v1877, %v2247
  %v2278 = vmul.f32 %v1878, %v2247
  %v2279 = vmul.f32 %v1879, %v2247
  %v2280 = vmul.f32 %v1880, %v2247
  %v2281 = vmul.f32 %v1881, %v2247
  %v2282 = vmul.f32 %v1882, %v2247
  %v2283 = vmul.f32 %v1883, %v2247
  %v2284 = vmul.f32 %v1884, %v2247
  %v2285 = vmul.f32 %v1885, %v2247
  %v2286 = vmul.f32 %v1886, %v2247
  %v2287 = vmul.f32 %v1887, %v2247
  %v2288 = vmul.f32 %v1888, %v2247
  %v2289 = vmul.f32 %v1889, %v2247
  %v2290 = vmul.f32 %v1890, %v2247
  %v2291 = vmul.f32 %v1891, %v2247
  %v2292 = vmul.f32 %v1892, %v2247
  %v2293 = vmul.f32 %v1893, %v2247
  %v2294 = vmul.f32 %v1894, %v2247
  %v2295 = vmul.f32 %v1895, %v2247
  %v2296 = vmul.f32 %v1896, %v2247
  %v2297 = vmul.f32 %v1897, %v2247
  %v2298 = vmul.f32 %v1898, %v2247
  %v2299 = vmul.f32 %v1899, %v2247
  %v2300 = vmul.f32 %v1900, %v2247
  %v2301 = vmul.f32 %v1901, %v2247
  %v2302 = vmul.f32 %v1902, %v2247
  %v2303 = vmul.f32 %v1903, %v2247
  %v2304 = vmul.f32 %v1904, %v2247
  %v2305 = vmul.f32 %v1905, %v2247
  %v2306 = vmul.f32 %v1906, %v2247
  %v2307 = vmul.f32 %v1907, %v2247
  %v2308 = vmul.f32 %v1908, %v2247
  %v2309 = vmul.f32 %v1909, %v2247
  %v2310 = vmul.f32 %v1910, %v2247
  %v2311 = vmul.f32 %v1911, %v2247
  %v2312 = vmul.f32 %v1912, %v2247
  %v2313 = vmul.f32 %v1913, %v2247
  %v2314 = vmul.f32 %v1914, %v2247
  %v2315 = vmul.f32 %v1915, %v2247
  %v2316 = vmul.f32 %v1916, %v2247
  %v2317 = vmul.f32 %v1917, %v2247
  %v2318 = vmul.f32 %v1918, %v2247
  %v2319 = vmul.f32 %v1919, %v2247
  %v2320 = vmul.f32 %v1920, %v2247
  %v2321 = vmul.f32 %v1921, %v2247
  %v2322 = vmul.f32 %v1922, %v2247
  %v2323 = vmul.f32 %v1923, %v2247
  %v2324 = vmul.f32 %v1924, %v2247
  %v2325 = vmul.f32 %v1925, %v2247
  %v2326 = vmul.f32 %v1926, %v2247
  %v2327 = vmul.f32 %v1927, %v2247
  %v2328 = vmul.f32 %v1928, %v2247
  %v2329 = vmul.f32 %v1929, %v2247
  %v2330 = vmul.f32 %v1930, %v2247
  %v2331 = vmul.f32 %v1931, %v2247
  %v2332 = vmul.f32 %v1932, %v2247
  %v2333 = vmul.f32 %v1933, %v2247
  %v2334 = vmul.f32 %v1934, %v2247
  %v2335 = vmul.f32 %v1935, %v2247
  %v2336 = vmul.f32 %v1936, %v2247
  %v2337 = vmul.f32 %v1937, %v2247
  %v2338 = vmul.f32 %v1938, %v2247
  %v2339 = vmul.f32 %v1939, %v2247
  %v2340 = vmul.f32 %v1940, %v2247
  %v2341 = vmul.f32 %v1941, %v2247
  %v2342 = vmul.f32 %v1942, %v2247
  %v2343 = vmul.f32 %v1943, %v2247
  %v2344 = vmul.f32 %v1944, %v2247
  %v2345 = vmul.f32 %v1945, %v2247
  %v2346 = vmul.f32 %v1946, %v2247
  %v2347 = vmul.f32 %v1947, %v2247
  %v2348 = vmul.f32 %v1948, %v2247
  %v2349 = vmul.f32 %v1949, %v2247
  %v2350 = vmul.f32 %v1950, %v2247
  %v2351 = vmul.f32 %v1951, %v2247
  %v2352 = vmul.f32 %v1952, %v2247
  %v2353 = vmul.f32 %v1953, %v2247
  %v2354 = vmul.f32 %v1954, %v2247
  %v2355 = vmul.f32 %v1955, %v2247
  %v2356 = vmul.f32 %v1956, %v2247
  %v2357 = vmul.f32 %v1957, %v2247
  %v2358 = vmul.f32 %v1958, %v2247
  %v2359 = vmul.f32 %v1959, %v2247
  %v2360 = vmul.f32 %v1960, %v2247
  %v2361 = vmul.f32 %v1961, %v2247
  %v2362 = vmul.f32 %v1962, %v2247
  %v2363 = vmul.f32 %v1963, %v2247
  %v2364 = vmul.f32 %v1964, %v2247
  %v2365 = vmul.f32 %v1965, %v2247
  %v2366 = vmul.f32 %v1966, %v2247
  %v2367 = vmul.f32 %v1967, %v2247
  %v2368 = vmul.f32 %v1968, %v2247
  %v2369 = vmul.f32 %v1969, %v2247
  %v2370 = vmul.f32 %v1970, %v2247
  %v2371 = vmul.f32 %v1971, %v2247
  %v2372 = vmul.f32 %v1972, %v2247
  %v2373 = vmul.f32 %v1973, %v2247
  %v2374 = vmul.f32 %v1974, %v2247
  %v2375 = vmul.f32 %v1975, %v2247
  %v2376 = vmul.f32 %v1976, %v2247
  %v2377 = vld [vmem:[%s3] sm:$0x1]
  %v2379 = vlaneseq
  %v2380 = vshrl.u32 %v2379, 7
  %v2381 = vsub.s32 0, %v2380
  %v2382 = vrot.slane %v2377, %v2381
  %v2384 = vadd.f32 %v2249, %v2382
  %v2385 = vadd.f32 %v2250, %v2382
  %v2386 = vadd.f32 %v2251, %v2382
  %v2387 = vadd.f32 %v2252, %v2382
  %v2388 = vadd.f32 %v2253, %v2382
  %v2389 = vadd.f32 %v2254, %v2382
  %v2390 = vadd.f32 %v2255, %v2382
  %v2391 = vadd.f32 %v2256, %v2382
  %v2392 = vadd.f32 %v2257, %v2382
  %v2393 = vadd.f32 %v2258, %v2382
  %v2394 = vadd.f32 %v2259, %v2382
  %v2395 = vadd.f32 %v2260, %v2382
  %v2396 = vadd.f32 %v2261, %v2382
  %v2397 = vadd.f32 %v2262, %v2382
  %v2398 = vadd.f32 %v2263, %v2382
  %v2399 = vadd.f32 %v2264, %v2382
  %v2400 = vadd.f32 %v2265, %v2382
  %v2401 = vadd.f32 %v2266, %v2382
  %v2402 = vadd.f32 %v2267, %v2382
  %v2403 = vadd.f32 %v2268, %v2382
  %v2404 = vadd.f32 %v2269, %v2382
  %v2405 = vadd.f32 %v2270, %v2382
  %v2406 = vadd.f32 %v2271, %v2382
  %v2407 = vadd.f32 %v2272, %v2382
  %v2408 = vadd.f32 %v2273, %v2382
  %v2409 = vadd.f32 %v2274, %v2382
  %v2410 = vadd.f32 %v2275, %v2382
  %v2411 = vadd.f32 %v2276, %v2382
  %v2412 = vadd.f32 %v2277, %v2382
  %v2413 = vadd.f32 %v2278, %v2382
  %v2414 = vadd.f32 %v2279, %v2382
  %v2415 = vadd.f32 %v2280, %v2382
  %v2416 = vadd.f32 %v2281, %v2382
  %v2417 = vadd.f32 %v2282, %v2382
  %v2418 = vadd.f32 %v2283, %v2382
  %v2419 = vadd.f32 %v2284, %v2382
  %v2420 = vadd.f32 %v2285, %v2382
  %v2421 = vadd.f32 %v2286, %v2382
  %v2422 = vadd.f32 %v2287, %v2382
  %v2423 = vadd.f32 %v2288, %v2382
  %v2424 = vadd.f32 %v2289, %v2382
  %v2425 = vadd.f32 %v2290, %v2382
  %v2426 = vadd.f32 %v2291, %v2382
  %v2427 = vadd.f32 %v2292, %v2382
  %v2428 = vadd.f32 %v2293, %v2382
  %v2429 = vadd.f32 %v2294, %v2382
  %v2430 = vadd.f32 %v2295, %v2382
  %v2431 = vadd.f32 %v2296, %v2382
  %v2432 = vadd.f32 %v2297, %v2382
  %v2433 = vadd.f32 %v2298, %v2382
  %v2434 = vadd.f32 %v2299, %v2382
  %v2435 = vadd.f32 %v2300, %v2382
  %v2436 = vadd.f32 %v2301, %v2382
  %v2437 = vadd.f32 %v2302, %v2382
  %v2438 = vadd.f32 %v2303, %v2382
  %v2439 = vadd.f32 %v2304, %v2382
  %v2440 = vadd.f32 %v2305, %v2382
  %v2441 = vadd.f32 %v2306, %v2382
  %v2442 = vadd.f32 %v2307, %v2382
  %v2443 = vadd.f32 %v2308, %v2382
  %v2444 = vadd.f32 %v2309, %v2382
  %v2445 = vadd.f32 %v2310, %v2382
  %v2446 = vadd.f32 %v2311, %v2382
  %v2447 = vadd.f32 %v2312, %v2382
  %v2448 = vadd.f32 %v2313, %v2382
  %v2449 = vadd.f32 %v2314, %v2382
  %v2450 = vadd.f32 %v2315, %v2382
  %v2451 = vadd.f32 %v2316, %v2382
  %v2452 = vadd.f32 %v2317, %v2382
  %v2453 = vadd.f32 %v2318, %v2382
  %v2454 = vadd.f32 %v2319, %v2382
  %v2455 = vadd.f32 %v2320, %v2382
  %v2456 = vadd.f32 %v2321, %v2382
  %v2457 = vadd.f32 %v2322, %v2382
  %v2458 = vadd.f32 %v2323, %v2382
  %v2459 = vadd.f32 %v2324, %v2382
  %v2460 = vadd.f32 %v2325, %v2382
  %v2461 = vadd.f32 %v2326, %v2382
  %v2462 = vadd.f32 %v2327, %v2382
  %v2463 = vadd.f32 %v2328, %v2382
  %v2464 = vadd.f32 %v2329, %v2382
  %v2465 = vadd.f32 %v2330, %v2382
  %v2466 = vadd.f32 %v2331, %v2382
  %v2467 = vadd.f32 %v2332, %v2382
  %v2468 = vadd.f32 %v2333, %v2382
  %v2469 = vadd.f32 %v2334, %v2382
  %v2470 = vadd.f32 %v2335, %v2382
  %v2471 = vadd.f32 %v2336, %v2382
  %v2472 = vadd.f32 %v2337, %v2382
  %v2473 = vadd.f32 %v2338, %v2382
  %v2474 = vadd.f32 %v2339, %v2382
  %v2475 = vadd.f32 %v2340, %v2382
  %v2476 = vadd.f32 %v2341, %v2382
  %v2477 = vadd.f32 %v2342, %v2382
  %v2478 = vadd.f32 %v2343, %v2382
  %v2479 = vadd.f32 %v2344, %v2382
  %v2480 = vadd.f32 %v2345, %v2382
  %v2481 = vadd.f32 %v2346, %v2382
  %v2482 = vadd.f32 %v2347, %v2382
  %v2483 = vadd.f32 %v2348, %v2382
  %v2484 = vadd.f32 %v2349, %v2382
  %v2485 = vadd.f32 %v2350, %v2382
  %v2486 = vadd.f32 %v2351, %v2382
  %v2487 = vadd.f32 %v2352, %v2382
  %v2488 = vadd.f32 %v2353, %v2382
  %v2489 = vadd.f32 %v2354, %v2382
  %v2490 = vadd.f32 %v2355, %v2382
  %v2491 = vadd.f32 %v2356, %v2382
  %v2492 = vadd.f32 %v2357, %v2382
  %v2493 = vadd.f32 %v2358, %v2382
  %v2494 = vadd.f32 %v2359, %v2382
  %v2495 = vadd.f32 %v2360, %v2382
  %v2496 = vadd.f32 %v2361, %v2382
  %v2497 = vadd.f32 %v2362, %v2382
  %v2498 = vadd.f32 %v2363, %v2382
  %v2499 = vadd.f32 %v2364, %v2382
  %v2500 = vadd.f32 %v2365, %v2382
  %v2501 = vadd.f32 %v2366, %v2382
  %v2502 = vadd.f32 %v2367, %v2382
  %v2503 = vadd.f32 %v2368, %v2382
  %v2504 = vadd.f32 %v2369, %v2382
  %v2505 = vadd.f32 %v2370, %v2382
  %v2506 = vadd.f32 %v2371, %v2382
  %v2507 = vadd.f32 %v2372, %v2382
  %v2508 = vadd.f32 %v2373, %v2382
  %v2509 = vadd.f32 %v2374, %v2382
  %v2510 = vadd.f32 %v2375, %v2382
  %v2511 = vadd.f32 %v2376, %v2382
  %vm2512 = vcmp.ge.f32.partialorder %v2384, 0.0
  %vm2513 = vcmp.ge.f32.partialorder %v2385, 0.0
  %vm2514 = vcmp.ge.f32.partialorder %v2386, 0.0
  %vm2515 = vcmp.ge.f32.partialorder %v2387, 0.0
  %vm2516 = vcmp.ge.f32.partialorder %v2388, 0.0
  %vm2517 = vcmp.ge.f32.partialorder %v2389, 0.0
  %vm2518 = vcmp.ge.f32.partialorder %v2390, 0.0
  %vm2519 = vcmp.ge.f32.partialorder %v2391, 0.0
  %vm2520 = vcmp.ge.f32.partialorder %v2392, 0.0
  %vm2521 = vcmp.ge.f32.partialorder %v2393, 0.0
  %vm2522 = vcmp.ge.f32.partialorder %v2394, 0.0
  %vm2523 = vcmp.ge.f32.partialorder %v2395, 0.0
  %vm2524 = vcmp.ge.f32.partialorder %v2396, 0.0
  %vm2525 = vcmp.ge.f32.partialorder %v2397, 0.0
  %vm2526 = vcmp.ge.f32.partialorder %v2398, 0.0
  %vm2527 = vcmp.ge.f32.partialorder %v2399, 0.0
  %vm2528 = vcmp.ge.f32.partialorder %v2400, 0.0
  %vm2529 = vcmp.ge.f32.partialorder %v2401, 0.0
  %vm2530 = vcmp.ge.f32.partialorder %v2402, 0.0
  %vm2531 = vcmp.ge.f32.partialorder %v2403, 0.0
  %vm2532 = vcmp.ge.f32.partialorder %v2404, 0.0
  %vm2533 = vcmp.ge.f32.partialorder %v2405, 0.0
  %vm2534 = vcmp.ge.f32.partialorder %v2406, 0.0
  %vm2535 = vcmp.ge.f32.partialorder %v2407, 0.0
  %vm2536 = vcmp.ge.f32.partialorder %v2408, 0.0
  %vm2537 = vcmp.ge.f32.partialorder %v2409, 0.0
  %vm2538 = vcmp.ge.f32.partialorder %v2410, 0.0
  %vm2539 = vcmp.ge.f32.partialorder %v2411, 0.0
  %vm2540 = vcmp.ge.f32.partialorder %v2412, 0.0
  %vm2541 = vcmp.ge.f32.partialorder %v2413, 0.0
  %vm2542 = vcmp.ge.f32.partialorder %v2414, 0.0
  %vm2543 = vcmp.ge.f32.partialorder %v2415, 0.0
  %vm2544 = vcmp.ge.f32.partialorder %v2416, 0.0
  %vm2545 = vcmp.ge.f32.partialorder %v2417, 0.0
  %vm2546 = vcmp.ge.f32.partialorder %v2418, 0.0
  %vm2547 = vcmp.ge.f32.partialorder %v2419, 0.0
  %vm2548 = vcmp.ge.f32.partialorder %v2420, 0.0
  %vm2549 = vcmp.ge.f32.partialorder %v2421, 0.0
  %vm2550 = vcmp.ge.f32.partialorder %v2422, 0.0
  %vm2551 = vcmp.ge.f32.partialorder %v2423, 0.0
  %vm2552 = vcmp.ge.f32.partialorder %v2424, 0.0
  %vm2553 = vcmp.ge.f32.partialorder %v2425, 0.0
  %vm2554 = vcmp.ge.f32.partialorder %v2426, 0.0
  %vm2555 = vcmp.ge.f32.partialorder %v2427, 0.0
  %vm2556 = vcmp.ge.f32.partialorder %v2428, 0.0
  %vm2557 = vcmp.ge.f32.partialorder %v2429, 0.0
  %vm2558 = vcmp.ge.f32.partialorder %v2430, 0.0
  %vm2559 = vcmp.ge.f32.partialorder %v2431, 0.0
  %vm2560 = vcmp.ge.f32.partialorder %v2432, 0.0
  %vm2561 = vcmp.ge.f32.partialorder %v2433, 0.0
  %vm2562 = vcmp.ge.f32.partialorder %v2434, 0.0
  %vm2563 = vcmp.ge.f32.partialorder %v2435, 0.0
  %vm2564 = vcmp.ge.f32.partialorder %v2436, 0.0
  %vm2565 = vcmp.ge.f32.partialorder %v2437, 0.0
  %vm2566 = vcmp.ge.f32.partialorder %v2438, 0.0
  %vm2567 = vcmp.ge.f32.partialorder %v2439, 0.0
  %vm2568 = vcmp.ge.f32.partialorder %v2440, 0.0
  %vm2569 = vcmp.ge.f32.partialorder %v2441, 0.0
  %vm2570 = vcmp.ge.f32.partialorder %v2442, 0.0
  %vm2571 = vcmp.ge.f32.partialorder %v2443, 0.0
  %vm2572 = vcmp.ge.f32.partialorder %v2444, 0.0
  %vm2573 = vcmp.ge.f32.partialorder %v2445, 0.0
  %vm2574 = vcmp.ge.f32.partialorder %v2446, 0.0
  %vm2575 = vcmp.ge.f32.partialorder %v2447, 0.0
  %vm2576 = vcmp.ge.f32.partialorder %v2448, 0.0
  %vm2577 = vcmp.ge.f32.partialorder %v2449, 0.0
  %vm2578 = vcmp.ge.f32.partialorder %v2450, 0.0
  %vm2579 = vcmp.ge.f32.partialorder %v2451, 0.0
  %vm2580 = vcmp.ge.f32.partialorder %v2452, 0.0
  %vm2581 = vcmp.ge.f32.partialorder %v2453, 0.0
  %vm2582 = vcmp.ge.f32.partialorder %v2454, 0.0
  %vm2583 = vcmp.ge.f32.partialorder %v2455, 0.0
  %vm2584 = vcmp.ge.f32.partialorder %v2456, 0.0
  %vm2585 = vcmp.ge.f32.partialorder %v2457, 0.0
  %vm2586 = vcmp.ge.f32.partialorder %v2458, 0.0
  %vm2587 = vcmp.ge.f32.partialorder %v2459, 0.0
  %vm2588 = vcmp.ge.f32.partialorder %v2460, 0.0
  %vm2589 = vcmp.ge.f32.partialorder %v2461, 0.0
  %vm2590 = vcmp.ge.f32.partialorder %v2462, 0.0
  %vm2591 = vcmp.ge.f32.partialorder %v2463, 0.0
  %vm2592 = vcmp.ge.f32.partialorder %v2464, 0.0
  %vm2593 = vcmp.ge.f32.partialorder %v2465, 0.0
  %vm2594 = vcmp.ge.f32.partialorder %v2466, 0.0
  %vm2595 = vcmp.ge.f32.partialorder %v2467, 0.0
  %vm2596 = vcmp.ge.f32.partialorder %v2468, 0.0
  %vm2597 = vcmp.ge.f32.partialorder %v2469, 0.0
  %vm2598 = vcmp.ge.f32.partialorder %v2470, 0.0
  %vm2599 = vcmp.ge.f32.partialorder %v2471, 0.0
  %vm2600 = vcmp.ge.f32.partialorder %v2472, 0.0
  %vm2601 = vcmp.ge.f32.partialorder %v2473, 0.0
  %vm2602 = vcmp.ge.f32.partialorder %v2474, 0.0
  %vm2603 = vcmp.ge.f32.partialorder %v2475, 0.0
  %vm2604 = vcmp.ge.f32.partialorder %v2476, 0.0
  %vm2605 = vcmp.ge.f32.partialorder %v2477, 0.0
  %vm2606 = vcmp.ge.f32.partialorder %v2478, 0.0
  %vm2607 = vcmp.ge.f32.partialorder %v2479, 0.0
  %vm2608 = vcmp.ge.f32.partialorder %v2480, 0.0
  %vm2609 = vcmp.ge.f32.partialorder %v2481, 0.0
  %vm2610 = vcmp.ge.f32.partialorder %v2482, 0.0
  %vm2611 = vcmp.ge.f32.partialorder %v2483, 0.0
  %vm2612 = vcmp.ge.f32.partialorder %v2484, 0.0
  %vm2613 = vcmp.ge.f32.partialorder %v2485, 0.0
  %vm2614 = vcmp.ge.f32.partialorder %v2486, 0.0
  %vm2615 = vcmp.ge.f32.partialorder %v2487, 0.0
  %vm2616 = vcmp.ge.f32.partialorder %v2488, 0.0
  %vm2617 = vcmp.ge.f32.partialorder %v2489, 0.0
  %vm2618 = vcmp.ge.f32.partialorder %v2490, 0.0
  %vm2619 = vcmp.ge.f32.partialorder %v2491, 0.0
  %vm2620 = vcmp.ge.f32.partialorder %v2492, 0.0
  %vm2621 = vcmp.ge.f32.partialorder %v2493, 0.0
  %vm2622 = vcmp.ge.f32.partialorder %v2494, 0.0
  %vm2623 = vcmp.ge.f32.partialorder %v2495, 0.0
  %vm2624 = vcmp.ge.f32.partialorder %v2496, 0.0
  %vm2625 = vcmp.ge.f32.partialorder %v2497, 0.0
  %vm2626 = vcmp.ge.f32.partialorder %v2498, 0.0
  %vm2627 = vcmp.ge.f32.partialorder %v2499, 0.0
  %vm2628 = vcmp.ge.f32.partialorder %v2500, 0.0
  %vm2629 = vcmp.ge.f32.partialorder %v2501, 0.0
  %vm2630 = vcmp.ge.f32.partialorder %v2502, 0.0
  %vm2631 = vcmp.ge.f32.partialorder %v2503, 0.0
  %vm2632 = vcmp.ge.f32.partialorder %v2504, 0.0
  %vm2633 = vcmp.ge.f32.partialorder %v2505, 0.0
  %vm2634 = vcmp.ge.f32.partialorder %v2506, 0.0
  %vm2635 = vcmp.ge.f32.partialorder %v2507, 0.0
  %vm2636 = vcmp.ge.f32.partialorder %v2508, 0.0
  %vm2637 = vcmp.ge.f32.partialorder %v2509, 0.0
  %vm2638 = vcmp.ge.f32.partialorder %v2510, 0.0
  %vm2639 = vcmp.ge.f32.partialorder %v2511, 0.0
  %v2640 = vmul.f32 %v2384, 0.2
  %v2641 = vmul.f32 %v2385, 0.2
  %v2642 = vmul.f32 %v2386, 0.2
  %v2643 = vmul.f32 %v2387, 0.2
  %v2644 = vmul.f32 %v2388, 0.2
  %v2645 = vmul.f32 %v2389, 0.2
  %v2646 = vmul.f32 %v2390, 0.2
  %v2647 = vmul.f32 %v2391, 0.2
  %v2648 = vmul.f32 %v2392, 0.2
  %v2649 = vmul.f32 %v2393, 0.2
  %v2650 = vmul.f32 %v2394, 0.2
  %v2651 = vmul.f32 %v2395, 0.2
  %v2652 = vmul.f32 %v2396, 0.2
  %v2653 = vmul.f32 %v2397, 0.2
  %v2654 = vmul.f32 %v2398, 0.2
  %v2655 = vmul.f32 %v2399, 0.2
  %v2656 = vmul.f32 %v2400, 0.2
  %v2657 = vmul.f32 %v2401, 0.2
  %v2658 = vmul.f32 %v2402, 0.2
  %v2659 = vmul.f32 %v2403, 0.2
  %v2660 = vmul.f32 %v2404, 0.2
  %v2661 = vmul.f32 %v2405, 0.2
  %v2662 = vmul.f32 %v2406, 0.2
  %v2663 = vmul.f32 %v2407, 0.2
  %v2664 = vmul.f32 %v2408, 0.2
  %v2665 = vmul.f32 %v2409, 0.2
  %v2666 = vmul.f32 %v2410, 0.2
  %v2667 = vmul.f32 %v2411, 0.2
  %v2668 = vmul.f32 %v2412, 0.2
  %v2669 = vmul.f32 %v2413, 0.2
  %v2670 = vmul.f32 %v2414, 0.2
  %v2671 = vmul.f32 %v2415, 0.2
  %v2672 = vmul.f32 %v2416, 0.2
  %v2673 = vmul.f32 %v2417, 0.2
  %v2674 = vmul.f32 %v2418, 0.2
  %v2675 = vmul.f32 %v2419, 0.2
  %v2676 = vmul.f32 %v2420, 0.2
  %v2677 = vmul.f32 %v2421, 0.2
  %v2678 = vmul.f32 %v2422, 0.2
  %v2679 = vmul.f32 %v2423, 0.2
  %v2680 = vmul.f32 %v2424, 0.2
  %v2681 = vmul.f32 %v2425, 0.2
  %v2682 = vmul.f32 %v2426, 0.2
  %v2683 = vmul.f32 %v2427, 0.2
  %v2684 = vmul.f32 %v2428, 0.2
  %v2685 = vmul.f32 %v2429, 0.2
  %v2686 = vmul.f32 %v2430, 0.2
  %v2687 = vmul.f32 %v2431, 0.2
  %v2688 = vmul.f32 %v2432, 0.2
  %v2689 = vmul.f32 %v2433, 0.2
  %v2690 = vmul.f32 %v2434, 0.2
  %v2691 = vmul.f32 %v2435, 0.2
  %v2692 = vmul.f32 %v2436, 0.2
  %v2693 = vmul.f32 %v2437, 0.2
  %v2694 = vmul.f32 %v2438, 0.2
  %v2695 = vmul.f32 %v2439, 0.2
  %v2696 = vmul.f32 %v2440, 0.2
  %v2697 = vmul.f32 %v2441, 0.2
  %v2698 = vmul.f32 %v2442, 0.2
  %v2699 = vmul.f32 %v2443, 0.2
  %v2700 = vmul.f32 %v2444, 0.2
  %v2701 = vmul.f32 %v2445, 0.2
  %v2702 = vmul.f32 %v2446, 0.2
  %v2703 = vmul.f32 %v2447, 0.2
  %v2704 = vmul.f32 %v2448, 0.2
  %v2705 = vmul.f32 %v2449, 0.2
  %v2706 = vmul.f32 %v2450, 0.2
  %v2707 = vmul.f32 %v2451, 0.2
  %v2708 = vmul.f32 %v2452, 0.2
  %v2709 = vmul.f32 %v2453, 0.2
  %v2710 = vmul.f32 %v2454, 0.2
  %v2711 = vmul.f32 %v2455, 0.2
  %v2712 = vmul.f32 %v2456, 0.2
  %v2713 = vmul.f32 %v2457, 0.2
  %v2714 = vmul.f32 %v2458, 0.2
  %v2715 = vmul.f32 %v2459, 0.2
  %v2716 = vmul.f32 %v2460, 0.2
  %v2717 = vmul.f32 %v2461, 0.2
  %v2718 = vmul.f32 %v2462, 0.2
  %v2719 = vmul.f32 %v2463, 0.2
  %v2720 = vmul.f32 %v2464, 0.2
  %v2721 = vmul.f32 %v2465, 0.2
  %v2722 = vmul.f32 %v2466, 0.2
  %v2723 = vmul.f32 %v2467, 0.2
  %v2724 = vmul.f32 %v2468, 0.2
  %v2725 = vmul.f32 %v2469, 0.2
  %v2726 = vmul.f32 %v2470, 0.2
  %v2727 = vmul.f32 %v2471, 0.2
  %v2728 = vmul.f32 %v2472, 0.2
  %v2729 = vmul.f32 %v2473, 0.2
  %v2730 = vmul.f32 %v2474, 0.2
  %v2731 = vmul.f32 %v2475, 0.2
  %v2732 = vmul.f32 %v2476, 0.2
  %v2733 = vmul.f32 %v2477, 0.2
  %v2734 = vmul.f32 %v2478, 0.2
  %v2735 = vmul.f32 %v2479, 0.2
  %v2736 = vmul.f32 %v2480, 0.2
  %v2737 = vmul.f32 %v2481, 0.2
  %v2738 = vmul.f32 %v2482, 0.2
  %v2739 = vmul.f32 %v2483, 0.2
  %v2740 = vmul.f32 %v2484, 0.2
  %v2741 = vmul.f32 %v2485, 0.2
  %v2742 = vmul.f32 %v2486, 0.2
  %v2743 = vmul.f32 %v2487, 0.2
  %v2744 = vmul.f32 %v2488, 0.2
  %v2745 = vmul.f32 %v2489, 0.2
  %v2746 = vmul.f32 %v2490, 0.2
  %v2747 = vmul.f32 %v2491, 0.2
  %v2748 = vmul.f32 %v2492, 0.2
  %v2749 = vmul.f32 %v2493, 0.2
  %v2750 = vmul.f32 %v2494, 0.2
  %v2751 = vmul.f32 %v2495, 0.2
  %v2752 = vmul.f32 %v2496, 0.2
  %v2753 = vmul.f32 %v2497, 0.2
  %v2754 = vmul.f32 %v2498, 0.2
  %v2755 = vmul.f32 %v2499, 0.2
  %v2756 = vmul.f32 %v2500, 0.2
  %v2757 = vmul.f32 %v2501, 0.2
  %v2758 = vmul.f32 %v2502, 0.2
  %v2759 = vmul.f32 %v2503, 0.2
  %v2760 = vmul.f32 %v2504, 0.2
  %v2761 = vmul.f32 %v2505, 0.2
  %v2762 = vmul.f32 %v2506, 0.2
  %v2763 = vmul.f32 %v2507, 0.2
  %v2764 = vmul.f32 %v2508, 0.2
  %v2765 = vmul.f32 %v2509, 0.2
  %v2766 = vmul.f32 %v2510, 0.2
  %v2767 = vmul.f32 %v2511, 0.2
  %v2768 = vsel %vm2512, %v2384, %v2640
  %v2769 = vsel %vm2513, %v2385, %v2641
  %v2770 = vsel %vm2514, %v2386, %v2642
  %v2771 = vsel %vm2515, %v2387, %v2643
  %v2772 = vsel %vm2516, %v2388, %v2644
  %v2773 = vsel %vm2517, %v2389, %v2645
  %v2774 = vsel %vm2518, %v2390, %v2646
  %v2775 = vsel %vm2519, %v2391, %v2647
  %v2776 = vsel %vm2520, %v2392, %v2648
  %v2777 = vsel %vm2521, %v2393, %v2649
  %v2778 = vsel %vm2522, %v2394, %v2650
  %v2779 = vsel %vm2523, %v2395, %v2651
  %v2780 = vsel %vm2524, %v2396, %v2652
  %v2781 = vsel %vm2525, %v2397, %v2653
  %v2782 = vsel %vm2526, %v2398, %v2654
  %v2783 = vsel %vm2527, %v2399, %v2655
  %v2784 = vsel %vm2528, %v2400, %v2656
  %v2785 = vsel %vm2529, %v2401, %v2657
  %v2786 = vsel %vm2530, %v2402, %v2658
  %v2787 = vsel %vm2531, %v2403, %v2659
  %v2788 = vsel %vm2532, %v2404, %v2660
  %v2789 = vsel %vm2533, %v2405, %v2661
  %v2790 = vsel %vm2534, %v2406, %v2662
  %v2791 = vsel %vm2535, %v2407, %v2663
  %v2792 = vsel %vm2536, %v2408, %v2664
  %v2793 = vsel %vm2537, %v2409, %v2665
  %v2794 = vsel %vm2538, %v2410, %v2666
  %v2795 = vsel %vm2539, %v2411, %v2667
  %v2796 = vsel %vm2540, %v2412, %v2668
  %v2797 = vsel %vm2541, %v2413, %v2669
  %v2798 = vsel %vm2542, %v2414, %v2670
  %v2799 = vsel %vm2543, %v2415, %v2671
  %v2800 = vsel %vm2544, %v2416, %v2672
  %v2801 = vsel %vm2545, %v2417, %v2673
  %v2802 = vsel %vm2546, %v2418, %v2674
  %v2803 = vsel %vm2547, %v2419, %v2675
  %v2804 = vsel %vm2548, %v2420, %v2676
  %v2805 = vsel %vm2549, %v2421, %v2677
  %v2806 = vsel %vm2550, %v2422, %v2678
  %v2807 = vsel %vm2551, %v2423, %v2679
  %v2808 = vsel %vm2552, %v2424, %v2680
  %v2809 = vsel %vm2553, %v2425, %v2681
  %v2810 = vsel %vm2554, %v2426, %v2682
  %v2811 = vsel %vm2555, %v2427, %v2683
  %v2812 = vsel %vm2556, %v2428, %v2684
  %v2813 = vsel %vm2557, %v2429, %v2685
  %v2814 = vsel %vm2558, %v2430, %v2686
  %v2815 = vsel %vm2559, %v2431, %v2687
  %v2816 = vsel %vm2560, %v2432, %v2688
  %v2817 = vsel %vm2561, %v2433, %v2689
  %v2818 = vsel %vm2562, %v2434, %v2690
  %v2819 = vsel %vm2563, %v2435, %v2691
  %v2820 = vsel %vm2564, %v2436, %v2692
  %v2821 = vsel %vm2565, %v2437, %v2693
  %v2822 = vsel %vm2566, %v2438, %v2694
  %v2823 = vsel %vm2567, %v2439, %v2695
  %v2824 = vsel %vm2568, %v2440, %v2696
  %v2825 = vsel %vm2569, %v2441, %v2697
  %v2826 = vsel %vm2570, %v2442, %v2698
  %v2827 = vsel %vm2571, %v2443, %v2699
  %v2828 = vsel %vm2572, %v2444, %v2700
  %v2829 = vsel %vm2573, %v2445, %v2701
  %v2830 = vsel %vm2574, %v2446, %v2702
  %v2831 = vsel %vm2575, %v2447, %v2703
  %v2832 = vsel %vm2576, %v2448, %v2704
  %v2833 = vsel %vm2577, %v2449, %v2705
  %v2834 = vsel %vm2578, %v2450, %v2706
  %v2835 = vsel %vm2579, %v2451, %v2707
  %v2836 = vsel %vm2580, %v2452, %v2708
  %v2837 = vsel %vm2581, %v2453, %v2709
  %v2838 = vsel %vm2582, %v2454, %v2710
  %v2839 = vsel %vm2583, %v2455, %v2711
  %v2840 = vsel %vm2584, %v2456, %v2712
  %v2841 = vsel %vm2585, %v2457, %v2713
  %v2842 = vsel %vm2586, %v2458, %v2714
  %v2843 = vsel %vm2587, %v2459, %v2715
  %v2844 = vsel %vm2588, %v2460, %v2716
  %v2845 = vsel %vm2589, %v2461, %v2717
  %v2846 = vsel %vm2590, %v2462, %v2718
  %v2847 = vsel %vm2591, %v2463, %v2719
  %v2848 = vsel %vm2592, %v2464, %v2720
  %v2849 = vsel %vm2593, %v2465, %v2721
  %v2850 = vsel %vm2594, %v2466, %v2722
  %v2851 = vsel %vm2595, %v2467, %v2723
  %v2852 = vsel %vm2596, %v2468, %v2724
  %v2853 = vsel %vm2597, %v2469, %v2725
  %v2854 = vsel %vm2598, %v2470, %v2726
  %v2855 = vsel %vm2599, %v2471, %v2727
  %v2856 = vsel %vm2600, %v2472, %v2728
  %v2857 = vsel %vm2601, %v2473, %v2729
  %v2858 = vsel %vm2602, %v2474, %v2730
  %v2859 = vsel %vm2603, %v2475, %v2731
  %v2860 = vsel %vm2604, %v2476, %v2732
  %v2861 = vsel %vm2605, %v2477, %v2733
  %v2862 = vsel %vm2606, %v2478, %v2734
  %v2863 = vsel %vm2607, %v2479, %v2735
  %v2864 = vsel %vm2608, %v2480, %v2736
  %v2865 = vsel %vm2609, %v2481, %v2737
  %v2866 = vsel %vm2610, %v2482, %v2738
  %v2867 = vsel %vm2611, %v2483, %v2739
  %v2868 = vsel %vm2612, %v2484, %v2740
  %v2869 = vsel %vm2613, %v2485, %v2741
  %v2870 = vsel %vm2614, %v2486, %v2742
  %v2871 = vsel %vm2615, %v2487, %v2743
  %v2872 = vsel %vm2616, %v2488, %v2744
  %v2873 = vsel %vm2617, %v2489, %v2745
  %v2874 = vsel %vm2618, %v2490, %v2746
  %v2875 = vsel %vm2619, %v2491, %v2747
  %v2876 = vsel %vm2620, %v2492, %v2748
  %v2877 = vsel %vm2621, %v2493, %v2749
  %v2878 = vsel %vm2622, %v2494, %v2750
  %v2879 = vsel %vm2623, %v2495, %v2751
  %v2880 = vsel %vm2624, %v2496, %v2752
  %v2881 = vsel %vm2625, %v2497, %v2753
  %v2882 = vsel %vm2626, %v2498, %v2754
  %v2883 = vsel %vm2627, %v2499, %v2755
  %v2884 = vsel %vm2628, %v2500, %v2756
  %v2885 = vsel %vm2629, %v2501, %v2757
  %v2886 = vsel %vm2630, %v2502, %v2758
  %v2887 = vsel %vm2631, %v2503, %v2759
  %v2888 = vsel %vm2632, %v2504, %v2760
  %v2889 = vsel %vm2633, %v2505, %v2761
  %v2890 = vsel %vm2634, %v2506, %v2762
  %v2891 = vsel %vm2635, %v2507, %v2763
  %v2892 = vsel %vm2636, %v2508, %v2764
  %v2893 = vsel %vm2637, %v2509, %v2765
  %v2894 = vsel %vm2638, %v2510, %v2766
  %v2895 = vsel %vm2639, %v2511, %v2767
  %v2896 = vpack.c.bf16 %v2769, %v2768
  %v2897 = vpack.c.bf16 %v2771, %v2770
  %v2898 = vpack.c.bf16 %v2773, %v2772
  %v2899 = vpack.c.bf16 %v2775, %v2774
  %v2900 = vpack.c.bf16 %v2777, %v2776
  %v2901 = vpack.c.bf16 %v2779, %v2778
  %v2902 = vpack.c.bf16 %v2781, %v2780
  %v2903 = vpack.c.bf16 %v2783, %v2782
  %v2904 = vpack.c.bf16 %v2785, %v2784
  %v2905 = vpack.c.bf16 %v2787, %v2786
  %v2906 = vpack.c.bf16 %v2789, %v2788
  %v2907 = vpack.c.bf16 %v2791, %v2790
  %v2908 = vpack.c.bf16 %v2793, %v2792
  %v2909 = vpack.c.bf16 %v2795, %v2794
  %v2910 = vpack.c.bf16 %v2797, %v2796
  %v2911 = vpack.c.bf16 %v2799, %v2798
  %v2912 = vpack.c.bf16 %v2801, %v2800
  %v2913 = vpack.c.bf16 %v2803, %v2802
  %v2914 = vpack.c.bf16 %v2805, %v2804
  %v2915 = vpack.c.bf16 %v2807, %v2806
  %v2916 = vpack.c.bf16 %v2809, %v2808
  %v2917 = vpack.c.bf16 %v2811, %v2810
  %v2918 = vpack.c.bf16 %v2813, %v2812
  %v2919 = vpack.c.bf16 %v2815, %v2814
  %v2920 = vpack.c.bf16 %v2817, %v2816
  %v2921 = vpack.c.bf16 %v2819, %v2818
  %v2922 = vpack.c.bf16 %v2821, %v2820
  %v2923 = vpack.c.bf16 %v2823, %v2822
  %v2924 = vpack.c.bf16 %v2825, %v2824
  %v2925 = vpack.c.bf16 %v2827, %v2826
  %v2926 = vpack.c.bf16 %v2829, %v2828
  %v2927 = vpack.c.bf16 %v2831, %v2830
  %v2928 = vpack.c.bf16 %v2833, %v2832
  %v2929 = vpack.c.bf16 %v2835, %v2834
  %v2930 = vpack.c.bf16 %v2837, %v2836
  %v2931 = vpack.c.bf16 %v2839, %v2838
  %v2932 = vpack.c.bf16 %v2841, %v2840
  %v2933 = vpack.c.bf16 %v2843, %v2842
  %v2934 = vpack.c.bf16 %v2845, %v2844
  %v2935 = vpack.c.bf16 %v2847, %v2846
  %v2936 = vpack.c.bf16 %v2849, %v2848
  %v2937 = vpack.c.bf16 %v2851, %v2850
  %v2938 = vpack.c.bf16 %v2853, %v2852
  %v2939 = vpack.c.bf16 %v2855, %v2854
  %v2940 = vpack.c.bf16 %v2857, %v2856
  %v2941 = vpack.c.bf16 %v2859, %v2858
  %v2942 = vpack.c.bf16 %v2861, %v2860
  %v2943 = vpack.c.bf16 %v2863, %v2862
  %v2944 = vpack.c.bf16 %v2865, %v2864
  %v2945 = vpack.c.bf16 %v2867, %v2866
  %v2946 = vpack.c.bf16 %v2869, %v2868
  %v2947 = vpack.c.bf16 %v2871, %v2870
  %v2948 = vpack.c.bf16 %v2873, %v2872
  %v2949 = vpack.c.bf16 %v2875, %v2874
  %v2950 = vpack.c.bf16 %v2877, %v2876
  %v2951 = vpack.c.bf16 %v2879, %v2878
  %v2952 = vpack.c.bf16 %v2881, %v2880
  %v2953 = vpack.c.bf16 %v2883, %v2882
  %v2954 = vpack.c.bf16 %v2885, %v2884
  %v2955 = vpack.c.bf16 %v2887, %v2886
  %v2956 = vpack.c.bf16 %v2889, %v2888
  %v2957 = vpack.c.bf16 %v2891, %v2890
  %v2958 = vpack.c.bf16 %v2893, %v2892
  %v2959 = vpack.c.bf16 %v2895, %v2894
  %v3024 = vunpack.c.l.b16 %v2896
  %v3025 = vunpack.c.h.b16 %v2896
  %v3026 = vunpack.c.l.b16 %v2897
  %v3027 = vunpack.c.h.b16 %v2897
  %v3028 = vunpack.c.l.b16 %v2898
  %v3029 = vunpack.c.h.b16 %v2898
  %v3030 = vunpack.c.l.b16 %v2899
  %v3031 = vunpack.c.h.b16 %v2899
  %v3032 = vunpack.c.l.b16 %v2900
  %v3033 = vunpack.c.h.b16 %v2900
  %v3034 = vunpack.c.l.b16 %v2901
  %v3035 = vunpack.c.h.b16 %v2901
  %v3036 = vunpack.c.l.b16 %v2902
  %v3037 = vunpack.c.h.b16 %v2902
  %v3038 = vunpack.c.l.b16 %v2903
  %v3039 = vunpack.c.h.b16 %v2903
  %v3040 = vunpack.c.l.b16 %v2904
  %v3041 = vunpack.c.h.b16 %v2904
  %v3042 = vunpack.c.l.b16 %v2905
  %v3043 = vunpack.c.h.b16 %v2905
  %v3044 = vunpack.c.l.b16 %v2906
  %v3045 = vunpack.c.h.b16 %v2906
  %v3046 = vunpack.c.l.b16 %v2907
  %v3047 = vunpack.c.h.b16 %v2907
  %v3048 = vunpack.c.l.b16 %v2908
  %v3049 = vunpack.c.h.b16 %v2908
  %v3050 = vunpack.c.l.b16 %v2909
  %v3051 = vunpack.c.h.b16 %v2909
  %v3052 = vunpack.c.l.b16 %v2910
  %v3053 = vunpack.c.h.b16 %v2910
  %v3054 = vunpack.c.l.b16 %v2911
  %v3055 = vunpack.c.h.b16 %v2911
  %v3056 = vunpack.c.l.b16 %v2912
  %v3057 = vunpack.c.h.b16 %v2912
  %v3058 = vunpack.c.l.b16 %v2913
  %v3059 = vunpack.c.h.b16 %v2913
  %v3060 = vunpack.c.l.b16 %v2914
  %v3061 = vunpack.c.h.b16 %v2914
  %v3062 = vunpack.c.l.b16 %v2915
  %v3063 = vunpack.c.h.b16 %v2915
  %v3064 = vunpack.c.l.b16 %v2916
  %v3065 = vunpack.c.h.b16 %v2916
  %v3066 = vunpack.c.l.b16 %v2917
  %v3067 = vunpack.c.h.b16 %v2917
  %v3068 = vunpack.c.l.b16 %v2918
  %v3069 = vunpack.c.h.b16 %v2918
  %v3070 = vunpack.c.l.b16 %v2919
  %v3071 = vunpack.c.h.b16 %v2919
  %v3072 = vunpack.c.l.b16 %v2920
  %v3073 = vunpack.c.h.b16 %v2920
  %v3074 = vunpack.c.l.b16 %v2921
  %v3075 = vunpack.c.h.b16 %v2921
  %v3076 = vunpack.c.l.b16 %v2922
  %v3077 = vunpack.c.h.b16 %v2922
  %v3078 = vunpack.c.l.b16 %v2923
  %v3079 = vunpack.c.h.b16 %v2923
  %v3080 = vunpack.c.l.b16 %v2924
  %v3081 = vunpack.c.h.b16 %v2924
  %v3082 = vunpack.c.l.b16 %v2925
  %v3083 = vunpack.c.h.b16 %v2925
  %v3084 = vunpack.c.l.b16 %v2926
  %v3085 = vunpack.c.h.b16 %v2926
  %v3086 = vunpack.c.l.b16 %v2927
  %v3087 = vunpack.c.h.b16 %v2927
  %v3088 = vunpack.c.l.b16 %v2928
  %v3089 = vunpack.c.h.b16 %v2928
  %v3090 = vunpack.c.l.b16 %v2929
  %v3091 = vunpack.c.h.b16 %v2929
  %v3092 = vunpack.c.l.b16 %v2930
  %v3093 = vunpack.c.h.b16 %v2930
  %v3094 = vunpack.c.l.b16 %v2931
  %v3095 = vunpack.c.h.b16 %v2931
  %v3096 = vunpack.c.l.b16 %v2932
  %v3097 = vunpack.c.h.b16 %v2932
  %v3098 = vunpack.c.l.b16 %v2933
  %v3099 = vunpack.c.h.b16 %v2933
  %v3100 = vunpack.c.l.b16 %v2934
  %v3101 = vunpack.c.h.b16 %v2934
  %v3102 = vunpack.c.l.b16 %v2935
  %v3103 = vunpack.c.h.b16 %v2935
  %v3104 = vunpack.c.l.b16 %v2936
  %v3105 = vunpack.c.h.b16 %v2936
  %v3106 = vunpack.c.l.b16 %v2937
  %v3107 = vunpack.c.h.b16 %v2937
  %v3108 = vunpack.c.l.b16 %v2938
  %v3109 = vunpack.c.h.b16 %v2938
  %v3110 = vunpack.c.l.b16 %v2939
  %v3111 = vunpack.c.h.b16 %v2939
  %v3112 = vunpack.c.l.b16 %v2940
  %v3113 = vunpack.c.h.b16 %v2940
  %v3114 = vunpack.c.l.b16 %v2941
  %v3115 = vunpack.c.h.b16 %v2941
  %v3116 = vunpack.c.l.b16 %v2942
  %v3117 = vunpack.c.h.b16 %v2942
  %v3118 = vunpack.c.l.b16 %v2943
  %v3119 = vunpack.c.h.b16 %v2943
  %v3120 = vunpack.c.l.b16 %v2944
  %v3121 = vunpack.c.h.b16 %v2944
  %v3122 = vunpack.c.l.b16 %v2945
  %v3123 = vunpack.c.h.b16 %v2945
  %v3124 = vunpack.c.l.b16 %v2946
  %v3125 = vunpack.c.h.b16 %v2946
  %v3126 = vunpack.c.l.b16 %v2947
  %v3127 = vunpack.c.h.b16 %v2947
  %v3128 = vunpack.c.l.b16 %v2948
  %v3129 = vunpack.c.h.b16 %v2948
  %v3130 = vunpack.c.l.b16 %v2949
  %v3131 = vunpack.c.h.b16 %v2949
  %v3132 = vunpack.c.l.b16 %v2950
  %v3133 = vunpack.c.h.b16 %v2950
  %v3134 = vunpack.c.l.b16 %v2951
  %v3135 = vunpack.c.h.b16 %v2951
  %v3136 = vunpack.c.l.b16 %v2952
  %v3137 = vunpack.c.h.b16 %v2952
  %v3138 = vunpack.c.l.b16 %v2953
  %v3139 = vunpack.c.h.b16 %v2953
  %v3140 = vunpack.c.l.b16 %v2954
  %v3141 = vunpack.c.h.b16 %v2954
  %v3142 = vunpack.c.l.b16 %v2955
  %v3143 = vunpack.c.h.b16 %v2955
  %v3144 = vunpack.c.l.b16 %v2956
  %v3145 = vunpack.c.h.b16 %v2956
  %v3146 = vunpack.c.l.b16 %v2957
  %v3147 = vunpack.c.h.b16 %v2957
  %v3148 = vunpack.c.l.b16 %v2958
  %v3149 = vunpack.c.h.b16 %v2958
  %v3150 = vunpack.c.l.b16 %v2959
  %v3151 = vunpack.c.h.b16 %v2959
  %v3152 = vpack.c.b16 %v3024, %v3024
  %v3153 = vpack.c.b16 %v3025, %v3025
  %v3154 = vpack.c.b16 %v3026, %v3026
  %v3155 = vpack.c.b16 %v3027, %v3027
  %v3156 = vpack.c.b16 %v3028, %v3028
  %v3157 = vpack.c.b16 %v3029, %v3029
  %v3158 = vpack.c.b16 %v3030, %v3030
  %v3159 = vpack.c.b16 %v3031, %v3031
  %v3160 = vpack.c.b16 %v3032, %v3032
  %v3161 = vpack.c.b16 %v3033, %v3033
  %v3162 = vpack.c.b16 %v3034, %v3034
  %v3163 = vpack.c.b16 %v3035, %v3035
  %v3164 = vpack.c.b16 %v3036, %v3036
  %v3165 = vpack.c.b16 %v3037, %v3037
  %v3166 = vpack.c.b16 %v3038, %v3038
  %v3167 = vpack.c.b16 %v3039, %v3039
  %v3168 = vpack.c.b16 %v3040, %v3040
  %v3169 = vpack.c.b16 %v3041, %v3041
  %v3170 = vpack.c.b16 %v3042, %v3042
  %v3171 = vpack.c.b16 %v3043, %v3043
  %v3172 = vpack.c.b16 %v3044, %v3044
  %v3173 = vpack.c.b16 %v3045, %v3045
  %v3174 = vpack.c.b16 %v3046, %v3046
  %v3175 = vpack.c.b16 %v3047, %v3047
  %v3176 = vpack.c.b16 %v3048, %v3048
  %v3177 = vpack.c.b16 %v3049, %v3049
  %v3178 = vpack.c.b16 %v3050, %v3050
  %v3179 = vpack.c.b16 %v3051, %v3051
  %v3180 = vpack.c.b16 %v3052, %v3052
  %v3181 = vpack.c.b16 %v3053, %v3053
  %v3182 = vpack.c.b16 %v3054, %v3054
  %v3183 = vpack.c.b16 %v3055, %v3055
  %v3184 = vpack.c.b16 %v3056, %v3056
  %v3185 = vpack.c.b16 %v3057, %v3057
  %v3186 = vpack.c.b16 %v3058, %v3058
  %v3187 = vpack.c.b16 %v3059, %v3059
  %v3188 = vpack.c.b16 %v3060, %v3060
  %v3189 = vpack.c.b16 %v3061, %v3061
  %v3190 = vpack.c.b16 %v3062, %v3062
  %v3191 = vpack.c.b16 %v3063, %v3063
  %v3192 = vpack.c.b16 %v3064, %v3064
  %v3193 = vpack.c.b16 %v3065, %v3065
  %v3194 = vpack.c.b16 %v3066, %v3066
  %v3195 = vpack.c.b16 %v3067, %v3067
  %v3196 = vpack.c.b16 %v3068, %v3068
  %v3197 = vpack.c.b16 %v3069, %v3069
  %v3198 = vpack.c.b16 %v3070, %v3070
  %v3199 = vpack.c.b16 %v3071, %v3071
  %v3200 = vpack.c.b16 %v3072, %v3072
  %v3201 = vpack.c.b16 %v3073, %v3073
  %v3202 = vpack.c.b16 %v3074, %v3074
  %v3203 = vpack.c.b16 %v3075, %v3075
  %v3204 = vpack.c.b16 %v3076, %v3076
  %v3205 = vpack.c.b16 %v3077, %v3077
  %v3206 = vpack.c.b16 %v3078, %v3078
  %v3207 = vpack.c.b16 %v3079, %v3079
  %v3208 = vpack.c.b16 %v3080, %v3080
  %v3209 = vpack.c.b16 %v3081, %v3081
  %v3210 = vpack.c.b16 %v3082, %v3082
  %v3211 = vpack.c.b16 %v3083, %v3083
  %v3212 = vpack.c.b16 %v3084, %v3084
  %v3213 = vpack.c.b16 %v3085, %v3085
  %v3214 = vpack.c.b16 %v3086, %v3086
  %v3215 = vpack.c.b16 %v3087, %v3087
  %v3216 = vpack.c.b16 %v3088, %v3088
  %v3217 = vpack.c.b16 %v3089, %v3089
  %v3218 = vpack.c.b16 %v3090, %v3090
  %v3219 = vpack.c.b16 %v3091, %v3091
  %v3220 = vpack.c.b16 %v3092, %v3092
  %v3221 = vpack.c.b16 %v3093, %v3093
  %v3222 = vpack.c.b16 %v3094, %v3094
  %v3223 = vpack.c.b16 %v3095, %v3095
  %v3224 = vpack.c.b16 %v3096, %v3096
  %v3225 = vpack.c.b16 %v3097, %v3097
  %v3226 = vpack.c.b16 %v3098, %v3098
  %v3227 = vpack.c.b16 %v3099, %v3099
  %v3228 = vpack.c.b16 %v3100, %v3100
  %v3229 = vpack.c.b16 %v3101, %v3101
  %v3230 = vpack.c.b16 %v3102, %v3102
  %v3231 = vpack.c.b16 %v3103, %v3103
  %v3232 = vpack.c.b16 %v3104, %v3104
  %v3233 = vpack.c.b16 %v3105, %v3105
  %v3234 = vpack.c.b16 %v3106, %v3106
  %v3235 = vpack.c.b16 %v3107, %v3107
  %v3236 = vpack.c.b16 %v3108, %v3108
  %v3237 = vpack.c.b16 %v3109, %v3109
  %v3238 = vpack.c.b16 %v3110, %v3110
  %v3239 = vpack.c.b16 %v3111, %v3111
  %v3240 = vpack.c.b16 %v3112, %v3112
  %v3241 = vpack.c.b16 %v3113, %v3113
  %v3242 = vpack.c.b16 %v3114, %v3114
  %v3243 = vpack.c.b16 %v3115, %v3115
  %v3244 = vpack.c.b16 %v3116, %v3116
  %v3245 = vpack.c.b16 %v3117, %v3117
  %v3246 = vpack.c.b16 %v3118, %v3118
  %v3247 = vpack.c.b16 %v3119, %v3119
  %v3248 = vpack.c.b16 %v3120, %v3120
  %v3249 = vpack.c.b16 %v3121, %v3121
  %v3250 = vpack.c.b16 %v3122, %v3122
  %v3251 = vpack.c.b16 %v3123, %v3123
  %v3252 = vpack.c.b16 %v3124, %v3124
  %v3253 = vpack.c.b16 %v3125, %v3125
  %v3254 = vpack.c.b16 %v3126, %v3126
  %v3255 = vpack.c.b16 %v3127, %v3127
  %v3256 = vpack.c.b16 %v3128, %v3128
  %v3257 = vpack.c.b16 %v3129, %v3129
  %v3258 = vpack.c.b16 %v3130, %v3130
  %v3259 = vpack.c.b16 %v3131, %v3131
  %v3260 = vpack.c.b16 %v3132, %v3132
  %v3261 = vpack.c.b16 %v3133, %v3133
  %v3262 = vpack.c.b16 %v3134, %v3134
  %v3263 = vpack.c.b16 %v3135, %v3135
  %v3264 = vpack.c.b16 %v3136, %v3136
  %v3265 = vpack.c.b16 %v3137, %v3137
  %v3266 = vpack.c.b16 %v3138, %v3138
  %v3267 = vpack.c.b16 %v3139, %v3139
  %v3268 = vpack.c.b16 %v3140, %v3140
  %v3269 = vpack.c.b16 %v3141, %v3141
  %v3270 = vpack.c.b16 %v3142, %v3142
  %v3271 = vpack.c.b16 %v3143, %v3143
  %v3272 = vpack.c.b16 %v3144, %v3144
  %v3273 = vpack.c.b16 %v3145, %v3145
  %v3274 = vpack.c.b16 %v3146, %v3146
  %v3275 = vpack.c.b16 %v3147, %v3147
  %v3276 = vpack.c.b16 %v3148, %v3148
  %v3277 = vpack.c.b16 %v3149, %v3149
  %v3278 = vpack.c.b16 %v3150, %v3150
  %v3279 = vpack.c.b16 %v3151, %v3151
  %3408 = vst [vmem:[%s4] sm:$0xf] %v3152
  %3409 = vst [vmem:[%s4 + $0x4] sm:$0xf] %v3153
  %3410 = vst [vmem:[%s4 + $0x8] sm:$0xf] %v3154
  %3411 = vst [vmem:[%s4 + $0xc] sm:$0xf] %v3155
  %3412 = vst [vmem:[%s4 + $0x10] sm:$0xf] %v3156
  %3413 = vst [vmem:[%s4 + $0x14] sm:$0xf] %v3157
  %3414 = vst [vmem:[%s4 + $0x18] sm:$0xf] %v3158
  %3415 = vst [vmem:[%s4 + $0x1c] sm:$0xf] %v3159
  %3416 = vst [vmem:[%s4 + $0x20] sm:$0xf] %v3160
  %3417 = vst [vmem:[%s4 + $0x24] sm:$0xf] %v3161
  %3418 = vst [vmem:[%s4 + $0x28] sm:$0xf] %v3162
  %3419 = vst [vmem:[%s4 + $0x2c] sm:$0xf] %v3163
  %3420 = vst [vmem:[%s4 + $0x30] sm:$0xf] %v3164
  %3421 = vst [vmem:[%s4 + $0x34] sm:$0xf] %v3165
  %3422 = vst [vmem:[%s4 + $0x38] sm:$0xf] %v3166
  %3423 = vst [vmem:[%s4 + $0x3c] sm:$0xf] %v3167
  %3424 = vst [vmem:[%s4 + $0x40] sm:$0xf] %v3168
  %3425 = vst [vmem:[%s4 + $0x44] sm:$0xf] %v3169
  %3426 = vst [vmem:[%s4 + $0x48] sm:$0xf] %v3170
  %3427 = vst [vmem:[%s4 + $0x4c] sm:$0xf] %v3171
  %3428 = vst [vmem:[%s4 + $0x50] sm:$0xf] %v3172
  %3429 = vst [vmem:[%s4 + $0x54] sm:$0xf] %v3173
  %3430 = vst [vmem:[%s4 + $0x58] sm:$0xf] %v3174
  %3431 = vst [vmem:[%s4 + $0x5c] sm:$0xf] %v3175
  %3432 = vst [vmem:[%s4 + $0x60] sm:$0xf] %v3176
  %3433 = vst [vmem:[%s4 + $0x64] sm:$0xf] %v3177
  %3434 = vst [vmem:[%s4 + $0x68] sm:$0xf] %v3178
  %3435 = vst [vmem:[%s4 + $0x6c] sm:$0xf] %v3179
  %3436 = vst [vmem:[%s4 + $0x70] sm:$0xf] %v3180
  %3437 = vst [vmem:[%s4 + $0x74] sm:$0xf] %v3181
  %3438 = vst [vmem:[%s4 + $0x78] sm:$0xf] %v3182
  %3439 = vst [vmem:[%s4 + $0x7c] sm:$0xf] %v3183
  %3440 = vst [vmem:[%s4 + $0x80] sm:$0xf] %v3184
  %3441 = vst [vmem:[%s4 + $0x84] sm:$0xf] %v3185
  %3442 = vst [vmem:[%s4 + $0x88] sm:$0xf] %v3186
  %3443 = vst [vmem:[%s4 + $0x8c] sm:$0xf] %v3187
  %3444 = vst [vmem:[%s4 + $0x90] sm:$0xf] %v3188
  %3445 = vst [vmem:[%s4 + $0x94] sm:$0xf] %v3189
  %3446 = vst [vmem:[%s4 + $0x98] sm:$0xf] %v3190
  %3447 = vst [vmem:[%s4 + $0x9c] sm:$0xf] %v3191
  %3448 = vst [vmem:[%s4 + $0xa0] sm:$0xf] %v3192
  %3449 = vst [vmem:[%s4 + $0xa4] sm:$0xf] %v3193
  %3450 = vst [vmem:[%s4 + $0xa8] sm:$0xf] %v3194
  %3451 = vst [vmem:[%s4 + $0xac] sm:$0xf] %v3195
  %3452 = vst [vmem:[%s4 + $0xb0] sm:$0xf] %v3196
  %3453 = vst [vmem:[%s4 + $0xb4] sm:$0xf] %v3197
  %3454 = vst [vmem:[%s4 + $0xb8] sm:$0xf] %v3198
  %3455 = vst [vmem:[%s4 + $0xbc] sm:$0xf] %v3199
  %3456 = vst [vmem:[%s4 + $0xc0] sm:$0xf] %v3200
  %3457 = vst [vmem:[%s4 + $0xc4] sm:$0xf] %v3201
  %3458 = vst [vmem:[%s4 + $0xc8] sm:$0xf] %v3202
  %3459 = vst [vmem:[%s4 + $0xcc] sm:$0xf] %v3203
  %3460 = vst [vmem:[%s4 + $0xd0] sm:$0xf] %v3204
  %3461 = vst [vmem:[%s4 + $0xd4] sm:$0xf] %v3205
  %3462 = vst [vmem:[%s4 + $0xd8] sm:$0xf] %v3206
  %3463 = vst [vmem:[%s4 + $0xdc] sm:$0xf] %v3207
  %3464 = vst [vmem:[%s4 + $0xe0] sm:$0xf] %v3208
  %3465 = vst [vmem:[%s4 + $0xe4] sm:$0xf] %v3209
  %3466 = vst [vmem:[%s4 + $0xe8] sm:$0xf] %v3210
  %3467 = vst [vmem:[%s4 + $0xec] sm:$0xf] %v3211
  %3468 = vst [vmem:[%s4 + $0xf0] sm:$0xf] %v3212
  %3469 = vst [vmem:[%s4 + $0xf4] sm:$0xf] %v3213
  %3470 = vst [vmem:[%s4 + $0xf8] sm:$0xf] %v3214
  %3471 = vst [vmem:[%s4 + $0xfc] sm:$0xf] %v3215
  %3472 = vst [vmem:[%s4 + $0x100] sm:$0xf] %v3216
  %3473 = vst [vmem:[%s4 + $0x104] sm:$0xf] %v3217
  %3474 = vst [vmem:[%s4 + $0x108] sm:$0xf] %v3218
  %3475 = vst [vmem:[%s4 + $0x10c] sm:$0xf] %v3219
  %3476 = vst [vmem:[%s4 + $0x110] sm:$0xf] %v3220
  %3477 = vst [vmem:[%s4 + $0x114] sm:$0xf] %v3221
  %3478 = vst [vmem:[%s4 + $0x118] sm:$0xf] %v3222
  %3479 = vst [vmem:[%s4 + $0x11c] sm:$0xf] %v3223
  %3480 = vst [vmem:[%s4 + $0x120] sm:$0xf] %v3224
  %3481 = vst [vmem:[%s4 + $0x124] sm:$0xf] %v3225
  %3482 = vst [vmem:[%s4 + $0x128] sm:$0xf] %v3226
  %3483 = vst [vmem:[%s4 + $0x12c] sm:$0xf] %v3227
  %3484 = vst [vmem:[%s4 + $0x130] sm:$0xf] %v3228
  %3485 = vst [vmem:[%s4 + $0x134] sm:$0xf] %v3229
  %3486 = vst [vmem:[%s4 + $0x138] sm:$0xf] %v3230
  %3487 = vst [vmem:[%s4 + $0x13c] sm:$0xf] %v3231
  %3488 = vst [vmem:[%s4 + $0x140] sm:$0xf] %v3232
  %3489 = vst [vmem:[%s4 + $0x144] sm:$0xf] %v3233
  %3490 = vst [vmem:[%s4 + $0x148] sm:$0xf] %v3234
  %3491 = vst [vmem:[%s4 + $0x14c] sm:$0xf] %v3235
  %3492 = vst [vmem:[%s4 + $0x150] sm:$0xf] %v3236
  %3493 = vst [vmem:[%s4 + $0x154] sm:$0xf] %v3237
  %3494 = vst [vmem:[%s4 + $0x158] sm:$0xf] %v3238
  %3495 = vst [vmem:[%s4 + $0x15c] sm:$0xf] %v3239
  %3496 = vst [vmem:[%s4 + $0x160] sm:$0xf] %v3240
  %3497 = vst [vmem:[%s4 + $0x164] sm:$0xf] %v3241
  %3498 = vst [vmem:[%s4 + $0x168] sm:$0xf] %v3242
  %3499 = vst [vmem:[%s4 + $0x16c] sm:$0xf] %v3243
  %3500 = vst [vmem:[%s4 + $0x170] sm:$0xf] %v3244
  %3501 = vst [vmem:[%s4 + $0x174] sm:$0xf] %v3245
  %3502 = vst [vmem:[%s4 + $0x178] sm:$0xf] %v3246
  %3503 = vst [vmem:[%s4 + $0x17c] sm:$0xf] %v3247
  %3504 = vst [vmem:[%s4 + $0x180] sm:$0xf] %v3248
  %3505 = vst [vmem:[%s4 + $0x184] sm:$0xf] %v3249
  %3506 = vst [vmem:[%s4 + $0x188] sm:$0xf] %v3250
  %3507 = vst [vmem:[%s4 + $0x18c] sm:$0xf] %v3251
  %3508 = vst [vmem:[%s4 + $0x190] sm:$0xf] %v3252
  %3509 = vst [vmem:[%s4 + $0x194] sm:$0xf] %v3253
  %3510 = vst [vmem:[%s4 + $0x198] sm:$0xf] %v3254
  %3511 = vst [vmem:[%s4 + $0x19c] sm:$0xf] %v3255
  %3512 = vst [vmem:[%s4 + $0x1a0] sm:$0xf] %v3256
  %3513 = vst [vmem:[%s4 + $0x1a4] sm:$0xf] %v3257
  %3514 = vst [vmem:[%s4 + $0x1a8] sm:$0xf] %v3258
  %3515 = vst [vmem:[%s4 + $0x1ac] sm:$0xf] %v3259
  %3516 = vst [vmem:[%s4 + $0x1b0] sm:$0xf] %v3260
  %3517 = vst [vmem:[%s4 + $0x1b4] sm:$0xf] %v3261
  %3518 = vst [vmem:[%s4 + $0x1b8] sm:$0xf] %v3262
  %3519 = vst [vmem:[%s4 + $0x1bc] sm:$0xf] %v3263
  %3520 = vst [vmem:[%s4 + $0x1c0] sm:$0xf] %v3264
  %3521 = vst [vmem:[%s4 + $0x1c4] sm:$0xf] %v3265
  %3522 = vst [vmem:[%s4 + $0x1c8] sm:$0xf] %v3266
  %3523 = vst [vmem:[%s4 + $0x1cc] sm:$0xf] %v3267
  %3524 = vst [vmem:[%s4 + $0x1d0] sm:$0xf] %v3268
  %3525 = vst [vmem:[%s4 + $0x1d4] sm:$0xf] %v3269
  %3526 = vst [vmem:[%s4 + $0x1d8] sm:$0xf] %v3270
  %3527 = vst [vmem:[%s4 + $0x1dc] sm:$0xf] %v3271
  %3528 = vst [vmem:[%s4 + $0x1e0] sm:$0xf] %v3272
  %3529 = vst [vmem:[%s4 + $0x1e4] sm:$0xf] %v3273
  %3530 = vst [vmem:[%s4 + $0x1e8] sm:$0xf] %v3274
  %3531 = vst [vmem:[%s4 + $0x1ec] sm:$0xf] %v3275
  %3532 = vst [vmem:[%s4 + $0x1f0] sm:$0xf] %v3276
  %3533 = vst [vmem:[%s4 + $0x1f4] sm:$0xf] %v3277
  %3534 = vst [vmem:[%s4 + $0x1f8] sm:$0xf] %v3278
  %3535 = vst [vmem:[%s4 + $0x1fc] sm:$0xf] %v3279
  // Predicated region
  $region18: #{discriminator_f.5} parent=0 // pred_check
    _
  $region19: #{discriminator_f.5} parent=0 // pred_check_branch
    %3537 = sbr.rel (0) target = $region21
  $region20: #{discriminator_f.5} parent=0 // pred_region
    _
  $region21: #{discriminator_f.5} parent=0 // pred_fallthru
    _
  // Predicated region
  $region22: #{discriminator_f.5} parent=0 // pred_check
    _
  $region23: #{discriminator_f.5} parent=0 // pred_check_branch
    %3539 = sbr.rel (0) target = $region25
  $region24: #{discriminator_f.5} parent=0 // pred_region
    _
  $region25: #{discriminator_f.5} parent=0 // pred_fallthru
    _

// kernel: discriminator_f.6
$region0: #{discriminator_f.6}
  #allocation0 [shape = 'u32[]', space=smem, size = 0x4, offset = 0x4, fixed_abs, tag = 'smem constant byte address 0x4 - core index']
  #allocation1 [shape = 'u32[144,128]{1,0:T(1,128)}', space=vmem, size = 0x12000, scoped, tag = 'internal scratch']
  #allocation2 [shape = 'f32[256,128]{1,0:T(8,128)}', space=vmem, size = 0x20000, scoped, tag = 'scratch operand']
  %s0 = inlined_call_operand.vmem [shape: bf16[256,512], index: 0, kind: input, shape index: {}]
  %s1 = inlined_call_operand.vmem [shape: bf16[512,128], index: 1, kind: input, shape index: {}]
  %s2 = inlined_call_operand.vmem [shape: f32[1,128], index: 2, kind: input, shape index: {}]
  %s3 = inlined_call_operand.vmem [shape: f32[1,128], index: 3, kind: input, shape index: {}]
  %s4 = inlined_call_operand.vmem [shape: bf16[256,128], index: 4, kind: output, shape index: {}]
  %s5 = sld [smem:[#allocation0]]
  $region26: #{discriminator_f.6} parent=0
    _
  %s7 = ssub.s32 1, %s5
  %s8 = scalar_select 0, %s7, %s5
  // Predicated region
  $region2: #{discriminator_f.6} parent=0 // pred_check
    _
  $region3: #{discriminator_f.6} parent=0 // pred_check_branch
    %10 = sbr.rel (0) target = $region5
  $region4: #{discriminator_f.6} parent=0 // pred_region
    _
  $region5: #{discriminator_f.6} parent=0 // pred_fallthru
    _
  // Predicated region
  $region6: #{discriminator_f.6} parent=0 // pred_check
    _
  $region7: #{discriminator_f.6} parent=0 // pred_check_branch
    %12 = sbr.rel (0) target = $region9
  $region8: #{discriminator_f.6} parent=0 // pred_region
    _
  $region9: #{discriminator_f.6} parent=0 // pred_fallthru
    _
  // Predicated region
  $region10: #{discriminator_f.6} parent=0 // pred_check
    _
  $region11: #{discriminator_f.6} parent=0 // pred_check_branch
    %14 = sbr.rel (0) target = $region13
  $region12: #{discriminator_f.6} parent=0 // pred_region
    _
  $region13: #{discriminator_f.6} parent=0 // pred_fallthru
    _
  // Predicated region
  $region14: #{discriminator_f.6} parent=0 // pred_check
    _
  $region15: #{discriminator_f.6} parent=0 // pred_check_branch
    %16 = sbr.rel (0) target = $region17
  $region16: #{discriminator_f.6} parent=0 // pred_region
    _
  $region17: #{discriminator_f.6} parent=0 // pred_fallthru
    _
  %v18 = vld [vmem:[%s0] sm:$0xff]
  %v19 = vld [vmem:[%s0 + $0x8] sm:$0xff]
  %v20 = vld [vmem:[%s0 + $0x10] sm:$0xff]
  %v21 = vld [vmem:[%s0 + $0x18] sm:$0xff]
  %v22 = vld [vmem:[%s0 + $0x20] sm:$0xff]
  %v23 = vld [vmem:[%s0 + $0x28] sm:$0xff]
  %v24 = vld [vmem:[%s0 + $0x30] sm:$0xff]
  %v25 = vld [vmem:[%s0 + $0x38] sm:$0xff]
  %v26 = vld [vmem:[%s0 + $0x40] sm:$0xff]
  %v27 = vld [vmem:[%s0 + $0x48] sm:$0xff]
  %v28 = vld [vmem:[%s0 + $0x50] sm:$0xff]
  %v29 = vld [vmem:[%s0 + $0x58] sm:$0xff]
  %v30 = vld [vmem:[%s0 + $0x60] sm:$0xff]
  %v31 = vld [vmem:[%s0 + $0x68] sm:$0xff]
  %v32 = vld [vmem:[%s0 + $0x70] sm:$0xff]
  %v33 = vld [vmem:[%s0 + $0x78] sm:$0xff]
  %v34 = vld [vmem:[%s0 + $0x80] sm:$0xff]
  %v35 = vld [vmem:[%s0 + $0x88] sm:$0xff]
  %v36 = vld [vmem:[%s0 + $0x90] sm:$0xff]
  %v37 = vld [vmem:[%s0 + $0x98] sm:$0xff]
  %v38 = vld [vmem:[%s0 + $0xa0] sm:$0xff]
  %v39 = vld [vmem:[%s0 + $0xa8] sm:$0xff]
  %v40 = vld [vmem:[%s0 + $0xb0] sm:$0xff]
  %v41 = vld [vmem:[%s0 + $0xb8] sm:$0xff]
  %v42 = vld [vmem:[%s0 + $0xc0] sm:$0xff]
  %v43 = vld [vmem:[%s0 + $0xc8] sm:$0xff]
  %v44 = vld [vmem:[%s0 + $0xd0] sm:$0xff]
  %v45 = vld [vmem:[%s0 + $0xd8] sm:$0xff]
  %v46 = vld [vmem:[%s0 + $0xe0] sm:$0xff]
  %v47 = vld [vmem:[%s0 + $0xe8] sm:$0xff]
  %v48 = vld [vmem:[%s0 + $0xf0] sm:$0xff]
  %v49 = vld [vmem:[%s0 + $0xf8] sm:$0xff]
  %v50 = vld [vmem:[%s0 + $0x100] sm:$0xff]
  %v51 = vld [vmem:[%s0 + $0x108] sm:$0xff]
  %v52 = vld [vmem:[%s0 + $0x110] sm:$0xff]
  %v53 = vld [vmem:[%s0 + $0x118] sm:$0xff]
  %v54 = vld [vmem:[%s0 + $0x120] sm:$0xff]
  %v55 = vld [vmem:[%s0 + $0x128] sm:$0xff]
  %v56 = vld [vmem:[%s0 + $0x130] sm:$0xff]
  %v57 = vld [vmem:[%s0 + $0x138] sm:$0xff]
  %v58 = vld [vmem:[%s0 + $0x140] sm:$0xff]
  %v59 = vld [vmem:[%s0 + $0x148] sm:$0xff]
  %v60 = vld [vmem:[%s0 + $0x150] sm:$0xff]
  %v61 = vld [vmem:[%s0 + $0x158] sm:$0xff]
  %v62 = vld [vmem:[%s0 + $0x160] sm:$0xff]
  %v63 = vld [vmem:[%s0 + $0x168] sm:$0xff]
  %v64 = vld [vmem:[%s0 + $0x170] sm:$0xff]
  %v65 = vld [vmem:[%s0 + $0x178] sm:$0xff]
  %v66 = vld [vmem:[%s0 + $0x180] sm:$0xff]
  %v67 = vld [vmem:[%s0 + $0x188] sm:$0xff]
  %v68 = vld [vmem:[%s0 + $0x190] sm:$0xff]
  %v69 = vld [vmem:[%s0 + $0x198] sm:$0xff]
  %v70 = vld [vmem:[%s0 + $0x1a0] sm:$0xff]
  %v71 = vld [vmem:[%s0 + $0x1a8] sm:$0xff]
  %v72 = vld [vmem:[%s0 + $0x1b0] sm:$0xff]
  %v73 = vld [vmem:[%s0 + $0x1b8] sm:$0xff]
  %v74 = vld [vmem:[%s0 + $0x1c0] sm:$0xff]
  %v75 = vld [vmem:[%s0 + $0x1c8] sm:$0xff]
  %v76 = vld [vmem:[%s0 + $0x1d0] sm:$0xff]
  %v77 = vld [vmem:[%s0 + $0x1d8] sm:$0xff]
  %v78 = vld [vmem:[%s0 + $0x1e0] sm:$0xff]
  %v79 = vld [vmem:[%s0 + $0x1e8] sm:$0xff]
  %v80 = vld [vmem:[%s0 + $0x1f0] sm:$0xff]
  %v81 = vld [vmem:[%s0 + $0x1f8] sm:$0xff]
  %v82 = vld [vmem:[%s1] sm:$0xf]
  %v83 = vld [vmem:[%s1 + $0x4] sm:$0xf]
  %v84 = vld [vmem:[%s1 + $0x8] sm:$0xf]
  %v85 = vld [vmem:[%s1 + $0xc] sm:$0xf]
  %v86 = vld [vmem:[%s1 + $0x10] sm:$0xf]
  %v87 = vld [vmem:[%s1 + $0x14] sm:$0xf]
  %v88 = vld [vmem:[%s1 + $0x18] sm:$0xf]
  %v89 = vld [vmem:[%s1 + $0x1c] sm:$0xf]
  %v90 = vld [vmem:[%s1 + $0x20] sm:$0xf]
  %v91 = vld [vmem:[%s1 + $0x24] sm:$0xf]
  %v92 = vld [vmem:[%s1 + $0x28] sm:$0xf]
  %v93 = vld [vmem:[%s1 + $0x2c] sm:$0xf]
  %v94 = vld [vmem:[%s1 + $0x30] sm:$0xf]
  %v95 = vld [vmem:[%s1 + $0x34] sm:$0xf]
  %v96 = vld [vmem:[%s1 + $0x38] sm:$0xf]
  %v97 = vld [vmem:[%s1 + $0x3c] sm:$0xf]
  %v98 = vld [vmem:[%s1 + $0x40] sm:$0xf]
  %v99 = vld [vmem:[%s1 + $0x44] sm:$0xf]
  %v100 = vld [vmem:[%s1 + $0x48] sm:$0xf]
  %v101 = vld [vmem:[%s1 + $0x4c] sm:$0xf]
  %v102 = vld [vmem:[%s1 + $0x50] sm:$0xf]
  %v103 = vld [vmem:[%s1 + $0x54] sm:$0xf]
  %v104 = vld [vmem:[%s1 + $0x58] sm:$0xf]
  %v105 = vld [vmem:[%s1 + $0x5c] sm:$0xf]
  %v106 = vld [vmem:[%s1 + $0x60] sm:$0xf]
  %v107 = vld [vmem:[%s1 + $0x64] sm:$0xf]
  %v108 = vld [vmem:[%s1 + $0x68] sm:$0xf]
  %v109 = vld [vmem:[%s1 + $0x6c] sm:$0xf]
  %v110 = vld [vmem:[%s1 + $0x70] sm:$0xf]
  %v111 = vld [vmem:[%s1 + $0x74] sm:$0xf]
  %v112 = vld [vmem:[%s1 + $0x78] sm:$0xf]
  %v113 = vld [vmem:[%s1 + $0x7c] sm:$0xf]
  %v114 = vld [vmem:[%s1 + $0x80] sm:$0xf]
  %v115 = vld [vmem:[%s1 + $0x84] sm:$0xf]
  %v116 = vld [vmem:[%s1 + $0x88] sm:$0xf]
  %v117 = vld [vmem:[%s1 + $0x8c] sm:$0xf]
  %v118 = vld [vmem:[%s1 + $0x90] sm:$0xf]
  %v119 = vld [vmem:[%s1 + $0x94] sm:$0xf]
  %v120 = vld [vmem:[%s1 + $0x98] sm:$0xf]
  %v121 = vld [vmem:[%s1 + $0x9c] sm:$0xf]
  %v122 = vld [vmem:[%s1 + $0xa0] sm:$0xf]
  %v123 = vld [vmem:[%s1 + $0xa4] sm:$0xf]
  %v124 = vld [vmem:[%s1 + $0xa8] sm:$0xf]
  %v125 = vld [vmem:[%s1 + $0xac] sm:$0xf]
  %v126 = vld [vmem:[%s1 + $0xb0] sm:$0xf]
  %v127 = vld [vmem:[%s1 + $0xb4] sm:$0xf]
  %v128 = vld [vmem:[%s1 + $0xb8] sm:$0xf]
  %v129 = vld [vmem:[%s1 + $0xbc] sm:$0xf]
  %v130 = vld [vmem:[%s1 + $0xc0] sm:$0xf]
  %v131 = vld [vmem:[%s1 + $0xc4] sm:$0xf]
  %v132 = vld [vmem:[%s1 + $0xc8] sm:$0xf]
  %v133 = vld [vmem:[%s1 + $0xcc] sm:$0xf]
  %v134 = vld [vmem:[%s1 + $0xd0] sm:$0xf]
  %v135 = vld [vmem:[%s1 + $0xd4] sm:$0xf]
  %v136 = vld [vmem:[%s1 + $0xd8] sm:$0xf]
  %v137 = vld [vmem:[%s1 + $0xdc] sm:$0xf]
  %v138 = vld [vmem:[%s1 + $0xe0] sm:$0xf]
  %v139 = vld [vmem:[%s1 + $0xe4] sm:$0xf]
  %v140 = vld [vmem:[%s1 + $0xe8] sm:$0xf]
  %v141 = vld [vmem:[%s1 + $0xec] sm:$0xf]
  %v142 = vld [vmem:[%s1 + $0xf0] sm:$0xf]
  %v143 = vld [vmem:[%s1 + $0xf4] sm:$0xf]
  %v144 = vld [vmem:[%s1 + $0xf8] sm:$0xf]
  %v145 = vld [vmem:[%s1 + $0xfc] sm:$0xf]
  %v210 = vunpack.c.l.b16 %v18
  %v211 = vunpack.c.h.b16 %v18
  %v212 = vunpack.c.l.b16 %v19
  %v213 = vunpack.c.h.b16 %v19
  %v214 = vunpack.c.l.b16 %v20
  %v215 = vunpack.c.h.b16 %v20
  %v216 = vunpack.c.l.b16 %v21
  %v217 = vunpack.c.h.b16 %v21
  %v218 = vunpack.c.l.b16 %v22
  %v219 = vunpack.c.h.b16 %v22
  %v220 = vunpack.c.l.b16 %v23
  %v221 = vunpack.c.h.b16 %v23
  %v222 = vunpack.c.l.b16 %v24
  %v223 = vunpack.c.h.b16 %v24
  %v224 = vunpack.c.l.b16 %v25
  %v225 = vunpack.c.h.b16 %v25
  %v226 = vunpack.c.l.b16 %v26
  %v227 = vunpack.c.h.b16 %v26
  %v228 = vunpack.c.l.b16 %v27
  %v229 = vunpack.c.h.b16 %v27
  %v230 = vunpack.c.l.b16 %v28
  %v231 = vunpack.c.h.b16 %v28
  %v232 = vunpack.c.l.b16 %v29
  %v233 = vunpack.c.h.b16 %v29
  %v234 = vunpack.c.l.b16 %v30
  %v235 = vunpack.c.h.b16 %v30
  %v236 = vunpack.c.l.b16 %v31
  %v237 = vunpack.c.h.b16 %v31
  %v238 = vunpack.c.l.b16 %v32
  %v239 = vunpack.c.h.b16 %v32
  %v240 = vunpack.c.l.b16 %v33
  %v241 = vunpack.c.h.b16 %v33
  %v242 = vunpack.c.l.b16 %v34
  %v243 = vunpack.c.h.b16 %v34
  %v244 = vunpack.c.l.b16 %v35
  %v245 = vunpack.c.h.b16 %v35
  %v246 = vunpack.c.l.b16 %v36
  %v247 = vunpack.c.h.b16 %v36
  %v248 = vunpack.c.l.b16 %v37
  %v249 = vunpack.c.h.b16 %v37
  %v250 = vunpack.c.l.b16 %v38
  %v251 = vunpack.c.h.b16 %v38
  %v252 = vunpack.c.l.b16 %v39
  %v253 = vunpack.c.h.b16 %v39
  %v254 = vunpack.c.l.b16 %v40
  %v255 = vunpack.c.h.b16 %v40
  %v256 = vunpack.c.l.b16 %v41
  %v257 = vunpack.c.h.b16 %v41
  %v258 = vunpack.c.l.b16 %v42
  %v259 = vunpack.c.h.b16 %v42
  %v260 = vunpack.c.l.b16 %v43
  %v261 = vunpack.c.h.b16 %v43
  %v262 = vunpack.c.l.b16 %v44
  %v263 = vunpack.c.h.b16 %v44
  %v264 = vunpack.c.l.b16 %v45
  %v265 = vunpack.c.h.b16 %v45
  %v266 = vunpack.c.l.b16 %v46
  %v267 = vunpack.c.h.b16 %v46
  %v268 = vunpack.c.l.b16 %v47
  %v269 = vunpack.c.h.b16 %v47
  %v270 = vunpack.c.l.b16 %v48
  %v271 = vunpack.c.h.b16 %v48
  %v272 = vunpack.c.l.b16 %v49
  %v273 = vunpack.c.h.b16 %v49
  %v274 = vunpack.c.l.b16 %v50
  %v275 = vunpack.c.h.b16 %v50
  %v276 = vunpack.c.l.b16 %v51
  %v277 = vunpack.c.h.b16 %v51
  %v278 = vunpack.c.l.b16 %v52
  %v279 = vunpack.c.h.b16 %v52
  %v280 = vunpack.c.l.b16 %v53
  %v281 = vunpack.c.h.b16 %v53
  %v282 = vunpack.c.l.b16 %v54
  %v283 = vunpack.c.h.b16 %v54
  %v284 = vunpack.c.l.b16 %v55
  %v285 = vunpack.c.h.b16 %v55
  %v286 = vunpack.c.l.b16 %v56
  %v287 = vunpack.c.h.b16 %v56
  %v288 = vunpack.c.l.b16 %v57
  %v289 = vunpack.c.h.b16 %v57
  %v290 = vunpack.c.l.b16 %v58
  %v291 = vunpack.c.h.b16 %v58
  %v292 = vunpack.c.l.b16 %v59
  %v293 = vunpack.c.h.b16 %v59
  %v294 = vunpack.c.l.b16 %v60
  %v295 = vunpack.c.h.b16 %v60
  %v296 = vunpack.c.l.b16 %v61
  %v297 = vunpack.c.h.b16 %v61
  %v298 = vunpack.c.l.b16 %v62
  %v299 = vunpack.c.h.b16 %v62
  %v300 = vunpack.c.l.b16 %v63
  %v301 = vunpack.c.h.b16 %v63
  %v302 = vunpack.c.l.b16 %v64
  %v303 = vunpack.c.h.b16 %v64
  %v304 = vunpack.c.l.b16 %v65
  %v305 = vunpack.c.h.b16 %v65
  %v306 = vunpack.c.l.b16 %v66
  %v307 = vunpack.c.h.b16 %v66
  %v308 = vunpack.c.l.b16 %v67
  %v309 = vunpack.c.h.b16 %v67
  %v310 = vunpack.c.l.b16 %v68
  %v311 = vunpack.c.h.b16 %v68
  %v312 = vunpack.c.l.b16 %v69
  %v313 = vunpack.c.h.b16 %v69
  %v314 = vunpack.c.l.b16 %v70
  %v315 = vunpack.c.h.b16 %v70
  %v316 = vunpack.c.l.b16 %v71
  %v317 = vunpack.c.h.b16 %v71
  %v318 = vunpack.c.l.b16 %v72
  %v319 = vunpack.c.h.b16 %v72
  %v320 = vunpack.c.l.b16 %v73
  %v321 = vunpack.c.h.b16 %v73
  %v322 = vunpack.c.l.b16 %v74
  %v323 = vunpack.c.h.b16 %v74
  %v324 = vunpack.c.l.b16 %v75
  %v325 = vunpack.c.h.b16 %v75
  %v326 = vunpack.c.l.b16 %v76
  %v327 = vunpack.c.h.b16 %v76
  %v328 = vunpack.c.l.b16 %v77
  %v329 = vunpack.c.h.b16 %v77
  %v330 = vunpack.c.l.b16 %v78
  %v331 = vunpack.c.h.b16 %v78
  %v332 = vunpack.c.l.b16 %v79
  %v333 = vunpack.c.h.b16 %v79
  %v334 = vunpack.c.l.b16 %v80
  %v335 = vunpack.c.h.b16 %v80
  %v336 = vunpack.c.l.b16 %v81
  %v337 = vunpack.c.h.b16 %v81
  %v338 = vpack.c.b16 %v214, %v210
  %v339 = vpack.c.b16 %v215, %v211
  %v340 = vpack.c.b16 %v216, %v212
  %v341 = vpack.c.b16 %v217, %v213
  %v342 = vpack.c.b16 %v222, %v218
  %v343 = vpack.c.b16 %v223, %v219
  %v344 = vpack.c.b16 %v224, %v220
  %v345 = vpack.c.b16 %v225, %v221
  %v346 = vpack.c.b16 %v230, %v226
  %v347 = vpack.c.b16 %v231, %v227
  %v348 = vpack.c.b16 %v232, %v228
  %v349 = vpack.c.b16 %v233, %v229
  %v350 = vpack.c.b16 %v238, %v234
  %v351 = vpack.c.b16 %v239, %v235
  %v352 = vpack.c.b16 %v240, %v236
  %v353 = vpack.c.b16 %v241, %v237
  %v354 = vpack.c.b16 %v246, %v242
  %v355 = vpack.c.b16 %v247, %v243
  %v356 = vpack.c.b16 %v248, %v244
  %v357 = vpack.c.b16 %v249, %v245
  %v358 = vpack.c.b16 %v254, %v250
  %v359 = vpack.c.b16 %v255, %v251
  %v360 = vpack.c.b16 %v256, %v252
  %v361 = vpack.c.b16 %v257, %v253
  %v362 = vpack.c.b16 %v262, %v258
  %v363 = vpack.c.b16 %v263, %v259
  %v364 = vpack.c.b16 %v264, %v260
  %v365 = vpack.c.b16 %v265, %v261
  %v366 = vpack.c.b16 %v270, %v266
  %v367 = vpack.c.b16 %v271, %v267
  %v368 = vpack.c.b16 %v272, %v268
  %v369 = vpack.c.b16 %v273, %v269
  %v370 = vpack.c.b16 %v278, %v274
  %v371 = vpack.c.b16 %v279, %v275
  %v372 = vpack.c.b16 %v280, %v276
  %v373 = vpack.c.b16 %v281, %v277
  %v374 = vpack.c.b16 %v286, %v282
  %v375 = vpack.c.b16 %v287, %v283
  %v376 = vpack.c.b16 %v288, %v284
  %v377 = vpack.c.b16 %v289, %v285
  %v378 = vpack.c.b16 %v294, %v290
  %v379 = vpack.c.b16 %v295, %v291
  %v380 = vpack.c.b16 %v296, %v292
  %v381 = vpack.c.b16 %v297, %v293
  %v382 = vpack.c.b16 %v302, %v298
  %v383 = vpack.c.b16 %v303, %v299
  %v384 = vpack.c.b16 %v304, %v300
  %v385 = vpack.c.b16 %v305, %v301
  %v386 = vpack.c.b16 %v310, %v306
  %v387 = vpack.c.b16 %v311, %v307
  %v388 = vpack.c.b16 %v312, %v308
  %v389 = vpack.c.b16 %v313, %v309
  %v390 = vpack.c.b16 %v318, %v314
  %v391 = vpack.c.b16 %v319, %v315
  %v392 = vpack.c.b16 %v320, %v316
  %v393 = vpack.c.b16 %v321, %v317
  %v394 = vpack.c.b16 %v326, %v322
  %v395 = vpack.c.b16 %v327, %v323
  %v396 = vpack.c.b16 %v328, %v324
  %v397 = vpack.c.b16 %v329, %v325
  %v398 = vpack.c.b16 %v334, %v330
  %v399 = vpack.c.b16 %v335, %v331
  %v400 = vpack.c.b16 %v336, %v332
  %v401 = vpack.c.b16 %v337, %v333
  %v530 = vunpack.c.l.b16 %v82
  %v531 = vunpack.c.l.b16 %v83
  %v532 = vunpack.c.l.b16 %v84
  %v533 = vunpack.c.l.b16 %v85
  %v534 = vunpack.c.l.b16 %v86
  %v535 = vunpack.c.l.b16 %v87
  %v536 = vunpack.c.l.b16 %v88
  %v537 = vunpack.c.l.b16 %v89
  %v538 = vunpack.c.l.b16 %v90
  %v539 = vunpack.c.l.b16 %v91
  %v540 = vunpack.c.l.b16 %v92
  %v541 = vunpack.c.l.b16 %v93
  %v542 = vunpack.c.l.b16 %v94
  %v543 = vunpack.c.l.b16 %v95
  %v544 = vunpack.c.l.b16 %v96
  %v545 = vunpack.c.l.b16 %v97
  %v546 = vunpack.c.l.b16 %v98
  %v547 = vunpack.c.l.b16 %v99
  %v548 = vunpack.c.l.b16 %v100
  %v549 = vunpack.c.l.b16 %v101
  %v550 = vunpack.c.l.b16 %v102
  %v551 = vunpack.c.l.b16 %v103
  %v552 = vunpack.c.l.b16 %v104
  %v553 = vunpack.c.l.b16 %v105
  %v554 = vunpack.c.l.b16 %v106
  %v555 = vunpack.c.l.b16 %v107
  %v556 = vunpack.c.l.b16 %v108
  %v557 = vunpack.c.l.b16 %v109
  %v558 = vunpack.c.l.b16 %v110
  %v559 = vunpack.c.l.b16 %v111
  %v560 = vunpack.c.l.b16 %v112
  %v561 = vunpack.c.l.b16 %v113
  %v562 = vunpack.c.l.b16 %v114
  %v563 = vunpack.c.l.b16 %v115
  %v564 = vunpack.c.l.b16 %v116
  %v565 = vunpack.c.l.b16 %v117
  %v566 = vunpack.c.l.b16 %v118
  %v567 = vunpack.c.l.b16 %v119
  %v568 = vunpack.c.l.b16 %v120
  %v569 = vunpack.c.l.b16 %v121
  %v570 = vunpack.c.l.b16 %v122
  %v571 = vunpack.c.l.b16 %v123
  %v572 = vunpack.c.l.b16 %v124
  %v573 = vunpack.c.l.b16 %v125
  %v574 = vunpack.c.l.b16 %v126
  %v575 = vunpack.c.l.b16 %v127
  %v576 = vunpack.c.l.b16 %v128
  %v577 = vunpack.c.l.b16 %v129
  %v578 = vunpack.c.l.b16 %v130
  %v579 = vunpack.c.l.b16 %v131
  %v580 = vunpack.c.l.b16 %v132
  %v581 = vunpack.c.l.b16 %v133
  %v582 = vunpack.c.l.b16 %v134
  %v583 = vunpack.c.l.b16 %v135
  %v584 = vunpack.c.l.b16 %v136
  %v585 = vunpack.c.l.b16 %v137
  %v586 = vunpack.c.l.b16 %v138
  %v587 = vunpack.c.l.b16 %v139
  %v588 = vunpack.c.l.b16 %v140
  %v589 = vunpack.c.l.b16 %v141
  %v590 = vunpack.c.l.b16 %v142
  %v591 = vunpack.c.l.b16 %v143
  %v592 = vunpack.c.l.b16 %v144
  %v593 = vunpack.c.l.b16 %v145
  %v594 = vpack.c.b16 %v531, %v530
  %v595 = vpack.c.b16 %v533, %v532
  %v596 = vpack.c.b16 %v535, %v534
  %v597 = vpack.c.b16 %v537, %v536
  %v598 = vpack.c.b16 %v539, %v538
  %v599 = vpack.c.b16 %v541, %v540
  %v600 = vpack.c.b16 %v543, %v542
  %v601 = vpack.c.b16 %v545, %v544
  %v602 = vpack.c.b16 %v547, %v546
  %v603 = vpack.c.b16 %v549, %v548
  %v604 = vpack.c.b16 %v551, %v550
  %v605 = vpack.c.b16 %v553, %v552
  %v606 = vpack.c.b16 %v555, %v554
  %v607 = vpack.c.b16 %v557, %v556
  %v608 = vpack.c.b16 %v559, %v558
  %v609 = vpack.c.b16 %v561, %v560
  %v610 = vpack.c.b16 %v563, %v562
  %v611 = vpack.c.b16 %v565, %v564
  %v612 = vpack.c.b16 %v567, %v566
  %v613 = vpack.c.b16 %v569, %v568
  %v614 = vpack.c.b16 %v571, %v570
  %v615 = vpack.c.b16 %v573, %v572
  %v616 = vpack.c.b16 %v575, %v574
  %v617 = vpack.c.b16 %v577, %v576
  %v618 = vpack.c.b16 %v579, %v578
  %v619 = vpack.c.b16 %v581, %v580
  %v620 = vpack.c.b16 %v583, %v582
  %v621 = vpack.c.b16 %v585, %v584
  %v622 = vpack.c.b16 %v587, %v586
  %v623 = vpack.c.b16 %v589, %v588
  %v624 = vpack.c.b16 %v591, %v590
  %v625 = vpack.c.b16 %v593, %v592
  %658 = vmatprep.subr.bf16.mxu0 0
  %659 = vmatpush1.bf16.msra.mxu0 %v594
  %660 = vmatprep.subr.bf16.mxu0 0
  %661 = vmatpush1.bf16.msra.mxu0 %v595
  %662 = vmatprep.subr.bf16.mxu0 0
  %663 = vmatpush1.bf16.msra.mxu0 %v596
  %664 = vmatprep.subr.bf16.mxu0 0
  %665 = vmatpush1.bf16.msra.mxu0 %v597
  %666 = vmatprep.subr.bf16.mxu0 0
  %667 = vmatpush1.bf16.msra.mxu0 %v598
  %668 = vmatprep.subr.bf16.mxu0 0
  %669 = vmatpush1.bf16.msra.mxu0 %v599
  %670 = vmatprep.subr.bf16.mxu0 0
  %671 = vmatpush1.bf16.msra.mxu0 %v600
  %672 = vmatprep.subr.bf16.mxu0 0
  %673 = vmatpush1.bf16.msra.mxu0 %v601
  %674 = vmatprep.subr.bf16.mxu0 0
  %675 = vmatpush1.bf16.msra.mxu0 %v602
  %676 = vmatprep.subr.bf16.mxu0 0
  %677 = vmatpush1.bf16.msra.mxu0 %v603
  %678 = vmatprep.subr.bf16.mxu0 0
  %679 = vmatpush1.bf16.msra.mxu0 %v604
  %680 = vmatprep.subr.bf16.mxu0 0
  %681 = vmatpush1.bf16.msra.mxu0 %v605
  %682 = vmatprep.subr.bf16.mxu0 0
  %683 = vmatpush1.bf16.msra.mxu0 %v606
  %684 = vmatprep.subr.bf16.mxu0 0
  %685 = vmatpush1.bf16.msra.mxu0 %v607
  %686 = vmatprep.subr.bf16.mxu0 0
  %687 = vmatpush1.bf16.msra.mxu0 %v608
  %688 = vmatprep.subr.bf16.mxu0 0
  %689 = vmatpush1.bf16.msra.mxu0 %v609
  %690 = vmatprep.mubr.bf16.mxu0 %v339
  %691 = vmatmul.mubr.bf16.gmra.mrb[0].mxu0 %v338
  %v692 = vpop.f32.mrb[0].mxu0
  %v693 = vadd.f32 0.0, %v692
  %v694 = vpop.f32.mrb[0].mxu0
  %v695 = vpop.f32.mrb[0].mxu0
  %v696 = vadd.f32 0.0, %v695
  %v697 = vpop.f32.mrb[0].mxu0
  %698 = vmatprep.mubr.bf16.mxu0 %v343
  %699 = vmatmul.mubr.bf16.gmra.mrb[0].mxu0 %v342
  %v700 = vpop.f32.mrb[0].mxu0
  %v701 = vadd.f32 0.0, %v700
  %v702 = vpop.f32.mrb[0].mxu0
  %v703 = vpop.f32.mrb[0].mxu0
  %v704 = vadd.f32 0.0, %v703
  %v705 = vpop.f32.mrb[0].mxu0
  %706 = vmatprep.mubr.bf16.mxu0 %v347
  %707 = vmatmul.mubr.bf16.gmra.mrb[0].mxu0 %v346
  %v708 = vpop.f32.mrb[0].mxu0
  %v709 = vadd.f32 0.0, %v708
  %v710 = vpop.f32.mrb[0].mxu0
  %v711 = vpop.f32.mrb[0].mxu0
  %v712 = vadd.f32 0.0, %v711
  %v713 = vpop.f32.mrb[0].mxu0
  %714 = vmatprep.mubr.bf16.mxu0 %v351
  %715 = vmatmul.mubr.bf16.gmra.mrb[0].mxu0 %v350
  %v716 = vpop.f32.mrb[0].mxu0
  %v717 = vadd.f32 0.0, %v716
  %v718 = vpop.f32.mrb[0].mxu0
  %v719 = vpop.f32.mrb[0].mxu0
  %v720 = vadd.f32 0.0, %v719
  %v721 = vpop.f32.mrb[0].mxu0
  %722 = vmatprep.mubr.bf16.mxu0 %v355
  %723 = vmatmul.mubr.bf16.gmra.mrb[0].mxu0 %v354
  %v724 = vpop.f32.mrb[0].mxu0
  %v725 = vadd.f32 0.0, %v724
  %v726 = vpop.f32.mrb[0].mxu0
  %v727 = vpop.f32.mrb[0].mxu0
  %v728 = vadd.f32 0.0, %v727
  %v729 = vpop.f32.mrb[0].mxu0
  %730 = vmatprep.mubr.bf16.mxu0 %v359
  %731 = vmatmul.mubr.bf16.gmra.mrb[0].mxu0 %v358
  %v732 = vpop.f32.mrb[0].mxu0
  %v733 = vadd.f32 0.0, %v732
  %v734 = vpop.f32.mrb[0].mxu0
  %v735 = vpop.f32.mrb[0].mxu0
  %v736 = vadd.f32 0.0, %v735
  %v737 = vpop.f32.mrb[0].mxu0
  %738 = vmatprep.mubr.bf16.mxu0 %v363
  %739 = vmatmul.mubr.bf16.gmra.mrb[0].mxu0 %v362
  %v740 = vpop.f32.mrb[0].mxu0
  %v741 = vadd.f32 0.0, %v740
  %v742 = vpop.f32.mrb[0].mxu0
  %v743 = vpop.f32.mrb[0].mxu0
  %v744 = vadd.f32 0.0, %v743
  %v745 = vpop.f32.mrb[0].mxu0
  %746 = vmatprep.mubr.bf16.mxu0 %v367
  %747 = vmatmul.mubr.bf16.gmra.mrb[0].mxu0 %v366
  %v748 = vpop.f32.mrb[0].mxu0
  %v749 = vadd.f32 0.0, %v748
  %v750 = vpop.f32.mrb[0].mxu0
  %v751 = vpop.f32.mrb[0].mxu0
  %v752 = vadd.f32 0.0, %v751
  %v753 = vpop.f32.mrb[0].mxu0
  %754 = vmatprep.mubr.bf16.mxu0 %v371
  %755 = vmatmul.mubr.bf16.gmra.mrb[0].mxu0 %v370
  %v756 = vpop.f32.mrb[0].mxu0
  %v757 = vadd.f32 0.0, %v756
  %v758 = vpop.f32.mrb[0].mxu0
  %v759 = vpop.f32.mrb[0].mxu0
  %v760 = vadd.f32 0.0, %v759
  %v761 = vpop.f32.mrb[0].mxu0
  %762 = vmatprep.mubr.bf16.mxu0 %v375
  %763 = vmatmul.mubr.bf16.gmra.mrb[0].mxu0 %v374
  %v764 = vpop.f32.mrb[0].mxu0
  %v765 = vadd.f32 0.0, %v764
  %v766 = vpop.f32.mrb[0].mxu0
  %v767 = vpop.f32.mrb[0].mxu0
  %v768 = vadd.f32 0.0, %v767
  %v769 = vpop.f32.mrb[0].mxu0
  %770 = vmatprep.mubr.bf16.mxu0 %v379
  %771 = vmatmul.mubr.bf16.gmra.mrb[0].mxu0 %v378
  %v772 = vpop.f32.mrb[0].mxu0
  %v773 = vadd.f32 0.0, %v772
  %v774 = vpop.f32.mrb[0].mxu0
  %v775 = vpop.f32.mrb[0].mxu0
  %v776 = vadd.f32 0.0, %v775
  %v777 = vpop.f32.mrb[0].mxu0
  %778 = vmatprep.mubr.bf16.mxu0 %v383
  %779 = vmatmul.mubr.bf16.gmra.mrb[0].mxu0 %v382
  %v780 = vpop.f32.mrb[0].mxu0
  %v781 = vadd.f32 0.0, %v780
  %v782 = vpop.f32.mrb[0].mxu0
  %v783 = vpop.f32.mrb[0].mxu0
  %v784 = vadd.f32 0.0, %v783
  %v785 = vpop.f32.mrb[0].mxu0
  %786 = vmatprep.mubr.bf16.mxu0 %v387
  %787 = vmatmul.mubr.bf16.gmra.mrb[0].mxu0 %v386
  %v788 = vpop.f32.mrb[0].mxu0
  %v789 = vadd.f32 0.0, %v788
  %v790 = vpop.f32.mrb[0].mxu0
  %v791 = vpop.f32.mrb[0].mxu0
  %v792 = vadd.f32 0.0, %v791
  %v793 = vpop.f32.mrb[0].mxu0
  %794 = vmatprep.mubr.bf16.mxu0 %v391
  %795 = vmatmul.mubr.bf16.gmra.mrb[0].mxu0 %v390
  %v796 = vpop.f32.mrb[0].mxu0
  %v797 = vadd.f32 0.0, %v796
  %v798 = vpop.f32.mrb[0].mxu0
  %v799 = vpop.f32.mrb[0].mxu0
  %v800 = vadd.f32 0.0, %v799
  %v801 = vpop.f32.mrb[0].mxu0
  %802 = vmatprep.mubr.bf16.mxu0 %v395
  %803 = vmatmul.mubr.bf16.gmra.mrb[0].mxu0 %v394
  %v804 = vpop.f32.mrb[0].mxu0
  %v805 = vadd.f32 0.0, %v804
  %v806 = vpop.f32.mrb[0].mxu0
  %v807 = vpop.f32.mrb[0].mxu0
  %v808 = vadd.f32 0.0, %v807
  %v809 = vpop.f32.mrb[0].mxu0
  %810 = vmatprep.mubr.bf16.mxu0 %v399
  %811 = vmatmul.mubr.bf16.gmra.mrb[0].mxu0 %v398
  %v812 = vpop.f32.mrb[0].mxu0
  %v813 = vadd.f32 0.0, %v812
  %v814 = vpop.f32.mrb[0].mxu0
  %v815 = vpop.f32.mrb[0].mxu0
  %v816 = vadd.f32 0.0, %v815
  %v817 = vpop.f32.mrb[0].mxu0
  %818 = vdwg.mxu0
  %819 = vmatprep.subr.bf16.mxu0 0
  %820 = vmatpush1.bf16.msra.mxu0 %v610
  %821 = vmatprep.subr.bf16.mxu0 0
  %822 = vmatpush1.bf16.msra.mxu0 %v611
  %823 = vmatprep.subr.bf16.mxu0 0
  %824 = vmatpush1.bf16.msra.mxu0 %v612
  %825 = vmatprep.subr.bf16.mxu0 0
  %826 = vmatpush1.bf16.msra.mxu0 %v613
  %827 = vmatprep.subr.bf16.mxu0 0
  %828 = vmatpush1.bf16.msra.mxu0 %v614
  %829 = vmatprep.subr.bf16.mxu0 0
  %830 = vmatpush1.bf16.msra.mxu0 %v615
  %831 = vmatprep.subr.bf16.mxu0 0
  %832 = vmatpush1.bf16.msra.mxu0 %v616
  %833 = vmatprep.subr.bf16.mxu0 0
  %834 = vmatpush1.bf16.msra.mxu0 %v617
  %835 = vmatprep.subr.bf16.mxu0 0
  %836 = vmatpush1.bf16.msra.mxu0 %v618
  %837 = vmatprep.subr.bf16.mxu0 0
  %838 = vmatpush1.bf16.msra.mxu0 %v619
  %839 = vmatprep.subr.bf16.mxu0 0
  %840 = vmatpush1.bf16.msra.mxu0 %v620
  %841 = vmatprep.subr.bf16.mxu0 0
  %842 = vmatpush1.bf16.msra.mxu0 %v621
  %843 = vmatprep.subr.bf16.mxu0 0
  %844 = vmatpush1.bf16.msra.mxu0 %v622
  %845 = vmatprep.subr.bf16.mxu0 0
  %846 = vmatpush1.bf16.msra.mxu0 %v623
  %847 = vmatprep.subr.bf16.mxu0 0
  %848 = vmatpush1.bf16.msra.mxu0 %v624
  %849 = vmatprep.subr.bf16.mxu0 0
  %850 = vmatpush1.bf16.msra.mxu0 %v625
  %851 = vmatprep.mubr.bf16.mxu0 %v341
  %852 = vmatmul.mubr.bf16.gmra.mrb[0].mxu0 %v340
  %v853 = vpop.f32.mrb[0].mxu0
  %v854 = vadd.f32 %v693, %v853
  %v855 = vpop.f32.mrb[0].mxu0
  %v856 = vpop.f32.mrb[0].mxu0
  %v857 = vadd.f32 %v696, %v856
  %v858 = vpop.f32.mrb[0].mxu0
  %859 = vmatprep.mubr.bf16.mxu0 %v345
  %860 = vmatmul.mubr.bf16.gmra.mrb[0].mxu0 %v344
  %v861 = vpop.f32.mrb[0].mxu0
  %v862 = vadd.f32 %v701, %v861
  %v863 = vpop.f32.mrb[0].mxu0
  %v864 = vpop.f32.mrb[0].mxu0
  %v865 = vadd.f32 %v704, %v864
  %v866 = vpop.f32.mrb[0].mxu0
  %867 = vmatprep.mubr.bf16.mxu0 %v349
  %868 = vmatmul.mubr.bf16.gmra.mrb[0].mxu0 %v348
  %v869 = vpop.f32.mrb[0].mxu0
  %v870 = vadd.f32 %v709, %v869
  %v871 = vpop.f32.mrb[0].mxu0
  %v872 = vpop.f32.mrb[0].mxu0
  %v873 = vadd.f32 %v712, %v872
  %v874 = vpop.f32.mrb[0].mxu0
  %875 = vmatprep.mubr.bf16.mxu0 %v353
  %876 = vmatmul.mubr.bf16.gmra.mrb[0].mxu0 %v352
  %v877 = vpop.f32.mrb[0].mxu0
  %v878 = vadd.f32 %v717, %v877
  %v879 = vpop.f32.mrb[0].mxu0
  %v880 = vpop.f32.mrb[0].mxu0
  %v881 = vadd.f32 %v720, %v880
  %v882 = vpop.f32.mrb[0].mxu0
  %883 = vmatprep.mubr.bf16.mxu0 %v357
  %884 = vmatmul.mubr.bf16.gmra.mrb[0].mxu0 %v356
  %v885 = vpop.f32.mrb[0].mxu0
  %v886 = vadd.f32 %v725, %v885
  %v887 = vpop.f32.mrb[0].mxu0
  %v888 = vpop.f32.mrb[0].mxu0
  %v889 = vadd.f32 %v728, %v888
  %v890 = vpop.f32.mrb[0].mxu0
  %891 = vmatprep.mubr.bf16.mxu0 %v361
  %892 = vmatmul.mubr.bf16.gmra.mrb[0].mxu0 %v360
  %v893 = vpop.f32.mrb[0].mxu0
  %v894 = vadd.f32 %v733, %v893
  %v895 = vpop.f32.mrb[0].mxu0
  %v896 = vpop.f32.mrb[0].mxu0
  %v897 = vadd.f32 %v736, %v896
  %v898 = vpop.f32.mrb[0].mxu0
  %899 = vmatprep.mubr.bf16.mxu0 %v365
  %900 = vmatmul.mubr.bf16.gmra.mrb[0].mxu0 %v364
  %v901 = vpop.f32.mrb[0].mxu0
  %v902 = vadd.f32 %v741, %v901
  %v903 = vpop.f32.mrb[0].mxu0
  %v904 = vpop.f32.mrb[0].mxu0
  %v905 = vadd.f32 %v744, %v904
  %v906 = vpop.f32.mrb[0].mxu0
  %907 = vmatprep.mubr.bf16.mxu0 %v369
  %908 = vmatmul.mubr.bf16.gmra.mrb[0].mxu0 %v368
  %v909 = vpop.f32.mrb[0].mxu0
  %v910 = vadd.f32 %v749, %v909
  %v911 = vpop.f32.mrb[0].mxu0
  %v912 = vpop.f32.mrb[0].mxu0
  %v913 = vadd.f32 %v752, %v912
  %v914 = vpop.f32.mrb[0].mxu0
  %915 = vmatprep.mubr.bf16.mxu0 %v373
  %916 = vmatmul.mubr.bf16.gmra.mrb[0].mxu0 %v372
  %v917 = vpop.f32.mrb[0].mxu0
  %v918 = vadd.f32 %v757, %v917
  %v919 = vpop.f32.mrb[0].mxu0
  %v920 = vpop.f32.mrb[0].mxu0
  %v921 = vadd.f32 %v760, %v920
  %v922 = vpop.f32.mrb[0].mxu0
  %923 = vmatprep.mubr.bf16.mxu0 %v377
  %924 = vmatmul.mubr.bf16.gmra.mrb[0].mxu0 %v376
  %v925 = vpop.f32.mrb[0].mxu0
  %v926 = vadd.f32 %v765, %v925
  %v927 = vpop.f32.mrb[0].mxu0
  %v928 = vpop.f32.mrb[0].mxu0
  %v929 = vadd.f32 %v768, %v928
  %v930 = vpop.f32.mrb[0].mxu0
  %931 = vmatprep.mubr.bf16.mxu0 %v381
  %932 = vmatmul.mubr.bf16.gmra.mrb[0].mxu0 %v380
  %v933 = vpop.f32.mrb[0].mxu0
  %v934 = vadd.f32 %v773, %v933
  %v935 = vpop.f32.mrb[0].mxu0
  %v936 = vpop.f32.mrb[0].mxu0
  %v937 = vadd.f32 %v776, %v936
  %v938 = vpop.f32.mrb[0].mxu0
  %939 = vmatprep.mubr.bf16.mxu0 %v385
  %940 = vmatmul.mubr.bf16.gmra.mrb[0].mxu0 %v384
  %v941 = vpop.f32.mrb[0].mxu0
  %v942 = vadd.f32 %v781, %v941
  %v943 = vpop.f32.mrb[0].mxu0
  %v944 = vpop.f32.mrb[0].mxu0
  %v945 = vadd.f32 %v784, %v944
  %v946 = vpop.f32.mrb[0].mxu0
  %947 = vmatprep.mubr.bf16.mxu0 %v389
  %948 = vmatmul.mubr.bf16.gmra.mrb[0].mxu0 %v388
  %v949 = vpop.f32.mrb[0].mxu0
  %v950 = vadd.f32 %v789, %v949
  %v951 = vpop.f32.mrb[0].mxu0
  %v952 = vpop.f32.mrb[0].mxu0
  %v953 = vadd.f32 %v792, %v952
  %v954 = vpop.f32.mrb[0].mxu0
  %955 = vmatprep.mubr.bf16.mxu0 %v393
  %956 = vmatmul.mubr.bf16.gmra.mrb[0].mxu0 %v392
  %v957 = vpop.f32.mrb[0].mxu0
  %v958 = vadd.f32 %v797, %v957
  %v959 = vpop.f32.mrb[0].mxu0
  %v960 = vpop.f32.mrb[0].mxu0
  %v961 = vadd.f32 %v800, %v960
  %v962 = vpop.f32.mrb[0].mxu0
  %963 = vmatprep.mubr.bf16.mxu0 %v397
  %964 = vmatmul.mubr.bf16.gmra.mrb[0].mxu0 %v396
  %v965 = vpop.f32.mrb[0].mxu0
  %v966 = vadd.f32 %v805, %v965
  %v967 = vpop.f32.mrb[0].mxu0
  %v968 = vpop.f32.mrb[0].mxu0
  %v969 = vadd.f32 %v808, %v968
  %v970 = vpop.f32.mrb[0].mxu0
  %971 = vmatprep.mubr.bf16.mxu0 %v401
  %972 = vmatmul.mubr.bf16.gmra.mrb[0].mxu0 %v400
  %v973 = vpop.f32.mrb[0].mxu0
  %v974 = vadd.f32 %v813, %v973
  %v975 = vpop.f32.mrb[0].mxu0
  %v976 = vpop.f32.mrb[0].mxu0
  %v977 = vadd.f32 %v816, %v976
  %v978 = vpop.f32.mrb[0].mxu0
  %979 = vdwg.mxu0
  %980 = vst [vmem:[#allocation2] sm:$0xff] %v854
  %981 = vst [vmem:[#allocation2 + $0x8] sm:$0xff] %v857
  %982 = vst [vmem:[#allocation2 + $0x10] sm:$0xff] %v862
  %983 = vst [vmem:[#allocation2 + $0x18] sm:$0xff] %v865
  %984 = vst [vmem:[#allocation2 + $0x20] sm:$0xff] %v870
  %985 = vst [vmem:[#allocation2 + $0x28] sm:$0xff] %v873
  %986 = vst [vmem:[#allocation2 + $0x30] sm:$0xff] %v878
  %987 = vst [vmem:[#allocation2 + $0x38] sm:$0xff] %v881
  %988 = vst [vmem:[#allocation2 + $0x40] sm:$0xff] %v886
  %989 = vst [vmem:[#allocation2 + $0x48] sm:$0xff] %v889
  %990 = vst [vmem:[#allocation2 + $0x50] sm:$0xff] %v894
  %991 = vst [vmem:[#allocation2 + $0x58] sm:$0xff] %v897
  %992 = vst [vmem:[#allocation2 + $0x60] sm:$0xff] %v902
  %993 = vst [vmem:[#allocation2 + $0x68] sm:$0xff] %v905
  %994 = vst [vmem:[#allocation2 + $0x70] sm:$0xff] %v910
  %995 = vst [vmem:[#allocation2 + $0x78] sm:$0xff] %v913
  %996 = vst [vmem:[#allocation2 + $0x80] sm:$0xff] %v918
  %997 = vst [vmem:[#allocation2 + $0x88] sm:$0xff] %v921
  %998 = vst [vmem:[#allocation2 + $0x90] sm:$0xff] %v926
  %999 = vst [vmem:[#allocation2 + $0x98] sm:$0xff] %v929
  %1000 = vst [vmem:[#allocation2 + $0xa0] sm:$0xff] %v934
  %1001 = vst [vmem:[#allocation2 + $0xa8] sm:$0xff] %v937
  %1002 = vst [vmem:[#allocation2 + $0xb0] sm:$0xff] %v942
  %1003 = vst [vmem:[#allocation2 + $0xb8] sm:$0xff] %v945
  %1004 = vst [vmem:[#allocation2 + $0xc0] sm:$0xff] %v950
  %1005 = vst [vmem:[#allocation2 + $0xc8] sm:$0xff] %v953
  %1006 = vst [vmem:[#allocation2 + $0xd0] sm:$0xff] %v958
  %1007 = vst [vmem:[#allocation2 + $0xd8] sm:$0xff] %v961
  %1008 = vst [vmem:[#allocation2 + $0xe0] sm:$0xff] %v966
  %1009 = vst [vmem:[#allocation2 + $0xe8] sm:$0xff] %v969
  %1010 = vst [vmem:[#allocation2 + $0xf0] sm:$0xff] %v974
  %1011 = vst [vmem:[#allocation2 + $0xf8] sm:$0xff] %v977
  %v1012 = vld [vmem:[#allocation2] sm:$0xff]
  %v1013 = vld [vmem:[#allocation2 + $0x8] sm:$0xff]
  %v1014 = vld [vmem:[#allocation2 + $0x10] sm:$0xff]
  %v1015 = vld [vmem:[#allocation2 + $0x18] sm:$0xff]
  %v1016 = vld [vmem:[#allocation2 + $0x20] sm:$0xff]
  %v1017 = vld [vmem:[#allocation2 + $0x28] sm:$0xff]
  %v1018 = vld [vmem:[#allocation2 + $0x30] sm:$0xff]
  %v1019 = vld [vmem:[#allocation2 + $0x38] sm:$0xff]
  %v1020 = vld [vmem:[#allocation2 + $0x40] sm:$0xff]
  %v1021 = vld [vmem:[#allocation2 + $0x48] sm:$0xff]
  %v1022 = vld [vmem:[#allocation2 + $0x50] sm:$0xff]
  %v1023 = vld [vmem:[#allocation2 + $0x58] sm:$0xff]
  %v1024 = vld [vmem:[#allocation2 + $0x60] sm:$0xff]
  %v1025 = vld [vmem:[#allocation2 + $0x68] sm:$0xff]
  %v1026 = vld [vmem:[#allocation2 + $0x70] sm:$0xff]
  %v1027 = vld [vmem:[#allocation2 + $0x78] sm:$0xff]
  %v1028 = vld [vmem:[#allocation2 + $0x80] sm:$0xff]
  %v1029 = vld [vmem:[#allocation2 + $0x88] sm:$0xff]
  %v1030 = vld [vmem:[#allocation2 + $0x90] sm:$0xff]
  %v1031 = vld [vmem:[#allocation2 + $0x98] sm:$0xff]
  %v1032 = vld [vmem:[#allocation2 + $0xa0] sm:$0xff]
  %v1033 = vld [vmem:[#allocation2 + $0xa8] sm:$0xff]
  %v1034 = vld [vmem:[#allocation2 + $0xb0] sm:$0xff]
  %v1035 = vld [vmem:[#allocation2 + $0xb8] sm:$0xff]
  %v1036 = vld [vmem:[#allocation2 + $0xc0] sm:$0xff]
  %v1037 = vld [vmem:[#allocation2 + $0xc8] sm:$0xff]
  %v1038 = vld [vmem:[#allocation2 + $0xd0] sm:$0xff]
  %v1039 = vld [vmem:[#allocation2 + $0xd8] sm:$0xff]
  %v1040 = vld [vmem:[#allocation2 + $0xe0] sm:$0xff]
  %v1041 = vld [vmem:[#allocation2 + $0xe8] sm:$0xff]
  %v1042 = vld [vmem:[#allocation2 + $0xf0] sm:$0xff]
  %v1043 = vld [vmem:[#allocation2 + $0xf8] sm:$0xff]
  %v1044 = vadd.f32 %v1012, %v1013
  %v1045 = vadd.f32 %v1044, %v1014
  %v1046 = vadd.f32 %v1045, %v1015
  %v1047 = vadd.f32 %v1046, %v1016
  %v1048 = vadd.f32 %v1047, %v1017
  %v1049 = vadd.f32 %v1048, %v1018
  %v1050 = vadd.f32 %v1049, %v1019
  %v1051 = vadd.f32 %v1050, %v1020
  %v1052 = vadd.f32 %v1051, %v1021
  %v1053 = vadd.f32 %v1052, %v1022
  %v1054 = vadd.f32 %v1053, %v1023
  %v1055 = vadd.f32 %v1054, %v1024
  %v1056 = vadd.f32 %v1055, %v1025
  %v1057 = vadd.f32 %v1056, %v1026
  %v1058 = vadd.f32 %v1057, %v1027
  %v1059 = vadd.f32 %v1058, %v1028
  %v1060 = vadd.f32 %v1059, %v1029
  %v1061 = vadd.f32 %v1060, %v1030
  %v1062 = vadd.f32 %v1061, %v1031
  %v1063 = vadd.f32 %v1062, %v1032
  %v1064 = vadd.f32 %v1063, %v1033
  %v1065 = vadd.f32 %v1064, %v1034
  %v1066 = vadd.f32 %v1065, %v1035
  %v1067 = vadd.f32 %v1066, %v1036
  %v1068 = vadd.f32 %v1067, %v1037
  %v1069 = vadd.f32 %v1068, %v1038
  %v1070 = vadd.f32 %v1069, %v1039
  %v1071 = vadd.f32 %v1070, %v1040
  %v1072 = vadd.f32 %v1071, %v1041
  %v1073 = vadd.f32 %v1072, %v1042
  %v1074 = vadd.f32 %v1073, %v1043
  %v1075 = vrot.slane %v1074, 4
  %v1076 = vadd.f32 %v1074, %v1075
  %v1077 = vrot.slane %v1076, 2
  %v1078 = vadd.f32 %v1076, %v1077
  %v1079 = vrot.slane %v1078, 1
  %v1080 = vadd.f32 %v1078, %v1079
  %v1081 = vmul.f32 %v1080, 0.00390625
  %v1082 = vsub.f32 %v1012, %v1081
  %v1083 = vsub.f32 %v1013, %v1081
  %v1084 = vsub.f32 %v1014, %v1081
  %v1085 = vsub.f32 %v1015, %v1081
  %v1086 = vsub.f32 %v1016, %v1081
  %v1087 = vsub.f32 %v1017, %v1081
  %v1088 = vsub.f32 %v1018, %v1081
  %v1089 = vsub.f32 %v1019, %v1081
  %v1090 = vsub.f32 %v1020, %v1081
  %v1091 = vsub.f32 %v1021, %v1081
  %v1092 = vsub.f32 %v1022, %v1081
  %v1093 = vsub.f32 %v1023, %v1081
  %v1094 = vsub.f32 %v1024, %v1081
  %v1095 = vsub.f32 %v1025, %v1081
  %v1096 = vsub.f32 %v1026, %v1081
  %v1097 = vsub.f32 %v1027, %v1081
  %v1098 = vsub.f32 %v1028, %v1081
  %v1099 = vsub.f32 %v1029, %v1081
  %v1100 = vsub.f32 %v1030, %v1081
  %v1101 = vsub.f32 %v1031, %v1081
  %v1102 = vsub.f32 %v1032, %v1081
  %v1103 = vsub.f32 %v1033, %v1081
  %v1104 = vsub.f32 %v1034, %v1081
  %v1105 = vsub.f32 %v1035, %v1081
  %v1106 = vsub.f32 %v1036, %v1081
  %v1107 = vsub.f32 %v1037, %v1081
  %v1108 = vsub.f32 %v1038, %v1081
  %v1109 = vsub.f32 %v1039, %v1081
  %v1110 = vsub.f32 %v1040, %v1081
  %v1111 = vsub.f32 %v1041, %v1081
  %v1112 = vsub.f32 %v1042, %v1081
  %v1113 = vsub.f32 %v1043, %v1081
  %v1114 = vmul.f32 %v1082, %v1082
  %v1115 = vmul.f32 %v1083, %v1083
  %v1116 = vmul.f32 %v1084, %v1084
  %v1117 = vmul.f32 %v1085, %v1085
  %v1118 = vmul.f32 %v1086, %v1086
  %v1119 = vmul.f32 %v1087, %v1087
  %v1120 = vmul.f32 %v1088, %v1088
  %v1121 = vmul.f32 %v1089, %v1089
  %v1122 = vmul.f32 %v1090, %v1090
  %v1123 = vmul.f32 %v1091, %v1091
  %v1124 = vmul.f32 %v1092, %v1092
  %v1125 = vmul.f32 %v1093, %v1093
  %v1126 = vmul.f32 %v1094, %v1094
  %v1127 = vmul.f32 %v1095, %v1095
  %v1128 = vmul.f32 %v1096, %v1096
  %v1129 = vmul.f32 %v1097, %v1097
  %v1130 = vmul.f32 %v1098, %v1098
  %v1131 = vmul.f32 %v1099, %v1099
  %v1132 = vmul.f32 %v1100, %v1100
  %v1133 = vmul.f32 %v1101, %v1101
  %v1134 = vmul.f32 %v1102, %v1102
  %v1135 = vmul.f32 %v1103, %v1103
  %v1136 = vmul.f32 %v1104, %v1104
  %v1137 = vmul.f32 %v1105, %v1105
  %v1138 = vmul.f32 %v1106, %v1106
  %v1139 = vmul.f32 %v1107, %v1107
  %v1140 = vmul.f32 %v1108, %v1108
  %v1141 = vmul.f32 %v1109, %v1109
  %v1142 = vmul.f32 %v1110, %v1110
  %v1143 = vmul.f32 %v1111, %v1111
  %v1144 = vmul.f32 %v1112, %v1112
  %v1145 = vmul.f32 %v1113, %v1113
  %v1146 = vadd.f32 %v1114, %v1115
  %v1147 = vadd.f32 %v1146, %v1116
  %v1148 = vadd.f32 %v1147, %v1117
  %v1149 = vadd.f32 %v1148, %v1118
  %v1150 = vadd.f32 %v1149, %v1119
  %v1151 = vadd.f32 %v1150, %v1120
  %v1152 = vadd.f32 %v1151, %v1121
  %v1153 = vadd.f32 %v1152, %v1122
  %v1154 = vadd.f32 %v1153, %v1123
  %v1155 = vadd.f32 %v1154, %v1124
  %v1156 = vadd.f32 %v1155, %v1125
  %v1157 = vadd.f32 %v1156, %v1126
  %v1158 = vadd.f32 %v1157, %v1127
  %v1159 = vadd.f32 %v1158, %v1128
  %v1160 = vadd.f32 %v1159, %v1129
  %v1161 = vadd.f32 %v1160, %v1130
  %v1162 = vadd.f32 %v1161, %v1131
  %v1163 = vadd.f32 %v1162, %v1132
  %v1164 = vadd.f32 %v1163, %v1133
  %v1165 = vadd.f32 %v1164, %v1134
  %v1166 = vadd.f32 %v1165, %v1135
  %v1167 = vadd.f32 %v1166, %v1136
  %v1168 = vadd.f32 %v1167, %v1137
  %v1169 = vadd.f32 %v1168, %v1138
  %v1170 = vadd.f32 %v1169, %v1139
  %v1171 = vadd.f32 %v1170, %v1140
  %v1172 = vadd.f32 %v1171, %v1141
  %v1173 = vadd.f32 %v1172, %v1142
  %v1174 = vadd.f32 %v1173, %v1143
  %v1175 = vadd.f32 %v1174, %v1144
  %v1176 = vadd.f32 %v1175, %v1145
  %v1177 = vrot.slane %v1176, 4
  %v1178 = vadd.f32 %v1176, %v1177
  %v1179 = vrot.slane %v1178, 2
  %v1180 = vadd.f32 %v1178, %v1179
  %v1181 = vrot.slane %v1180, 1
  %v1182 = vadd.f32 %v1180, %v1181
  %v1183 = vmul.f32 %v1182, 0.00390625
  %v1184 = vld [vmem:[%s2] sm:$0x1]
  %v1185 = vadd.f32 %v1183, 1e-05
  %v1186 = vrsqrt.pop %v1185
  %v1187 = vmul.f32 %v1184, %v1186
  %v1189 = vlaneseq
  %v1190 = vshrl.u32 %v1189, 7
  %v1191 = vsub.s32 0, %v1190
  %v1192 = vrot.slane %v1187, %v1191
  %v1194 = vmul.f32 %v1082, %v1192
  %v1195 = vmul.f32 %v1083, %v1192
  %v1196 = vmul.f32 %v1084, %v1192
  %v1197 = vmul.f32 %v1085, %v1192
  %v1198 = vmul.f32 %v1086, %v1192
  %v1199 = vmul.f32 %v1087, %v1192
  %v1200 = vmul.f32 %v1088, %v1192
  %v1201 = vmul.f32 %v1089, %v1192
  %v1202 = vmul.f32 %v1090, %v1192
  %v1203 = vmul.f32 %v1091, %v1192
  %v1204 = vmul.f32 %v1092, %v1192
  %v1205 = vmul.f32 %v1093, %v1192
  %v1206 = vmul.f32 %v1094, %v1192
  %v1207 = vmul.f32 %v1095, %v1192
  %v1208 = vmul.f32 %v1096, %v1192
  %v1209 = vmul.f32 %v1097, %v1192
  %v1210 = vmul.f32 %v1098, %v1192
  %v1211 = vmul.f32 %v1099, %v1192
  %v1212 = vmul.f32 %v1100, %v1192
  %v1213 = vmul.f32 %v1101, %v1192
  %v1214 = vmul.f32 %v1102, %v1192
  %v1215 = vmul.f32 %v1103, %v1192
  %v1216 = vmul.f32 %v1104, %v1192
  %v1217 = vmul.f32 %v1105, %v1192
  %v1218 = vmul.f32 %v1106, %v1192
  %v1219 = vmul.f32 %v1107, %v1192
  %v1220 = vmul.f32 %v1108, %v1192
  %v1221 = vmul.f32 %v1109, %v1192
  %v1222 = vmul.f32 %v1110, %v1192
  %v1223 = vmul.f32 %v1111, %v1192
  %v1224 = vmul.f32 %v1112, %v1192
  %v1225 = vmul.f32 %v1113, %v1192
  %v1226 = vld [vmem:[%s3] sm:$0x1]
  %v1228 = vlaneseq
  %v1229 = vshrl.u32 %v1228, 7
  %v1230 = vsub.s32 0, %v1229
  %v1231 = vrot.slane %v1226, %v1230
  %v1233 = vadd.f32 %v1194, %v1231
  %v1234 = vadd.f32 %v1195, %v1231
  %v1235 = vadd.f32 %v1196, %v1231
  %v1236 = vadd.f32 %v1197, %v1231
  %v1237 = vadd.f32 %v1198, %v1231
  %v1238 = vadd.f32 %v1199, %v1231
  %v1239 = vadd.f32 %v1200, %v1231
  %v1240 = vadd.f32 %v1201, %v1231
  %v1241 = vadd.f32 %v1202, %v1231
  %v1242 = vadd.f32 %v1203, %v1231
  %v1243 = vadd.f32 %v1204, %v1231
  %v1244 = vadd.f32 %v1205, %v1231
  %v1245 = vadd.f32 %v1206, %v1231
  %v1246 = vadd.f32 %v1207, %v1231
  %v1247 = vadd.f32 %v1208, %v1231
  %v1248 = vadd.f32 %v1209, %v1231
  %v1249 = vadd.f32 %v1210, %v1231
  %v1250 = vadd.f32 %v1211, %v1231
  %v1251 = vadd.f32 %v1212, %v1231
  %v1252 = vadd.f32 %v1213, %v1231
  %v1253 = vadd.f32 %v1214, %v1231
  %v1254 = vadd.f32 %v1215, %v1231
  %v1255 = vadd.f32 %v1216, %v1231
  %v1256 = vadd.f32 %v1217, %v1231
  %v1257 = vadd.f32 %v1218, %v1231
  %v1258 = vadd.f32 %v1219, %v1231
  %v1259 = vadd.f32 %v1220, %v1231
  %v1260 = vadd.f32 %v1221, %v1231
  %v1261 = vadd.f32 %v1222, %v1231
  %v1262 = vadd.f32 %v1223, %v1231
  %v1263 = vadd.f32 %v1224, %v1231
  %v1264 = vadd.f32 %v1225, %v1231
  %vm1265 = vcmp.ge.f32.partialorder %v1233, 0.0
  %vm1266 = vcmp.ge.f32.partialorder %v1234, 0.0
  %vm1267 = vcmp.ge.f32.partialorder %v1235, 0.0
  %vm1268 = vcmp.ge.f32.partialorder %v1236, 0.0
  %vm1269 = vcmp.ge.f32.partialorder %v1237, 0.0
  %vm1270 = vcmp.ge.f32.partialorder %v1238, 0.0
  %vm1271 = vcmp.ge.f32.partialorder %v1239, 0.0
  %vm1272 = vcmp.ge.f32.partialorder %v1240, 0.0
  %vm1273 = vcmp.ge.f32.partialorder %v1241, 0.0
  %vm1274 = vcmp.ge.f32.partialorder %v1242, 0.0
  %vm1275 = vcmp.ge.f32.partialorder %v1243, 0.0
  %vm1276 = vcmp.ge.f32.partialorder %v1244, 0.0
  %vm1277 = vcmp.ge.f32.partialorder %v1245, 0.0
  %vm1278 = vcmp.ge.f32.partialorder %v1246, 0.0
  %vm1279 = vcmp.ge.f32.partialorder %v1247, 0.0
  %vm1280 = vcmp.ge.f32.partialorder %v1248, 0.0
  %vm1281 = vcmp.ge.f32.partialorder %v1249, 0.0
  %vm1282 = vcmp.ge.f32.partialorder %v1250, 0.0
  %vm1283 = vcmp.ge.f32.partialorder %v1251, 0.0
  %vm1284 = vcmp.ge.f32.partialorder %v1252, 0.0
  %vm1285 = vcmp.ge.f32.partialorder %v1253, 0.0
  %vm1286 = vcmp.ge.f32.partialorder %v1254, 0.0
  %vm1287 = vcmp.ge.f32.partialorder %v1255, 0.0
  %vm1288 = vcmp.ge.f32.partialorder %v1256, 0.0
  %vm1289 = vcmp.ge.f32.partialorder %v1257, 0.0
  %vm1290 = vcmp.ge.f32.partialorder %v1258, 0.0
  %vm1291 = vcmp.ge.f32.partialorder %v1259, 0.0
  %vm1292 = vcmp.ge.f32.partialorder %v1260, 0.0
  %vm1293 = vcmp.ge.f32.partialorder %v1261, 0.0
  %vm1294 = vcmp.ge.f32.partialorder %v1262, 0.0
  %vm1295 = vcmp.ge.f32.partialorder %v1263, 0.0
  %vm1296 = vcmp.ge.f32.partialorder %v1264, 0.0
  %v1297 = vmul.f32 %v1233, 0.2
  %v1298 = vmul.f32 %v1234, 0.2
  %v1299 = vmul.f32 %v1235, 0.2
  %v1300 = vmul.f32 %v1236, 0.2
  %v1301 = vmul.f32 %v1237, 0.2
  %v1302 = vmul.f32 %v1238, 0.2
  %v1303 = vmul.f32 %v1239, 0.2
  %v1304 = vmul.f32 %v1240, 0.2
  %v1305 = vmul.f32 %v1241, 0.2
  %v1306 = vmul.f32 %v1242, 0.2
  %v1307 = vmul.f32 %v1243, 0.2
  %v1308 = vmul.f32 %v1244, 0.2
  %v1309 = vmul.f32 %v1245, 0.2
  %v1310 = vmul.f32 %v1246, 0.2
  %v1311 = vmul.f32 %v1247, 0.2
  %v1312 = vmul.f32 %v1248, 0.2
  %v1313 = vmul.f32 %v1249, 0.2
  %v1314 = vmul.f32 %v1250, 0.2
  %v1315 = vmul.f32 %v1251, 0.2
  %v1316 = vmul.f32 %v1252, 0.2
  %v1317 = vmul.f32 %v1253, 0.2
  %v1318 = vmul.f32 %v1254, 0.2
  %v1319 = vmul.f32 %v1255, 0.2
  %v1320 = vmul.f32 %v1256, 0.2
  %v1321 = vmul.f32 %v1257, 0.2
  %v1322 = vmul.f32 %v1258, 0.2
  %v1323 = vmul.f32 %v1259, 0.2
  %v1324 = vmul.f32 %v1260, 0.2
  %v1325 = vmul.f32 %v1261, 0.2
  %v1326 = vmul.f32 %v1262, 0.2
  %v1327 = vmul.f32 %v1263, 0.2
  %v1328 = vmul.f32 %v1264, 0.2
  %v1329 = vsel %vm1265, %v1233, %v1297
  %v1330 = vsel %vm1266, %v1234, %v1298
  %v1331 = vsel %vm1267, %v1235, %v1299
  %v1332 = vsel %vm1268, %v1236, %v1300
  %v1333 = vsel %vm1269, %v1237, %v1301
  %v1334 = vsel %vm1270, %v1238, %v1302
  %v1335 = vsel %vm1271, %v1239, %v1303
  %v1336 = vsel %vm1272, %v1240, %v1304
  %v1337 = vsel %vm1273, %v1241, %v1305
  %v1338 = vsel %vm1274, %v1242, %v1306
  %v1339 = vsel %vm1275, %v1243, %v1307
  %v1340 = vsel %vm1276, %v1244, %v1308
  %v1341 = vsel %vm1277, %v1245, %v1309
  %v1342 = vsel %vm1278, %v1246, %v1310
  %v1343 = vsel %vm1279, %v1247, %v1311
  %v1344 = vsel %vm1280, %v1248, %v1312
  %v1345 = vsel %vm1281, %v1249, %v1313
  %v1346 = vsel %vm1282, %v1250, %v1314
  %v1347 = vsel %vm1283, %v1251, %v1315
  %v1348 = vsel %vm1284, %v1252, %v1316
  %v1349 = vsel %vm1285, %v1253, %v1317
  %v1350 = vsel %vm1286, %v1254, %v1318
  %v1351 = vsel %vm1287, %v1255, %v1319
  %v1352 = vsel %vm1288, %v1256, %v1320
  %v1353 = vsel %vm1289, %v1257, %v1321
  %v1354 = vsel %vm1290, %v1258, %v1322
  %v1355 = vsel %vm1291, %v1259, %v1323
  %v1356 = vsel %vm1292, %v1260, %v1324
  %v1357 = vsel %vm1293, %v1261, %v1325
  %v1358 = vsel %vm1294, %v1262, %v1326
  %v1359 = vsel %vm1295, %v1263, %v1327
  %v1360 = vsel %vm1296, %v1264, %v1328
  %v1361 = vpack.c.bf16 %v1330, %v1329
  %v1362 = vpack.c.bf16 %v1332, %v1331
  %v1363 = vpack.c.bf16 %v1334, %v1333
  %v1364 = vpack.c.bf16 %v1336, %v1335
  %v1365 = vpack.c.bf16 %v1338, %v1337
  %v1366 = vpack.c.bf16 %v1340, %v1339
  %v1367 = vpack.c.bf16 %v1342, %v1341
  %v1368 = vpack.c.bf16 %v1344, %v1343
  %v1369 = vpack.c.bf16 %v1346, %v1345
  %v1370 = vpack.c.bf16 %v1348, %v1347
  %v1371 = vpack.c.bf16 %v1350, %v1349
  %v1372 = vpack.c.bf16 %v1352, %v1351
  %v1373 = vpack.c.bf16 %v1354, %v1353
  %v1374 = vpack.c.bf16 %v1356, %v1355
  %v1375 = vpack.c.bf16 %v1358, %v1357
  %v1376 = vpack.c.bf16 %v1360, %v1359
  %v1393 = vunpack.c.l.b16 %v1361
  %v1394 = vunpack.c.h.b16 %v1361
  %v1395 = vunpack.c.l.b16 %v1362
  %v1396 = vunpack.c.h.b16 %v1362
  %v1397 = vunpack.c.l.b16 %v1363
  %v1398 = vunpack.c.h.b16 %v1363
  %v1399 = vunpack.c.l.b16 %v1364
  %v1400 = vunpack.c.h.b16 %v1364
  %v1401 = vunpack.c.l.b16 %v1365
  %v1402 = vunpack.c.h.b16 %v1365
  %v1403 = vunpack.c.l.b16 %v1366
  %v1404 = vunpack.c.h.b16 %v1366
  %v1405 = vunpack.c.l.b16 %v1367
  %v1406 = vunpack.c.h.b16 %v1367
  %v1407 = vunpack.c.l.b16 %v1368
  %v1408 = vunpack.c.h.b16 %v1368
  %v1409 = vunpack.c.l.b16 %v1369
  %v1410 = vunpack.c.h.b16 %v1369
  %v1411 = vunpack.c.l.b16 %v1370
  %v1412 = vunpack.c.h.b16 %v1370
  %v1413 = vunpack.c.l.b16 %v1371
  %v1414 = vunpack.c.h.b16 %v1371
  %v1415 = vunpack.c.l.b16 %v1372
  %v1416 = vunpack.c.h.b16 %v1372
  %v1417 = vunpack.c.l.b16 %v1373
  %v1418 = vunpack.c.h.b16 %v1373
  %v1419 = vunpack.c.l.b16 %v1374
  %v1420 = vunpack.c.h.b16 %v1374
  %v1421 = vunpack.c.l.b16 %v1375
  %v1422 = vunpack.c.h.b16 %v1375
  %v1423 = vunpack.c.l.b16 %v1376
  %v1424 = vunpack.c.h.b16 %v1376
  %v1425 = vpack.c.b16 %v1393, %v1393
  %v1426 = vpack.c.b16 %v1394, %v1394
  %v1427 = vpack.c.b16 %v1395, %v1395
  %v1428 = vpack.c.b16 %v1396, %v1396
  %v1429 = vpack.c.b16 %v1397, %v1397
  %v1430 = vpack.c.b16 %v1398, %v1398
  %v1431 = vpack.c.b16 %v1399, %v1399
  %v1432 = vpack.c.b16 %v1400, %v1400
  %v1433 = vpack.c.b16 %v1401, %v1401
  %v1434 = vpack.c.b16 %v1402, %v1402
  %v1435 = vpack.c.b16 %v1403, %v1403
  %v1436 = vpack.c.b16 %v1404, %v1404
  %v1437 = vpack.c.b16 %v1405, %v1405
  %v1438 = vpack.c.b16 %v1406, %v1406
  %v1439 = vpack.c.b16 %v1407, %v1407
  %v1440 = vpack.c.b16 %v1408, %v1408
  %v1441 = vpack.c.b16 %v1409, %v1409
  %v1442 = vpack.c.b16 %v1410, %v1410
  %v1443 = vpack.c.b16 %v1411, %v1411
  %v1444 = vpack.c.b16 %v1412, %v1412
  %v1445 = vpack.c.b16 %v1413, %v1413
  %v1446 = vpack.c.b16 %v1414, %v1414
  %v1447 = vpack.c.b16 %v1415, %v1415
  %v1448 = vpack.c.b16 %v1416, %v1416
  %v1449 = vpack.c.b16 %v1417, %v1417
  %v1450 = vpack.c.b16 %v1418, %v1418
  %v1451 = vpack.c.b16 %v1419, %v1419
  %v1452 = vpack.c.b16 %v1420, %v1420
  %v1453 = vpack.c.b16 %v1421, %v1421
  %v1454 = vpack.c.b16 %v1422, %v1422
  %v1455 = vpack.c.b16 %v1423, %v1423
  %v1456 = vpack.c.b16 %v1424, %v1424
  %1489 = vst [vmem:[%s4] sm:$0xf] %v1425
  %1490 = vst [vmem:[%s4 + $0x4] sm:$0xf] %v1426
  %1491 = vst [vmem:[%s4 + $0x8] sm:$0xf] %v1427
  %1492 = vst [vmem:[%s4 + $0xc] sm:$0xf] %v1428
  %1493 = vst [vmem:[%s4 + $0x10] sm:$0xf] %v1429
  %1494 = vst [vmem:[%s4 + $0x14] sm:$0xf] %v1430
  %1495 = vst [vmem:[%s4 + $0x18] sm:$0xf] %v1431
  %1496 = vst [vmem:[%s4 + $0x1c] sm:$0xf] %v1432
  %1497 = vst [vmem:[%s4 + $0x20] sm:$0xf] %v1433
  %1498 = vst [vmem:[%s4 + $0x24] sm:$0xf] %v1434
  %1499 = vst [vmem:[%s4 + $0x28] sm:$0xf] %v1435
  %1500 = vst [vmem:[%s4 + $0x2c] sm:$0xf] %v1436
  %1501 = vst [vmem:[%s4 + $0x30] sm:$0xf] %v1437
  %1502 = vst [vmem:[%s4 + $0x34] sm:$0xf] %v1438
  %1503 = vst [vmem:[%s4 + $0x38] sm:$0xf] %v1439
  %1504 = vst [vmem:[%s4 + $0x3c] sm:$0xf] %v1440
  %1505 = vst [vmem:[%s4 + $0x40] sm:$0xf] %v1441
  %1506 = vst [vmem:[%s4 + $0x44] sm:$0xf] %v1442
  %1507 = vst [vmem:[%s4 + $0x48] sm:$0xf] %v1443
  %1508 = vst [vmem:[%s4 + $0x4c] sm:$0xf] %v1444
  %1509 = vst [vmem:[%s4 + $0x50] sm:$0xf] %v1445
  %1510 = vst [vmem:[%s4 + $0x54] sm:$0xf] %v1446
  %1511 = vst [vmem:[%s4 + $0x58] sm:$0xf] %v1447
  %1512 = vst [vmem:[%s4 + $0x5c] sm:$0xf] %v1448
  %1513 = vst [vmem:[%s4 + $0x60] sm:$0xf] %v1449
  %1514 = vst [vmem:[%s4 + $0x64] sm:$0xf] %v1450
  %1515 = vst [vmem:[%s4 + $0x68] sm:$0xf] %v1451
  %1516 = vst [vmem:[%s4 + $0x6c] sm:$0xf] %v1452
  %1517 = vst [vmem:[%s4 + $0x70] sm:$0xf] %v1453
  %1518 = vst [vmem:[%s4 + $0x74] sm:$0xf] %v1454
  %1519 = vst [vmem:[%s4 + $0x78] sm:$0xf] %v1455
  %1520 = vst [vmem:[%s4 + $0x7c] sm:$0xf] %v1456
  // Predicated region
  $region18: #{discriminator_f.6} parent=0 // pred_check
    _
  $region19: #{discriminator_f.6} parent=0 // pred_check_branch
    %1522 = sbr.rel (0) target = $region21
  $region20: #{discriminator_f.6} parent=0 // pred_region
    _
  $region21: #{discriminator_f.6} parent=0 // pred_fallthru
    _
  // Predicated region
  $region22: #{discriminator_f.6} parent=0 // pred_check
    _
  $region23: #{discriminator_f.6} parent=0 // pred_check_branch
    %1524 = sbr.rel (0) target = $region25
  $region24: #{discriminator_f.6} parent=0 // pred_region
    _
  $region25: #{discriminator_f.6} parent=0 // pred_fallthru
    _

// kernel: discriminator_f.7
$region0: #{discriminator_f.7}
  #allocation0 [shape = 'u32[]', space=smem, size = 0x4, offset = 0x4, fixed_abs, tag = 'smem constant byte address 0x4 - core index']
  #allocation1 [shape = 'u32[144,128]{1,0:T(1,128)}', space=vmem, size = 0x12000, scoped, tag = 'internal scratch']
  #allocation2 [shape = 'f32[64,128]{1,0:T(8,128)}', space=vmem, size = 0x8000, scoped, tag = 'scratch operand']
  %s0 = inlined_call_operand.vmem [shape: bf16[64,1024], index: 0, kind: input, shape index: {}]
  %s1 = inlined_call_operand.vmem [shape: bf16[1024,128], index: 1, kind: input, shape index: {}]
  %s2 = inlined_call_operand.vmem [shape: f32[1,128], index: 2, kind: input, shape index: {}]
  %s3 = inlined_call_operand.vmem [shape: f32[1,128], index: 3, kind: input, shape index: {}]
  %s4 = inlined_call_operand.hbm [shape: f32[64,128], index: 4, kind: output, shape index: {}]
  %s5 = sld [smem:[#allocation0]]
  $region26: #{discriminator_f.7} parent=0
    _
  %s7 = ssub.s32 1, %s5
  %s8 = scalar_select 0, %s7, %s5
  $region1: #{discriminator_f.7} parent=0
    #allocation3 [shape = 'u8[32768]{0}', space=vmem, size = 0x8000, scoped, tag = 'output window, operand 0, single buffered']
    #allocation4 [shape = 's32[1]{0}', space=sflag, size = 0x4, scoped, tag = 'scoped memory for discriminator_f.7']
    %9 = vsyncpa [#allocation4], 0
    // Predicated region
    $region2: #{discriminator_f.7} parent=1 // pred_check
      _
    $region3: #{discriminator_f.7} parent=1 // pred_check_branch
      %11 = sbr.rel (0) target = $region5
    $region4: #{discriminator_f.7} parent=1 // pred_region
      _
    $region5: #{discriminator_f.7} parent=1 // pred_fallthru
      _
    // Predicated region
    $region6: #{discriminator_f.7} parent=1 // pred_check
      _
    $region7: #{discriminator_f.7} parent=1 // pred_check_branch
      %13 = sbr.rel (0) target = $region9
    $region8: #{discriminator_f.7} parent=1 // pred_region
      _
    $region9: #{discriminator_f.7} parent=1 // pred_fallthru
      _
    // Predicated region
    $region10: #{discriminator_f.7} parent=1 // pred_check
      _
    $region11: #{discriminator_f.7} parent=1 // pred_check_branch
      %15 = sbr.rel (0) target = $region13
    $region12: #{discriminator_f.7} parent=1 // pred_region
      _
    $region13: #{discriminator_f.7} parent=1 // pred_fallthru
      _
    // Predicated region
    $region14: #{discriminator_f.7} parent=1 // pred_check
      _
    $region15: #{discriminator_f.7} parent=1 // pred_check_branch
      %17 = sbr.rel (0) target = $region17
    $region16: #{discriminator_f.7} parent=1 // pred_region
      _
    $region17: #{discriminator_f.7} parent=1 // pred_fallthru
      _
    %v19 = vld [vmem:[%s0] sm:$0xff]
    %v20 = vld [vmem:[%s0 + $0x8] sm:$0xff]
    %v21 = vld [vmem:[%s0 + $0x10] sm:$0xff]
    %v22 = vld [vmem:[%s0 + $0x18] sm:$0xff]
    %v23 = vld [vmem:[%s0 + $0x20] sm:$0xff]
    %v24 = vld [vmem:[%s0 + $0x28] sm:$0xff]
    %v25 = vld [vmem:[%s0 + $0x30] sm:$0xff]
    %v26 = vld [vmem:[%s0 + $0x38] sm:$0xff]
    %v27 = vld [vmem:[%s0 + $0x40] sm:$0xff]
    %v28 = vld [vmem:[%s0 + $0x48] sm:$0xff]
    %v29 = vld [vmem:[%s0 + $0x50] sm:$0xff]
    %v30 = vld [vmem:[%s0 + $0x58] sm:$0xff]
    %v31 = vld [vmem:[%s0 + $0x60] sm:$0xff]
    %v32 = vld [vmem:[%s0 + $0x68] sm:$0xff]
    %v33 = vld [vmem:[%s0 + $0x70] sm:$0xff]
    %v34 = vld [vmem:[%s0 + $0x78] sm:$0xff]
    %v35 = vld [vmem:[%s0 + $0x80] sm:$0xff]
    %v36 = vld [vmem:[%s0 + $0x88] sm:$0xff]
    %v37 = vld [vmem:[%s0 + $0x90] sm:$0xff]
    %v38 = vld [vmem:[%s0 + $0x98] sm:$0xff]
    %v39 = vld [vmem:[%s0 + $0xa0] sm:$0xff]
    %v40 = vld [vmem:[%s0 + $0xa8] sm:$0xff]
    %v41 = vld [vmem:[%s0 + $0xb0] sm:$0xff]
    %v42 = vld [vmem:[%s0 + $0xb8] sm:$0xff]
    %v43 = vld [vmem:[%s0 + $0xc0] sm:$0xff]
    %v44 = vld [vmem:[%s0 + $0xc8] sm:$0xff]
    %v45 = vld [vmem:[%s0 + $0xd0] sm:$0xff]
    %v46 = vld [vmem:[%s0 + $0xd8] sm:$0xff]
    %v47 = vld [vmem:[%s0 + $0xe0] sm:$0xff]
    %v48 = vld [vmem:[%s0 + $0xe8] sm:$0xff]
    %v49 = vld [vmem:[%s0 + $0xf0] sm:$0xff]
    %v50 = vld [vmem:[%s0 + $0xf8] sm:$0xff]
    %v51 = vld [vmem:[%s1] sm:$0xf]
    %v52 = vld [vmem:[%s1 + $0x4] sm:$0xf]
    %v53 = vld [vmem:[%s1 + $0x8] sm:$0xf]
    %v54 = vld [vmem:[%s1 + $0xc] sm:$0xf]
    %v55 = vld [vmem:[%s1 + $0x10] sm:$0xf]
    %v56 = vld [vmem:[%s1 + $0x14] sm:$0xf]
    %v57 = vld [vmem:[%s1 + $0x18] sm:$0xf]
    %v58 = vld [vmem:[%s1 + $0x1c] sm:$0xf]
    %v59 = vld [vmem:[%s1 + $0x20] sm:$0xf]
    %v60 = vld [vmem:[%s1 + $0x24] sm:$0xf]
    %v61 = vld [vmem:[%s1 + $0x28] sm:$0xf]
    %v62 = vld [vmem:[%s1 + $0x2c] sm:$0xf]
    %v63 = vld [vmem:[%s1 + $0x30] sm:$0xf]
    %v64 = vld [vmem:[%s1 + $0x34] sm:$0xf]
    %v65 = vld [vmem:[%s1 + $0x38] sm:$0xf]
    %v66 = vld [vmem:[%s1 + $0x3c] sm:$0xf]
    %v67 = vld [vmem:[%s1 + $0x40] sm:$0xf]
    %v68 = vld [vmem:[%s1 + $0x44] sm:$0xf]
    %v69 = vld [vmem:[%s1 + $0x48] sm:$0xf]
    %v70 = vld [vmem:[%s1 + $0x4c] sm:$0xf]
    %v71 = vld [vmem:[%s1 + $0x50] sm:$0xf]
    %v72 = vld [vmem:[%s1 + $0x54] sm:$0xf]
    %v73 = vld [vmem:[%s1 + $0x58] sm:$0xf]
    %v74 = vld [vmem:[%s1 + $0x5c] sm:$0xf]
    %v75 = vld [vmem:[%s1 + $0x60] sm:$0xf]
    %v76 = vld [vmem:[%s1 + $0x64] sm:$0xf]
    %v77 = vld [vmem:[%s1 + $0x68] sm:$0xf]
    %v78 = vld [vmem:[%s1 + $0x6c] sm:$0xf]
    %v79 = vld [vmem:[%s1 + $0x70] sm:$0xf]
    %v80 = vld [vmem:[%s1 + $0x74] sm:$0xf]
    %v81 = vld [vmem:[%s1 + $0x78] sm:$0xf]
    %v82 = vld [vmem:[%s1 + $0x7c] sm:$0xf]
    %v83 = vld [vmem:[%s1 + $0x80] sm:$0xf]
    %v84 = vld [vmem:[%s1 + $0x84] sm:$0xf]
    %v85 = vld [vmem:[%s1 + $0x88] sm:$0xf]
    %v86 = vld [vmem:[%s1 + $0x8c] sm:$0xf]
    %v87 = vld [vmem:[%s1 + $0x90] sm:$0xf]
    %v88 = vld [vmem:[%s1 + $0x94] sm:$0xf]
    %v89 = vld [vmem:[%s1 + $0x98] sm:$0xf]
    %v90 = vld [vmem:[%s1 + $0x9c] sm:$0xf]
    %v91 = vld [vmem:[%s1 + $0xa0] sm:$0xf]
    %v92 = vld [vmem:[%s1 + $0xa4] sm:$0xf]
    %v93 = vld [vmem:[%s1 + $0xa8] sm:$0xf]
    %v94 = vld [vmem:[%s1 + $0xac] sm:$0xf]
    %v95 = vld [vmem:[%s1 + $0xb0] sm:$0xf]
    %v96 = vld [vmem:[%s1 + $0xb4] sm:$0xf]
    %v97 = vld [vmem:[%s1 + $0xb8] sm:$0xf]
    %v98 = vld [vmem:[%s1 + $0xbc] sm:$0xf]
    %v99 = vld [vmem:[%s1 + $0xc0] sm:$0xf]
    %v100 = vld [vmem:[%s1 + $0xc4] sm:$0xf]
    %v101 = vld [vmem:[%s1 + $0xc8] sm:$0xf]
    %v102 = vld [vmem:[%s1 + $0xcc] sm:$0xf]
    %v103 = vld [vmem:[%s1 + $0xd0] sm:$0xf]
    %v104 = vld [vmem:[%s1 + $0xd4] sm:$0xf]
    %v105 = vld [vmem:[%s1 + $0xd8] sm:$0xf]
    %v106 = vld [vmem:[%s1 + $0xdc] sm:$0xf]
    %v107 = vld [vmem:[%s1 + $0xe0] sm:$0xf]
    %v108 = vld [vmem:[%s1 + $0xe4] sm:$0xf]
    %v109 = vld [vmem:[%s1 + $0xe8] sm:$0xf]
    %v110 = vld [vmem:[%s1 + $0xec] sm:$0xf]
    %v111 = vld [vmem:[%s1 + $0xf0] sm:$0xf]
    %v112 = vld [vmem:[%s1 + $0xf4] sm:$0xf]
    %v113 = vld [vmem:[%s1 + $0xf8] sm:$0xf]
    %v114 = vld [vmem:[%s1 + $0xfc] sm:$0xf]
    %v115 = vld [vmem:[%s1 + $0x100] sm:$0xf]
    %v116 = vld [vmem:[%s1 + $0x104] sm:$0xf]
    %v117 = vld [vmem:[%s1 + $0x108] sm:$0xf]
    %v118 = vld [vmem:[%s1 + $0x10c] sm:$0xf]
    %v119 = vld [vmem:[%s1 + $0x110] sm:$0xf]
    %v120 = vld [vmem:[%s1 + $0x114] sm:$0xf]
    %v121 = vld [vmem:[%s1 + $0x118] sm:$0xf]
    %v122 = vld [vmem:[%s1 + $0x11c] sm:$0xf]
    %v123 = vld [vmem:[%s1 + $0x120] sm:$0xf]
    %v124 = vld [vmem:[%s1 + $0x124] sm:$0xf]
    %v125 = vld [vmem:[%s1 + $0x128] sm:$0xf]
    %v126 = vld [vmem:[%s1 + $0x12c] sm:$0xf]
    %v127 = vld [vmem:[%s1 + $0x130] sm:$0xf]
    %v128 = vld [vmem:[%s1 + $0x134] sm:$0xf]
    %v129 = vld [vmem:[%s1 + $0x138] sm:$0xf]
    %v130 = vld [vmem:[%s1 + $0x13c] sm:$0xf]
    %v131 = vld [vmem:[%s1 + $0x140] sm:$0xf]
    %v132 = vld [vmem:[%s1 + $0x144] sm:$0xf]
    %v133 = vld [vmem:[%s1 + $0x148] sm:$0xf]
    %v134 = vld [vmem:[%s1 + $0x14c] sm:$0xf]
    %v135 = vld [vmem:[%s1 + $0x150] sm:$0xf]
    %v136 = vld [vmem:[%s1 + $0x154] sm:$0xf]
    %v137 = vld [vmem:[%s1 + $0x158] sm:$0xf]
    %v138 = vld [vmem:[%s1 + $0x15c] sm:$0xf]
    %v139 = vld [vmem:[%s1 + $0x160] sm:$0xf]
    %v140 = vld [vmem:[%s1 + $0x164] sm:$0xf]
    %v141 = vld [vmem:[%s1 + $0x168] sm:$0xf]
    %v142 = vld [vmem:[%s1 + $0x16c] sm:$0xf]
    %v143 = vld [vmem:[%s1 + $0x170] sm:$0xf]
    %v144 = vld [vmem:[%s1 + $0x174] sm:$0xf]
    %v145 = vld [vmem:[%s1 + $0x178] sm:$0xf]
    %v146 = vld [vmem:[%s1 + $0x17c] sm:$0xf]
    %v147 = vld [vmem:[%s1 + $0x180] sm:$0xf]
    %v148 = vld [vmem:[%s1 + $0x184] sm:$0xf]
    %v149 = vld [vmem:[%s1 + $0x188] sm:$0xf]
    %v150 = vld [vmem:[%s1 + $0x18c] sm:$0xf]
    %v151 = vld [vmem:[%s1 + $0x190] sm:$0xf]
    %v152 = vld [vmem:[%s1 + $0x194] sm:$0xf]
    %v153 = vld [vmem:[%s1 + $0x198] sm:$0xf]
    %v154 = vld [vmem:[%s1 + $0x19c] sm:$0xf]
    %v155 = vld [vmem:[%s1 + $0x1a0] sm:$0xf]
    %v156 = vld [vmem:[%s1 + $0x1a4] sm:$0xf]
    %v157 = vld [vmem:[%s1 + $0x1a8] sm:$0xf]
    %v158 = vld [vmem:[%s1 + $0x1ac] sm:$0xf]
    %v159 = vld [vmem:[%s1 + $0x1b0] sm:$0xf]
    %v160 = vld [vmem:[%s1 + $0x1b4] sm:$0xf]
    %v161 = vld [vmem:[%s1 + $0x1b8] sm:$0xf]
    %v162 = vld [vmem:[%s1 + $0x1bc] sm:$0xf]
    %v163 = vld [vmem:[%s1 + $0x1c0] sm:$0xf]
    %v164 = vld [vmem:[%s1 + $0x1c4] sm:$0xf]
    %v165 = vld [vmem:[%s1 + $0x1c8] sm:$0xf]
    %v166 = vld [vmem:[%s1 + $0x1cc] sm:$0xf]
    %v167 = vld [vmem:[%s1 + $0x1d0] sm:$0xf]
    %v168 = vld [vmem:[%s1 + $0x1d4] sm:$0xf]
    %v169 = vld [vmem:[%s1 + $0x1d8] sm:$0xf]
    %v170 = vld [vmem:[%s1 + $0x1dc] sm:$0xf]
    %v171 = vld [vmem:[%s1 + $0x1e0] sm:$0xf]
    %v172 = vld [vmem:[%s1 + $0x1e4] sm:$0xf]
    %v173 = vld [vmem:[%s1 + $0x1e8] sm:$0xf]
    %v174 = vld [vmem:[%s1 + $0x1ec] sm:$0xf]
    %v175 = vld [vmem:[%s1 + $0x1f0] sm:$0xf]
    %v176 = vld [vmem:[%s1 + $0x1f4] sm:$0xf]
    %v177 = vld [vmem:[%s1 + $0x1f8] sm:$0xf]
    %v178 = vld [vmem:[%s1 + $0x1fc] sm:$0xf]
    %v211 = vunpack.c.l.b16 %v19
    %v212 = vunpack.c.h.b16 %v19
    %v213 = vunpack.c.l.b16 %v20
    %v214 = vunpack.c.h.b16 %v20
    %v215 = vunpack.c.l.b16 %v21
    %v216 = vunpack.c.h.b16 %v21
    %v217 = vunpack.c.l.b16 %v22
    %v218 = vunpack.c.h.b16 %v22
    %v219 = vunpack.c.l.b16 %v23
    %v220 = vunpack.c.h.b16 %v23
    %v221 = vunpack.c.l.b16 %v24
    %v222 = vunpack.c.h.b16 %v24
    %v223 = vunpack.c.l.b16 %v25
    %v224 = vunpack.c.h.b16 %v25
    %v225 = vunpack.c.l.b16 %v26
    %v226 = vunpack.c.h.b16 %v26
    %v227 = vunpack.c.l.b16 %v27
    %v228 = vunpack.c.h.b16 %v27
    %v229 = vunpack.c.l.b16 %v28
    %v230 = vunpack.c.h.b16 %v28
    %v231 = vunpack.c.l.b16 %v29
    %v232 = vunpack.c.h.b16 %v29
    %v233 = vunpack.c.l.b16 %v30
    %v234 = vunpack.c.h.b16 %v30
    %v235 = vunpack.c.l.b16 %v31
    %v236 = vunpack.c.h.b16 %v31
    %v237 = vunpack.c.l.b16 %v32
    %v238 = vunpack.c.h.b16 %v32
    %v239 = vunpack.c.l.b16 %v33
    %v240 = vunpack.c.h.b16 %v33
    %v241 = vunpack.c.l.b16 %v34
    %v242 = vunpack.c.h.b16 %v34
    %v243 = vunpack.c.l.b16 %v35
    %v244 = vunpack.c.h.b16 %v35
    %v245 = vunpack.c.l.b16 %v36
    %v246 = vunpack.c.h.b16 %v36
    %v247 = vunpack.c.l.b16 %v37
    %v248 = vunpack.c.h.b16 %v37
    %v249 = vunpack.c.l.b16 %v38
    %v250 = vunpack.c.h.b16 %v38
    %v251 = vunpack.c.l.b16 %v39
    %v252 = vunpack.c.h.b16 %v39
    %v253 = vunpack.c.l.b16 %v40
    %v254 = vunpack.c.h.b16 %v40
    %v255 = vunpack.c.l.b16 %v41
    %v256 = vunpack.c.h.b16 %v41
    %v257 = vunpack.c.l.b16 %v42
    %v258 = vunpack.c.h.b16 %v42
    %v259 = vunpack.c.l.b16 %v43
    %v260 = vunpack.c.h.b16 %v43
    %v261 = vunpack.c.l.b16 %v44
    %v262 = vunpack.c.h.b16 %v44
    %v263 = vunpack.c.l.b16 %v45
    %v264 = vunpack.c.h.b16 %v45
    %v265 = vunpack.c.l.b16 %v46
    %v266 = vunpack.c.h.b16 %v46
    %v267 = vunpack.c.l.b16 %v47
    %v268 = vunpack.c.h.b16 %v47
    %v269 = vunpack.c.l.b16 %v48
    %v270 = vunpack.c.h.b16 %v48
    %v271 = vunpack.c.l.b16 %v49
    %v272 = vunpack.c.h.b16 %v49
    %v273 = vunpack.c.l.b16 %v50
    %v274 = vunpack.c.h.b16 %v50
    %v275 = vpack.c.b16 %v219, %v211
    %v276 = vpack.c.b16 %v220, %v212
    %v277 = vpack.c.b16 %v221, %v213
    %v278 = vpack.c.b16 %v222, %v214
    %v279 = vpack.c.b16 %v223, %v215
    %v280 = vpack.c.b16 %v224, %v216
    %v281 = vpack.c.b16 %v225, %v217
    %v282 = vpack.c.b16 %v226, %v218
    %v283 = vpack.c.b16 %v235, %v227
    %v284 = vpack.c.b16 %v236, %v228
    %v285 = vpack.c.b16 %v237, %v229
    %v286 = vpack.c.b16 %v238, %v230
    %v287 = vpack.c.b16 %v239, %v231
    %v288 = vpack.c.b16 %v240, %v232
    %v289 = vpack.c.b16 %v241, %v233
    %v290 = vpack.c.b16 %v242, %v234
    %v291 = vpack.c.b16 %v251, %v243
    %v292 = vpack.c.b16 %v252, %v244
    %v293 = vpack.c.b16 %v253, %v245
    %v294 = vpack.c.b16 %v254, %v246
    %v295 = vpack.c.b16 %v255, %v247
    %v296 = vpack.c.b16 %v256, %v248
    %v297 = vpack.c.b16 %v257, %v249
    %v298 = vpack.c.b16 %v258, %v250
    %v299 = vpack.c.b16 %v267, %v259
    %v300 = vpack.c.b16 %v268, %v260
    %v301 = vpack.c.b16 %v269, %v261
    %v302 = vpack.c.b16 %v270, %v262
    %v303 = vpack.c.b16 %v271, %v263
    %v304 = vpack.c.b16 %v272, %v264
    %v305 = vpack.c.b16 %v273, %v265
    %v306 = vpack.c.b16 %v274, %v266
    %v467 = vunpack.c.l.b16 %v51
    %v468 = vunpack.c.l.b16 %v52
    %v469 = vunpack.c.l.b16 %v53
    %v470 = vunpack.c.l.b16 %v54
    %v471 = vunpack.c.l.b16 %v55
    %v472 = vunpack.c.l.b16 %v56
    %v473 = vunpack.c.l.b16 %v57
    %v474 = vunpack.c.l.b16 %v58
    %v475 = vunpack.c.l.b16 %v59
    %v476 = vunpack.c.l.b16 %v60
    %v477 = vunpack.c.l.b16 %v61
    %v478 = vunpack.c.l.b16 %v62
    %v479 = vunpack.c.l.b16 %v63
    %v480 = vunpack.c.l.b16 %v64
    %v481 = vunpack.c.l.b16 %v65
    %v482 = vunpack.c.l.b16 %v66
    %v483 = vunpack.c.l.b16 %v67
    %v484 = vunpack.c.l.b16 %v68
    %v485 = vunpack.c.l.b16 %v69
    %v486 = vunpack.c.l.b16 %v70
    %v487 = vunpack.c.l.b16 %v71
    %v488 = vunpack.c.l.b16 %v72
    %v489 = vunpack.c.l.b16 %v73
    %v490 = vunpack.c.l.b16 %v74
    %v491 = vunpack.c.l.b16 %v75
    %v492 = vunpack.c.l.b16 %v76
    %v493 = vunpack.c.l.b16 %v77
    %v494 = vunpack.c.l.b16 %v78
    %v495 = vunpack.c.l.b16 %v79
    %v496 = vunpack.c.l.b16 %v80
    %v497 = vunpack.c.l.b16 %v81
    %v498 = vunpack.c.l.b16 %v82
    %v499 = vunpack.c.l.b16 %v83
    %v500 = vunpack.c.l.b16 %v84
    %v501 = vunpack.c.l.b16 %v85
    %v502 = vunpack.c.l.b16 %v86
    %v503 = vunpack.c.l.b16 %v87
    %v504 = vunpack.c.l.b16 %v88
    %v505 = vunpack.c.l.b16 %v89
    %v506 = vunpack.c.l.b16 %v90
    %v507 = vunpack.c.l.b16 %v91
    %v508 = vunpack.c.l.b16 %v92
    %v509 = vunpack.c.l.b16 %v93
    %v510 = vunpack.c.l.b16 %v94
    %v511 = vunpack.c.l.b16 %v95
    %v512 = vunpack.c.l.b16 %v96
    %v513 = vunpack.c.l.b16 %v97
    %v514 = vunpack.c.l.b16 %v98
    %v515 = vunpack.c.l.b16 %v99
    %v516 = vunpack.c.l.b16 %v100
    %v517 = vunpack.c.l.b16 %v101
    %v518 = vunpack.c.l.b16 %v102
    %v519 = vunpack.c.l.b16 %v103
    %v520 = vunpack.c.l.b16 %v104
    %v521 = vunpack.c.l.b16 %v105
    %v522 = vunpack.c.l.b16 %v106
    %v523 = vunpack.c.l.b16 %v107
    %v524 = vunpack.c.l.b16 %v108
    %v525 = vunpack.c.l.b16 %v109
    %v526 = vunpack.c.l.b16 %v110
    %v527 = vunpack.c.l.b16 %v111
    %v528 = vunpack.c.l.b16 %v112
    %v529 = vunpack.c.l.b16 %v113
    %v530 = vunpack.c.l.b16 %v114
    %v531 = vunpack.c.l.b16 %v115
    %v532 = vunpack.c.l.b16 %v116
    %v533 = vunpack.c.l.b16 %v117
    %v534 = vunpack.c.l.b16 %v118
    %v535 = vunpack.c.l.b16 %v119
    %v536 = vunpack.c.l.b16 %v120
    %v537 = vunpack.c.l.b16 %v121
    %v538 = vunpack.c.l.b16 %v122
    %v539 = vunpack.c.l.b16 %v123
    %v540 = vunpack.c.l.b16 %v124
    %v541 = vunpack.c.l.b16 %v125
    %v542 = vunpack.c.l.b16 %v126
    %v543 = vunpack.c.l.b16 %v127
    %v544 = vunpack.c.l.b16 %v128
    %v545 = vunpack.c.l.b16 %v129
    %v546 = vunpack.c.l.b16 %v130
    %v547 = vunpack.c.l.b16 %v131
    %v548 = vunpack.c.l.b16 %v132
    %v549 = vunpack.c.l.b16 %v133
    %v550 = vunpack.c.l.b16 %v134
    %v551 = vunpack.c.l.b16 %v135
    %v552 = vunpack.c.l.b16 %v136
    %v553 = vunpack.c.l.b16 %v137
    %v554 = vunpack.c.l.b16 %v138
    %v555 = vunpack.c.l.b16 %v139
    %v556 = vunpack.c.l.b16 %v140
    %v557 = vunpack.c.l.b16 %v141
    %v558 = vunpack.c.l.b16 %v142
    %v559 = vunpack.c.l.b16 %v143
    %v560 = vunpack.c.l.b16 %v144
    %v561 = vunpack.c.l.b16 %v145
    %v562 = vunpack.c.l.b16 %v146
    %v563 = vunpack.c.l.b16 %v147
    %v564 = vunpack.c.l.b16 %v148
    %v565 = vunpack.c.l.b16 %v149
    %v566 = vunpack.c.l.b16 %v150
    %v567 = vunpack.c.l.b16 %v151
    %v568 = vunpack.c.l.b16 %v152
    %v569 = vunpack.c.l.b16 %v153
    %v570 = vunpack.c.l.b16 %v154
    %v571 = vunpack.c.l.b16 %v155
    %v572 = vunpack.c.l.b16 %v156
    %v573 = vunpack.c.l.b16 %v157
    %v574 = vunpack.c.l.b16 %v158
    %v575 = vunpack.c.l.b16 %v159
    %v576 = vunpack.c.l.b16 %v160
    %v577 = vunpack.c.l.b16 %v161
    %v578 = vunpack.c.l.b16 %v162
    %v579 = vunpack.c.l.b16 %v163
    %v580 = vunpack.c.l.b16 %v164
    %v581 = vunpack.c.l.b16 %v165
    %v582 = vunpack.c.l.b16 %v166
    %v583 = vunpack.c.l.b16 %v167
    %v584 = vunpack.c.l.b16 %v168
    %v585 = vunpack.c.l.b16 %v169
    %v586 = vunpack.c.l.b16 %v170
    %v587 = vunpack.c.l.b16 %v171
    %v588 = vunpack.c.l.b16 %v172
    %v589 = vunpack.c.l.b16 %v173
    %v590 = vunpack.c.l.b16 %v174
    %v591 = vunpack.c.l.b16 %v175
    %v592 = vunpack.c.l.b16 %v176
    %v593 = vunpack.c.l.b16 %v177
    %v594 = vunpack.c.l.b16 %v178
    %v595 = vpack.c.b16 %v468, %v467
    %v596 = vpack.c.b16 %v470, %v469
    %v597 = vpack.c.b16 %v472, %v471
    %v598 = vpack.c.b16 %v474, %v473
    %v599 = vpack.c.b16 %v476, %v475
    %v600 = vpack.c.b16 %v478, %v477
    %v601 = vpack.c.b16 %v480, %v479
    %v602 = vpack.c.b16 %v482, %v481
    %v603 = vpack.c.b16 %v484, %v483
    %v604 = vpack.c.b16 %v486, %v485
    %v605 = vpack.c.b16 %v488, %v487
    %v606 = vpack.c.b16 %v490, %v489
    %v607 = vpack.c.b16 %v492, %v491
    %v608 = vpack.c.b16 %v494, %v493
    %v609 = vpack.c.b16 %v496, %v495
    %v610 = vpack.c.b16 %v498, %v497
    %v611 = vpack.c.b16 %v500, %v499
    %v612 = vpack.c.b16 %v502, %v501
    %v613 = vpack.c.b16 %v504, %v503
    %v614 = vpack.c.b16 %v506, %v505
    %v615 = vpack.c.b16 %v508, %v507
    %v616 = vpack.c.b16 %v510, %v509
    %v617 = vpack.c.b16 %v512, %v511
    %v618 = vpack.c.b16 %v514, %v513
    %v619 = vpack.c.b16 %v516, %v515
    %v620 = vpack.c.b16 %v518, %v517
    %v621 = vpack.c.b16 %v520, %v519
    %v622 = vpack.c.b16 %v522, %v521
    %v623 = vpack.c.b16 %v524, %v523
    %v624 = vpack.c.b16 %v526, %v525
    %v625 = vpack.c.b16 %v528, %v527
    %v626 = vpack.c.b16 %v530, %v529
    %v627 = vpack.c.b16 %v532, %v531
    %v628 = vpack.c.b16 %v534, %v533
    %v629 = vpack.c.b16 %v536, %v535
    %v630 = vpack.c.b16 %v538, %v537
    %v631 = vpack.c.b16 %v540, %v539
    %v632 = vpack.c.b16 %v542, %v541
    %v633 = vpack.c.b16 %v544, %v543
    %v634 = vpack.c.b16 %v546, %v545
    %v635 = vpack.c.b16 %v548, %v547
    %v636 = vpack.c.b16 %v550, %v549
    %v637 = vpack.c.b16 %v552, %v551
    %v638 = vpack.c.b16 %v554, %v553
    %v639 = vpack.c.b16 %v556, %v555
    %v640 = vpack.c.b16 %v558, %v557
    %v641 = vpack.c.b16 %v560, %v559
    %v642 = vpack.c.b16 %v562, %v561
    %v643 = vpack.c.b16 %v564, %v563
    %v644 = vpack.c.b16 %v566, %v565
    %v645 = vpack.c.b16 %v568, %v567
    %v646 = vpack.c.b16 %v570, %v569
    %v647 = vpack.c.b16 %v572, %v571
    %v648 = vpack.c.b16 %v574, %v573
    %v649 = vpack.c.b16 %v576, %v575
    %v650 = vpack.c.b16 %v578, %v577
    %v651 = vpack.c.b16 %v580, %v579
    %v652 = vpack.c.b16 %v582, %v581
    %v653 = vpack.c.b16 %v584, %v583
    %v654 = vpack.c.b16 %v586, %v585
    %v655 = vpack.c.b16 %v588, %v587
    %v656 = vpack.c.b16 %v590, %v589
    %v657 = vpack.c.b16 %v592, %v591
    %v658 = vpack.c.b16 %v594, %v593
    %723 = vmatprep.subr.bf16.mxu0 0
    %724 = vmatpush1.bf16.msra.mxu0 %v595
    %725 = vmatprep.subr.bf16.mxu0 0
    %726 = vmatpush1.bf16.msra.mxu0 %v596
    %727 = vmatprep.subr.bf16.mxu0 0
    %728 = vmatpush1.bf16.msra.mxu0 %v597
    %729 = vmatprep.subr.bf16.mxu0 0
    %730 = vmatpush1.bf16.msra.mxu0 %v598
    %731 = vmatprep.subr.bf16.mxu0 0
    %732 = vmatpush1.bf16.msra.mxu0 %v599
    %733 = vmatprep.subr.bf16.mxu0 0
    %734 = vmatpush1.bf16.msra.mxu0 %v600
    %735 = vmatprep.subr.bf16.mxu0 0
    %736 = vmatpush1.bf16.msra.mxu0 %v601
    %737 = vmatprep.subr.bf16.mxu0 0
    %738 = vmatpush1.bf16.msra.mxu0 %v602
    %739 = vmatprep.subr.bf16.mxu0 0
    %740 = vmatpush1.bf16.msra.mxu0 %v603
    %741 = vmatprep.subr.bf16.mxu0 0
    %742 = vmatpush1.bf16.msra.mxu0 %v604
    %743 = vmatprep.subr.bf16.mxu0 0
    %744 = vmatpush1.bf16.msra.mxu0 %v605
    %745 = vmatprep.subr.bf16.mxu0 0
    %746 = vmatpush1.bf16.msra.mxu0 %v606
    %747 = vmatprep.subr.bf16.mxu0 0
    %748 = vmatpush1.bf16.msra.mxu0 %v607
    %749 = vmatprep.subr.bf16.mxu0 0
    %750 = vmatpush1.bf16.msra.mxu0 %v608
    %751 = vmatprep.subr.bf16.mxu0 0
    %752 = vmatpush1.bf16.msra.mxu0 %v609
    %753 = vmatprep.subr.bf16.mxu0 0
    %754 = vmatpush1.bf16.msra.mxu0 %v610
    %755 = vmatprep.mubr.bf16.mxu0 %v276
    %756 = vmatmul.mubr.bf16.gmra.mrb[0].mxu0 %v275
    %v757 = vpop.f32.mrb[0].mxu0
    %v758 = vadd.f32 0.0, %v757
    %v759 = vpop.f32.mrb[0].mxu0
    %v760 = vpop.f32.mrb[0].mxu0
    %v761 = vadd.f32 0.0, %v760
    %v762 = vpop.f32.mrb[0].mxu0
    %763 = vmatprep.mubr.bf16.mxu0 %v284
    %764 = vmatmul.mubr.bf16.gmra.mrb[0].mxu0 %v283
    %v765 = vpop.f32.mrb[0].mxu0
    %v766 = vadd.f32 0.0, %v765
    %v767 = vpop.f32.mrb[0].mxu0
    %v768 = vpop.f32.mrb[0].mxu0
    %v769 = vadd.f32 0.0, %v768
    %v770 = vpop.f32.mrb[0].mxu0
    %771 = vmatprep.mubr.bf16.mxu0 %v292
    %772 = vmatmul.mubr.bf16.gmra.mrb[0].mxu0 %v291
    %v773 = vpop.f32.mrb[0].mxu0
    %v774 = vadd.f32 0.0, %v773
    %v775 = vpop.f32.mrb[0].mxu0
    %v776 = vpop.f32.mrb[0].mxu0
    %v777 = vadd.f32 0.0, %v776
    %v778 = vpop.f32.mrb[0].mxu0
    %779 = vmatprep.mubr.bf16.mxu0 %v300
    %780 = vmatmul.mubr.bf16.gmra.mrb[0].mxu0 %v299
    %v781 = vpop.f32.mrb[0].mxu0
    %v782 = vadd.f32 0.0, %v781
    %v783 = vpop.f32.mrb[0].mxu0
    %v784 = vpop.f32.mrb[0].mxu0
    %v785 = vadd.f32 0.0, %v784
    %v786 = vpop.f32.mrb[0].mxu0
    %787 = vdwg.mxu0
    %788 = vmatprep.subr.bf16.mxu0 0
    %789 = vmatpush1.bf16.msra.mxu0 %v611
    %790 = vmatprep.subr.bf16.mxu0 0
    %791 = vmatpush1.bf16.msra.mxu0 %v612
    %792 = vmatprep.subr.bf16.mxu0 0
    %793 = vmatpush1.bf16.msra.mxu0 %v613
    %794 = vmatprep.subr.bf16.mxu0 0
    %795 = vmatpush1.bf16.msra.mxu0 %v614
    %796 = vmatprep.subr.bf16.mxu0 0
    %797 = vmatpush1.bf16.msra.mxu0 %v615
    %798 = vmatprep.subr.bf16.mxu0 0
    %799 = vmatpush1.bf16.msra.mxu0 %v616
    %800 = vmatprep.subr.bf16.mxu0 0
    %801 = vmatpush1.bf16.msra.mxu0 %v617
    %802 = vmatprep.subr.bf16.mxu0 0
    %803 = vmatpush1.bf16.msra.mxu0 %v618
    %804 = vmatprep.subr.bf16.mxu0 0
    %805 = vmatpush1.bf16.msra.mxu0 %v619
    %806 = vmatprep.subr.bf16.mxu0 0
    %807 = vmatpush1.bf16.msra.mxu0 %v620
    %808 = vmatprep.subr.bf16.mxu0 0
    %809 = vmatpush1.bf16.msra.mxu0 %v621
    %810 = vmatprep.subr.bf16.mxu0 0
    %811 = vmatpush1.bf16.msra.mxu0 %v622
    %812 = vmatprep.subr.bf16.mxu0 0
    %813 = vmatpush1.bf16.msra.mxu0 %v623
    %814 = vmatprep.subr.bf16.mxu0 0
    %815 = vmatpush1.bf16.msra.mxu0 %v624
    %816 = vmatprep.subr.bf16.mxu0 0
    %817 = vmatpush1.bf16.msra.mxu0 %v625
    %818 = vmatprep.subr.bf16.mxu0 0
    %819 = vmatpush1.bf16.msra.mxu0 %v626
    %820 = vmatprep.mubr.bf16.mxu0 %v278
    %821 = vmatmul.mubr.bf16.gmra.mrb[0].mxu0 %v277
    %v822 = vpop.f32.mrb[0].mxu0
    %v823 = vadd.f32 %v758, %v822
    %v824 = vpop.f32.mrb[0].mxu0
    %v825 = vpop.f32.mrb[0].mxu0
    %v826 = vadd.f32 %v761, %v825
    %v827 = vpop.f32.mrb[0].mxu0
    %828 = vmatprep.mubr.bf16.mxu0 %v286
    %829 = vmatmul.mubr.bf16.gmra.mrb[0].mxu0 %v285
    %v830 = vpop.f32.mrb[0].mxu0
    %v831 = vadd.f32 %v766, %v830
    %v832 = vpop.f32.mrb[0].mxu0
    %v833 = vpop.f32.mrb[0].mxu0
    %v834 = vadd.f32 %v769, %v833
    %v835 = vpop.f32.mrb[0].mxu0
    %836 = vmatprep.mubr.bf16.mxu0 %v294
    %837 = vmatmul.mubr.bf16.gmra.mrb[0].mxu0 %v293
    %v838 = vpop.f32.mrb[0].mxu0
    %v839 = vadd.f32 %v774, %v838
    %v840 = vpop.f32.mrb[0].mxu0
    %v841 = vpop.f32.mrb[0].mxu0
    %v842 = vadd.f32 %v777, %v841
    %v843 = vpop.f32.mrb[0].mxu0
    %844 = vmatprep.mubr.bf16.mxu0 %v302
    %845 = vmatmul.mubr.bf16.gmra.mrb[0].mxu0 %v301
    %v846 = vpop.f32.mrb[0].mxu0
    %v847 = vadd.f32 %v782, %v846
    %v848 = vpop.f32.mrb[0].mxu0
    %v849 = vpop.f32.mrb[0].mxu0
    %v850 = vadd.f32 %v785, %v849
    %v851 = vpop.f32.mrb[0].mxu0
    %852 = vdwg.mxu0
    %853 = vmatprep.subr.bf16.mxu0 0
    %854 = vmatpush1.bf16.msra.mxu0 %v627
    %855 = vmatprep.subr.bf16.mxu0 0
    %856 = vmatpush1.bf16.msra.mxu0 %v628
    %857 = vmatprep.subr.bf16.mxu0 0
    %858 = vmatpush1.bf16.msra.mxu0 %v629
    %859 = vmatprep.subr.bf16.mxu0 0
    %860 = vmatpush1.bf16.msra.mxu0 %v630
    %861 = vmatprep.subr.bf16.mxu0 0
    %862 = vmatpush1.bf16.msra.mxu0 %v631
    %863 = vmatprep.subr.bf16.mxu0 0
    %864 = vmatpush1.bf16.msra.mxu0 %v632
    %865 = vmatprep.subr.bf16.mxu0 0
    %866 = vmatpush1.bf16.msra.mxu0 %v633
    %867 = vmatprep.subr.bf16.mxu0 0
    %868 = vmatpush1.bf16.msra.mxu0 %v634
    %869 = vmatprep.subr.bf16.mxu0 0
    %870 = vmatpush1.bf16.msra.mxu0 %v635
    %871 = vmatprep.subr.bf16.mxu0 0
    %872 = vmatpush1.bf16.msra.mxu0 %v636
    %873 = vmatprep.subr.bf16.mxu0 0
    %874 = vmatpush1.bf16.msra.mxu0 %v637
    %875 = vmatprep.subr.bf16.mxu0 0
    %876 = vmatpush1.bf16.msra.mxu0 %v638
    %877 = vmatprep.subr.bf16.mxu0 0
    %878 = vmatpush1.bf16.msra.mxu0 %v639
    %879 = vmatprep.subr.bf16.mxu0 0
    %880 = vmatpush1.bf16.msra.mxu0 %v640
    %881 = vmatprep.subr.bf16.mxu0 0
    %882 = vmatpush1.bf16.msra.mxu0 %v641
    %883 = vmatprep.subr.bf16.mxu0 0
    %884 = vmatpush1.bf16.msra.mxu0 %v642
    %885 = vmatprep.mubr.bf16.mxu0 %v280
    %886 = vmatmul.mubr.bf16.gmra.mrb[0].mxu0 %v279
    %v887 = vpop.f32.mrb[0].mxu0
    %v888 = vadd.f32 %v823, %v887
    %v889 = vpop.f32.mrb[0].mxu0
    %v890 = vpop.f32.mrb[0].mxu0
    %v891 = vadd.f32 %v826, %v890
    %v892 = vpop.f32.mrb[0].mxu0
    %893 = vmatprep.mubr.bf16.mxu0 %v288
    %894 = vmatmul.mubr.bf16.gmra.mrb[0].mxu0 %v287
    %v895 = vpop.f32.mrb[0].mxu0
    %v896 = vadd.f32 %v831, %v895
    %v897 = vpop.f32.mrb[0].mxu0
    %v898 = vpop.f32.mrb[0].mxu0
    %v899 = vadd.f32 %v834, %v898
    %v900 = vpop.f32.mrb[0].mxu0
    %901 = vmatprep.mubr.bf16.mxu0 %v296
    %902 = vmatmul.mubr.bf16.gmra.mrb[0].mxu0 %v295
    %v903 = vpop.f32.mrb[0].mxu0
    %v904 = vadd.f32 %v839, %v903
    %v905 = vpop.f32.mrb[0].mxu0
    %v906 = vpop.f32.mrb[0].mxu0
    %v907 = vadd.f32 %v842, %v906
    %v908 = vpop.f32.mrb[0].mxu0
    %909 = vmatprep.mubr.bf16.mxu0 %v304
    %910 = vmatmul.mubr.bf16.gmra.mrb[0].mxu0 %v303
    %v911 = vpop.f32.mrb[0].mxu0
    %v912 = vadd.f32 %v847, %v911
    %v913 = vpop.f32.mrb[0].mxu0
    %v914 = vpop.f32.mrb[0].mxu0
    %v915 = vadd.f32 %v850, %v914
    %v916 = vpop.f32.mrb[0].mxu0
    %917 = vdwg.mxu0
    %918 = vmatprep.subr.bf16.mxu0 0
    %919 = vmatpush1.bf16.msra.mxu0 %v643
    %920 = vmatprep.subr.bf16.mxu0 0
    %921 = vmatpush1.bf16.msra.mxu0 %v644
    %922 = vmatprep.subr.bf16.mxu0 0
    %923 = vmatpush1.bf16.msra.mxu0 %v645
    %924 = vmatprep.subr.bf16.mxu0 0
    %925 = vmatpush1.bf16.msra.mxu0 %v646
    %926 = vmatprep.subr.bf16.mxu0 0
    %927 = vmatpush1.bf16.msra.mxu0 %v647
    %928 = vmatprep.subr.bf16.mxu0 0
    %929 = vmatpush1.bf16.msra.mxu0 %v648
    %930 = vmatprep.subr.bf16.mxu0 0
    %931 = vmatpush1.bf16.msra.mxu0 %v649
    %932 = vmatprep.subr.bf16.mxu0 0
    %933 = vmatpush1.bf16.msra.mxu0 %v650
    %934 = vmatprep.subr.bf16.mxu0 0
    %935 = vmatpush1.bf16.msra.mxu0 %v651
    %936 = vmatprep.subr.bf16.mxu0 0
    %937 = vmatpush1.bf16.msra.mxu0 %v652
    %938 = vmatprep.subr.bf16.mxu0 0
    %939 = vmatpush1.bf16.msra.mxu0 %v653
    %940 = vmatprep.subr.bf16.mxu0 0
    %941 = vmatpush1.bf16.msra.mxu0 %v654
    %942 = vmatprep.subr.bf16.mxu0 0
    %943 = vmatpush1.bf16.msra.mxu0 %v655
    %944 = vmatprep.subr.bf16.mxu0 0
    %945 = vmatpush1.bf16.msra.mxu0 %v656
    %946 = vmatprep.subr.bf16.mxu0 0
    %947 = vmatpush1.bf16.msra.mxu0 %v657
    %948 = vmatprep.subr.bf16.mxu0 0
    %949 = vmatpush1.bf16.msra.mxu0 %v658
    %950 = vmatprep.mubr.bf16.mxu0 %v282
    %951 = vmatmul.mubr.bf16.gmra.mrb[0].mxu0 %v281
    %v952 = vpop.f32.mrb[0].mxu0
    %v953 = vadd.f32 %v888, %v952
    %v954 = vpop.f32.mrb[0].mxu0
    %v955 = vpop.f32.mrb[0].mxu0
    %v956 = vadd.f32 %v891, %v955
    %v957 = vpop.f32.mrb[0].mxu0
    %958 = vmatprep.mubr.bf16.mxu0 %v290
    %959 = vmatmul.mubr.bf16.gmra.mrb[0].mxu0 %v289
    %v960 = vpop.f32.mrb[0].mxu0
    %v961 = vadd.f32 %v896, %v960
    %v962 = vpop.f32.mrb[0].mxu0
    %v963 = vpop.f32.mrb[0].mxu0
    %v964 = vadd.f32 %v899, %v963
    %v965 = vpop.f32.mrb[0].mxu0
    %966 = vmatprep.mubr.bf16.mxu0 %v298
    %967 = vmatmul.mubr.bf16.gmra.mrb[0].mxu0 %v297
    %v968 = vpop.f32.mrb[0].mxu0
    %v969 = vadd.f32 %v904, %v968
    %v970 = vpop.f32.mrb[0].mxu0
    %v971 = vpop.f32.mrb[0].mxu0
    %v972 = vadd.f32 %v907, %v971
    %v973 = vpop.f32.mrb[0].mxu0
    %974 = vmatprep.mubr.bf16.mxu0 %v306
    %975 = vmatmul.mubr.bf16.gmra.mrb[0].mxu0 %v305
    %v976 = vpop.f32.mrb[0].mxu0
    %v977 = vadd.f32 %v912, %v976
    %v978 = vpop.f32.mrb[0].mxu0
    %v979 = vpop.f32.mrb[0].mxu0
    %v980 = vadd.f32 %v915, %v979
    %v981 = vpop.f32.mrb[0].mxu0
    %982 = vdwg.mxu0
    %983 = vst [vmem:[#allocation2] sm:$0xff] %v953
    %984 = vst [vmem:[#allocation2 + $0x8] sm:$0xff] %v956
    %985 = vst [vmem:[#allocation2 + $0x10] sm:$0xff] %v961
    %986 = vst [vmem:[#allocation2 + $0x18] sm:$0xff] %v964
    %987 = vst [vmem:[#allocation2 + $0x20] sm:$0xff] %v969
    %988 = vst [vmem:[#allocation2 + $0x28] sm:$0xff] %v972
    %989 = vst [vmem:[#allocation2 + $0x30] sm:$0xff] %v977
    %990 = vst [vmem:[#allocation2 + $0x38] sm:$0xff] %v980
    %v991 = vld [vmem:[#allocation2] sm:$0xff]
    %v992 = vld [vmem:[#allocation2 + $0x8] sm:$0xff]
    %v993 = vld [vmem:[#allocation2 + $0x10] sm:$0xff]
    %v994 = vld [vmem:[#allocation2 + $0x18] sm:$0xff]
    %v995 = vld [vmem:[#allocation2 + $0x20] sm:$0xff]
    %v996 = vld [vmem:[#allocation2 + $0x28] sm:$0xff]
    %v997 = vld [vmem:[#allocation2 + $0x30] sm:$0xff]
    %v998 = vld [vmem:[#allocation2 + $0x38] sm:$0xff]
    %v999 = vadd.f32 %v991, %v992
    %v1000 = vadd.f32 %v999, %v993
    %v1001 = vadd.f32 %v1000, %v994
    %v1002 = vadd.f32 %v1001, %v995
    %v1003 = vadd.f32 %v1002, %v996
    %v1004 = vadd.f32 %v1003, %v997
    %v1005 = vadd.f32 %v1004, %v998
    %v1006 = vrot.slane %v1005, 4
    %v1007 = vadd.f32 %v1005, %v1006
    %v1008 = vrot.slane %v1007, 2
    %v1009 = vadd.f32 %v1007, %v1008
    %v1010 = vrot.slane %v1009, 1
    %v1011 = vadd.f32 %v1009, %v1010
    %v1012 = vmul.f32 %v1011, 0.015625
    %v1013 = vsub.f32 %v991, %v1012
    %v1014 = vsub.f32 %v992, %v1012
    %v1015 = vsub.f32 %v993, %v1012
    %v1016 = vsub.f32 %v994, %v1012
    %v1017 = vsub.f32 %v995, %v1012
    %v1018 = vsub.f32 %v996, %v1012
    %v1019 = vsub.f32 %v997, %v1012
    %v1020 = vsub.f32 %v998, %v1012
    %v1021 = vmul.f32 %v1013, %v1013
    %v1022 = vmul.f32 %v1014, %v1014
    %v1023 = vmul.f32 %v1015, %v1015
    %v1024 = vmul.f32 %v1016, %v1016
    %v1025 = vmul.f32 %v1017, %v1017
    %v1026 = vmul.f32 %v1018, %v1018
    %v1027 = vmul.f32 %v1019, %v1019
    %v1028 = vmul.f32 %v1020, %v1020
    %v1029 = vadd.f32 %v1021, %v1022
    %v1030 = vadd.f32 %v1029, %v1023
    %v1031 = vadd.f32 %v1030, %v1024
    %v1032 = vadd.f32 %v1031, %v1025
    %v1033 = vadd.f32 %v1032, %v1026
    %v1034 = vadd.f32 %v1033, %v1027
    %v1035 = vadd.f32 %v1034, %v1028
    %v1036 = vrot.slane %v1035, 4
    %v1037 = vadd.f32 %v1035, %v1036
    %v1038 = vrot.slane %v1037, 2
    %v1039 = vadd.f32 %v1037, %v1038
    %v1040 = vrot.slane %v1039, 1
    %v1041 = vadd.f32 %v1039, %v1040
    %v1042 = vmul.f32 %v1041, 0.015625
    %v1043 = vld [vmem:[%s2] sm:$0x1]
    %v1044 = vadd.f32 %v1042, 1e-05
    %v1045 = vrsqrt.pop %v1044
    %v1046 = vmul.f32 %v1043, %v1045
    %v1048 = vlaneseq
    %v1049 = vshrl.u32 %v1048, 7
    %v1050 = vsub.s32 0, %v1049
    %v1051 = vrot.slane %v1046, %v1050
    %v1053 = vmul.f32 %v1013, %v1051
    %v1054 = vmul.f32 %v1014, %v1051
    %v1055 = vmul.f32 %v1015, %v1051
    %v1056 = vmul.f32 %v1016, %v1051
    %v1057 = vmul.f32 %v1017, %v1051
    %v1058 = vmul.f32 %v1018, %v1051
    %v1059 = vmul.f32 %v1019, %v1051
    %v1060 = vmul.f32 %v1020, %v1051
    %v1061 = vld [vmem:[%s3] sm:$0x1]
    %v1063 = vlaneseq
    %v1064 = vshrl.u32 %v1063, 7
    %v1065 = vsub.s32 0, %v1064
    %v1066 = vrot.slane %v1061, %v1065
    %v1068 = vadd.f32 %v1053, %v1066
    %v1069 = vadd.f32 %v1054, %v1066
    %v1070 = vadd.f32 %v1055, %v1066
    %v1071 = vadd.f32 %v1056, %v1066
    %v1072 = vadd.f32 %v1057, %v1066
    %v1073 = vadd.f32 %v1058, %v1066
    %v1074 = vadd.f32 %v1059, %v1066
    %v1075 = vadd.f32 %v1060, %v1066
    %vm1076 = vcmp.ge.f32.partialorder %v1068, 0.0
    %vm1077 = vcmp.ge.f32.partialorder %v1069, 0.0
    %vm1078 = vcmp.ge.f32.partialorder %v1070, 0.0
    %vm1079 = vcmp.ge.f32.partialorder %v1071, 0.0
    %vm1080 = vcmp.ge.f32.partialorder %v1072, 0.0
    %vm1081 = vcmp.ge.f32.partialorder %v1073, 0.0
    %vm1082 = vcmp.ge.f32.partialorder %v1074, 0.0
    %vm1083 = vcmp.ge.f32.partialorder %v1075, 0.0
    %v1084 = vmul.f32 %v1068, 0.2
    %v1085 = vmul.f32 %v1069, 0.2
    %v1086 = vmul.f32 %v1070, 0.2
    %v1087 = vmul.f32 %v1071, 0.2
    %v1088 = vmul.f32 %v1072, 0.2
    %v1089 = vmul.f32 %v1073, 0.2
    %v1090 = vmul.f32 %v1074, 0.2
    %v1091 = vmul.f32 %v1075, 0.2
    %v1092 = vsel %vm1076, %v1068, %v1084
    %v1093 = vsel %vm1077, %v1069, %v1085
    %v1094 = vsel %vm1078, %v1070, %v1086
    %v1095 = vsel %vm1079, %v1071, %v1087
    %v1096 = vsel %vm1080, %v1072, %v1088
    %v1097 = vsel %vm1081, %v1073, %v1089
    %v1098 = vsel %vm1082, %v1074, %v1090
    %v1099 = vsel %vm1083, %v1075, %v1091
    %1100 = vst [vmem:[#allocation3] sm:$0xff] %v1092
    %1101 = vst [vmem:[#allocation3 + $0x8] sm:$0xff] %v1093
    %1102 = vst [vmem:[#allocation3 + $0x10] sm:$0xff] %v1094
    %1103 = vst [vmem:[#allocation3 + $0x18] sm:$0xff] %v1095
    %1104 = vst [vmem:[#allocation3 + $0x20] sm:$0xff] %v1096
    %1105 = vst [vmem:[#allocation3 + $0x28] sm:$0xff] %v1097
    %1106 = vst [vmem:[#allocation3 + $0x30] sm:$0xff] %v1098
    %1107 = vst [vmem:[#allocation3 + $0x38] sm:$0xff] %v1099
    // Predicated region
    $region18: #{discriminator_f.7} parent=1 // pred_check
      _
    $region19: #{discriminator_f.7} parent=1 // pred_check_branch
      %1109 = sbr.rel (0) target = $region21
    $region20: #{discriminator_f.7} parent=1 // pred_region
      %s1111 = ssub.s32 1024, 1024
      %1112 = vsyncadd [#allocation4], %s1111
      %s1113 = sshll.u32 [#allocation3], 4
      %s1114 = int_to_ptr.vmem [resolvable:$true] %s1113
      %1119 = dma.vmem_to_hbm [thread:$0]  %s1114, 1024, %s4, [#allocation4], 128, 128, 8
    $region21: #{discriminator_f.7} parent=1 // pred_fallthru
      _
    // Predicated region
    $region22: #{discriminator_f.7} parent=1 // pred_check
      _
    $region23: #{discriminator_f.7} parent=1 // pred_check_branch
      %1121 = sbr.rel (0) target = $region25
    $region24: #{discriminator_f.7} parent=1 // pred_region
      %1122 = dma.done [#allocation4], 1024
    $region25: #{discriminator_f.7} parent=1 // pred_fallthru
      _
    %1123 = vsyncpa [#allocation4], 1

</llo_original>
